<compile_context>
chip_gen: v5e
topology: v5e:2x2
jax: 0.10.0
libtpu: 0.0.40
codegen_flags: <defaults>
</compile_context>

<pallas_src>
import numpy as np

import jax
import jax.numpy as jnp
from jax import lax
from jax.experimental import pallas as pl
from jax.experimental.pallas import tpu as pltpu

NC = 3        # input channels
NDF = 8       # discriminator feature width (small for this synthetic test)
IMG = 64      # spatial size required by the 4x4/s1/p0 head
BN_EPS = 1e-5
SLOPE = 0.2   # LeakyReLU slope


# ----------------------------------------------------------------------------
# Weight-path precompute (tiny, weight-only): band matrices + channel maps
# ----------------------------------------------------------------------------
def _build_band_weights(w_hwio, w_out, stride, wp_in, pad_out):
    """HWIO conv weight -> 4 'row band' matrices T[i] (bf16) so that one padded
    conv output row is  y_row(ho) = sum_i x_row(stride*ho + i) @ T[i], where
    rows are flattened as (padded_col, channel).  Zero columns are emitted at
    the output W-padding positions so a single aligned full-row store suffices.
    """
    kh, kw, cin, cout = w_hwio.shape
    po = 1 if pad_out else 0
    wp_out = w_out + 2 * po
    j = np.arange(kw, dtype=np.int32)[:, None, None, None]
    wo = np.arange(w_out, dtype=np.int32)[None, :, None, None]
    ci = np.arange(cin, dtype=np.int32)[None, None, :, None]
    co = np.arange(cout, dtype=np.int32)[None, None, None, :]
    shape = (kw, w_out, cin, cout)
    rows = np.broadcast_to((stride * wo + j) * cin + ci, shape).reshape(-1)
    cols = np.broadcast_to((wo + po) * cout + co, shape).reshape(-1)
    vals = jnp.broadcast_to(w_hwio[:, :, None, :, :], (kh,) + shape).reshape(kh, -1)
    t = jnp.zeros((kh, wp_in * cin, wp_out * cout), jnp.float32)
    return t.at[:, rows, cols].set(vals).astype(jnp.bfloat16)


def _build_channel_maps(w_out, cout, pad_out):
    """0/1 constants mapping padded-row layout <-> channels (for BN stats).
    S  [wp_out*cout, cout]: collapse row-flattened sums to per-channel sums.
    ST [cout, wp_out*cout]: tile per-channel scale/shift back onto the padded
    row layout (zeros at W-padding columns keep the padding exactly zero)."""
    po = 1 if pad_out else 0
    wp_out = w_out + 2 * po
    s = np.zeros((wp_out * cout, cout), np.float32)
    eye = np.eye(cout, dtype=np.float32)
    for w in range(w_out):
        base = (w + po) * cout
        s[base:base + cout, :] = eye
    return jnp.asarray(s), jnp.asarray(np.ascontiguousarray(s.T))


# ----------------------------------------------------------------------------
# Fused Pallas kernel (whole network, single invocation, VMEM-resident)
# ----------------------------------------------------------------------------
def _make_discriminator_kernel(n):
    h1, h2, h3, h4 = 32, 16, 8, 4

    def kernel(x_ref, t1_ref, t2_ref, t3_ref, t4_ref, t5_ref,
               s2_ref, st2_ref, s3_ref, st3_ref, s4_ref, st4_ref,
               g2_ref, b2_ref, g3_ref, b3_ref, g4_ref, b4_ref,
               out_ref,
               buf2, buf3, buf4, buf5, raw2, raw3, raw4):

        def conv_row(in_ref, t_ref, row0):
            # One 4x4-conv output row: 4 bf16 MXU matmuls, f32 accumulation.
            acc = jnp.dot(in_ref[row0], t_ref[0],
                          preferred_element_type=jnp.float32)
            for i in range(1, 4):
                acc = acc + jnp.dot(in_ref[row0 + i], t_ref[i],
                                    preferred_element_type=jnp.float32)
            return acc

        def lrelu(v):
            return jnp.where(v >= 0, v, SLOPE * v)

        # Zero padded activation buffers once (establishes the H/W zero pad).
        buf2[...] = jnp.zeros(buf2.shape, buf2.dtype)
        buf3[...] = jnp.zeros(buf3.shape, buf3.dtype)
        buf4[...] = jnp.zeros(buf4.shape, buf4.dtype)

        # -------- Layer 1: conv(nc->ndf, 4, 2, 1) + LeakyReLU --------
        def l1_body(ho, carry):
            y = lrelu(conv_row(x_ref, t1_ref, 2 * ho))
            buf2[ho + 1] = y.astype(buf2.dtype)
            return carry

        lax.fori_loop(0, h1, l1_body, 0)

        # -------- Layers 2-4: conv + BatchNorm(batch stats) + LeakyReLU --------
        def bn_layer(in_ref, t_ref, raw_ref, s_ref, st_ref, g_ref, b_ref,
                     dst_ref, h_out, dst_row_off):
            width = raw_ref.shape[-1]

            # Pass 1: conv rows -> f32 scratch; accumulate sum / sum-of-squares.
            def pass1(ho, carry):
                ssum, ssq = carry
                acc = conv_row(in_ref, t_ref, 2 * ho)
                raw_ref[ho] = acc
                return ssum + acc, ssq + acc * acc

            zero = jnp.zeros((n, width), jnp.float32)
            ssum, ssq = lax.fori_loop(0, h_out, pass1, (zero, zero))

            # Per-channel batch statistics (biased variance, PyTorch training BN).
            cnt = float(n * h_out * h_out)
            sum_c = jnp.dot(jnp.sum(ssum, axis=0, keepdims=True), s_ref[...],
                            preferred_element_type=jnp.float32)
            sq_c = jnp.dot(jnp.sum(ssq, axis=0, keepdims=True), s_ref[...],
                           preferred_element_type=jnp.float32)
            mean = sum_c / cnt
            var = sq_c / cnt - mean * mean
            scale_c = g_ref[...] * lax.rsqrt(var + BN_EPS)
            shift_c = b_ref[...] - mean * scale_c
            # Tile per-channel affine back to the padded row layout (zeros at
            # the W-padding columns so the padding stays exactly zero).
            scale_f = jnp.dot(scale_c, st_ref[...],
                              preferred_element_type=jnp.float32)
            shift_f = jnp.dot(shift_c, st_ref[...],
                              preferred_element_type=jnp.float32)

            # Pass 2: affine + LeakyReLU, store into the next layer's buffer.
            def pass2(ho, carry):
                y = lrelu(raw_ref[ho] * scale_f + shift_f)
                dst_ref[ho + dst_row_off] = y.astype(dst_ref.dtype)
                return carry

            lax.fori_loop(0, h_out, pass2, 0)

        bn_layer(buf2, t2_ref, raw2, s2_ref, st2_ref, g2_ref, b2_ref,
                 buf3, h2, 1)
        bn_layer(buf3, t3_ref, raw3, s3_ref, st3_ref, g3_ref, b3_ref,
                 buf4, h3, 1)
        bn_layer(buf4, t4_ref, raw4, s4_ref, st4_ref, g4_ref, b4_ref,
                 buf5, h4, 0)

        # -------- Layer 5: conv(ndf*8 -> 1, 4, 1, 0) + Sigmoid --------
        out_ref[...] = jax.nn.sigmoid(conv_row(buf5, t5_ref, 0))

    return kernel


# ----------------------------------------------------------------------------
# Forward pass (same interface / semantics as before: NCHW in, [N,1,1,1] out)
# ----------------------------------------------------------------------------
def discriminator_forward(x_nchw, params):
    n = x_nchw.shape[0]

    # Activation-path prep: NCHW -> zero-padded NHWC, row-flattened to
    # [Hp, N, Wp*Cin] bf16 (dense contiguous rows for the in-kernel conv taps).
    x = jnp.transpose(x_nchw, (0, 2, 3, 1)).astype(jnp.float32)
    x = jnp.pad(x, ((0, 0), (1, 1), (1, 1), (0, 0)))
    x = x.reshape(n, IMG + 2, (IMG + 2) * NC)
    x = jnp.transpose(x, (1, 0, 2)).astype(jnp.bfloat16)

    # Weight-path prep (weight-only; cacheable by callers across steps).
    t1 = _build_band_weights(params["w1"], 32, 2, 66, True)
    t2 = _build_band_weights(params["w2"], 16, 2, 34, True)
    t3 = _build_band_weights(params["w3"], 8, 2, 18, True)
    t4 = _build_band_weights(params["w4"], 4, 2, 10, False)
    t5 = _build_band_weights(params["w5"], 1, 1, 4, False)

    s2, st2 = _build_channel_maps(16, NDF * 2, True)
    s3, st3 = _build_channel_maps(8, NDF * 4, True)
    s4, st4 = _build_channel_maps(4, NDF * 8, False)

    g2 = params["gamma2"].reshape(1, -1)
    b2 = params["beta2"].reshape(1, -1)
    g3 = params["gamma3"].reshape(1, -1)
    b3 = params["beta3"].reshape(1, -1)
    g4 = params["gamma4"].reshape(1, -1)
    b4 = params["beta4"].reshape(1, -1)

    vmem_spec = pl.BlockSpec(memory_space=pltpu.MemorySpace.VMEM)
    out = pl.pallas_call(
        _make_discriminator_kernel(n),
        out_shape=jax.ShapeDtypeStruct((n, 1), jnp.float32),
        in_specs=[vmem_spec] * 18,
        out_specs=vmem_spec,
        scratch_shapes=[
            pltpu.VMEM((34, n, 34 * NDF), jnp.bfloat16),      # layer-1 out (padded)
            pltpu.VMEM((18, n, 18 * NDF * 2), jnp.bfloat16),  # layer-2 out (padded)
            pltpu.VMEM((10, n, 10 * NDF * 4), jnp.bfloat16),  # layer-3 out (padded)
            pltpu.VMEM((4, n, 4 * NDF * 8), jnp.bfloat16),    # layer-4 out
            pltpu.VMEM((16, n, 18 * NDF * 2), jnp.float32),   # pre-BN rows, L2
            pltpu.VMEM((8, n, 10 * NDF * 4), jnp.float32),    # pre-BN rows, L3
            pltpu.VMEM((4, n, 4 * NDF * 8), jnp.float32),     # pre-BN rows, L4
        ],
    )(x, t1, t2, t3, t4, t5, s2, st2, s3, st3, s4, st4, g2, b2, g3, b3, g4, b4)

    return out.reshape(n, 1, 1, 1)


# ----------------------------------------------------------------------------
# Parameters and a pure-JAX f32 reference (for a loose parity check)
# ----------------------------------------------------------------------------
def init_params(key):
    """Deterministic DCGAN-style init (normal(0, 0.02)); weights in HWIO."""
    keys = jax.random.split(key, 5)
    shapes = [
        (4, 4, NC, NDF),
        (4, 4, NDF, NDF * 2),
        (4, 4, NDF * 2, NDF * 4),
        (4, 4, NDF * 4, NDF * 8),
        (4, 4, NDF * 8, 1),
    ]
    params = {}
    for idx, (k, s) in enumerate(zip(keys, shapes), start=1):
        params[f"w{idx}"] = 0.02 * jax.random.normal(k, s, dtype=jnp.float32)
    for idx, c in zip((2, 3, 4), (NDF * 2, NDF * 4, NDF * 8)):
        params[f"gamma{idx}"] = jnp.ones((c,), jnp.float32)
        params[f"beta{idx}"] = jnp.zeros((c,), jnp.float32)
    return params


def _reference_forward(x_nchw, params):
    """Pure-JAX f32 reference with identical (training-mode BN) semantics."""
    x = jnp.transpose(x_nchw, (0, 2, 3, 1)).astype(jnp.float32)

    def conv(v, w, stride, pad):
        return lax.conv_general_dilated(
            v, w, (stride, stride), [(pad, pad), (pad, pad)],
            dimension_numbers=("NHWC", "HWIO", "NHWC"))

    y = conv(x, params["w1"], 2, 1)
    y = jnp.where(y >= 0, y, SLOPE * y)
    for idx in (2, 3, 4):
        z = conv(y, params[f"w{idx}"], 2, 1)
        mean = jnp.mean(z, axis=(0, 1, 2))
        var = jnp.mean((z - mean) ** 2, axis=(0, 1, 2))
        z = (z - mean) * lax.rsqrt(var + BN_EPS)
        z = z * params[f"gamma{idx}"] + params[f"beta{idx}"]
        y = jnp.where(z >= 0, z, SLOPE * z)
    out = jax.nn.sigmoid(conv(y, params["w5"], 1, 0))
    return jnp.transpose(out, (0, 3, 1, 2))


if __name__ == "__main__":
    key = jax.random.PRNGKey(0)
    k_x, k_p = jax.random.split(key)

    # batch=2, channels=nc=3, spatial=64 (needed so the head reaches 1x1).
    x = jax.random.normal(k_x, (2, NC, IMG, IMG), dtype=jnp.float32)
    params = init_params(k_p)

    fwd = jax.jit(discriminator_forward)
    out = jax.block_until_ready(fwd(x, params))

    assert out.shape == (2, 1, 1, 1), out.shape
    assert bool(jnp.all(jnp.isfinite(out)))
    assert bool(jnp.all((out >= 0.0) & (out <= 1.0)))

    # Loose parity check vs. the f32 reference (bf16 MXU inputs, f32 accum/BN).
    ref = jax.block_until_ready(jax.jit(_reference_forward)(x, params))
    assert float(jnp.max(jnp.abs(out - ref))) < 5e-2

    print("KERNEL_OK")
</pallas_src>

<mosaic_0001>
module attributes {stable_mosaic.version = 11 : i64} {
  func.func @kernel(%arg0: memref<66x2x198xbf16, #tpu.memory_space<vmem>>, %arg1: memref<4x198x272xbf16, #tpu.memory_space<vmem>>, %arg2: memref<4x272x288xbf16, #tpu.memory_space<vmem>>, %arg3: memref<4x288x320xbf16, #tpu.memory_space<vmem>>, %arg4: memref<4x320x256xbf16, #tpu.memory_space<vmem>>, %arg5: memref<4x256x1xbf16, #tpu.memory_space<vmem>>, %arg6: memref<288x16xf32, #tpu.memory_space<vmem>>, %arg7: memref<16x288xf32, #tpu.memory_space<vmem>>, %arg8: memref<320x32xf32, #tpu.memory_space<vmem>>, %arg9: memref<32x320xf32, #tpu.memory_space<vmem>>, %arg10: memref<256x64xf32, #tpu.memory_space<vmem>>, %arg11: memref<64x256xf32, #tpu.memory_space<vmem>>, %arg12: memref<1x16xf32, #tpu.memory_space<vmem>>, %arg13: memref<1x16xf32, #tpu.memory_space<vmem>>, %arg14: memref<1x32xf32, #tpu.memory_space<vmem>>, %arg15: memref<1x32xf32, #tpu.memory_space<vmem>>, %arg16: memref<1x64xf32, #tpu.memory_space<vmem>>, %arg17: memref<1x64xf32, #tpu.memory_space<vmem>>, %arg18: memref<2x1xf32, #tpu.memory_space<vmem>>, %arg19: memref<34x2x272xbf16, #tpu.memory_space<vmem>>, %arg20: memref<18x2x288xbf16, #tpu.memory_space<vmem>>, %arg21: memref<10x2x320xbf16, #tpu.memory_space<vmem>>, %arg22: memref<4x2x256xbf16, #tpu.memory_space<vmem>>, %arg23: memref<16x2x288xf32, #tpu.memory_space<vmem>>, %arg24: memref<8x2x320xf32, #tpu.memory_space<vmem>>, %arg25: memref<4x2x256xf32, #tpu.memory_space<vmem>>) attributes {dimension_semantics = [], scalar_prefetch = 0 : i64, scratch_operands = 7 : i64, tpu.core_type = #tpu.core_type<tc>} {
    %cst = arith.constant 0.000000e+00 : bf16
    %0 = vector.broadcast %cst : bf16 to vector<34x2x272xbf16>
    %c0 = arith.constant 0 : index
    %c0_0 = arith.constant 0 : index
    %c0_1 = arith.constant 0 : index
    %1 = vector.load %arg19[%c0, %c0_0, %c0_1] : memref<34x2x272xbf16, #tpu.memory_space<vmem>>, vector<34x2x272xbf16>
    tpu.vector_store %arg19[%c0, %c0_0, %c0_1], %0 {strides = array<i32>} : memref<34x2x272xbf16, #tpu.memory_space<vmem>>, vector<34x2x272xbf16>,
    %cst_2 = arith.constant 0.000000e+00 : bf16
    %2 = vector.broadcast %cst_2 : bf16 to vector<18x2x288xbf16>
    %c0_3 = arith.constant 0 : index
    %c0_4 = arith.constant 0 : index
    %c0_5 = arith.constant 0 : index
    %3 = vector.load %arg20[%c0_3, %c0_4, %c0_5] : memref<18x2x288xbf16, #tpu.memory_space<vmem>>, vector<18x2x288xbf16>
    tpu.vector_store %arg20[%c0_3, %c0_4, %c0_5], %2 {strides = array<i32>} : memref<18x2x288xbf16, #tpu.memory_space<vmem>>, vector<18x2x288xbf16>,
    %cst_6 = arith.constant 0.000000e+00 : bf16
    %4 = vector.broadcast %cst_6 : bf16 to vector<10x2x320xbf16>
    %c0_7 = arith.constant 0 : index
    %c0_8 = arith.constant 0 : index
    %c0_9 = arith.constant 0 : index
    %5 = vector.load %arg21[%c0_7, %c0_8, %c0_9] : memref<10x2x320xbf16, #tpu.memory_space<vmem>>, vector<10x2x320xbf16>
    tpu.vector_store %arg21[%c0_7, %c0_8, %c0_9], %4 {strides = array<i32>} : memref<10x2x320xbf16, #tpu.memory_space<vmem>>, vector<10x2x320xbf16>,
    %c0_i32 = arith.constant 0 : i32
    %c32_i32 = arith.constant 32 : i32
    %6 = arith.addi %c0_i32, %c32_i32 : i32
    %c1_i32 = arith.constant 1 : i32
    scf.for %arg26 = %c0_i32 to %6 step %c1_i32  : i32 {
      %c2_i32 = arith.constant 2 : i32
      %126 = arith.muli %c2_i32, %arg26 : i32
      %127 = arith.index_cast %126 : i32 to index
      %c0_126 = arith.constant 0 : index
      %c0_127 = arith.constant 0 : index
      %128 = vector.load %arg0[%127, %c0_126, %c0_127] : memref<66x2x198xbf16, #tpu.memory_space<vmem>>, vector<1x2x198xbf16>
      %129 = vector.shape_cast %128 : vector<1x2x198xbf16> to vector<2x198xbf16>
      %c0_128 = arith.constant 0 : index
      %c0_129 = arith.constant 0 : index
      %c0_130 = arith.constant 0 : index
      %130 = vector.load %arg1[%c0_128, %c0_129, %c0_130] : memref<4x198x272xbf16, #tpu.memory_space<vmem>>, vector<1x198x272xbf16>
      %131 = vector.shape_cast %130 : vector<1x198x272xbf16> to vector<198x272xbf16>
      %cst_131 = arith.constant dense<0.000000e+00> : vector<2x272xf32>
      %132 = tpu.matmul %129, %131, %cst_131 {dimension_numbers = #tpu.dot_dimension_numbers<[1], [0], [0], [1], [0, 0, 1, 1], [], []>} : vector<2x198xbf16>, vector<198x272xbf16>, vector<2x272xf32> -> vector<2x272xf32>
      %c1_i32_132 = arith.constant 1 : i32
      %133 = arith.addi %126, %c1_i32_132 : i32
      %134 = arith.index_cast %133 : i32 to index
      %c0_133 = arith.constant 0 : index
      %c0_134 = arith.constant 0 : index
      %135 = vector.load %arg0[%134, %c0_133, %c0_134] : memref<66x2x198xbf16, #tpu.memory_space<vmem>>, vector<1x2x198xbf16>
      %136 = vector.shape_cast %135 : vector<1x2x198xbf16> to vector<2x198xbf16>
      %c1_135 = arith.constant 1 : index
      %c0_136 = arith.constant 0 : index
      %c0_137 = arith.constant 0 : index
      %137 = vector.load %arg1[%c1_135, %c0_136, %c0_137] : memref<4x198x272xbf16, #tpu.memory_space<vmem>>, vector<1x198x272xbf16>
      %138 = vector.shape_cast %137 : vector<1x198x272xbf16> to vector<198x272xbf16>
      %cst_138 = arith.constant dense<0.000000e+00> : vector<2x272xf32>
      %139 = tpu.matmul %136, %138, %cst_138 {dimension_numbers = #tpu.dot_dimension_numbers<[1], [0], [0], [1], [0, 0, 1, 1], [], []>} : vector<2x198xbf16>, vector<198x272xbf16>, vector<2x272xf32> -> vector<2x272xf32>
      %140 = arith.addf %132, %139 : vector<2x272xf32>
      %c2_i32_139 = arith.constant 2 : i32
      %141 = arith.addi %126, %c2_i32_139 : i32
      %142 = arith.index_cast %141 : i32 to index
      %c0_140 = arith.constant 0 : index
      %c0_141 = arith.constant 0 : index
      %143 = vector.load %arg0[%142, %c0_140, %c0_141] : memref<66x2x198xbf16, #tpu.memory_space<vmem>>, vector<1x2x198xbf16>
      %144 = vector.shape_cast %143 : vector<1x2x198xbf16> to vector<2x198xbf16>
      %c2_142 = arith.constant 2 : index
      %c0_143 = arith.constant 0 : index
      %c0_144 = arith.constant 0 : index
      %145 = vector.load %arg1[%c2_142, %c0_143, %c0_144] : memref<4x198x272xbf16, #tpu.memory_space<vmem>>, vector<1x198x272xbf16>
      %146 = vector.shape_cast %145 : vector<1x198x272xbf16> to vector<198x272xbf16>
      %cst_145 = arith.constant dense<0.000000e+00> : vector<2x272xf32>
      %147 = tpu.matmul %144, %146, %cst_145 {dimension_numbers = #tpu.dot_dimension_numbers<[1], [0], [0], [1], [0, 0, 1, 1], [], []>} : vector<2x198xbf16>, vector<198x272xbf16>, vector<2x272xf32> -> vector<2x272xf32>
      %148 = arith.addf %140, %147 : vector<2x272xf32>
      %c3_i32 = arith.constant 3 : i32
      %149 = arith.addi %126, %c3_i32 : i32
      %150 = arith.index_cast %149 : i32 to index
      %c0_146 = arith.constant 0 : index
      %c0_147 = arith.constant 0 : index
      %151 = vector.load %arg0[%150, %c0_146, %c0_147] : memref<66x2x198xbf16, #tpu.memory_space<vmem>>, vector<1x2x198xbf16>
      %152 = vector.shape_cast %151 : vector<1x2x198xbf16> to vector<2x198xbf16>
      %c3_148 = arith.constant 3 : index
      %c0_149 = arith.constant 0 : index
      %c0_150 = arith.constant 0 : index
      %153 = vector.load %arg1[%c3_148, %c0_149, %c0_150] : memref<4x198x272xbf16, #tpu.memory_space<vmem>>, vector<1x198x272xbf16>
      %154 = vector.shape_cast %153 : vector<1x198x272xbf16> to vector<198x272xbf16>
      %cst_151 = arith.constant dense<0.000000e+00> : vector<2x272xf32>
      %155 = tpu.matmul %152, %154, %cst_151 {dimension_numbers = #tpu.dot_dimension_numbers<[1], [0], [0], [1], [0, 0, 1, 1], [], []>} : vector<2x198xbf16>, vector<198x272xbf16>, vector<2x272xf32> -> vector<2x272xf32>
      %156 = arith.addf %148, %155 : vector<2x272xf32>
      %cst_152 = arith.constant 0.000000e+00 : f32
      %157 = vector.broadcast %cst_152 : f32 to vector<2x272xf32>
      %158 = arith.cmpf oge, %156, %157 : vector<2x272xf32>
      %cst_153 = arith.constant 2.000000e-01 : f32
      %159 = vector.broadcast %cst_153 : f32 to vector<2x272xf32>
      %160 = arith.mulf %159, %156 : vector<2x272xf32>
      %161 = arith.select %158, %156, %160 : vector<2x272xi1>, vector<2x272xf32>
      %162 = arith.truncf %161 : vector<2x272xf32> to vector<2x272xbf16>
      %c1_i32_154 = arith.constant 1 : i32
      %163 = arith.addi %arg26, %c1_i32_154 : i32
      %164 = arith.index_cast %163 : i32 to index
      %c0_155 = arith.constant 0 : index
      %c0_156 = arith.constant 0 : index
      %165 = vector.load %arg19[%164, %c0_155, %c0_156] : memref<34x2x272xbf16, #tpu.memory_space<vmem>>, vector<1x2x272xbf16>
      %166 = vector.shape_cast %165 : vector<1x2x272xbf16> to vector<2x272xbf16>
      %167 = vector.shape_cast %162 : vector<2x272xbf16> to vector<1x2x272xbf16>
      tpu.vector_store %arg19[%164, %c0_155, %c0_156], %167 {strides = array<i32>} : memref<34x2x272xbf16, #tpu.memory_space<vmem>>, vector<1x2x272xbf16>,
    }
    %c32_i32_10 = arith.constant 32 : i32
    %cst_11 = arith.constant 0.000000e+00 : f32
    %7 = vector.broadcast %cst_11 : f32 to vector<2x288xf32>
    %c0_i32_12 = arith.constant 0 : i32
    %c16_i32 = arith.constant 16 : i32
    %8 = arith.addi %c0_i32_12, %c16_i32 : i32
    %c1_i32_13 = arith.constant 1 : i32
    %9:2 = scf.for %arg26 = %c0_i32_12 to %8 step %c1_i32_13 iter_args(%arg27 = %7, %arg28 = %7) -> (vector<2x288xf32>, vector<2x288xf32>)  : i32 {
      %c2_i32 = arith.constant 2 : i32
      %126 = arith.muli %c2_i32, %arg26 : i32
      %127 = arith.index_cast %126 : i32 to index
      %c0_126 = arith.constant 0 : index
      %c0_127 = arith.constant 0 : index
      %128 = vector.load %arg19[%127, %c0_126, %c0_127] : memref<34x2x272xbf16, #tpu.memory_space<vmem>>, vector<1x2x272xbf16>
      %129 = vector.shape_cast %128 : vector<1x2x272xbf16> to vector<2x272xbf16>
      %c0_128 = arith.constant 0 : index
      %c0_129 = arith.constant 0 : index
      %c0_130 = arith.constant 0 : index
      %130 = vector.load %arg2[%c0_128, %c0_129, %c0_130] : memref<4x272x288xbf16, #tpu.memory_space<vmem>>, vector<1x272x288xbf16>
      %131 = vector.shape_cast %130 : vector<1x272x288xbf16> to vector<272x288xbf16>
      %cst_131 = arith.constant dense<0.000000e+00> : vector<2x288xf32>
      %132 = tpu.matmul %129, %131, %cst_131 {dimension_numbers = #tpu.dot_dimension_numbers<[1], [0], [0], [1], [0, 0, 1, 1], [], []>} : vector<2x272xbf16>, vector<272x288xbf16>, vector<2x288xf32> -> vector<2x288xf32>
      %c1_i32_132 = arith.constant 1 : i32
      %133 = arith.addi %126, %c1_i32_132 : i32
      %134 = arith.index_cast %133 : i32 to index
      %c0_133 = arith.constant 0 : index
      %c0_134 = arith.constant 0 : index
      %135 = vector.load %arg19[%134, %c0_133, %c0_134] : memref<34x2x272xbf16, #tpu.memory_space<vmem>>, vector<1x2x272xbf16>
      %136 = vector.shape_cast %135 : vector<1x2x272xbf16> to vector<2x272xbf16>
      %c1_135 = arith.constant 1 : index
      %c0_136 = arith.constant 0 : index
      %c0_137 = arith.constant 0 : index
      %137 = vector.load %arg2[%c1_135, %c0_136, %c0_137] : memref<4x272x288xbf16, #tpu.memory_space<vmem>>, vector<1x272x288xbf16>
      %138 = vector.shape_cast %137 : vector<1x272x288xbf16> to vector<272x288xbf16>
      %cst_138 = arith.constant dense<0.000000e+00> : vector<2x288xf32>
      %139 = tpu.matmul %136, %138, %cst_138 {dimension_numbers = #tpu.dot_dimension_numbers<[1], [0], [0], [1], [0, 0, 1, 1], [], []>} : vector<2x272xbf16>, vector<272x288xbf16>, vector<2x288xf32> -> vector<2x288xf32>
      %140 = arith.addf %132, %139 : vector<2x288xf32>
      %c2_i32_139 = arith.constant 2 : i32
      %141 = arith.addi %126, %c2_i32_139 : i32
      %142 = arith.index_cast %141 : i32 to index
      %c0_140 = arith.constant 0 : index
      %c0_141 = arith.constant 0 : index
      %143 = vector.load %arg19[%142, %c0_140, %c0_141] : memref<34x2x272xbf16, #tpu.memory_space<vmem>>, vector<1x2x272xbf16>
      %144 = vector.shape_cast %143 : vector<1x2x272xbf16> to vector<2x272xbf16>
      %c2_142 = arith.constant 2 : index
      %c0_143 = arith.constant 0 : index
      %c0_144 = arith.constant 0 : index
      %145 = vector.load %arg2[%c2_142, %c0_143, %c0_144] : memref<4x272x288xbf16, #tpu.memory_space<vmem>>, vector<1x272x288xbf16>
      %146 = vector.shape_cast %145 : vector<1x272x288xbf16> to vector<272x288xbf16>
      %cst_145 = arith.constant dense<0.000000e+00> : vector<2x288xf32>
      %147 = tpu.matmul %144, %146, %cst_145 {dimension_numbers = #tpu.dot_dimension_numbers<[1], [0], [0], [1], [0, 0, 1, 1], [], []>} : vector<2x272xbf16>, vector<272x288xbf16>, vector<2x288xf32> -> vector<2x288xf32>
      %148 = arith.addf %140, %147 : vector<2x288xf32>
      %c3_i32 = arith.constant 3 : i32
      %149 = arith.addi %126, %c3_i32 : i32
      %150 = arith.index_cast %149 : i32 to index
      %c0_146 = arith.constant 0 : index
      %c0_147 = arith.constant 0 : index
      %151 = vector.load %arg19[%150, %c0_146, %c0_147] : memref<34x2x272xbf16, #tpu.memory_space<vmem>>, vector<1x2x272xbf16>
      %152 = vector.shape_cast %151 : vector<1x2x272xbf16> to vector<2x272xbf16>
      %c3_148 = arith.constant 3 : index
      %c0_149 = arith.constant 0 : index
      %c0_150 = arith.constant 0 : index
      %153 = vector.load %arg2[%c3_148, %c0_149, %c0_150] : memref<4x272x288xbf16, #tpu.memory_space<vmem>>, vector<1x272x288xbf16>
      %154 = vector.shape_cast %153 : vector<1x272x288xbf16> to vector<272x288xbf16>
      %cst_151 = arith.constant dense<0.000000e+00> : vector<2x288xf32>
      %155 = tpu.matmul %152, %154, %cst_151 {dimension_numbers = #tpu.dot_dimension_numbers<[1], [0], [0], [1], [0, 0, 1, 1], [], []>} : vector<2x272xbf16>, vector<272x288xbf16>, vector<2x288xf32> -> vector<2x288xf32>
      %156 = arith.addf %148, %155 : vector<2x288xf32>
      %157 = arith.index_cast %arg26 : i32 to index
      %c0_152 = arith.constant 0 : index
      %c0_153 = arith.constant 0 : index
      %158 = vector.load %arg23[%157, %c0_152, %c0_153] : memref<16x2x288xf32, #tpu.memory_space<vmem>>, vector<1x2x288xf32>
      %159 = vector.shape_cast %158 : vector<1x2x288xf32> to vector<2x288xf32>
      %160 = vector.shape_cast %156 : vector<2x288xf32> to vector<1x2x288xf32>
      tpu.vector_store %arg23[%157, %c0_152, %c0_153], %160 {strides = array<i32>} : memref<16x2x288xf32, #tpu.memory_space<vmem>>, vector<1x2x288xf32>,
      %161 = arith.addf %arg27, %156 : vector<2x288xf32>
      %162 = arith.mulf %156, %156 : vector<2x288xf32>
      %163 = arith.addf %arg28, %162 : vector<2x288xf32>
      scf.yield %161, %163 : vector<2x288xf32>, vector<2x288xf32>
    }
    %c16_i32_14 = arith.constant 16 : i32
    %cst_15 = arith.constant dense<0.000000e+00> : vector<288xf32>
    %10 = vector.multi_reduction <add>, %9#0, %cst_15 [0] : vector<2x288xf32> to vector<288xf32>
    %11 = vector.shape_cast %10 : vector<288xf32> to vector<1x288xf32>
    %c0_16 = arith.constant 0 : index
    %c0_17 = arith.constant 0 : index
    %12 = vector.load %arg6[%c0_16, %c0_17] : memref<288x16xf32, #tpu.memory_space<vmem>>, vector<288x16xf32>
    %cst_18 = arith.constant dense<0.000000e+00> : vector<1x16xf32>
    %13 = tpu.matmul %11, %12, %cst_18 {dimension_numbers = #tpu.dot_dimension_numbers<[1], [0], [0], [1], [0, 0, 1, 1], [], []>} : vector<1x288xf32>, vector<288x16xf32>, vector<1x16xf32> -> vector<1x16xf32>
    %cst_19 = arith.constant dense<0.000000e+00> : vector<288xf32>
    %14 = vector.multi_reduction <add>, %9#1, %cst_19 [0] : vector<2x288xf32> to vector<288xf32>
    %15 = vector.shape_cast %14 : vector<288xf32> to vector<1x288xf32>
    %c0_20 = arith.constant 0 : index
    %c0_21 = arith.constant 0 : index
    %16 = vector.load %arg6[%c0_20, %c0_21] : memref<288x16xf32, #tpu.memory_space<vmem>>, vector<288x16xf32>
    %cst_22 = arith.constant dense<0.000000e+00> : vector<1x16xf32>
    %17 = tpu.matmul %15, %16, %cst_22 {dimension_numbers = #tpu.dot_dimension_numbers<[1], [0], [0], [1], [0, 0, 1, 1], [], []>} : vector<1x288xf32>, vector<288x16xf32>, vector<1x16xf32> -> vector<1x16xf32>
    %cst_23 = arith.constant 5.120000e+02 : f32
    %18 = vector.broadcast %cst_23 : f32 to vector<1x16xf32>
    %19 = arith.divf %13, %18 : vector<1x16xf32>
    %cst_24 = arith.constant 5.120000e+02 : f32
    %20 = vector.broadcast %cst_24 : f32 to vector<1x16xf32>
    %21 = arith.divf %17, %20 : vector<1x16xf32>
    %22 = arith.mulf %19, %19 : vector<1x16xf32>
    %23 = arith.subf %21, %22 : vector<1x16xf32>
    %c0_25 = arith.constant 0 : index
    %c0_26 = arith.constant 0 : index
    %24 = vector.load %arg12[%c0_25, %c0_26] : memref<1x16xf32, #tpu.memory_space<vmem>>, vector<1x16xf32>
    %cst_27 = arith.constant 9.99999974E-6 : f32
    %25 = vector.broadcast %cst_27 : f32 to vector<1x16xf32>
    %26 = arith.addf %23, %25 : vector<1x16xf32>
    %27 = math.rsqrt %26 : vector<1x16xf32>
    %28 = arith.mulf %24, %27 : vector<1x16xf32>
    %c0_28 = arith.constant 0 : index
    %c0_29 = arith.constant 0 : index
    %29 = vector.load %arg13[%c0_28, %c0_29] : memref<1x16xf32, #tpu.memory_space<vmem>>, vector<1x16xf32>
    %30 = arith.mulf %19, %28 : vector<1x16xf32>
    %31 = arith.subf %29, %30 : vector<1x16xf32>
    %c0_30 = arith.constant 0 : index
    %c0_31 = arith.constant 0 : index
    %32 = vector.load %arg7[%c0_30, %c0_31] : memref<16x288xf32, #tpu.memory_space<vmem>>, vector<16x288xf32>
    %cst_32 = arith.constant dense<0.000000e+00> : vector<1x288xf32>
    %33 = tpu.matmul %28, %32, %cst_32 {dimension_numbers = #tpu.dot_dimension_numbers<[1], [0], [0], [1], [0, 0, 1, 1], [], []>} : vector<1x16xf32>, vector<16x288xf32>, vector<1x288xf32> -> vector<1x288xf32>
    %c0_33 = arith.constant 0 : index
    %c0_34 = arith.constant 0 : index
    %34 = vector.load %arg7[%c0_33, %c0_34] : memref<16x288xf32, #tpu.memory_space<vmem>>, vector<16x288xf32>
    %cst_35 = arith.constant dense<0.000000e+00> : vector<1x288xf32>
    %35 = tpu.matmul %31, %34, %cst_35 {dimension_numbers = #tpu.dot_dimension_numbers<[1], [0], [0], [1], [0, 0, 1, 1], [], []>} : vector<1x16xf32>, vector<16x288xf32>, vector<1x288xf32> -> vector<1x288xf32>
    %c0_i32_36 = arith.constant 0 : i32
    %c16_i32_37 = arith.constant 16 : i32
    %36 = arith.addi %c0_i32_36, %c16_i32_37 : i32
    %c1_i32_38 = arith.constant 1 : i32
    scf.for %arg26 = %c0_i32_36 to %36 step %c1_i32_38  : i32 {
      %126 = arith.index_cast %arg26 : i32 to index
      %c0_126 = arith.constant 0 : index
      %c0_127 = arith.constant 0 : index
      %127 = vector.load %arg23[%126, %c0_126, %c0_127] : memref<16x2x288xf32, #tpu.memory_space<vmem>>, vector<1x2x288xf32>
      %128 = vector.shape_cast %127 : vector<1x2x288xf32> to vector<2x288xf32>
      %129 = vector.broadcast %33 : vector<1x288xf32> to vector<2x288xf32>
      %130 = arith.mulf %128, %129 : vector<2x288xf32>
      %131 = vector.broadcast %35 : vector<1x288xf32> to vector<2x288xf32>
      %132 = arith.addf %130, %131 : vector<2x288xf32>
      %cst_128 = arith.constant 0.000000e+00 : f32
      %133 = vector.broadcast %cst_128 : f32 to vector<2x288xf32>
      %134 = arith.cmpf oge, %132, %133 : vector<2x288xf32>
      %cst_129 = arith.constant 2.000000e-01 : f32
      %135 = vector.broadcast %cst_129 : f32 to vector<2x288xf32>
      %136 = arith.mulf %135, %132 : vector<2x288xf32>
      %137 = arith.select %134, %132, %136 : vector<2x288xi1>, vector<2x288xf32>
      %138 = arith.truncf %137 : vector<2x288xf32> to vector<2x288xbf16>
      %c1_i32_130 = arith.constant 1 : i32
      %139 = arith.addi %arg26, %c1_i32_130 : i32
      %140 = arith.index_cast %139 : i32 to index
      %c0_131 = arith.constant 0 : index
      %c0_132 = arith.constant 0 : index
      %141 = vector.load %arg20[%140, %c0_131, %c0_132] : memref<18x2x288xbf16, #tpu.memory_space<vmem>>, vector<1x2x288xbf16>
      %142 = vector.shape_cast %141 : vector<1x2x288xbf16> to vector<2x288xbf16>
      %143 = vector.shape_cast %138 : vector<2x288xbf16> to vector<1x2x288xbf16>
      tpu.vector_store %arg20[%140, %c0_131, %c0_132], %143 {strides = array<i32>} : memref<18x2x288xbf16, #tpu.memory_space<vmem>>, vector<1x2x288xbf16>,
    }
    %c16_i32_39 = arith.constant 16 : i32
    %cst_40 = arith.constant 0.000000e+00 : f32
    %37 = vector.broadcast %cst_40 : f32 to vector<2x320xf32>
    %c0_i32_41 = arith.constant 0 : i32
    %c8_i32 = arith.constant 8 : i32
    %38 = arith.addi %c0_i32_41, %c8_i32 : i32
    %c1_i32_42 = arith.constant 1 : i32
    %39:2 = scf.for %arg26 = %c0_i32_41 to %38 step %c1_i32_42 iter_args(%arg27 = %37, %arg28 = %37) -> (vector<2x320xf32>, vector<2x320xf32>)  : i32 {
      %c2_i32 = arith.constant 2 : i32
      %126 = arith.muli %c2_i32, %arg26 : i32
      %127 = arith.index_cast %126 : i32 to index
      %c0_126 = arith.constant 0 : index
      %c0_127 = arith.constant 0 : index
      %128 = vector.load %arg20[%127, %c0_126, %c0_127] : memref<18x2x288xbf16, #tpu.memory_space<vmem>>, vector<1x2x288xbf16>
      %129 = vector.shape_cast %128 : vector<1x2x288xbf16> to vector<2x288xbf16>
      %c0_128 = arith.constant 0 : index
      %c0_129 = arith.constant 0 : index
      %c0_130 = arith.constant 0 : index
      %130 = vector.load %arg3[%c0_128, %c0_129, %c0_130] : memref<4x288x320xbf16, #tpu.memory_space<vmem>>, vector<1x288x320xbf16>
      %131 = vector.shape_cast %130 : vector<1x288x320xbf16> to vector<288x320xbf16>
      %cst_131 = arith.constant dense<0.000000e+00> : vector<2x320xf32>
      %132 = tpu.matmul %129, %131, %cst_131 {dimension_numbers = #tpu.dot_dimension_numbers<[1], [0], [0], [1], [0, 0, 1, 1], [], []>} : vector<2x288xbf16>, vector<288x320xbf16>, vector<2x320xf32> -> vector<2x320xf32>
      %c1_i32_132 = arith.constant 1 : i32
      %133 = arith.addi %126, %c1_i32_132 : i32
      %134 = arith.index_cast %133 : i32 to index
      %c0_133 = arith.constant 0 : index
      %c0_134 = arith.constant 0 : index
      %135 = vector.load %arg20[%134, %c0_133, %c0_134] : memref<18x2x288xbf16, #tpu.memory_space<vmem>>, vector<1x2x288xbf16>
      %136 = vector.shape_cast %135 : vector<1x2x288xbf16> to vector<2x288xbf16>
      %c1_135 = arith.constant 1 : index
      %c0_136 = arith.constant 0 : index
      %c0_137 = arith.constant 0 : index
      %137 = vector.load %arg3[%c1_135, %c0_136, %c0_137] : memref<4x288x320xbf16, #tpu.memory_space<vmem>>, vector<1x288x320xbf16>
      %138 = vector.shape_cast %137 : vector<1x288x320xbf16> to vector<288x320xbf16>
      %cst_138 = arith.constant dense<0.000000e+00> : vector<2x320xf32>
      %139 = tpu.matmul %136, %138, %cst_138 {dimension_numbers = #tpu.dot_dimension_numbers<[1], [0], [0], [1], [0, 0, 1, 1], [], []>} : vector<2x288xbf16>, vector<288x320xbf16>, vector<2x320xf32> -> vector<2x320xf32>
      %140 = arith.addf %132, %139 : vector<2x320xf32>
      %c2_i32_139 = arith.constant 2 : i32
      %141 = arith.addi %126, %c2_i32_139 : i32
      %142 = arith.index_cast %141 : i32 to index
      %c0_140 = arith.constant 0 : index
      %c0_141 = arith.constant 0 : index
      %143 = vector.load %arg20[%142, %c0_140, %c0_141] : memref<18x2x288xbf16, #tpu.memory_space<vmem>>, vector<1x2x288xbf16>
      %144 = vector.shape_cast %143 : vector<1x2x288xbf16> to vector<2x288xbf16>
      %c2_142 = arith.constant 2 : index
      %c0_143 = arith.constant 0 : index
      %c0_144 = arith.constant 0 : index
      %145 = vector.load %arg3[%c2_142, %c0_143, %c0_144] : memref<4x288x320xbf16, #tpu.memory_space<vmem>>, vector<1x288x320xbf16>
      %146 = vector.shape_cast %145 : vector<1x288x320xbf16> to vector<288x320xbf16>
      %cst_145 = arith.constant dense<0.000000e+00> : vector<2x320xf32>
      %147 = tpu.matmul %144, %146, %cst_145 {dimension_numbers = #tpu.dot_dimension_numbers<[1], [0], [0], [1], [0, 0, 1, 1], [], []>} : vector<2x288xbf16>, vector<288x320xbf16>, vector<2x320xf32> -> vector<2x320xf32>
      %148 = arith.addf %140, %147 : vector<2x320xf32>
      %c3_i32 = arith.constant 3 : i32
      %149 = arith.addi %126, %c3_i32 : i32
      %150 = arith.index_cast %149 : i32 to index
      %c0_146 = arith.constant 0 : index
      %c0_147 = arith.constant 0 : index
      %151 = vector.load %arg20[%150, %c0_146, %c0_147] : memref<18x2x288xbf16, #tpu.memory_space<vmem>>, vector<1x2x288xbf16>
      %152 = vector.shape_cast %151 : vector<1x2x288xbf16> to vector<2x288xbf16>
      %c3_148 = arith.constant 3 : index
      %c0_149 = arith.constant 0 : index
      %c0_150 = arith.constant 0 : index
      %153 = vector.load %arg3[%c3_148, %c0_149, %c0_150] : memref<4x288x320xbf16, #tpu.memory_space<vmem>>, vector<1x288x320xbf16>
      %154 = vector.shape_cast %153 : vector<1x288x320xbf16> to vector<288x320xbf16>
      %cst_151 = arith.constant dense<0.000000e+00> : vector<2x320xf32>
      %155 = tpu.matmul %152, %154, %cst_151 {dimension_numbers = #tpu.dot_dimension_numbers<[1], [0], [0], [1], [0, 0, 1, 1], [], []>} : vector<2x288xbf16>, vector<288x320xbf16>, vector<2x320xf32> -> vector<2x320xf32>
      %156 = arith.addf %148, %155 : vector<2x320xf32>
      %157 = arith.index_cast %arg26 : i32 to index
      %c0_152 = arith.constant 0 : index
      %c0_153 = arith.constant 0 : index
      %158 = vector.load %arg24[%157, %c0_152, %c0_153] : memref<8x2x320xf32, #tpu.memory_space<vmem>>, vector<1x2x320xf32>
      %159 = vector.shape_cast %158 : vector<1x2x320xf32> to vector<2x320xf32>
      %160 = vector.shape_cast %156 : vector<2x320xf32> to vector<1x2x320xf32>
      tpu.vector_store %arg24[%157, %c0_152, %c0_153], %160 {strides = array<i32>} : memref<8x2x320xf32, #tpu.memory_space<vmem>>, vector<1x2x320xf32>,
      %161 = arith.addf %arg27, %156 : vector<2x320xf32>
      %162 = arith.mulf %156, %156 : vector<2x320xf32>
      %163 = arith.addf %arg28, %162 : vector<2x320xf32>
      scf.yield %161, %163 : vector<2x320xf32>, vector<2x320xf32>
    }
    %c8_i32_43 = arith.constant 8 : i32
    %cst_44 = arith.constant dense<0.000000e+00> : vector<320xf32>
    %40 = vector.multi_reduction <add>, %39#0, %cst_44 [0] : vector<2x320xf32> to vector<320xf32>
    %41 = vector.shape_cast %40 : vector<320xf32> to vector<1x320xf32>
    %c0_45 = arith.constant 0 : index
    %c0_46 = arith.constant 0 : index
    %42 = vector.load %arg8[%c0_45, %c0_46] : memref<320x32xf32, #tpu.memory_space<vmem>>, vector<320x32xf32>
    %cst_47 = arith.constant dense<0.000000e+00> : vector<1x32xf32>
    %43 = tpu.matmul %41, %42, %cst_47 {dimension_numbers = #tpu.dot_dimension_numbers<[1], [0], [0], [1], [0, 0, 1, 1], [], []>} : vector<1x320xf32>, vector<320x32xf32>, vector<1x32xf32> -> vector<1x32xf32>
    %cst_48 = arith.constant dense<0.000000e+00> : vector<320xf32>
    %44 = vector.multi_reduction <add>, %39#1, %cst_48 [0] : vector<2x320xf32> to vector<320xf32>
    %45 = vector.shape_cast %44 : vector<320xf32> to vector<1x320xf32>
    %c0_49 = arith.constant 0 : index
    %c0_50 = arith.constant 0 : index
    %46 = vector.load %arg8[%c0_49, %c0_50] : memref<320x32xf32, #tpu.memory_space<vmem>>, vector<320x32xf32>
    %cst_51 = arith.constant dense<0.000000e+00> : vector<1x32xf32>
    %47 = tpu.matmul %45, %46, %cst_51 {dimension_numbers = #tpu.dot_dimension_numbers<[1], [0], [0], [1], [0, 0, 1, 1], [], []>} : vector<1x320xf32>, vector<320x32xf32>, vector<1x32xf32> -> vector<1x32xf32>
    %cst_52 = arith.constant 1.280000e+02 : f32
    %48 = vector.broadcast %cst_52 : f32 to vector<1x32xf32>
    %49 = arith.divf %43, %48 : vector<1x32xf32>
    %cst_53 = arith.constant 1.280000e+02 : f32
    %50 = vector.broadcast %cst_53 : f32 to vector<1x32xf32>
    %51 = arith.divf %47, %50 : vector<1x32xf32>
    %52 = arith.mulf %49, %49 : vector<1x32xf32>
    %53 = arith.subf %51, %52 : vector<1x32xf32>
    %c0_54 = arith.constant 0 : index
    %c0_55 = arith.constant 0 : index
    %54 = vector.load %arg14[%c0_54, %c0_55] : memref<1x32xf32, #tpu.memory_space<vmem>>, vector<1x32xf32>
    %cst_56 = arith.constant 9.99999974E-6 : f32
    %55 = vector.broadcast %cst_56 : f32 to vector<1x32xf32>
    %56 = arith.addf %53, %55 : vector<1x32xf32>
    %57 = math.rsqrt %56 : vector<1x32xf32>
    %58 = arith.mulf %54, %57 : vector<1x32xf32>
    %c0_57 = arith.constant 0 : index
    %c0_58 = arith.constant 0 : index
    %59 = vector.load %arg15[%c0_57, %c0_58] : memref<1x32xf32, #tpu.memory_space<vmem>>, vector<1x32xf32>
    %60 = arith.mulf %49, %58 : vector<1x32xf32>
    %61 = arith.subf %59, %60 : vector<1x32xf32>
    %c0_59 = arith.constant 0 : index
    %c0_60 = arith.constant 0 : index
    %62 = vector.load %arg9[%c0_59, %c0_60] : memref<32x320xf32, #tpu.memory_space<vmem>>, vector<32x320xf32>
    %cst_61 = arith.constant dense<0.000000e+00> : vector<1x320xf32>
    %63 = tpu.matmul %58, %62, %cst_61 {dimension_numbers = #tpu.dot_dimension_numbers<[1], [0], [0], [1], [0, 0, 1, 1], [], []>} : vector<1x32xf32>, vector<32x320xf32>, vector<1x320xf32> -> vector<1x320xf32>
    %c0_62 = arith.constant 0 : index
    %c0_63 = arith.constant 0 : index
    %64 = vector.load %arg9[%c0_62, %c0_63] : memref<32x320xf32, #tpu.memory_space<vmem>>, vector<32x320xf32>
    %cst_64 = arith.constant dense<0.000000e+00> : vector<1x320xf32>
    %65 = tpu.matmul %61, %64, %cst_64 {dimension_numbers = #tpu.dot_dimension_numbers<[1], [0], [0], [1], [0, 0, 1, 1], [], []>} : vector<1x32xf32>, vector<32x320xf32>, vector<1x320xf32> -> vector<1x320xf32>
    %c0_i32_65 = arith.constant 0 : i32
    %c8_i32_66 = arith.constant 8 : i32
    %66 = arith.addi %c0_i32_65, %c8_i32_66 : i32
    %c1_i32_67 = arith.constant 1 : i32
    scf.for %arg26 = %c0_i32_65 to %66 step %c1_i32_67  : i32 {
      %126 = arith.index_cast %arg26 : i32 to index
      %c0_126 = arith.constant 0 : index
      %c0_127 = arith.constant 0 : index
      %127 = vector.load %arg24[%126, %c0_126, %c0_127] : memref<8x2x320xf32, #tpu.memory_space<vmem>>, vector<1x2x320xf32>
      %128 = vector.shape_cast %127 : vector<1x2x320xf32> to vector<2x320xf32>
      %129 = vector.broadcast %63 : vector<1x320xf32> to vector<2x320xf32>
      %130 = arith.mulf %128, %129 : vector<2x320xf32>
      %131 = vector.broadcast %65 : vector<1x320xf32> to vector<2x320xf32>
      %132 = arith.addf %130, %131 : vector<2x320xf32>
      %cst_128 = arith.constant 0.000000e+00 : f32
      %133 = vector.broadcast %cst_128 : f32 to vector<2x320xf32>
      %134 = arith.cmpf oge, %132, %133 : vector<2x320xf32>
      %cst_129 = arith.constant 2.000000e-01 : f32
      %135 = vector.broadcast %cst_129 : f32 to vector<2x320xf32>
      %136 = arith.mulf %135, %132 : vector<2x320xf32>
      %137 = arith.select %134, %132, %136 : vector<2x320xi1>, vector<2x320xf32>
      %138 = arith.truncf %137 : vector<2x320xf32> to vector<2x320xbf16>
      %c1_i32_130 = arith.constant 1 : i32
      %139 = arith.addi %arg26, %c1_i32_130 : i32
      %140 = arith.index_cast %139 : i32 to index
      %c0_131 = arith.constant 0 : index
      %c0_132 = arith.constant 0 : index
      %141 = vector.load %arg21[%140, %c0_131, %c0_132] : memref<10x2x320xbf16, #tpu.memory_space<vmem>>, vector<1x2x320xbf16>
      %142 = vector.shape_cast %141 : vector<1x2x320xbf16> to vector<2x320xbf16>
      %143 = vector.shape_cast %138 : vector<2x320xbf16> to vector<1x2x320xbf16>
      tpu.vector_store %arg21[%140, %c0_131, %c0_132], %143 {strides = array<i32>} : memref<10x2x320xbf16, #tpu.memory_space<vmem>>, vector<1x2x320xbf16>,
    }
    %c8_i32_68 = arith.constant 8 : i32
    %cst_69 = arith.constant 0.000000e+00 : f32
    %67 = vector.broadcast %cst_69 : f32 to vector<2x256xf32>
    %c0_i32_70 = arith.constant 0 : i32
    %c4_i32 = arith.constant 4 : i32
    %68 = arith.addi %c0_i32_70, %c4_i32 : i32
    %c1_i32_71 = arith.constant 1 : i32
    %69:2 = scf.for %arg26 = %c0_i32_70 to %68 step %c1_i32_71 iter_args(%arg27 = %67, %arg28 = %67) -> (vector<2x256xf32>, vector<2x256xf32>)  : i32 {
      %c2_i32 = arith.constant 2 : i32
      %126 = arith.muli %c2_i32, %arg26 : i32
      %127 = arith.index_cast %126 : i32 to index
      %c0_126 = arith.constant 0 : index
      %c0_127 = arith.constant 0 : index
      %128 = vector.load %arg21[%127, %c0_126, %c0_127] : memref<10x2x320xbf16, #tpu.memory_space<vmem>>, vector<1x2x320xbf16>
      %129 = vector.shape_cast %128 : vector<1x2x320xbf16> to vector<2x320xbf16>
      %c0_128 = arith.constant 0 : index
      %c0_129 = arith.constant 0 : index
      %c0_130 = arith.constant 0 : index
      %130 = vector.load %arg4[%c0_128, %c0_129, %c0_130] : memref<4x320x256xbf16, #tpu.memory_space<vmem>>, vector<1x320x256xbf16>
      %131 = vector.shape_cast %130 : vector<1x320x256xbf16> to vector<320x256xbf16>
      %cst_131 = arith.constant dense<0.000000e+00> : vector<2x256xf32>
      %132 = tpu.matmul %129, %131, %cst_131 {dimension_numbers = #tpu.dot_dimension_numbers<[1], [0], [0], [1], [0, 0, 1, 1], [], []>} : vector<2x320xbf16>, vector<320x256xbf16>, vector<2x256xf32> -> vector<2x256xf32>
      %c1_i32_132 = arith.constant 1 : i32
      %133 = arith.addi %126, %c1_i32_132 : i32
      %134 = arith.index_cast %133 : i32 to index
      %c0_133 = arith.constant 0 : index
      %c0_134 = arith.constant 0 : index
      %135 = vector.load %arg21[%134, %c0_133, %c0_134] : memref<10x2x320xbf16, #tpu.memory_space<vmem>>, vector<1x2x320xbf16>
      %136 = vector.shape_cast %135 : vector<1x2x320xbf16> to vector<2x320xbf16>
      %c1_135 = arith.constant 1 : index
      %c0_136 = arith.constant 0 : index
      %c0_137 = arith.constant 0 : index
      %137 = vector.load %arg4[%c1_135, %c0_136, %c0_137] : memref<4x320x256xbf16, #tpu.memory_space<vmem>>, vector<1x320x256xbf16>
      %138 = vector.shape_cast %137 : vector<1x320x256xbf16> to vector<320x256xbf16>
      %cst_138 = arith.constant dense<0.000000e+00> : vector<2x256xf32>
      %139 = tpu.matmul %136, %138, %cst_138 {dimension_numbers = #tpu.dot_dimension_numbers<[1], [0], [0], [1], [0, 0, 1, 1], [], []>} : vector<2x320xbf16>, vector<320x256xbf16>, vector<2x256xf32> -> vector<2x256xf32>
      %140 = arith.addf %132, %139 : vector<2x256xf32>
      %c2_i32_139 = arith.constant 2 : i32
      %141 = arith.addi %126, %c2_i32_139 : i32
      %142 = arith.index_cast %141 : i32 to index
      %c0_140 = arith.constant 0 : index
      %c0_141 = arith.constant 0 : index
      %143 = vector.load %arg21[%142, %c0_140, %c0_141] : memref<10x2x320xbf16, #tpu.memory_space<vmem>>, vector<1x2x320xbf16>
      %144 = vector.shape_cast %143 : vector<1x2x320xbf16> to vector<2x320xbf16>
      %c2_142 = arith.constant 2 : index
      %c0_143 = arith.constant 0 : index
      %c0_144 = arith.constant 0 : index
      %145 = vector.load %arg4[%c2_142, %c0_143, %c0_144] : memref<4x320x256xbf16, #tpu.memory_space<vmem>>, vector<1x320x256xbf16>
      %146 = vector.shape_cast %145 : vector<1x320x256xbf16> to vector<320x256xbf16>
      %cst_145 = arith.constant dense<0.000000e+00> : vector<2x256xf32>
      %147 = tpu.matmul %144, %146, %cst_145 {dimension_numbers = #tpu.dot_dimension_numbers<[1], [0], [0], [1], [0, 0, 1, 1], [], []>} : vector<2x320xbf16>, vector<320x256xbf16>, vector<2x256xf32> -> vector<2x256xf32>
      %148 = arith.addf %140, %147 : vector<2x256xf32>
      %c3_i32 = arith.constant 3 : i32
      %149 = arith.addi %126, %c3_i32 : i32
      %150 = arith.index_cast %149 : i32 to index
      %c0_146 = arith.constant 0 : index
      %c0_147 = arith.constant 0 : index
      %151 = vector.load %arg21[%150, %c0_146, %c0_147] : memref<10x2x320xbf16, #tpu.memory_space<vmem>>, vector<1x2x320xbf16>
      %152 = vector.shape_cast %151 : vector<1x2x320xbf16> to vector<2x320xbf16>
      %c3_148 = arith.constant 3 : index
      %c0_149 = arith.constant 0 : index
      %c0_150 = arith.constant 0 : index
      %153 = vector.load %arg4[%c3_148, %c0_149, %c0_150] : memref<4x320x256xbf16, #tpu.memory_space<vmem>>, vector<1x320x256xbf16>
      %154 = vector.shape_cast %153 : vector<1x320x256xbf16> to vector<320x256xbf16>
      %cst_151 = arith.constant dense<0.000000e+00> : vector<2x256xf32>
      %155 = tpu.matmul %152, %154, %cst_151 {dimension_numbers = #tpu.dot_dimension_numbers<[1], [0], [0], [1], [0, 0, 1, 1], [], []>} : vector<2x320xbf16>, vector<320x256xbf16>, vector<2x256xf32> -> vector<2x256xf32>
      %156 = arith.addf %148, %155 : vector<2x256xf32>
      %157 = arith.index_cast %arg26 : i32 to index
      %c0_152 = arith.constant 0 : index
      %c0_153 = arith.constant 0 : index
      %158 = vector.load %arg25[%157, %c0_152, %c0_153] : memref<4x2x256xf32, #tpu.memory_space<vmem>>, vector<1x2x256xf32>
      %159 = vector.shape_cast %158 : vector<1x2x256xf32> to vector<2x256xf32>
      %160 = vector.shape_cast %156 : vector<2x256xf32> to vector<1x2x256xf32>
      tpu.vector_store %arg25[%157, %c0_152, %c0_153], %160 {strides = array<i32>} : memref<4x2x256xf32, #tpu.memory_space<vmem>>, vector<1x2x256xf32>,
      %161 = arith.addf %arg27, %156 : vector<2x256xf32>
      %162 = arith.mulf %156, %156 : vector<2x256xf32>
      %163 = arith.addf %arg28, %162 : vector<2x256xf32>
      scf.yield %161, %163 : vector<2x256xf32>, vector<2x256xf32>
    }
    %c4_i32_72 = arith.constant 4 : i32
    %cst_73 = arith.constant dense<0.000000e+00> : vector<256xf32>
    %70 = vector.multi_reduction <add>, %69#0, %cst_73 [0] : vector<2x256xf32> to vector<256xf32>
    %71 = vector.shape_cast %70 : vector<256xf32> to vector<1x256xf32>
    %c0_74 = arith.constant 0 : index
    %c0_75 = arith.constant 0 : index
    %72 = vector.load %arg10[%c0_74, %c0_75] : memref<256x64xf32, #tpu.memory_space<vmem>>, vector<256x64xf32>
    %cst_76 = arith.constant dense<0.000000e+00> : vector<1x64xf32>
    %73 = tpu.matmul %71, %72, %cst_76 {dimension_numbers = #tpu.dot_dimension_numbers<[1], [0], [0], [1], [0, 0, 1, 1], [], []>} : vector<1x256xf32>, vector<256x64xf32>, vector<1x64xf32> -> vector<1x64xf32>
    %cst_77 = arith.constant dense<0.000000e+00> : vector<256xf32>
    %74 = vector.multi_reduction <add>, %69#1, %cst_77 [0] : vector<2x256xf32> to vector<256xf32>
    %75 = vector.shape_cast %74 : vector<256xf32> to vector<1x256xf32>
    %c0_78 = arith.constant 0 : index
    %c0_79 = arith.constant 0 : index
    %76 = vector.load %arg10[%c0_78, %c0_79] : memref<256x64xf32, #tpu.memory_space<vmem>>, vector<256x64xf32>
    %cst_80 = arith.constant dense<0.000000e+00> : vector<1x64xf32>
    %77 = tpu.matmul %75, %76, %cst_80 {dimension_numbers = #tpu.dot_dimension_numbers<[1], [0], [0], [1], [0, 0, 1, 1], [], []>} : vector<1x256xf32>, vector<256x64xf32>, vector<1x64xf32> -> vector<1x64xf32>
    %cst_81 = arith.constant 3.200000e+01 : f32
    %78 = vector.broadcast %cst_81 : f32 to vector<1x64xf32>
    %79 = arith.divf %73, %78 : vector<1x64xf32>
    %cst_82 = arith.constant 3.200000e+01 : f32
    %80 = vector.broadcast %cst_82 : f32 to vector<1x64xf32>
    %81 = arith.divf %77, %80 : vector<1x64xf32>
    %82 = arith.mulf %79, %79 : vector<1x64xf32>
    %83 = arith.subf %81, %82 : vector<1x64xf32>
    %c0_83 = arith.constant 0 : index
    %c0_84 = arith.constant 0 : index
    %84 = vector.load %arg16[%c0_83, %c0_84] : memref<1x64xf32, #tpu.memory_space<vmem>>, vector<1x64xf32>
    %cst_85 = arith.constant 9.99999974E-6 : f32
    %85 = vector.broadcast %cst_85 : f32 to vector<1x64xf32>
    %86 = arith.addf %83, %85 : vector<1x64xf32>
    %87 = math.rsqrt %86 : vector<1x64xf32>
    %88 = arith.mulf %84, %87 : vector<1x64xf32>
    %c0_86 = arith.constant 0 : index
    %c0_87 = arith.constant 0 : index
    %89 = vector.load %arg17[%c0_86, %c0_87] : memref<1x64xf32, #tpu.memory_space<vmem>>, vector<1x64xf32>
    %90 = arith.mulf %79, %88 : vector<1x64xf32>
    %91 = arith.subf %89, %90 : vector<1x64xf32>
    %c0_88 = arith.constant 0 : index
    %c0_89 = arith.constant 0 : index
    %92 = vector.load %arg11[%c0_88, %c0_89] : memref<64x256xf32, #tpu.memory_space<vmem>>, vector<64x256xf32>
    %cst_90 = arith.constant dense<0.000000e+00> : vector<1x256xf32>
    %93 = tpu.matmul %88, %92, %cst_90 {dimension_numbers = #tpu.dot_dimension_numbers<[1], [0], [0], [1], [0, 0, 1, 1], [], []>} : vector<1x64xf32>, vector<64x256xf32>, vector<1x256xf32> -> vector<1x256xf32>
    %c0_91 = arith.constant 0 : index
    %c0_92 = arith.constant 0 : index
    %94 = vector.load %arg11[%c0_91, %c0_92] : memref<64x256xf32, #tpu.memory_space<vmem>>, vector<64x256xf32>
    %cst_93 = arith.constant dense<0.000000e+00> : vector<1x256xf32>
    %95 = tpu.matmul %91, %94, %cst_93 {dimension_numbers = #tpu.dot_dimension_numbers<[1], [0], [0], [1], [0, 0, 1, 1], [], []>} : vector<1x64xf32>, vector<64x256xf32>, vector<1x256xf32> -> vector<1x256xf32>
    %c0_i32_94 = arith.constant 0 : i32
    %c4_i32_95 = arith.constant 4 : i32
    %96 = arith.addi %c0_i32_94, %c4_i32_95 : i32
    %c1_i32_96 = arith.constant 1 : i32
    scf.for %arg26 = %c0_i32_94 to %96 step %c1_i32_96  : i32 {
      %126 = arith.index_cast %arg26 : i32 to index
      %c0_126 = arith.constant 0 : index
      %c0_127 = arith.constant 0 : index
      %127 = vector.load %arg25[%126, %c0_126, %c0_127] : memref<4x2x256xf32, #tpu.memory_space<vmem>>, vector<1x2x256xf32>
      %128 = vector.shape_cast %127 : vector<1x2x256xf32> to vector<2x256xf32>
      %129 = vector.broadcast %93 : vector<1x256xf32> to vector<2x256xf32>
      %130 = arith.mulf %128, %129 : vector<2x256xf32>
      %131 = vector.broadcast %95 : vector<1x256xf32> to vector<2x256xf32>
      %132 = arith.addf %130, %131 : vector<2x256xf32>
      %cst_128 = arith.constant 0.000000e+00 : f32
      %133 = vector.broadcast %cst_128 : f32 to vector<2x256xf32>
      %134 = arith.cmpf oge, %132, %133 : vector<2x256xf32>
      %cst_129 = arith.constant 2.000000e-01 : f32
      %135 = vector.broadcast %cst_129 : f32 to vector<2x256xf32>
      %136 = arith.mulf %135, %132 : vector<2x256xf32>
      %137 = arith.select %134, %132, %136 : vector<2x256xi1>, vector<2x256xf32>
      %138 = arith.truncf %137 : vector<2x256xf32> to vector<2x256xbf16>
      %c0_i32_130 = arith.constant 0 : i32
      %139 = arith.addi %arg26, %c0_i32_130 : i32
      %140 = arith.index_cast %139 : i32 to index
      %c0_131 = arith.constant 0 : index
      %c0_132 = arith.constant 0 : index
      %141 = vector.load %arg22[%140, %c0_131, %c0_132] : memref<4x2x256xbf16, #tpu.memory_space<vmem>>, vector<1x2x256xbf16>
      %142 = vector.shape_cast %141 : vector<1x2x256xbf16> to vector<2x256xbf16>
      %143 = vector.shape_cast %138 : vector<2x256xbf16> to vector<1x2x256xbf16>
      tpu.vector_store %arg22[%140, %c0_131, %c0_132], %143 {strides = array<i32>} : memref<4x2x256xbf16, #tpu.memory_space<vmem>>, vector<1x2x256xbf16>,
    }
    %c4_i32_97 = arith.constant 4 : i32
    %c0_98 = arith.constant 0 : index
    %c0_99 = arith.constant 0 : index
    %c0_100 = arith.constant 0 : index
    %97 = vector.load %arg22[%c0_98, %c0_99, %c0_100] : memref<4x2x256xbf16, #tpu.memory_space<vmem>>, vector<1x2x256xbf16>
    %98 = vector.shape_cast %97 : vector<1x2x256xbf16> to vector<2x256xbf16>
    %c0_101 = arith.constant 0 : index
    %c0_102 = arith.constant 0 : index
    %c0_103 = arith.constant 0 : index
    %99 = vector.load %arg5[%c0_101, %c0_102, %c0_103] : memref<4x256x1xbf16, #tpu.memory_space<vmem>>, vector<1x256x1xbf16>
    %100 = vector.shape_cast %99 : vector<1x256x1xbf16> to vector<256x1xbf16>
    %cst_104 = arith.constant dense<0.000000e+00> : vector<2x1xf32>
    %101 = tpu.matmul %98, %100, %cst_104 {dimension_numbers = #tpu.dot_dimension_numbers<[1], [0], [0], [1], [0, 0, 1, 1], [], []>} : vector<2x256xbf16>, vector<256x1xbf16>, vector<2x1xf32> -> vector<2x1xf32>
    %c1 = arith.constant 1 : index
    %c0_105 = arith.constant 0 : index
    %c0_106 = arith.constant 0 : index
    %102 = vector.load %arg22[%c1, %c0_105, %c0_106] : memref<4x2x256xbf16, #tpu.memory_space<vmem>>, vector<1x2x256xbf16>
    %103 = vector.shape_cast %102 : vector<1x2x256xbf16> to vector<2x256xbf16>
    %c1_107 = arith.constant 1 : index
    %c0_108 = arith.constant 0 : index
    %c0_109 = arith.constant 0 : index
    %104 = vector.load %arg5[%c1_107, %c0_108, %c0_109] : memref<4x256x1xbf16, #tpu.memory_space<vmem>>, vector<1x256x1xbf16>
    %105 = vector.shape_cast %104 : vector<1x256x1xbf16> to vector<256x1xbf16>
    %cst_110 = arith.constant dense<0.000000e+00> : vector<2x1xf32>
    %106 = tpu.matmul %103, %105, %cst_110 {dimension_numbers = #tpu.dot_dimension_numbers<[1], [0], [0], [1], [0, 0, 1, 1], [], []>} : vector<2x256xbf16>, vector<256x1xbf16>, vector<2x1xf32> -> vector<2x1xf32>
    %107 = arith.addf %101, %106 : vector<2x1xf32>
    %c2 = arith.constant 2 : index
    %c0_111 = arith.constant 0 : index
    %c0_112 = arith.constant 0 : index
    %108 = vector.load %arg22[%c2, %c0_111, %c0_112] : memref<4x2x256xbf16, #tpu.memory_space<vmem>>, vector<1x2x256xbf16>
    %109 = vector.shape_cast %108 : vector<1x2x256xbf16> to vector<2x256xbf16>
    %c2_113 = arith.constant 2 : index
    %c0_114 = arith.constant 0 : index
    %c0_115 = arith.constant 0 : index
    %110 = vector.load %arg5[%c2_113, %c0_114, %c0_115] : memref<4x256x1xbf16, #tpu.memory_space<vmem>>, vector<1x256x1xbf16>
    %111 = vector.shape_cast %110 : vector<1x256x1xbf16> to vector<256x1xbf16>
    %cst_116 = arith.constant dense<0.000000e+00> : vector<2x1xf32>
    %112 = tpu.matmul %109, %111, %cst_116 {dimension_numbers = #tpu.dot_dimension_numbers<[1], [0], [0], [1], [0, 0, 1, 1], [], []>} : vector<2x256xbf16>, vector<256x1xbf16>, vector<2x1xf32> -> vector<2x1xf32>
    %113 = arith.addf %107, %112 : vector<2x1xf32>
    %c3 = arith.constant 3 : index
    %c0_117 = arith.constant 0 : index
    %c0_118 = arith.constant 0 : index
    %114 = vector.load %arg22[%c3, %c0_117, %c0_118] : memref<4x2x256xbf16, #tpu.memory_space<vmem>>, vector<1x2x256xbf16>
    %115 = vector.shape_cast %114 : vector<1x2x256xbf16> to vector<2x256xbf16>
    %c3_119 = arith.constant 3 : index
    %c0_120 = arith.constant 0 : index
    %c0_121 = arith.constant 0 : index
    %116 = vector.load %arg5[%c3_119, %c0_120, %c0_121] : memref<4x256x1xbf16, #tpu.memory_space<vmem>>, vector<1x256x1xbf16>
    %117 = vector.shape_cast %116 : vector<1x256x1xbf16> to vector<256x1xbf16>
    %cst_122 = arith.constant dense<0.000000e+00> : vector<2x1xf32>
    %118 = tpu.matmul %115, %117, %cst_122 {dimension_numbers = #tpu.dot_dimension_numbers<[1], [0], [0], [1], [0, 0, 1, 1], [], []>} : vector<2x256xbf16>, vector<256x1xbf16>, vector<2x1xf32> -> vector<2x1xf32>
    %119 = arith.addf %113, %118 : vector<2x1xf32>
    %120 = arith.negf %119 : vector<2x1xf32>
    %121 = math.exp %120 : vector<2x1xf32>
    %cst_123 = arith.constant 1.000000e+00 : f32
    %122 = vector.broadcast %cst_123 : f32 to vector<2x1xf32>
    %123 = arith.addf %122, %121 : vector<2x1xf32>
    %124 = arith.divf %122, %123 : vector<2x1xf32>
    %c0_124 = arith.constant 0 : index
    %c0_125 = arith.constant 0 : index
    %125 = vector.load %arg18[%c0_124, %c0_125] : memref<2x1xf32, #tpu.memory_space<vmem>>, vector<2x1xf32>
    tpu.vector_store %arg18[%c0_124, %c0_125], %124 {strides = array<i32>} : memref<2x1xf32, #tpu.memory_space<vmem>>, vector<2x1xf32>,
    return
  }
}

</mosaic_0001>

<llo_original>
// kernel: discriminator_forward.1
$region0: #{discriminator_forward.1}
  #allocation0 [shape = 'u32[]', space=smem, size = 0x4, offset = 0x4, fixed_abs, tag = 'smem constant byte address 0x4 - core index']
  #allocation1 [shape = 'u32[72,128]{1,0:T(1,128)}', space=vmem, size = 0x9000, scoped, tag = 'internal scratch']
  #allocation2 [shape = 'bf16[34,2,272]{2,1,0:T(2,128)(2,1)}', space=vmem, size = 0xcc00, scoped, tag = 'scratch operand']
  #allocation3 [shape = 'bf16[18,2,288]{2,1,0:T(2,128)(2,1)}', space=vmem, size = 0x6c00, scoped, tag = 'scratch operand']
  #allocation4 [shape = 'bf16[10,2,320]{2,1,0:T(2,128)(2,1)}', space=vmem, size = 0x3c00, scoped, tag = 'scratch operand']
  #allocation5 [shape = 'bf16[4,2,256]{2,1,0:T(2,128)(2,1)}', space=vmem, size = 0x1000, scoped, tag = 'scratch operand']
  #allocation6 [shape = 'f32[16,2,288]{2,1,0:T(2,128)}', space=vmem, size = 0xc000, scoped, tag = 'scratch operand']
  #allocation7 [shape = 'f32[8,2,320]{2,1,0:T(2,128)}', space=vmem, size = 0x6000, scoped, tag = 'scratch operand']
  #allocation8 [shape = 'f32[4,2,256]{2,1,0:T(2,128)}', space=vmem, size = 0x2000, scoped, tag = 'scratch operand']
  %s0 = inlined_call_operand.vmem [shape: bf16[66,2,198], index: 0, kind: input, shape index: {}]
  %s1 = inlined_call_operand.vmem [shape: bf16[4,198,272], index: 1, kind: input, shape index: {}]
  %s2 = inlined_call_operand.vmem [shape: bf16[4,272,288], index: 2, kind: input, shape index: {}]
  %s3 = inlined_call_operand.vmem [shape: bf16[4,288,320], index: 3, kind: input, shape index: {}]
  %s4 = inlined_call_operand.vmem [shape: bf16[4,320,256], index: 4, kind: input, shape index: {}]
  %s5 = inlined_call_operand.vmem [shape: bf16[4,256,1], index: 5, kind: input, shape index: {}]
  %s6 = inlined_call_operand.vmem [shape: f32[288,16], index: 6, kind: input, shape index: {}]
  %s7 = inlined_call_operand.vmem [shape: f32[16,288], index: 7, kind: input, shape index: {}]
  %s8 = inlined_call_operand.vmem [shape: f32[320,32], index: 8, kind: input, shape index: {}]
  %s9 = inlined_call_operand.vmem [shape: f32[32,320], index: 9, kind: input, shape index: {}]
  %s10 = inlined_call_operand.vmem [shape: f32[256,64], index: 10, kind: input, shape index: {}]
  %s11 = inlined_call_operand.vmem [shape: f32[64,256], index: 11, kind: input, shape index: {}]
  %s12 = inlined_call_operand.vmem [shape: f32[1,16], index: 12, kind: input, shape index: {}]
  %s13 = inlined_call_operand.vmem [shape: f32[1,16], index: 13, kind: input, shape index: {}]
  %s14 = inlined_call_operand.vmem [shape: f32[1,32], index: 14, kind: input, shape index: {}]
  %s15 = inlined_call_operand.vmem [shape: f32[1,32], index: 15, kind: input, shape index: {}]
  %s16 = inlined_call_operand.vmem [shape: f32[1,64], index: 16, kind: input, shape index: {}]
  %s17 = inlined_call_operand.vmem [shape: f32[1,64], index: 17, kind: input, shape index: {}]
  %s18 = inlined_call_operand.vmem [shape: f32[2,1], index: 18, kind: output, shape index: {}]
  %s19 = sld [smem:[#allocation0]]
  $region131: #{discriminator_forward.1} parent=0
    _
  %s21 = ssub.s32 1, %s19
  %s22 = scalar_select 0, %s21, %s19
  // Predicated region
  $region2: #{discriminator_forward.1} parent=0 // pred_check
    _
  $region3: #{discriminator_forward.1} parent=0 // pred_check_branch
    %24 = sbr.rel (0) target = $region5
  $region4: #{discriminator_forward.1} parent=0 // pred_region
    _
  $region5: #{discriminator_forward.1} parent=0 // pred_fallthru
    _
  // Predicated region
  $region6: #{discriminator_forward.1} parent=0 // pred_check
    _
  $region7: #{discriminator_forward.1} parent=0 // pred_check_branch
    %26 = sbr.rel (0) target = $region9
  $region8: #{discriminator_forward.1} parent=0 // pred_region
    _
  $region9: #{discriminator_forward.1} parent=0 // pred_fallthru
    _
  // Predicated region
  $region10: #{discriminator_forward.1} parent=0 // pred_check
    _
  $region11: #{discriminator_forward.1} parent=0 // pred_check_branch
    %28 = sbr.rel (0) target = $region13
  $region12: #{discriminator_forward.1} parent=0 // pred_region
    _
  $region13: #{discriminator_forward.1} parent=0 // pred_fallthru
    _
  // Predicated region
  $region14: #{discriminator_forward.1} parent=0 // pred_check
    _
  $region15: #{discriminator_forward.1} parent=0 // pred_check_branch
    %30 = sbr.rel (0) target = $region17
  $region16: #{discriminator_forward.1} parent=0 // pred_region
    _
  $region17: #{discriminator_forward.1} parent=0 // pred_fallthru
    _
  // Predicated region
  $region18: #{discriminator_forward.1} parent=0 // pred_check
    _
  $region19: #{discriminator_forward.1} parent=0 // pred_check_branch
    %32 = sbr.rel (0) target = $region21
  $region20: #{discriminator_forward.1} parent=0 // pred_region
    _
  $region21: #{discriminator_forward.1} parent=0 // pred_fallthru
    _
  // Predicated region
  $region22: #{discriminator_forward.1} parent=0 // pred_check
    _
  $region23: #{discriminator_forward.1} parent=0 // pred_check_branch
    %34 = sbr.rel (0) target = $region25
  $region24: #{discriminator_forward.1} parent=0 // pred_region
    _
  $region25: #{discriminator_forward.1} parent=0 // pred_fallthru
    _
  // Predicated region
  $region26: #{discriminator_forward.1} parent=0 // pred_check
    _
  $region27: #{discriminator_forward.1} parent=0 // pred_check_branch
    %36 = sbr.rel (0) target = $region29
  $region28: #{discriminator_forward.1} parent=0 // pred_region
    _
  $region29: #{discriminator_forward.1} parent=0 // pred_fallthru
    _
  // Predicated region
  $region30: #{discriminator_forward.1} parent=0 // pred_check
    _
  $region31: #{discriminator_forward.1} parent=0 // pred_check_branch
    %38 = sbr.rel (0) target = $region33
  $region32: #{discriminator_forward.1} parent=0 // pred_region
    _
  $region33: #{discriminator_forward.1} parent=0 // pred_fallthru
    _
  // Predicated region
  $region34: #{discriminator_forward.1} parent=0 // pred_check
    _
  $region35: #{discriminator_forward.1} parent=0 // pred_check_branch
    %40 = sbr.rel (0) target = $region37
  $region36: #{discriminator_forward.1} parent=0 // pred_region
    _
  $region37: #{discriminator_forward.1} parent=0 // pred_fallthru
    _
  // Predicated region
  $region38: #{discriminator_forward.1} parent=0 // pred_check
    _
  $region39: #{discriminator_forward.1} parent=0 // pred_check_branch
    %42 = sbr.rel (0) target = $region41
  $region40: #{discriminator_forward.1} parent=0 // pred_region
    _
  $region41: #{discriminator_forward.1} parent=0 // pred_fallthru
    _
  // Predicated region
  $region42: #{discriminator_forward.1} parent=0 // pred_check
    _
  $region43: #{discriminator_forward.1} parent=0 // pred_check_branch
    %44 = sbr.rel (0) target = $region45
  $region44: #{discriminator_forward.1} parent=0 // pred_region
    _
  $region45: #{discriminator_forward.1} parent=0 // pred_fallthru
    _
  // Predicated region
  $region46: #{discriminator_forward.1} parent=0 // pred_check
    _
  $region47: #{discriminator_forward.1} parent=0 // pred_check_branch
    %46 = sbr.rel (0) target = $region49
  $region48: #{discriminator_forward.1} parent=0 // pred_region
    _
  $region49: #{discriminator_forward.1} parent=0 // pred_fallthru
    _
  // Predicated region
  $region50: #{discriminator_forward.1} parent=0 // pred_check
    _
  $region51: #{discriminator_forward.1} parent=0 // pred_check_branch
    %48 = sbr.rel (0) target = $region53
  $region52: #{discriminator_forward.1} parent=0 // pred_region
    _
  $region53: #{discriminator_forward.1} parent=0 // pred_fallthru
    _
  // Predicated region
  $region54: #{discriminator_forward.1} parent=0 // pred_check
    _
  $region55: #{discriminator_forward.1} parent=0 // pred_check_branch
    %50 = sbr.rel (0) target = $region57
  $region56: #{discriminator_forward.1} parent=0 // pred_region
    _
  $region57: #{discriminator_forward.1} parent=0 // pred_fallthru
    _
  // Predicated region
  $region58: #{discriminator_forward.1} parent=0 // pred_check
    _
  $region59: #{discriminator_forward.1} parent=0 // pred_check_branch
    %52 = sbr.rel (0) target = $region61
  $region60: #{discriminator_forward.1} parent=0 // pred_region
    _
  $region61: #{discriminator_forward.1} parent=0 // pred_fallthru
    _
  // Predicated region
  $region62: #{discriminator_forward.1} parent=0 // pred_check
    _
  $region63: #{discriminator_forward.1} parent=0 // pred_check_branch
    %54 = sbr.rel (0) target = $region65
  $region64: #{discriminator_forward.1} parent=0 // pred_region
    _
  $region65: #{discriminator_forward.1} parent=0 // pred_fallthru
    _
  // Predicated region
  $region66: #{discriminator_forward.1} parent=0 // pred_check
    _
  $region67: #{discriminator_forward.1} parent=0 // pred_check_branch
    %56 = sbr.rel (0) target = $region69
  $region68: #{discriminator_forward.1} parent=0 // pred_region
    _
  $region69: #{discriminator_forward.1} parent=0 // pred_fallthru
    _
  // Predicated region
  $region70: #{discriminator_forward.1} parent=0 // pred_check
    _
  $region71: #{discriminator_forward.1} parent=0 // pred_check_branch
    %58 = sbr.rel (0) target = $region73
  $region72: #{discriminator_forward.1} parent=0 // pred_region
    _
  $region73: #{discriminator_forward.1} parent=0 // pred_fallthru
    _
  %vm60 = vcmask 1040384
  %vm61 = vcmask 1041409
  %vm62 = vmor %vm61, %vm60
  %vm63 = vcmask 124930
  %vm64 = vmor %vm63, %vm62
  %65 = vst.msk [vmem:[#allocation2] sm:$0x7] %vm64, 0
  %66 = vst.msk [vmem:[#allocation2 + $0x3] sm:$0x7] %vm64, 0
  %67 = vst.msk [vmem:[#allocation2 + $0x6] sm:$0x7] %vm64, 0
  %68 = vst.msk [vmem:[#allocation2 + $0x9] sm:$0x7] %vm64, 0
  %69 = vst.msk [vmem:[#allocation2 + $0xc] sm:$0x7] %vm64, 0
  %70 = vst.msk [vmem:[#allocation2 + $0xf] sm:$0x7] %vm64, 0
  %71 = vst.msk [vmem:[#allocation2 + $0x12] sm:$0x7] %vm64, 0
  %72 = vst.msk [vmem:[#allocation2 + $0x15] sm:$0x7] %vm64, 0
  %73 = vst.msk [vmem:[#allocation2 + $0x18] sm:$0x7] %vm64, 0
  %74 = vst.msk [vmem:[#allocation2 + $0x1b] sm:$0x7] %vm64, 0
  %75 = vst.msk [vmem:[#allocation2 + $0x1e] sm:$0x7] %vm64, 0
  %76 = vst.msk [vmem:[#allocation2 + $0x21] sm:$0x7] %vm64, 0
  %77 = vst.msk [vmem:[#allocation2 + $0x24] sm:$0x7] %vm64, 0
  %78 = vst.msk [vmem:[#allocation2 + $0x27] sm:$0x7] %vm64, 0
  %79 = vst.msk [vmem:[#allocation2 + $0x2a] sm:$0x7] %vm64, 0
  %80 = vst.msk [vmem:[#allocation2 + $0x2d] sm:$0x7] %vm64, 0
  %81 = vst.msk [vmem:[#allocation2 + $0x30] sm:$0x7] %vm64, 0
  %82 = vst.msk [vmem:[#allocation2 + $0x33] sm:$0x7] %vm64, 0
  %83 = vst.msk [vmem:[#allocation2 + $0x36] sm:$0x7] %vm64, 0
  %84 = vst.msk [vmem:[#allocation2 + $0x39] sm:$0x7] %vm64, 0
  %85 = vst.msk [vmem:[#allocation2 + $0x3c] sm:$0x7] %vm64, 0
  %86 = vst.msk [vmem:[#allocation2 + $0x3f] sm:$0x7] %vm64, 0
  %87 = vst.msk [vmem:[#allocation2 + $0x42] sm:$0x7] %vm64, 0
  %88 = vst.msk [vmem:[#allocation2 + $0x45] sm:$0x7] %vm64, 0
  %89 = vst.msk [vmem:[#allocation2 + $0x48] sm:$0x7] %vm64, 0
  %90 = vst.msk [vmem:[#allocation2 + $0x4b] sm:$0x7] %vm64, 0
  %91 = vst.msk [vmem:[#allocation2 + $0x4e] sm:$0x7] %vm64, 0
  %92 = vst.msk [vmem:[#allocation2 + $0x51] sm:$0x7] %vm64, 0
  %93 = vst.msk [vmem:[#allocation2 + $0x54] sm:$0x7] %vm64, 0
  %94 = vst.msk [vmem:[#allocation2 + $0x57] sm:$0x7] %vm64, 0
  %95 = vst.msk [vmem:[#allocation2 + $0x5a] sm:$0x7] %vm64, 0
  %96 = vst.msk [vmem:[#allocation2 + $0x5d] sm:$0x7] %vm64, 0
  %97 = vst.msk [vmem:[#allocation2 + $0x60] sm:$0x7] %vm64, 0
  %98 = vst.msk [vmem:[#allocation2 + $0x63] sm:$0x7] %vm64, 0
  %vm99 = vcmask 256002
  %vm100 = vmor %vm99, %vm62
  %101 = vst.msk [vmem:[#allocation3] sm:$0x7] %vm100, 0
  %102 = vst.msk [vmem:[#allocation3 + $0x3] sm:$0x7] %vm100, 0
  %103 = vst.msk [vmem:[#allocation3 + $0x6] sm:$0x7] %vm100, 0
  %104 = vst.msk [vmem:[#allocation3 + $0x9] sm:$0x7] %vm100, 0
  %105 = vst.msk [vmem:[#allocation3 + $0xc] sm:$0x7] %vm100, 0
  %106 = vst.msk [vmem:[#allocation3 + $0xf] sm:$0x7] %vm100, 0
  %107 = vst.msk [vmem:[#allocation3 + $0x12] sm:$0x7] %vm100, 0
  %108 = vst.msk [vmem:[#allocation3 + $0x15] sm:$0x7] %vm100, 0
  %109 = vst.msk [vmem:[#allocation3 + $0x18] sm:$0x7] %vm100, 0
  %110 = vst.msk [vmem:[#allocation3 + $0x1b] sm:$0x7] %vm100, 0
  %111 = vst.msk [vmem:[#allocation3 + $0x1e] sm:$0x7] %vm100, 0
  %112 = vst.msk [vmem:[#allocation3 + $0x21] sm:$0x7] %vm100, 0
  %113 = vst.msk [vmem:[#allocation3 + $0x24] sm:$0x7] %vm100, 0
  %114 = vst.msk [vmem:[#allocation3 + $0x27] sm:$0x7] %vm100, 0
  %115 = vst.msk [vmem:[#allocation3 + $0x2a] sm:$0x7] %vm100, 0
  %116 = vst.msk [vmem:[#allocation3 + $0x2d] sm:$0x7] %vm100, 0
  %117 = vst.msk [vmem:[#allocation3 + $0x30] sm:$0x7] %vm100, 0
  %118 = vst.msk [vmem:[#allocation3 + $0x33] sm:$0x7] %vm100, 0
  %vm119 = vcmask 518146
  %vm120 = vmor %vm119, %vm62
  %121 = vst.msk [vmem:[#allocation4] sm:$0x7] %vm120, 0
  %122 = vst.msk [vmem:[#allocation4 + $0x3] sm:$0x7] %vm120, 0
  %123 = vst.msk [vmem:[#allocation4 + $0x6] sm:$0x7] %vm120, 0
  %124 = vst.msk [vmem:[#allocation4 + $0x9] sm:$0x7] %vm120, 0
  %125 = vst.msk [vmem:[#allocation4 + $0xc] sm:$0x7] %vm120, 0
  %126 = vst.msk [vmem:[#allocation4 + $0xf] sm:$0x7] %vm120, 0
  %127 = vst.msk [vmem:[#allocation4 + $0x12] sm:$0x7] %vm120, 0
  %128 = vst.msk [vmem:[#allocation4 + $0x15] sm:$0x7] %vm120, 0
  %129 = vst.msk [vmem:[#allocation4 + $0x18] sm:$0x7] %vm120, 0
  %130 = vst.msk [vmem:[#allocation4 + $0x1b] sm:$0x7] %vm120, 0
  loop: start=0, step=1, limit=32
  $region74: #{discriminator_forward.1} parent=0 // loop_pre_header
    _
  $region75: #{discriminator_forward.1} parent=0 // loop_header
    %s132 = sphi 0, %s136
    %p133 = scmp.ge.s32.totalorder %s132, 32
  $region76: #{discriminator_forward.1} parent=0 // loop_header_branch
    %135 = sbr.rel (%p133) target = $region80
  $region77: #{discriminator_forward.1} parent=0 // loop_body
    %s137 = smul.u32 %s132, 2
    %s138 = smul.u32 %s137, 2
    %s139 = scalar_lea.vmem %s0, %s138
    %v140 = vld [vmem:[%s139] sm:$0x3]
    %v141 = vld [vmem:[%s1] sm:$0xff]
    %v142 = vld [vmem:[%s1 + $0x8] sm:$0xf]
    %v143 = vld [vmem:[%s1 + $0xc] sm:$0xff]
    %v144 = vld [vmem:[%s1 + $0x14] sm:$0xf]
    %v145 = vld [vmem:[%s1 + $0x18] sm:$0xff]
    %v146 = vld [vmem:[%s1 + $0x20] sm:$0xf]
    %v147 = vld [vmem:[%s1 + $0x24] sm:$0xff]
    %v148 = vld [vmem:[%s1 + $0x2c] sm:$0xf]
    %v149 = vld [vmem:[%s1 + $0x30] sm:$0xff]
    %v150 = vld [vmem:[%s1 + $0x38] sm:$0xf]
    %v151 = vld [vmem:[%s1 + $0x3c] sm:$0xff]
    %v152 = vld [vmem:[%s1 + $0x44] sm:$0xf]
    %v153 = vld [vmem:[%s1 + $0x48] sm:$0xff]
    %v154 = vld [vmem:[%s1 + $0x50] sm:$0xf]
    %v155 = vld [vmem:[%s1 + $0x54] sm:$0xff]
    %v156 = vld [vmem:[%s1 + $0x5c] sm:$0xf]
    %v157 = vld [vmem:[%s1 + $0x60] sm:$0xff]
    %v158 = vld [vmem:[%s1 + $0x68] sm:$0xf]
    %v159 = vld [vmem:[%s1 + $0x6c] sm:$0xff]
    %v160 = vld [vmem:[%s1 + $0x74] sm:$0xf]
    %v161 = vld [vmem:[%s1 + $0x78] sm:$0xff]
    %v162 = vld [vmem:[%s1 + $0x80] sm:$0xf]
    %v163 = vld [vmem:[%s1 + $0x84] sm:$0xff]
    %v164 = vld [vmem:[%s1 + $0x8c] sm:$0xf]
    %v165 = vld [vmem:[%s1 + $0x90] sm:$0xff]
    %v166 = vld [vmem:[%s1 + $0x98] sm:$0xf]
    %v167 = vld [vmem:[%s1 + $0x9c] sm:$0xff]
    %v168 = vld [vmem:[%s1 + $0xa4] sm:$0xf]
    %v169 = vld [vmem:[%s1 + $0xa8] sm:$0xff]
    %v170 = vld [vmem:[%s1 + $0xb0] sm:$0xf]
    %v171 = vld [vmem:[%s1 + $0xb4] sm:$0xff]
    %v172 = vld [vmem:[%s1 + $0xbc] sm:$0xf]
    %v173 = vld [vmem:[%s1 + $0xc0] sm:$0xff]
    %v174 = vld [vmem:[%s1 + $0xc8] sm:$0xf]
    %v175 = vld [vmem:[%s1 + $0xcc] sm:$0xff]
    %v176 = vld [vmem:[%s1 + $0xd4] sm:$0xf]
    %v177 = vld [vmem:[%s1 + $0xd8] sm:$0xff]
    %v178 = vld [vmem:[%s1 + $0xe0] sm:$0xf]
    %v179 = vld [vmem:[%s1 + $0xe4] sm:$0xff]
    %v180 = vld [vmem:[%s1 + $0xec] sm:$0xf]
    %v181 = vld [vmem:[%s1 + $0xf0] sm:$0xff]
    %v182 = vld [vmem:[%s1 + $0xf8] sm:$0xf]
    %v183 = vld [vmem:[%s1 + $0xfc] sm:$0xff]
    %v184 = vld [vmem:[%s1 + $0x104] sm:$0xf]
    %v185 = vld [vmem:[%s1 + $0x108] sm:$0xff]
    %v186 = vld [vmem:[%s1 + $0x110] sm:$0xf]
    %v187 = vld [vmem:[%s1 + $0x114] sm:$0xff]
    %v188 = vld [vmem:[%s1 + $0x11c] sm:$0xf]
    %v189 = vld [vmem:[%s1 + $0x120] sm:$0x77]
    %v190 = vld [vmem:[%s1 + $0x128] sm:$0x7]
    %s191 = sadd.s32 %s137, 1
    %s192 = smul.u32 %s191, 2
    %s193 = scalar_lea.vmem %s0, %s192
    %v194 = vld [vmem:[%s193] sm:$0x3]
    %s195 = scalar_lea.vmem %s1, 300
    %v196 = vld [vmem:[%s195] sm:$0xff]
    %v197 = vld [vmem:[%s195 + $0x8] sm:$0xf]
    %v198 = vld [vmem:[%s195 + $0xc] sm:$0xff]
    %v199 = vld [vmem:[%s195 + $0x14] sm:$0xf]
    %v200 = vld [vmem:[%s195 + $0x18] sm:$0xff]
    %v201 = vld [vmem:[%s195 + $0x20] sm:$0xf]
    %v202 = vld [vmem:[%s195 + $0x24] sm:$0xff]
    %v203 = vld [vmem:[%s195 + $0x2c] sm:$0xf]
    %v204 = vld [vmem:[%s195 + $0x30] sm:$0xff]
    %v205 = vld [vmem:[%s195 + $0x38] sm:$0xf]
    %v206 = vld [vmem:[%s195 + $0x3c] sm:$0xff]
    %v207 = vld [vmem:[%s195 + $0x44] sm:$0xf]
    %v208 = vld [vmem:[%s195 + $0x48] sm:$0xff]
    %v209 = vld [vmem:[%s195 + $0x50] sm:$0xf]
    %v210 = vld [vmem:[%s195 + $0x54] sm:$0xff]
    %v211 = vld [vmem:[%s195 + $0x5c] sm:$0xf]
    %v212 = vld [vmem:[%s195 + $0x60] sm:$0xff]
    %v213 = vld [vmem:[%s195 + $0x68] sm:$0xf]
    %v214 = vld [vmem:[%s195 + $0x6c] sm:$0xff]
    %v215 = vld [vmem:[%s195 + $0x74] sm:$0xf]
    %v216 = vld [vmem:[%s195 + $0x78] sm:$0xff]
    %v217 = vld [vmem:[%s195 + $0x80] sm:$0xf]
    %v218 = vld [vmem:[%s195 + $0x84] sm:$0xff]
    %v219 = vld [vmem:[%s195 + $0x8c] sm:$0xf]
    %v220 = vld [vmem:[%s195 + $0x90] sm:$0xff]
    %v221 = vld [vmem:[%s195 + $0x98] sm:$0xf]
    %v222 = vld [vmem:[%s195 + $0x9c] sm:$0xff]
    %v223 = vld [vmem:[%s195 + $0xa4] sm:$0xf]
    %v224 = vld [vmem:[%s195 + $0xa8] sm:$0xff]
    %v225 = vld [vmem:[%s195 + $0xb0] sm:$0xf]
    %v226 = vld [vmem:[%s195 + $0xb4] sm:$0xff]
    %v227 = vld [vmem:[%s195 + $0xbc] sm:$0xf]
    %v228 = vld [vmem:[%s195 + $0xc0] sm:$0xff]
    %v229 = vld [vmem:[%s195 + $0xc8] sm:$0xf]
    %v230 = vld [vmem:[%s195 + $0xcc] sm:$0xff]
    %v231 = vld [vmem:[%s195 + $0xd4] sm:$0xf]
    %v232 = vld [vmem:[%s195 + $0xd8] sm:$0xff]
    %v233 = vld [vmem:[%s195 + $0xe0] sm:$0xf]
    %v234 = vld [vmem:[%s195 + $0xe4] sm:$0xff]
    %v235 = vld [vmem:[%s195 + $0xec] sm:$0xf]
    %v236 = vld [vmem:[%s195 + $0xf0] sm:$0xff]
    %v237 = vld [vmem:[%s195 + $0xf8] sm:$0xf]
    %v238 = vld [vmem:[%s195 + $0xfc] sm:$0xff]
    %v239 = vld [vmem:[%s195 + $0x104] sm:$0xf]
    %v240 = vld [vmem:[%s195 + $0x108] sm:$0xff]
    %v241 = vld [vmem:[%s195 + $0x110] sm:$0xf]
    %v242 = vld [vmem:[%s195 + $0x114] sm:$0xff]
    %v243 = vld [vmem:[%s195 + $0x11c] sm:$0xf]
    %v244 = vld [vmem:[%s195 + $0x120] sm:$0x77]
    %v245 = vld [vmem:[%s195 + $0x128] sm:$0x7]
    %247 = vst [vmem:[#allocation1] ss:$9 sm:$0xff] %v194
    %v248 = vld [vmem:[#allocation1] sm:$0xff]
    %v249 = vld [vmem:[#allocation1 + $0x9] sm:$0xff]
    %v301 = vunpack.c.l.b16 %v196
    %v302 = vunpack.c.h.b16 %v196
    %v303 = vunpack.c.l.b16 %v197
    %v304 = vunpack.c.l.b16 %v198
    %v305 = vunpack.c.h.b16 %v198
    %v306 = vunpack.c.l.b16 %v199
    %v307 = vunpack.c.l.b16 %v200
    %v308 = vunpack.c.h.b16 %v200
    %v309 = vunpack.c.l.b16 %v201
    %v310 = vunpack.c.l.b16 %v202
    %v311 = vunpack.c.h.b16 %v202
    %v312 = vunpack.c.l.b16 %v203
    %v313 = vunpack.c.l.b16 %v204
    %v314 = vunpack.c.h.b16 %v204
    %v315 = vunpack.c.l.b16 %v205
    %v316 = vunpack.c.l.b16 %v206
    %v317 = vunpack.c.h.b16 %v206
    %v318 = vunpack.c.l.b16 %v207
    %v319 = vunpack.c.l.b16 %v208
    %v320 = vunpack.c.h.b16 %v208
    %v321 = vunpack.c.l.b16 %v209
    %v322 = vunpack.c.l.b16 %v210
    %v323 = vunpack.c.h.b16 %v210
    %v324 = vunpack.c.l.b16 %v211
    %v325 = vunpack.c.l.b16 %v212
    %v326 = vunpack.c.h.b16 %v212
    %v327 = vunpack.c.l.b16 %v213
    %v328 = vunpack.c.l.b16 %v214
    %v329 = vunpack.c.h.b16 %v214
    %v330 = vunpack.c.l.b16 %v215
    %v331 = vunpack.c.l.b16 %v216
    %v332 = vunpack.c.h.b16 %v216
    %v333 = vunpack.c.l.b16 %v217
    %v334 = vunpack.c.l.b16 %v218
    %v335 = vunpack.c.h.b16 %v218
    %v336 = vunpack.c.l.b16 %v219
    %v337 = vunpack.c.l.b16 %v220
    %v338 = vunpack.c.h.b16 %v220
    %v339 = vunpack.c.l.b16 %v221
    %v340 = vunpack.c.l.b16 %v222
    %v341 = vunpack.c.h.b16 %v222
    %v342 = vunpack.c.l.b16 %v223
    %v343 = vunpack.c.l.b16 %v224
    %v344 = vunpack.c.h.b16 %v224
    %v345 = vunpack.c.l.b16 %v225
    %v346 = vunpack.c.l.b16 %v226
    %v347 = vunpack.c.h.b16 %v226
    %v348 = vunpack.c.l.b16 %v227
    %v349 = vunpack.c.l.b16 %v228
    %v350 = vunpack.c.h.b16 %v228
    %v351 = vunpack.c.l.b16 %v229
    %v352 = vunpack.c.l.b16 %v230
    %v353 = vunpack.c.h.b16 %v230
    %v354 = vunpack.c.l.b16 %v231
    %v355 = vunpack.c.l.b16 %v232
    %v356 = vunpack.c.h.b16 %v232
    %v357 = vunpack.c.l.b16 %v233
    %v358 = vunpack.c.l.b16 %v234
    %v359 = vunpack.c.h.b16 %v234
    %v360 = vunpack.c.l.b16 %v235
    %v361 = vunpack.c.l.b16 %v236
    %v362 = vunpack.c.h.b16 %v236
    %v363 = vunpack.c.l.b16 %v237
    %v364 = vunpack.c.l.b16 %v238
    %v365 = vunpack.c.h.b16 %v238
    %v366 = vunpack.c.l.b16 %v239
    %v367 = vunpack.c.l.b16 %v240
    %v368 = vunpack.c.h.b16 %v240
    %v369 = vunpack.c.l.b16 %v241
    %v370 = vunpack.c.l.b16 %v242
    %v371 = vunpack.c.h.b16 %v242
    %v372 = vunpack.c.l.b16 %v243
    %v373 = vunpack.c.l.b16 %v244
    %v374 = vunpack.c.h.b16 %v244
    %v375 = vunpack.c.l.b16 %v245
    %v376 = vpack.c.b16 %v304, %v301
    %v377 = vpack.c.b16 %v305, %v302
    %v378 = vpack.c.b16 %v306, %v303
    %v379 = vpack.c.b16 %v310, %v307
    %v380 = vpack.c.b16 %v311, %v308
    %v381 = vpack.c.b16 %v312, %v309
    %v382 = vpack.c.b16 %v316, %v313
    %v383 = vpack.c.b16 %v317, %v314
    %v384 = vpack.c.b16 %v318, %v315
    %v385 = vpack.c.b16 %v322, %v319
    %v386 = vpack.c.b16 %v323, %v320
    %v387 = vpack.c.b16 %v324, %v321
    %v388 = vpack.c.b16 %v328, %v325
    %v389 = vpack.c.b16 %v329, %v326
    %v390 = vpack.c.b16 %v330, %v327
    %v391 = vpack.c.b16 %v334, %v331
    %v392 = vpack.c.b16 %v335, %v332
    %v393 = vpack.c.b16 %v336, %v333
    %v394 = vpack.c.b16 %v340, %v337
    %v395 = vpack.c.b16 %v341, %v338
    %v396 = vpack.c.b16 %v342, %v339
    %v397 = vpack.c.b16 %v346, %v343
    %v398 = vpack.c.b16 %v347, %v344
    %v399 = vpack.c.b16 %v348, %v345
    %v400 = vpack.c.b16 %v352, %v349
    %v401 = vpack.c.b16 %v353, %v350
    %v402 = vpack.c.b16 %v354, %v351
    %v403 = vpack.c.b16 %v358, %v355
    %v404 = vpack.c.b16 %v359, %v356
    %v405 = vpack.c.b16 %v360, %v357
    %v406 = vpack.c.b16 %v364, %v361
    %v407 = vpack.c.b16 %v365, %v362
    %v408 = vpack.c.b16 %v366, %v363
    %v409 = vpack.c.b16 %v370, %v367
    %v410 = vpack.c.b16 %v371, %v368
    %v411 = vpack.c.b16 %v372, %v369
    %v412 = vpack.c.b16 %v373, %v373
    %v413 = vpack.c.b16 %v374, %v374
    %v414 = vpack.c.b16 %v375, %v375
    %vm451 = vcmask 572416
    %v452 = vsel %vm451, %v249, 0
    %vm454 = vcmask 1042432
    %v456 = vsel %vm454, %v412, 0
    %v459 = vsel %vm454, %v413, 0
    %v462 = vsel %vm454, %v414, 0
    %464 = vmatpush.bf16.msra.mxu0 %v397
    %465 = vmatpush.bf16.msra.mxu0 %v394
    %466 = vmatpush.bf16.msra.mxu0 %v391
    %467 = vmatpush.bf16.msra.mxu0 %v388
    %468 = vmatpush.bf16.msra.mxu0 %v385
    %469 = vmatpush.bf16.msra.mxu0 %v382
    %470 = vmatpush.bf16.msra.mxu0 %v379
    %471 = vmatpush.bf16.msra.mxu0 %v376
    %472 = vmatmul.bf16.gmra.mxu0 %v248
    %v473 = vpop.f32.mrf.mxu0
    %v474 = vadd.f32 0.0, %v473
    %v475 = vpop.f32.mrf.mxu0
    %476 = vdwg.mxu0
    %477 = vmatpush.bf16.msra.mxu0 0
    %478 = vmatpush.bf16.msra.mxu0 0
    %479 = vmatpush.bf16.msra.mxu0 0
    %480 = vmatpush.bf16.msra.mxu0 %v456
    %481 = vmatpush.bf16.msra.mxu0 %v409
    %482 = vmatpush.bf16.msra.mxu0 %v406
    %483 = vmatpush.bf16.msra.mxu0 %v403
    %484 = vmatpush.bf16.msra.mxu0 %v400
    %485 = vmatmul.bf16.gmra.mxu0 %v452
    %v486 = vpop.f32.mrf.mxu0
    %v487 = vadd.f32 %v474, %v486
    %v488 = vpop.f32.mrf.mxu0
    %489 = vdwg.mxu0
    %490 = vmatpush.bf16.msra.mxu0 %v398
    %491 = vmatpush.bf16.msra.mxu0 %v395
    %492 = vmatpush.bf16.msra.mxu0 %v392
    %493 = vmatpush.bf16.msra.mxu0 %v389
    %494 = vmatpush.bf16.msra.mxu0 %v386
    %495 = vmatpush.bf16.msra.mxu0 %v383
    %496 = vmatpush.bf16.msra.mxu0 %v380
    %497 = vmatpush.bf16.msra.mxu0 %v377
    %498 = vmatmul.bf16.gmra.mxu0 %v248
    %v499 = vpop.f32.mrf.mxu0
    %v500 = vadd.f32 0.0, %v499
    %v501 = vpop.f32.mrf.mxu0
    %502 = vdwg.mxu0
    %503 = vmatpush.bf16.msra.mxu0 0
    %504 = vmatpush.bf16.msra.mxu0 0
    %505 = vmatpush.bf16.msra.mxu0 0
    %506 = vmatpush.bf16.msra.mxu0 %v459
    %507 = vmatpush.bf16.msra.mxu0 %v410
    %508 = vmatpush.bf16.msra.mxu0 %v407
    %509 = vmatpush.bf16.msra.mxu0 %v404
    %510 = vmatpush.bf16.msra.mxu0 %v401
    %511 = vmatmul.bf16.gmra.mxu0 %v452
    %v512 = vpop.f32.mrf.mxu0
    %v513 = vadd.f32 %v500, %v512
    %v514 = vpop.f32.mrf.mxu0
    %515 = vdwg.mxu0
    %516 = vmatpush.bf16.msra.mxu0 %v399
    %517 = vmatpush.bf16.msra.mxu0 %v396
    %518 = vmatpush.bf16.msra.mxu0 %v393
    %519 = vmatpush.bf16.msra.mxu0 %v390
    %520 = vmatpush.bf16.msra.mxu0 %v387
    %521 = vmatpush.bf16.msra.mxu0 %v384
    %522 = vmatpush.bf16.msra.mxu0 %v381
    %523 = vmatpush.bf16.msra.mxu0 %v378
    %524 = vmatmul.bf16.gmra.mxu0 %v248
    %v525 = vpop.f32.mrf.mxu0
    %v526 = vadd.f32 0.0, %v525
    %v527 = vpop.f32.mrf.mxu0
    %528 = vdwg.mxu0
    %529 = vmatpush.bf16.msra.mxu0 0
    %530 = vmatpush.bf16.msra.mxu0 0
    %531 = vmatpush.bf16.msra.mxu0 0
    %532 = vmatpush.bf16.msra.mxu0 %v462
    %533 = vmatpush.bf16.msra.mxu0 %v411
    %534 = vmatpush.bf16.msra.mxu0 %v408
    %535 = vmatpush.bf16.msra.mxu0 %v405
    %536 = vmatpush.bf16.msra.mxu0 %v402
    %537 = vmatmul.bf16.gmra.mxu0 %v452
    %v538 = vpop.f32.mrf.mxu0
    %v539 = vadd.f32 %v526, %v538
    %v540 = vpop.f32.mrf.mxu0
    %541 = vdwg.mxu0
    %543 = vst [vmem:[#allocation1] ss:$9 sm:$0xff] %v140
    %v544 = vld [vmem:[#allocation1] sm:$0xff]
    %v545 = vld [vmem:[#allocation1 + $0x9] sm:$0xff]
    %v597 = vunpack.c.l.b16 %v141
    %v598 = vunpack.c.h.b16 %v141
    %v599 = vunpack.c.l.b16 %v142
    %v600 = vunpack.c.l.b16 %v143
    %v601 = vunpack.c.h.b16 %v143
    %v602 = vunpack.c.l.b16 %v144
    %v603 = vunpack.c.l.b16 %v145
    %v604 = vunpack.c.h.b16 %v145
    %v605 = vunpack.c.l.b16 %v146
    %v606 = vunpack.c.l.b16 %v147
    %v607 = vunpack.c.h.b16 %v147
    %v608 = vunpack.c.l.b16 %v148
    %v609 = vunpack.c.l.b16 %v149
    %v610 = vunpack.c.h.b16 %v149
    %v611 = vunpack.c.l.b16 %v150
    %v612 = vunpack.c.l.b16 %v151
    %v613 = vunpack.c.h.b16 %v151
    %v614 = vunpack.c.l.b16 %v152
    %v615 = vunpack.c.l.b16 %v153
    %v616 = vunpack.c.h.b16 %v153
    %v617 = vunpack.c.l.b16 %v154
    %v618 = vunpack.c.l.b16 %v155
    %v619 = vunpack.c.h.b16 %v155
    %v620 = vunpack.c.l.b16 %v156
    %v621 = vunpack.c.l.b16 %v157
    %v622 = vunpack.c.h.b16 %v157
    %v623 = vunpack.c.l.b16 %v158
    %v624 = vunpack.c.l.b16 %v159
    %v625 = vunpack.c.h.b16 %v159
    %v626 = vunpack.c.l.b16 %v160
    %v627 = vunpack.c.l.b16 %v161
    %v628 = vunpack.c.h.b16 %v161
    %v629 = vunpack.c.l.b16 %v162
    %v630 = vunpack.c.l.b16 %v163
    %v631 = vunpack.c.h.b16 %v163
    %v632 = vunpack.c.l.b16 %v164
    %v633 = vunpack.c.l.b16 %v165
    %v634 = vunpack.c.h.b16 %v165
    %v635 = vunpack.c.l.b16 %v166
    %v636 = vunpack.c.l.b16 %v167
    %v637 = vunpack.c.h.b16 %v167
    %v638 = vunpack.c.l.b16 %v168
    %v639 = vunpack.c.l.b16 %v169
    %v640 = vunpack.c.h.b16 %v169
    %v641 = vunpack.c.l.b16 %v170
    %v642 = vunpack.c.l.b16 %v171
    %v643 = vunpack.c.h.b16 %v171
    %v644 = vunpack.c.l.b16 %v172
    %v645 = vunpack.c.l.b16 %v173
    %v646 = vunpack.c.h.b16 %v173
    %v647 = vunpack.c.l.b16 %v174
    %v648 = vunpack.c.l.b16 %v175
    %v649 = vunpack.c.h.b16 %v175
    %v650 = vunpack.c.l.b16 %v176
    %v651 = vunpack.c.l.b16 %v177
    %v652 = vunpack.c.h.b16 %v177
    %v653 = vunpack.c.l.b16 %v178
    %v654 = vunpack.c.l.b16 %v179
    %v655 = vunpack.c.h.b16 %v179
    %v656 = vunpack.c.l.b16 %v180
    %v657 = vunpack.c.l.b16 %v181
    %v658 = vunpack.c.h.b16 %v181
    %v659 = vunpack.c.l.b16 %v182
    %v660 = vunpack.c.l.b16 %v183
    %v661 = vunpack.c.h.b16 %v183
    %v662 = vunpack.c.l.b16 %v184
    %v663 = vunpack.c.l.b16 %v185
    %v664 = vunpack.c.h.b16 %v185
    %v665 = vunpack.c.l.b16 %v186
    %v666 = vunpack.c.l.b16 %v187
    %v667 = vunpack.c.h.b16 %v187
    %v668 = vunpack.c.l.b16 %v188
    %v669 = vunpack.c.l.b16 %v189
    %v670 = vunpack.c.h.b16 %v189
    %v671 = vunpack.c.l.b16 %v190
    %v672 = vpack.c.b16 %v600, %v597
    %v673 = vpack.c.b16 %v601, %v598
    %v674 = vpack.c.b16 %v602, %v599
    %v675 = vpack.c.b16 %v606, %v603
    %v676 = vpack.c.b16 %v607, %v604
    %v677 = vpack.c.b16 %v608, %v605
    %v678 = vpack.c.b16 %v612, %v609
    %v679 = vpack.c.b16 %v613, %v610
    %v680 = vpack.c.b16 %v614, %v611
    %v681 = vpack.c.b16 %v618, %v615
    %v682 = vpack.c.b16 %v619, %v616
    %v683 = vpack.c.b16 %v620, %v617
    %v684 = vpack.c.b16 %v624, %v621
    %v685 = vpack.c.b16 %v625, %v622
    %v686 = vpack.c.b16 %v626, %v623
    %v687 = vpack.c.b16 %v630, %v627
    %v688 = vpack.c.b16 %v631, %v628
    %v689 = vpack.c.b16 %v632, %v629
    %v690 = vpack.c.b16 %v636, %v633
    %v691 = vpack.c.b16 %v637, %v634
    %v692 = vpack.c.b16 %v638, %v635
    %v693 = vpack.c.b16 %v642, %v639
    %v694 = vpack.c.b16 %v643, %v640
    %v695 = vpack.c.b16 %v644, %v641
    %v696 = vpack.c.b16 %v648, %v645
    %v697 = vpack.c.b16 %v649, %v646
    %v698 = vpack.c.b16 %v650, %v647
    %v699 = vpack.c.b16 %v654, %v651
    %v700 = vpack.c.b16 %v655, %v652
    %v701 = vpack.c.b16 %v656, %v653
    %v702 = vpack.c.b16 %v660, %v657
    %v703 = vpack.c.b16 %v661, %v658
    %v704 = vpack.c.b16 %v662, %v659
    %v705 = vpack.c.b16 %v666, %v663
    %v706 = vpack.c.b16 %v667, %v664
    %v707 = vpack.c.b16 %v668, %v665
    %v708 = vpack.c.b16 %v669, %v669
    %v709 = vpack.c.b16 %v670, %v670
    %v710 = vpack.c.b16 %v671, %v671
    %v747 = vsel %vm451, %v545, 0
    %v750 = vsel %vm454, %v708, 0
    %v753 = vsel %vm454, %v709, 0
    %v756 = vsel %vm454, %v710, 0
    %758 = vmatpush.bf16.msra.mxu0 %v693
    %759 = vmatpush.bf16.msra.mxu0 %v690
    %760 = vmatpush.bf16.msra.mxu0 %v687
    %761 = vmatpush.bf16.msra.mxu0 %v684
    %762 = vmatpush.bf16.msra.mxu0 %v681
    %763 = vmatpush.bf16.msra.mxu0 %v678
    %764 = vmatpush.bf16.msra.mxu0 %v675
    %765 = vmatpush.bf16.msra.mxu0 %v672
    %766 = vmatmul.bf16.gmra.mxu0 %v544
    %v767 = vpop.f32.mrf.mxu0
    %v768 = vadd.f32 %v487, %v767
    %v769 = vpop.f32.mrf.mxu0
    %770 = vdwg.mxu0
    %771 = vmatpush.bf16.msra.mxu0 0
    %772 = vmatpush.bf16.msra.mxu0 0
    %773 = vmatpush.bf16.msra.mxu0 0
    %774 = vmatpush.bf16.msra.mxu0 %v750
    %775 = vmatpush.bf16.msra.mxu0 %v705
    %776 = vmatpush.bf16.msra.mxu0 %v702
    %777 = vmatpush.bf16.msra.mxu0 %v699
    %778 = vmatpush.bf16.msra.mxu0 %v696
    %779 = vmatmul.bf16.gmra.mxu0 %v747
    %v780 = vpop.f32.mrf.mxu0
    %v781 = vadd.f32 %v768, %v780
    %v782 = vpop.f32.mrf.mxu0
    %783 = vdwg.mxu0
    %784 = vmatpush.bf16.msra.mxu0 %v694
    %785 = vmatpush.bf16.msra.mxu0 %v691
    %786 = vmatpush.bf16.msra.mxu0 %v688
    %787 = vmatpush.bf16.msra.mxu0 %v685
    %788 = vmatpush.bf16.msra.mxu0 %v682
    %789 = vmatpush.bf16.msra.mxu0 %v679
    %790 = vmatpush.bf16.msra.mxu0 %v676
    %791 = vmatpush.bf16.msra.mxu0 %v673
    %792 = vmatmul.bf16.gmra.mxu0 %v544
    %v793 = vpop.f32.mrf.mxu0
    %v794 = vadd.f32 %v513, %v793
    %v795 = vpop.f32.mrf.mxu0
    %796 = vdwg.mxu0
    %797 = vmatpush.bf16.msra.mxu0 0
    %798 = vmatpush.bf16.msra.mxu0 0
    %799 = vmatpush.bf16.msra.mxu0 0
    %800 = vmatpush.bf16.msra.mxu0 %v753
    %801 = vmatpush.bf16.msra.mxu0 %v706
    %802 = vmatpush.bf16.msra.mxu0 %v703
    %803 = vmatpush.bf16.msra.mxu0 %v700
    %804 = vmatpush.bf16.msra.mxu0 %v697
    %805 = vmatmul.bf16.gmra.mxu0 %v747
    %v806 = vpop.f32.mrf.mxu0
    %v807 = vadd.f32 %v794, %v806
    %v808 = vpop.f32.mrf.mxu0
    %809 = vdwg.mxu0
    %810 = vmatpush.bf16.msra.mxu0 %v695
    %811 = vmatpush.bf16.msra.mxu0 %v692
    %812 = vmatpush.bf16.msra.mxu0 %v689
    %813 = vmatpush.bf16.msra.mxu0 %v686
    %814 = vmatpush.bf16.msra.mxu0 %v683
    %815 = vmatpush.bf16.msra.mxu0 %v680
    %816 = vmatpush.bf16.msra.mxu0 %v677
    %817 = vmatpush.bf16.msra.mxu0 %v674
    %818 = vmatmul.bf16.gmra.mxu0 %v544
    %v819 = vpop.f32.mrf.mxu0
    %v820 = vadd.f32 %v539, %v819
    %v821 = vpop.f32.mrf.mxu0
    %822 = vdwg.mxu0
    %823 = vmatpush.bf16.msra.mxu0 0
    %824 = vmatpush.bf16.msra.mxu0 0
    %825 = vmatpush.bf16.msra.mxu0 0
    %826 = vmatpush.bf16.msra.mxu0 %v756
    %827 = vmatpush.bf16.msra.mxu0 %v707
    %828 = vmatpush.bf16.msra.mxu0 %v704
    %829 = vmatpush.bf16.msra.mxu0 %v701
    %830 = vmatpush.bf16.msra.mxu0 %v698
    %831 = vmatmul.bf16.gmra.mxu0 %v747
    %v832 = vpop.f32.mrf.mxu0
    %v833 = vadd.f32 %v820, %v832
    %v834 = vpop.f32.mrf.mxu0
    %835 = vdwg.mxu0
    %s836 = sadd.s32 %s137, 2
    %s837 = smul.u32 %s836, 2
    %s838 = scalar_lea.vmem %s0, %s837
    %v839 = vld [vmem:[%s838] sm:$0x3]
    %s840 = scalar_lea.vmem %s1, 600
    %v841 = vld [vmem:[%s840] sm:$0xff]
    %v842 = vld [vmem:[%s840 + $0x8] sm:$0xf]
    %v843 = vld [vmem:[%s840 + $0xc] sm:$0xff]
    %v844 = vld [vmem:[%s840 + $0x14] sm:$0xf]
    %v845 = vld [vmem:[%s840 + $0x18] sm:$0xff]
    %v846 = vld [vmem:[%s840 + $0x20] sm:$0xf]
    %v847 = vld [vmem:[%s840 + $0x24] sm:$0xff]
    %v848 = vld [vmem:[%s840 + $0x2c] sm:$0xf]
    %v849 = vld [vmem:[%s840 + $0x30] sm:$0xff]
    %v850 = vld [vmem:[%s840 + $0x38] sm:$0xf]
    %v851 = vld [vmem:[%s840 + $0x3c] sm:$0xff]
    %v852 = vld [vmem:[%s840 + $0x44] sm:$0xf]
    %v853 = vld [vmem:[%s840 + $0x48] sm:$0xff]
    %v854 = vld [vmem:[%s840 + $0x50] sm:$0xf]
    %v855 = vld [vmem:[%s840 + $0x54] sm:$0xff]
    %v856 = vld [vmem:[%s840 + $0x5c] sm:$0xf]
    %v857 = vld [vmem:[%s840 + $0x60] sm:$0xff]
    %v858 = vld [vmem:[%s840 + $0x68] sm:$0xf]
    %v859 = vld [vmem:[%s840 + $0x6c] sm:$0xff]
    %v860 = vld [vmem:[%s840 + $0x74] sm:$0xf]
    %v861 = vld [vmem:[%s840 + $0x78] sm:$0xff]
    %v862 = vld [vmem:[%s840 + $0x80] sm:$0xf]
    %v863 = vld [vmem:[%s840 + $0x84] sm:$0xff]
    %v864 = vld [vmem:[%s840 + $0x8c] sm:$0xf]
    %v865 = vld [vmem:[%s840 + $0x90] sm:$0xff]
    %v866 = vld [vmem:[%s840 + $0x98] sm:$0xf]
    %v867 = vld [vmem:[%s840 + $0x9c] sm:$0xff]
    %v868 = vld [vmem:[%s840 + $0xa4] sm:$0xf]
    %v869 = vld [vmem:[%s840 + $0xa8] sm:$0xff]
    %v870 = vld [vmem:[%s840 + $0xb0] sm:$0xf]
    %v871 = vld [vmem:[%s840 + $0xb4] sm:$0xff]
    %v872 = vld [vmem:[%s840 + $0xbc] sm:$0xf]
    %v873 = vld [vmem:[%s840 + $0xc0] sm:$0xff]
    %v874 = vld [vmem:[%s840 + $0xc8] sm:$0xf]
    %v875 = vld [vmem:[%s840 + $0xcc] sm:$0xff]
    %v876 = vld [vmem:[%s840 + $0xd4] sm:$0xf]
    %v877 = vld [vmem:[%s840 + $0xd8] sm:$0xff]
    %v878 = vld [vmem:[%s840 + $0xe0] sm:$0xf]
    %v879 = vld [vmem:[%s840 + $0xe4] sm:$0xff]
    %v880 = vld [vmem:[%s840 + $0xec] sm:$0xf]
    %v881 = vld [vmem:[%s840 + $0xf0] sm:$0xff]
    %v882 = vld [vmem:[%s840 + $0xf8] sm:$0xf]
    %v883 = vld [vmem:[%s840 + $0xfc] sm:$0xff]
    %v884 = vld [vmem:[%s840 + $0x104] sm:$0xf]
    %v885 = vld [vmem:[%s840 + $0x108] sm:$0xff]
    %v886 = vld [vmem:[%s840 + $0x110] sm:$0xf]
    %v887 = vld [vmem:[%s840 + $0x114] sm:$0xff]
    %v888 = vld [vmem:[%s840 + $0x11c] sm:$0xf]
    %v889 = vld [vmem:[%s840 + $0x120] sm:$0x77]
    %v890 = vld [vmem:[%s840 + $0x128] sm:$0x7]
    %892 = vst [vmem:[#allocation1] ss:$9 sm:$0xff] %v839
    %v893 = vld [vmem:[#allocation1] sm:$0xff]
    %v894 = vld [vmem:[#allocation1 + $0x9] sm:$0xff]
    %v946 = vunpack.c.l.b16 %v841
    %v947 = vunpack.c.h.b16 %v841
    %v948 = vunpack.c.l.b16 %v842
    %v949 = vunpack.c.l.b16 %v843
    %v950 = vunpack.c.h.b16 %v843
    %v951 = vunpack.c.l.b16 %v844
    %v952 = vunpack.c.l.b16 %v845
    %v953 = vunpack.c.h.b16 %v845
    %v954 = vunpack.c.l.b16 %v846
    %v955 = vunpack.c.l.b16 %v847
    %v956 = vunpack.c.h.b16 %v847
    %v957 = vunpack.c.l.b16 %v848
    %v958 = vunpack.c.l.b16 %v849
    %v959 = vunpack.c.h.b16 %v849
    %v960 = vunpack.c.l.b16 %v850
    %v961 = vunpack.c.l.b16 %v851
    %v962 = vunpack.c.h.b16 %v851
    %v963 = vunpack.c.l.b16 %v852
    %v964 = vunpack.c.l.b16 %v853
    %v965 = vunpack.c.h.b16 %v853
    %v966 = vunpack.c.l.b16 %v854
    %v967 = vunpack.c.l.b16 %v855
    %v968 = vunpack.c.h.b16 %v855
    %v969 = vunpack.c.l.b16 %v856
    %v970 = vunpack.c.l.b16 %v857
    %v971 = vunpack.c.h.b16 %v857
    %v972 = vunpack.c.l.b16 %v858
    %v973 = vunpack.c.l.b16 %v859
    %v974 = vunpack.c.h.b16 %v859
    %v975 = vunpack.c.l.b16 %v860
    %v976 = vunpack.c.l.b16 %v861
    %v977 = vunpack.c.h.b16 %v861
    %v978 = vunpack.c.l.b16 %v862
    %v979 = vunpack.c.l.b16 %v863
    %v980 = vunpack.c.h.b16 %v863
    %v981 = vunpack.c.l.b16 %v864
    %v982 = vunpack.c.l.b16 %v865
    %v983 = vunpack.c.h.b16 %v865
    %v984 = vunpack.c.l.b16 %v866
    %v985 = vunpack.c.l.b16 %v867
    %v986 = vunpack.c.h.b16 %v867
    %v987 = vunpack.c.l.b16 %v868
    %v988 = vunpack.c.l.b16 %v869
    %v989 = vunpack.c.h.b16 %v869
    %v990 = vunpack.c.l.b16 %v870
    %v991 = vunpack.c.l.b16 %v871
    %v992 = vunpack.c.h.b16 %v871
    %v993 = vunpack.c.l.b16 %v872
    %v994 = vunpack.c.l.b16 %v873
    %v995 = vunpack.c.h.b16 %v873
    %v996 = vunpack.c.l.b16 %v874
    %v997 = vunpack.c.l.b16 %v875
    %v998 = vunpack.c.h.b16 %v875
    %v999 = vunpack.c.l.b16 %v876
    %v1000 = vunpack.c.l.b16 %v877
    %v1001 = vunpack.c.h.b16 %v877
    %v1002 = vunpack.c.l.b16 %v878
    %v1003 = vunpack.c.l.b16 %v879
    %v1004 = vunpack.c.h.b16 %v879
    %v1005 = vunpack.c.l.b16 %v880
    %v1006 = vunpack.c.l.b16 %v881
    %v1007 = vunpack.c.h.b16 %v881
    %v1008 = vunpack.c.l.b16 %v882
    %v1009 = vunpack.c.l.b16 %v883
    %v1010 = vunpack.c.h.b16 %v883
    %v1011 = vunpack.c.l.b16 %v884
    %v1012 = vunpack.c.l.b16 %v885
    %v1013 = vunpack.c.h.b16 %v885
    %v1014 = vunpack.c.l.b16 %v886
    %v1015 = vunpack.c.l.b16 %v887
    %v1016 = vunpack.c.h.b16 %v887
    %v1017 = vunpack.c.l.b16 %v888
    %v1018 = vunpack.c.l.b16 %v889
    %v1019 = vunpack.c.h.b16 %v889
    %v1020 = vunpack.c.l.b16 %v890
    %v1021 = vpack.c.b16 %v949, %v946
    %v1022 = vpack.c.b16 %v950, %v947
    %v1023 = vpack.c.b16 %v951, %v948
    %v1024 = vpack.c.b16 %v955, %v952
    %v1025 = vpack.c.b16 %v956, %v953
    %v1026 = vpack.c.b16 %v957, %v954
    %v1027 = vpack.c.b16 %v961, %v958
    %v1028 = vpack.c.b16 %v962, %v959
    %v1029 = vpack.c.b16 %v963, %v960
    %v1030 = vpack.c.b16 %v967, %v964
    %v1031 = vpack.c.b16 %v968, %v965
    %v1032 = vpack.c.b16 %v969, %v966
    %v1033 = vpack.c.b16 %v973, %v970
    %v1034 = vpack.c.b16 %v974, %v971
    %v1035 = vpack.c.b16 %v975, %v972
    %v1036 = vpack.c.b16 %v979, %v976
    %v1037 = vpack.c.b16 %v980, %v977
    %v1038 = vpack.c.b16 %v981, %v978
    %v1039 = vpack.c.b16 %v985, %v982
    %v1040 = vpack.c.b16 %v986, %v983
    %v1041 = vpack.c.b16 %v987, %v984
    %v1042 = vpack.c.b16 %v991, %v988
    %v1043 = vpack.c.b16 %v992, %v989
    %v1044 = vpack.c.b16 %v993, %v990
    %v1045 = vpack.c.b16 %v997, %v994
    %v1046 = vpack.c.b16 %v998, %v995
    %v1047 = vpack.c.b16 %v999, %v996
    %v1048 = vpack.c.b16 %v1003, %v1000
    %v1049 = vpack.c.b16 %v1004, %v1001
    %v1050 = vpack.c.b16 %v1005, %v1002
    %v1051 = vpack.c.b16 %v1009, %v1006
    %v1052 = vpack.c.b16 %v1010, %v1007
    %v1053 = vpack.c.b16 %v1011, %v1008
    %v1054 = vpack.c.b16 %v1015, %v1012
    %v1055 = vpack.c.b16 %v1016, %v1013
    %v1056 = vpack.c.b16 %v1017, %v1014
    %v1057 = vpack.c.b16 %v1018, %v1018
    %v1058 = vpack.c.b16 %v1019, %v1019
    %v1059 = vpack.c.b16 %v1020, %v1020
    %v1096 = vsel %vm451, %v894, 0
    %v1099 = vsel %vm454, %v1057, 0
    %v1102 = vsel %vm454, %v1058, 0
    %v1105 = vsel %vm454, %v1059, 0
    %1107 = vmatpush.bf16.msra.mxu0 %v1042
    %1108 = vmatpush.bf16.msra.mxu0 %v1039
    %1109 = vmatpush.bf16.msra.mxu0 %v1036
    %1110 = vmatpush.bf16.msra.mxu0 %v1033
    %1111 = vmatpush.bf16.msra.mxu0 %v1030
    %1112 = vmatpush.bf16.msra.mxu0 %v1027
    %1113 = vmatpush.bf16.msra.mxu0 %v1024
    %1114 = vmatpush.bf16.msra.mxu0 %v1021
    %1115 = vmatmul.bf16.gmra.mxu0 %v893
    %v1116 = vpop.f32.mrf.mxu0
    %v1117 = vadd.f32 0.0, %v1116
    %v1118 = vpop.f32.mrf.mxu0
    %1119 = vdwg.mxu0
    %1120 = vmatpush.bf16.msra.mxu0 0
    %1121 = vmatpush.bf16.msra.mxu0 0
    %1122 = vmatpush.bf16.msra.mxu0 0
    %1123 = vmatpush.bf16.msra.mxu0 %v1099
    %1124 = vmatpush.bf16.msra.mxu0 %v1054
    %1125 = vmatpush.bf16.msra.mxu0 %v1051
    %1126 = vmatpush.bf16.msra.mxu0 %v1048
    %1127 = vmatpush.bf16.msra.mxu0 %v1045
    %1128 = vmatmul.bf16.gmra.mxu0 %v1096
    %v1129 = vpop.f32.mrf.mxu0
    %v1130 = vadd.f32 %v1117, %v1129
    %v1131 = vpop.f32.mrf.mxu0
    %1132 = vdwg.mxu0
    %1133 = vmatpush.bf16.msra.mxu0 %v1043
    %1134 = vmatpush.bf16.msra.mxu0 %v1040
    %1135 = vmatpush.bf16.msra.mxu0 %v1037
    %1136 = vmatpush.bf16.msra.mxu0 %v1034
    %1137 = vmatpush.bf16.msra.mxu0 %v1031
    %1138 = vmatpush.bf16.msra.mxu0 %v1028
    %1139 = vmatpush.bf16.msra.mxu0 %v1025
    %1140 = vmatpush.bf16.msra.mxu0 %v1022
    %1141 = vmatmul.bf16.gmra.mxu0 %v893
    %v1142 = vpop.f32.mrf.mxu0
    %v1143 = vadd.f32 0.0, %v1142
    %v1144 = vpop.f32.mrf.mxu0
    %1145 = vdwg.mxu0
    %1146 = vmatpush.bf16.msra.mxu0 0
    %1147 = vmatpush.bf16.msra.mxu0 0
    %1148 = vmatpush.bf16.msra.mxu0 0
    %1149 = vmatpush.bf16.msra.mxu0 %v1102
    %1150 = vmatpush.bf16.msra.mxu0 %v1055
    %1151 = vmatpush.bf16.msra.mxu0 %v1052
    %1152 = vmatpush.bf16.msra.mxu0 %v1049
    %1153 = vmatpush.bf16.msra.mxu0 %v1046
    %1154 = vmatmul.bf16.gmra.mxu0 %v1096
    %v1155 = vpop.f32.mrf.mxu0
    %v1156 = vadd.f32 %v1143, %v1155
    %v1157 = vpop.f32.mrf.mxu0
    %1158 = vdwg.mxu0
    %1159 = vmatpush.bf16.msra.mxu0 %v1044
    %1160 = vmatpush.bf16.msra.mxu0 %v1041
    %1161 = vmatpush.bf16.msra.mxu0 %v1038
    %1162 = vmatpush.bf16.msra.mxu0 %v1035
    %1163 = vmatpush.bf16.msra.mxu0 %v1032
    %1164 = vmatpush.bf16.msra.mxu0 %v1029
    %1165 = vmatpush.bf16.msra.mxu0 %v1026
    %1166 = vmatpush.bf16.msra.mxu0 %v1023
    %1167 = vmatmul.bf16.gmra.mxu0 %v893
    %v1168 = vpop.f32.mrf.mxu0
    %v1169 = vadd.f32 0.0, %v1168
    %v1170 = vpop.f32.mrf.mxu0
    %1171 = vdwg.mxu0
    %1172 = vmatpush.bf16.msra.mxu0 0
    %1173 = vmatpush.bf16.msra.mxu0 0
    %1174 = vmatpush.bf16.msra.mxu0 0
    %1175 = vmatpush.bf16.msra.mxu0 %v1105
    %1176 = vmatpush.bf16.msra.mxu0 %v1056
    %1177 = vmatpush.bf16.msra.mxu0 %v1053
    %1178 = vmatpush.bf16.msra.mxu0 %v1050
    %1179 = vmatpush.bf16.msra.mxu0 %v1047
    %1180 = vmatmul.bf16.gmra.mxu0 %v1096
    %v1181 = vpop.f32.mrf.mxu0
    %v1182 = vadd.f32 %v1169, %v1181
    %v1183 = vpop.f32.mrf.mxu0
    %1184 = vdwg.mxu0
    %v1185 = vadd.f32 %v781, %v1130
    %v1186 = vadd.f32 %v807, %v1156
    %v1187 = vadd.f32 %v833, %v1182
    %s1188 = sadd.s32 %s137, 3
    %s1189 = smul.u32 %s1188, 2
    %s1190 = scalar_lea.vmem %s0, %s1189
    %v1191 = vld [vmem:[%s1190] sm:$0x3]
    %s1192 = scalar_lea.vmem %s1, 900
    %v1193 = vld [vmem:[%s1192] sm:$0xff]
    %v1194 = vld [vmem:[%s1192 + $0x8] sm:$0xf]
    %v1195 = vld [vmem:[%s1192 + $0xc] sm:$0xff]
    %v1196 = vld [vmem:[%s1192 + $0x14] sm:$0xf]
    %v1197 = vld [vmem:[%s1192 + $0x18] sm:$0xff]
    %v1198 = vld [vmem:[%s1192 + $0x20] sm:$0xf]
    %v1199 = vld [vmem:[%s1192 + $0x24] sm:$0xff]
    %v1200 = vld [vmem:[%s1192 + $0x2c] sm:$0xf]
    %v1201 = vld [vmem:[%s1192 + $0x30] sm:$0xff]
    %v1202 = vld [vmem:[%s1192 + $0x38] sm:$0xf]
    %v1203 = vld [vmem:[%s1192 + $0x3c] sm:$0xff]
    %v1204 = vld [vmem:[%s1192 + $0x44] sm:$0xf]
    %v1205 = vld [vmem:[%s1192 + $0x48] sm:$0xff]
    %v1206 = vld [vmem:[%s1192 + $0x50] sm:$0xf]
    %v1207 = vld [vmem:[%s1192 + $0x54] sm:$0xff]
    %v1208 = vld [vmem:[%s1192 + $0x5c] sm:$0xf]
    %v1209 = vld [vmem:[%s1192 + $0x60] sm:$0xff]
    %v1210 = vld [vmem:[%s1192 + $0x68] sm:$0xf]
    %v1211 = vld [vmem:[%s1192 + $0x6c] sm:$0xff]
    %v1212 = vld [vmem:[%s1192 + $0x74] sm:$0xf]
    %v1213 = vld [vmem:[%s1192 + $0x78] sm:$0xff]
    %v1214 = vld [vmem:[%s1192 + $0x80] sm:$0xf]
    %v1215 = vld [vmem:[%s1192 + $0x84] sm:$0xff]
    %v1216 = vld [vmem:[%s1192 + $0x8c] sm:$0xf]
    %v1217 = vld [vmem:[%s1192 + $0x90] sm:$0xff]
    %v1218 = vld [vmem:[%s1192 + $0x98] sm:$0xf]
    %v1219 = vld [vmem:[%s1192 + $0x9c] sm:$0xff]
    %v1220 = vld [vmem:[%s1192 + $0xa4] sm:$0xf]
    %v1221 = vld [vmem:[%s1192 + $0xa8] sm:$0xff]
    %v1222 = vld [vmem:[%s1192 + $0xb0] sm:$0xf]
    %v1223 = vld [vmem:[%s1192 + $0xb4] sm:$0xff]
    %v1224 = vld [vmem:[%s1192 + $0xbc] sm:$0xf]
    %v1225 = vld [vmem:[%s1192 + $0xc0] sm:$0xff]
    %v1226 = vld [vmem:[%s1192 + $0xc8] sm:$0xf]
    %v1227 = vld [vmem:[%s1192 + $0xcc] sm:$0xff]
    %v1228 = vld [vmem:[%s1192 + $0xd4] sm:$0xf]
    %v1229 = vld [vmem:[%s1192 + $0xd8] sm:$0xff]
    %v1230 = vld [vmem:[%s1192 + $0xe0] sm:$0xf]
    %v1231 = vld [vmem:[%s1192 + $0xe4] sm:$0xff]
    %v1232 = vld [vmem:[%s1192 + $0xec] sm:$0xf]
    %v1233 = vld [vmem:[%s1192 + $0xf0] sm:$0xff]
    %v1234 = vld [vmem:[%s1192 + $0xf8] sm:$0xf]
    %v1235 = vld [vmem:[%s1192 + $0xfc] sm:$0xff]
    %v1236 = vld [vmem:[%s1192 + $0x104] sm:$0xf]
    %v1237 = vld [vmem:[%s1192 + $0x108] sm:$0xff]
    %v1238 = vld [vmem:[%s1192 + $0x110] sm:$0xf]
    %v1239 = vld [vmem:[%s1192 + $0x114] sm:$0xff]
    %v1240 = vld [vmem:[%s1192 + $0x11c] sm:$0xf]
    %v1241 = vld [vmem:[%s1192 + $0x120] sm:$0x77]
    %v1242 = vld [vmem:[%s1192 + $0x128] sm:$0x7]
    %1244 = vst [vmem:[#allocation1] ss:$9 sm:$0xff] %v1191
    %v1245 = vld [vmem:[#allocation1] sm:$0xff]
    %v1246 = vld [vmem:[#allocation1 + $0x9] sm:$0xff]
    %v1298 = vunpack.c.l.b16 %v1193
    %v1299 = vunpack.c.h.b16 %v1193
    %v1300 = vunpack.c.l.b16 %v1194
    %v1301 = vunpack.c.l.b16 %v1195
    %v1302 = vunpack.c.h.b16 %v1195
    %v1303 = vunpack.c.l.b16 %v1196
    %v1304 = vunpack.c.l.b16 %v1197
    %v1305 = vunpack.c.h.b16 %v1197
    %v1306 = vunpack.c.l.b16 %v1198
    %v1307 = vunpack.c.l.b16 %v1199
    %v1308 = vunpack.c.h.b16 %v1199
    %v1309 = vunpack.c.l.b16 %v1200
    %v1310 = vunpack.c.l.b16 %v1201
    %v1311 = vunpack.c.h.b16 %v1201
    %v1312 = vunpack.c.l.b16 %v1202
    %v1313 = vunpack.c.l.b16 %v1203
    %v1314 = vunpack.c.h.b16 %v1203
    %v1315 = vunpack.c.l.b16 %v1204
    %v1316 = vunpack.c.l.b16 %v1205
    %v1317 = vunpack.c.h.b16 %v1205
    %v1318 = vunpack.c.l.b16 %v1206
    %v1319 = vunpack.c.l.b16 %v1207
    %v1320 = vunpack.c.h.b16 %v1207
    %v1321 = vunpack.c.l.b16 %v1208
    %v1322 = vunpack.c.l.b16 %v1209
    %v1323 = vunpack.c.h.b16 %v1209
    %v1324 = vunpack.c.l.b16 %v1210
    %v1325 = vunpack.c.l.b16 %v1211
    %v1326 = vunpack.c.h.b16 %v1211
    %v1327 = vunpack.c.l.b16 %v1212
    %v1328 = vunpack.c.l.b16 %v1213
    %v1329 = vunpack.c.h.b16 %v1213
    %v1330 = vunpack.c.l.b16 %v1214
    %v1331 = vunpack.c.l.b16 %v1215
    %v1332 = vunpack.c.h.b16 %v1215
    %v1333 = vunpack.c.l.b16 %v1216
    %v1334 = vunpack.c.l.b16 %v1217
    %v1335 = vunpack.c.h.b16 %v1217
    %v1336 = vunpack.c.l.b16 %v1218
    %v1337 = vunpack.c.l.b16 %v1219
    %v1338 = vunpack.c.h.b16 %v1219
    %v1339 = vunpack.c.l.b16 %v1220
    %v1340 = vunpack.c.l.b16 %v1221
    %v1341 = vunpack.c.h.b16 %v1221
    %v1342 = vunpack.c.l.b16 %v1222
    %v1343 = vunpack.c.l.b16 %v1223
    %v1344 = vunpack.c.h.b16 %v1223
    %v1345 = vunpack.c.l.b16 %v1224
    %v1346 = vunpack.c.l.b16 %v1225
    %v1347 = vunpack.c.h.b16 %v1225
    %v1348 = vunpack.c.l.b16 %v1226
    %v1349 = vunpack.c.l.b16 %v1227
    %v1350 = vunpack.c.h.b16 %v1227
    %v1351 = vunpack.c.l.b16 %v1228
    %v1352 = vunpack.c.l.b16 %v1229
    %v1353 = vunpack.c.h.b16 %v1229
    %v1354 = vunpack.c.l.b16 %v1230
    %v1355 = vunpack.c.l.b16 %v1231
    %v1356 = vunpack.c.h.b16 %v1231
    %v1357 = vunpack.c.l.b16 %v1232
    %v1358 = vunpack.c.l.b16 %v1233
    %v1359 = vunpack.c.h.b16 %v1233
    %v1360 = vunpack.c.l.b16 %v1234
    %v1361 = vunpack.c.l.b16 %v1235
    %v1362 = vunpack.c.h.b16 %v1235
    %v1363 = vunpack.c.l.b16 %v1236
    %v1364 = vunpack.c.l.b16 %v1237
    %v1365 = vunpack.c.h.b16 %v1237
    %v1366 = vunpack.c.l.b16 %v1238
    %v1367 = vunpack.c.l.b16 %v1239
    %v1368 = vunpack.c.h.b16 %v1239
    %v1369 = vunpack.c.l.b16 %v1240
    %v1370 = vunpack.c.l.b16 %v1241
    %v1371 = vunpack.c.h.b16 %v1241
    %v1372 = vunpack.c.l.b16 %v1242
    %v1373 = vpack.c.b16 %v1301, %v1298
    %v1374 = vpack.c.b16 %v1302, %v1299
    %v1375 = vpack.c.b16 %v1303, %v1300
    %v1376 = vpack.c.b16 %v1307, %v1304
    %v1377 = vpack.c.b16 %v1308, %v1305
    %v1378 = vpack.c.b16 %v1309, %v1306
    %v1379 = vpack.c.b16 %v1313, %v1310
    %v1380 = vpack.c.b16 %v1314, %v1311
    %v1381 = vpack.c.b16 %v1315, %v1312
    %v1382 = vpack.c.b16 %v1319, %v1316
    %v1383 = vpack.c.b16 %v1320, %v1317
    %v1384 = vpack.c.b16 %v1321, %v1318
    %v1385 = vpack.c.b16 %v1325, %v1322
    %v1386 = vpack.c.b16 %v1326, %v1323
    %v1387 = vpack.c.b16 %v1327, %v1324
    %v1388 = vpack.c.b16 %v1331, %v1328
    %v1389 = vpack.c.b16 %v1332, %v1329
    %v1390 = vpack.c.b16 %v1333, %v1330
    %v1391 = vpack.c.b16 %v1337, %v1334
    %v1392 = vpack.c.b16 %v1338, %v1335
    %v1393 = vpack.c.b16 %v1339, %v1336
    %v1394 = vpack.c.b16 %v1343, %v1340
    %v1395 = vpack.c.b16 %v1344, %v1341
    %v1396 = vpack.c.b16 %v1345, %v1342
    %v1397 = vpack.c.b16 %v1349, %v1346
    %v1398 = vpack.c.b16 %v1350, %v1347
    %v1399 = vpack.c.b16 %v1351, %v1348
    %v1400 = vpack.c.b16 %v1355, %v1352
    %v1401 = vpack.c.b16 %v1356, %v1353
    %v1402 = vpack.c.b16 %v1357, %v1354
    %v1403 = vpack.c.b16 %v1361, %v1358
    %v1404 = vpack.c.b16 %v1362, %v1359
    %v1405 = vpack.c.b16 %v1363, %v1360
    %v1406 = vpack.c.b16 %v1367, %v1364
    %v1407 = vpack.c.b16 %v1368, %v1365
    %v1408 = vpack.c.b16 %v1369, %v1366
    %v1409 = vpack.c.b16 %v1370, %v1370
    %v1410 = vpack.c.b16 %v1371, %v1371
    %v1411 = vpack.c.b16 %v1372, %v1372
    %v1448 = vsel %vm451, %v1246, 0
    %v1451 = vsel %vm454, %v1409, 0
    %v1454 = vsel %vm454, %v1410, 0
    %v1457 = vsel %vm454, %v1411, 0
    %1459 = vmatpush.bf16.msra.mxu0 %v1394
    %1460 = vmatpush.bf16.msra.mxu0 %v1391
    %1461 = vmatpush.bf16.msra.mxu0 %v1388
    %1462 = vmatpush.bf16.msra.mxu0 %v1385
    %1463 = vmatpush.bf16.msra.mxu0 %v1382
    %1464 = vmatpush.bf16.msra.mxu0 %v1379
    %1465 = vmatpush.bf16.msra.mxu0 %v1376
    %1466 = vmatpush.bf16.msra.mxu0 %v1373
    %1467 = vmatmul.bf16.gmra.mxu0 %v1245
    %v1468 = vpop.f32.mrf.mxu0
    %v1469 = vadd.f32 0.0, %v1468
    %v1470 = vpop.f32.mrf.mxu0
    %1471 = vdwg.mxu0
    %1472 = vmatpush.bf16.msra.mxu0 0
    %1473 = vmatpush.bf16.msra.mxu0 0
    %1474 = vmatpush.bf16.msra.mxu0 0
    %1475 = vmatpush.bf16.msra.mxu0 %v1451
    %1476 = vmatpush.bf16.msra.mxu0 %v1406
    %1477 = vmatpush.bf16.msra.mxu0 %v1403
    %1478 = vmatpush.bf16.msra.mxu0 %v1400
    %1479 = vmatpush.bf16.msra.mxu0 %v1397
    %1480 = vmatmul.bf16.gmra.mxu0 %v1448
    %v1481 = vpop.f32.mrf.mxu0
    %v1482 = vadd.f32 %v1469, %v1481
    %v1483 = vpop.f32.mrf.mxu0
    %1484 = vdwg.mxu0
    %1485 = vmatpush.bf16.msra.mxu0 %v1395
    %1486 = vmatpush.bf16.msra.mxu0 %v1392
    %1487 = vmatpush.bf16.msra.mxu0 %v1389
    %1488 = vmatpush.bf16.msra.mxu0 %v1386
    %1489 = vmatpush.bf16.msra.mxu0 %v1383
    %1490 = vmatpush.bf16.msra.mxu0 %v1380
    %1491 = vmatpush.bf16.msra.mxu0 %v1377
    %1492 = vmatpush.bf16.msra.mxu0 %v1374
    %1493 = vmatmul.bf16.gmra.mxu0 %v1245
    %v1494 = vpop.f32.mrf.mxu0
    %v1495 = vadd.f32 0.0, %v1494
    %v1496 = vpop.f32.mrf.mxu0
    %1497 = vdwg.mxu0
    %1498 = vmatpush.bf16.msra.mxu0 0
    %1499 = vmatpush.bf16.msra.mxu0 0
    %1500 = vmatpush.bf16.msra.mxu0 0
    %1501 = vmatpush.bf16.msra.mxu0 %v1454
    %1502 = vmatpush.bf16.msra.mxu0 %v1407
    %1503 = vmatpush.bf16.msra.mxu0 %v1404
    %1504 = vmatpush.bf16.msra.mxu0 %v1401
    %1505 = vmatpush.bf16.msra.mxu0 %v1398
    %1506 = vmatmul.bf16.gmra.mxu0 %v1448
    %v1507 = vpop.f32.mrf.mxu0
    %v1508 = vadd.f32 %v1495, %v1507
    %v1509 = vpop.f32.mrf.mxu0
    %1510 = vdwg.mxu0
    %1511 = vmatpush.bf16.msra.mxu0 %v1396
    %1512 = vmatpush.bf16.msra.mxu0 %v1393
    %1513 = vmatpush.bf16.msra.mxu0 %v1390
    %1514 = vmatpush.bf16.msra.mxu0 %v1387
    %1515 = vmatpush.bf16.msra.mxu0 %v1384
    %1516 = vmatpush.bf16.msra.mxu0 %v1381
    %1517 = vmatpush.bf16.msra.mxu0 %v1378
    %1518 = vmatpush.bf16.msra.mxu0 %v1375
    %1519 = vmatmul.bf16.gmra.mxu0 %v1245
    %v1520 = vpop.f32.mrf.mxu0
    %v1521 = vadd.f32 0.0, %v1520
    %v1522 = vpop.f32.mrf.mxu0
    %1523 = vdwg.mxu0
    %1524 = vmatpush.bf16.msra.mxu0 0
    %1525 = vmatpush.bf16.msra.mxu0 0
    %1526 = vmatpush.bf16.msra.mxu0 0
    %1527 = vmatpush.bf16.msra.mxu0 %v1457
    %1528 = vmatpush.bf16.msra.mxu0 %v1408
    %1529 = vmatpush.bf16.msra.mxu0 %v1405
    %1530 = vmatpush.bf16.msra.mxu0 %v1402
    %1531 = vmatpush.bf16.msra.mxu0 %v1399
    %1532 = vmatmul.bf16.gmra.mxu0 %v1448
    %v1533 = vpop.f32.mrf.mxu0
    %v1534 = vadd.f32 %v1521, %v1533
    %v1535 = vpop.f32.mrf.mxu0
    %1536 = vdwg.mxu0
    %v1537 = vadd.f32 %v1185, %v1482
    %v1538 = vadd.f32 %v1186, %v1508
    %v1539 = vadd.f32 %v1187, %v1534
    %vm1540 = vcmp.ge.f32.partialorder %v1537, 0.0
    %vm1541 = vcmp.ge.f32.partialorder %v1538, 0.0
    %vm1542 = vcmp.ge.f32.partialorder %v1539, 0.0
    %v1543 = vmul.f32 %v1537, 0.2
    %v1544 = vmul.f32 %v1538, 0.2
    %v1545 = vmul.f32 %v1539, 0.2
    %v1546 = vsel %vm1540, %v1537, %v1543
    %v1547 = vsel %vm1541, %v1538, %v1544
    %v1548 = vsel %vm1542, %v1539, %v1545
    %v1549 = vpack.c.bf16 %v1547, %v1546
    %v1550 = vpack.c.bf16 %v1548, %v1548
    %s1551 = sadd.s32 %s132, 1
    %v1554 = vrot.slane %v1549, 3
    %v1555 = vrot.slane %v1550, 6
    %v1556 = vrot.slane %v1550, 1
    %v1559 = vsel %vm60, %v1549, %v1554
    %vm1560 = vcmask 1042434
    %v1563 = vsel %vm1560, %v1555, %v1556
    %vm1564 = vcmask 1041408
    %v1565 = vsel %vm1564, %v1559, %v1563
    %s1567 = smul.u32 %s1551, 3
    %s1568 = scalar_lea.vmem [#allocation2], %s1567
    %1569 = vst.msk [vmem:[%s1568] sm:$0x7] %vm64, %v1565
  $region78: #{discriminator_forward.1} parent=0 // loop_footer
    %s136 = sadd.s32 1, %s132
  $region79: #{discriminator_forward.1} parent=0 // loop_footer_branch
    %131 = sbr.rel target = $region75
  $region80: #{discriminator_forward.1} parent=0 // loop_exit
    _
  loop: start=0, step=1, limit=16
  $region81: #{discriminator_forward.1} parent=0 // loop_pre_header
    _
  $region82: #{discriminator_forward.1} parent=0 // loop_header
    %s1571 = sphi 0, %s1575
    %p1572 = scmp.ge.s32.totalorder %s1571, 16
    %v1576 = vphi 0.0, %v3490
    %v1577 = vphi 0.0, %v3491
    %v1578 = vphi 0.0, %v3492
    %v1579 = vphi 0.0, %v3496
    %v1580 = vphi 0.0, %v3497
    %v1581 = vphi 0.0, %v3498
  $region83: #{discriminator_forward.1} parent=0 // loop_header_branch
    %1574 = sbr.rel (%p1572) target = $region87
  $region84: #{discriminator_forward.1} parent=0 // loop_body
    %s1582 = smul.u32 %s1571, 2
    %s1583 = smul.u32 %s1582, 3
    %s1584 = scalar_lea.vmem [#allocation2], %s1583
    %v1585 = vld [vmem:[%s1584] sm:$0x7]
    %v1586 = vld [vmem:[%s2] sm:$0xff]
    %v1587 = vld [vmem:[%s2 + $0x8] sm:$0xf]
    %v1588 = vld [vmem:[%s2 + $0xc] sm:$0xff]
    %v1589 = vld [vmem:[%s2 + $0x14] sm:$0xf]
    %v1590 = vld [vmem:[%s2 + $0x18] sm:$0xff]
    %v1591 = vld [vmem:[%s2 + $0x20] sm:$0xf]
    %v1592 = vld [vmem:[%s2 + $0x24] sm:$0xff]
    %v1593 = vld [vmem:[%s2 + $0x2c] sm:$0xf]
    %v1594 = vld [vmem:[%s2 + $0x30] sm:$0xff]
    %v1595 = vld [vmem:[%s2 + $0x38] sm:$0xf]
    %v1596 = vld [vmem:[%s2 + $0x3c] sm:$0xff]
    %v1597 = vld [vmem:[%s2 + $0x44] sm:$0xf]
    %v1598 = vld [vmem:[%s2 + $0x48] sm:$0xff]
    %v1599 = vld [vmem:[%s2 + $0x50] sm:$0xf]
    %v1600 = vld [vmem:[%s2 + $0x54] sm:$0xff]
    %v1601 = vld [vmem:[%s2 + $0x5c] sm:$0xf]
    %v1602 = vld [vmem:[%s2 + $0x60] sm:$0xff]
    %v1603 = vld [vmem:[%s2 + $0x68] sm:$0xf]
    %v1604 = vld [vmem:[%s2 + $0x6c] sm:$0xff]
    %v1605 = vld [vmem:[%s2 + $0x74] sm:$0xf]
    %v1606 = vld [vmem:[%s2 + $0x78] sm:$0xff]
    %v1607 = vld [vmem:[%s2 + $0x80] sm:$0xf]
    %v1608 = vld [vmem:[%s2 + $0x84] sm:$0xff]
    %v1609 = vld [vmem:[%s2 + $0x8c] sm:$0xf]
    %v1610 = vld [vmem:[%s2 + $0x90] sm:$0xff]
    %v1611 = vld [vmem:[%s2 + $0x98] sm:$0xf]
    %v1612 = vld [vmem:[%s2 + $0x9c] sm:$0xff]
    %v1613 = vld [vmem:[%s2 + $0xa4] sm:$0xf]
    %v1614 = vld [vmem:[%s2 + $0xa8] sm:$0xff]
    %v1615 = vld [vmem:[%s2 + $0xb0] sm:$0xf]
    %v1616 = vld [vmem:[%s2 + $0xb4] sm:$0xff]
    %v1617 = vld [vmem:[%s2 + $0xbc] sm:$0xf]
    %v1618 = vld [vmem:[%s2 + $0xc0] sm:$0xff]
    %v1619 = vld [vmem:[%s2 + $0xc8] sm:$0xf]
    %v1620 = vld [vmem:[%s2 + $0xcc] sm:$0xff]
    %v1621 = vld [vmem:[%s2 + $0xd4] sm:$0xf]
    %v1622 = vld [vmem:[%s2 + $0xd8] sm:$0xff]
    %v1623 = vld [vmem:[%s2 + $0xe0] sm:$0xf]
    %v1624 = vld [vmem:[%s2 + $0xe4] sm:$0xff]
    %v1625 = vld [vmem:[%s2 + $0xec] sm:$0xf]
    %v1626 = vld [vmem:[%s2 + $0xf0] sm:$0xff]
    %v1627 = vld [vmem:[%s2 + $0xf8] sm:$0xf]
    %v1628 = vld [vmem:[%s2 + $0xfc] sm:$0xff]
    %v1629 = vld [vmem:[%s2 + $0x104] sm:$0xf]
    %v1630 = vld [vmem:[%s2 + $0x108] sm:$0xff]
    %v1631 = vld [vmem:[%s2 + $0x110] sm:$0xf]
    %v1632 = vld [vmem:[%s2 + $0x114] sm:$0xff]
    %v1633 = vld [vmem:[%s2 + $0x11c] sm:$0xf]
    %v1634 = vld [vmem:[%s2 + $0x120] sm:$0xff]
    %v1635 = vld [vmem:[%s2 + $0x128] sm:$0xf]
    %v1636 = vld [vmem:[%s2 + $0x12c] sm:$0xff]
    %v1637 = vld [vmem:[%s2 + $0x134] sm:$0xf]
    %v1638 = vld [vmem:[%s2 + $0x138] sm:$0xff]
    %v1639 = vld [vmem:[%s2 + $0x140] sm:$0xf]
    %v1640 = vld [vmem:[%s2 + $0x144] sm:$0xff]
    %v1641 = vld [vmem:[%s2 + $0x14c] sm:$0xf]
    %v1642 = vld [vmem:[%s2 + $0x150] sm:$0xff]
    %v1643 = vld [vmem:[%s2 + $0x158] sm:$0xf]
    %v1644 = vld [vmem:[%s2 + $0x15c] sm:$0xff]
    %v1645 = vld [vmem:[%s2 + $0x164] sm:$0xf]
    %v1646 = vld [vmem:[%s2 + $0x168] sm:$0xff]
    %v1647 = vld [vmem:[%s2 + $0x170] sm:$0xf]
    %v1648 = vld [vmem:[%s2 + $0x174] sm:$0xff]
    %v1649 = vld [vmem:[%s2 + $0x17c] sm:$0xf]
    %v1650 = vld [vmem:[%s2 + $0x180] sm:$0xff]
    %v1651 = vld [vmem:[%s2 + $0x188] sm:$0xf]
    %v1652 = vld [vmem:[%s2 + $0x18c] sm:$0xff]
    %v1653 = vld [vmem:[%s2 + $0x194] sm:$0xf]
    %s1654 = sadd.s32 %s1582, 1
    %s1655 = smul.u32 %s1654, 3
    %s1656 = scalar_lea.vmem [#allocation2], %s1655
    %v1657 = vld [vmem:[%s1656] sm:$0x7]
    %s1658 = scalar_lea.vmem %s2, 408
    %v1659 = vld [vmem:[%s1658] sm:$0xff]
    %v1660 = vld [vmem:[%s1658 + $0x8] sm:$0xf]
    %v1661 = vld [vmem:[%s1658 + $0xc] sm:$0xff]
    %v1662 = vld [vmem:[%s1658 + $0x14] sm:$0xf]
    %v1663 = vld [vmem:[%s1658 + $0x18] sm:$0xff]
    %v1664 = vld [vmem:[%s1658 + $0x20] sm:$0xf]
    %v1665 = vld [vmem:[%s1658 + $0x24] sm:$0xff]
    %v1666 = vld [vmem:[%s1658 + $0x2c] sm:$0xf]
    %v1667 = vld [vmem:[%s1658 + $0x30] sm:$0xff]
    %v1668 = vld [vmem:[%s1658 + $0x38] sm:$0xf]
    %v1669 = vld [vmem:[%s1658 + $0x3c] sm:$0xff]
    %v1670 = vld [vmem:[%s1658 + $0x44] sm:$0xf]
    %v1671 = vld [vmem:[%s1658 + $0x48] sm:$0xff]
    %v1672 = vld [vmem:[%s1658 + $0x50] sm:$0xf]
    %v1673 = vld [vmem:[%s1658 + $0x54] sm:$0xff]
    %v1674 = vld [vmem:[%s1658 + $0x5c] sm:$0xf]
    %v1675 = vld [vmem:[%s1658 + $0x60] sm:$0xff]
    %v1676 = vld [vmem:[%s1658 + $0x68] sm:$0xf]
    %v1677 = vld [vmem:[%s1658 + $0x6c] sm:$0xff]
    %v1678 = vld [vmem:[%s1658 + $0x74] sm:$0xf]
    %v1679 = vld [vmem:[%s1658 + $0x78] sm:$0xff]
    %v1680 = vld [vmem:[%s1658 + $0x80] sm:$0xf]
    %v1681 = vld [vmem:[%s1658 + $0x84] sm:$0xff]
    %v1682 = vld [vmem:[%s1658 + $0x8c] sm:$0xf]
    %v1683 = vld [vmem:[%s1658 + $0x90] sm:$0xff]
    %v1684 = vld [vmem:[%s1658 + $0x98] sm:$0xf]
    %v1685 = vld [vmem:[%s1658 + $0x9c] sm:$0xff]
    %v1686 = vld [vmem:[%s1658 + $0xa4] sm:$0xf]
    %v1687 = vld [vmem:[%s1658 + $0xa8] sm:$0xff]
    %v1688 = vld [vmem:[%s1658 + $0xb0] sm:$0xf]
    %v1689 = vld [vmem:[%s1658 + $0xb4] sm:$0xff]
    %v1690 = vld [vmem:[%s1658 + $0xbc] sm:$0xf]
    %v1691 = vld [vmem:[%s1658 + $0xc0] sm:$0xff]
    %v1692 = vld [vmem:[%s1658 + $0xc8] sm:$0xf]
    %v1693 = vld [vmem:[%s1658 + $0xcc] sm:$0xff]
    %v1694 = vld [vmem:[%s1658 + $0xd4] sm:$0xf]
    %v1695 = vld [vmem:[%s1658 + $0xd8] sm:$0xff]
    %v1696 = vld [vmem:[%s1658 + $0xe0] sm:$0xf]
    %v1697 = vld [vmem:[%s1658 + $0xe4] sm:$0xff]
    %v1698 = vld [vmem:[%s1658 + $0xec] sm:$0xf]
    %v1699 = vld [vmem:[%s1658 + $0xf0] sm:$0xff]
    %v1700 = vld [vmem:[%s1658 + $0xf8] sm:$0xf]
    %v1701 = vld [vmem:[%s1658 + $0xfc] sm:$0xff]
    %v1702 = vld [vmem:[%s1658 + $0x104] sm:$0xf]
    %v1703 = vld [vmem:[%s1658 + $0x108] sm:$0xff]
    %v1704 = vld [vmem:[%s1658 + $0x110] sm:$0xf]
    %v1705 = vld [vmem:[%s1658 + $0x114] sm:$0xff]
    %v1706 = vld [vmem:[%s1658 + $0x11c] sm:$0xf]
    %v1707 = vld [vmem:[%s1658 + $0x120] sm:$0xff]
    %v1708 = vld [vmem:[%s1658 + $0x128] sm:$0xf]
    %v1709 = vld [vmem:[%s1658 + $0x12c] sm:$0xff]
    %v1710 = vld [vmem:[%s1658 + $0x134] sm:$0xf]
    %v1711 = vld [vmem:[%s1658 + $0x138] sm:$0xff]
    %v1712 = vld [vmem:[%s1658 + $0x140] sm:$0xf]
    %v1713 = vld [vmem:[%s1658 + $0x144] sm:$0xff]
    %v1714 = vld [vmem:[%s1658 + $0x14c] sm:$0xf]
    %v1715 = vld [vmem:[%s1658 + $0x150] sm:$0xff]
    %v1716 = vld [vmem:[%s1658 + $0x158] sm:$0xf]
    %v1717 = vld [vmem:[%s1658 + $0x15c] sm:$0xff]
    %v1718 = vld [vmem:[%s1658 + $0x164] sm:$0xf]
    %v1719 = vld [vmem:[%s1658 + $0x168] sm:$0xff]
    %v1720 = vld [vmem:[%s1658 + $0x170] sm:$0xf]
    %v1721 = vld [vmem:[%s1658 + $0x174] sm:$0xff]
    %v1722 = vld [vmem:[%s1658 + $0x17c] sm:$0xf]
    %v1723 = vld [vmem:[%s1658 + $0x180] sm:$0xff]
    %v1724 = vld [vmem:[%s1658 + $0x188] sm:$0xf]
    %v1725 = vld [vmem:[%s1658 + $0x18c] sm:$0xff]
    %v1726 = vld [vmem:[%s1658 + $0x194] sm:$0xf]
    %1728 = vst [vmem:[#allocation1] ss:$9 sm:$0xff] %v1657
    %v1729 = vld [vmem:[#allocation1] sm:$0xff]
    %v1730 = vld [vmem:[#allocation1 + $0x9] sm:$0xff]
    %v1731 = vld [vmem:[#allocation1 + $0x12] sm:$0xff]
    %v1802 = vunpack.c.l.b16 %v1659
    %v1803 = vunpack.c.h.b16 %v1659
    %v1804 = vunpack.c.l.b16 %v1660
    %v1805 = vunpack.c.l.b16 %v1661
    %v1806 = vunpack.c.h.b16 %v1661
    %v1807 = vunpack.c.l.b16 %v1662
    %v1808 = vunpack.c.l.b16 %v1663
    %v1809 = vunpack.c.h.b16 %v1663
    %v1810 = vunpack.c.l.b16 %v1664
    %v1811 = vunpack.c.l.b16 %v1665
    %v1812 = vunpack.c.h.b16 %v1665
    %v1813 = vunpack.c.l.b16 %v1666
    %v1814 = vunpack.c.l.b16 %v1667
    %v1815 = vunpack.c.h.b16 %v1667
    %v1816 = vunpack.c.l.b16 %v1668
    %v1817 = vunpack.c.l.b16 %v1669
    %v1818 = vunpack.c.h.b16 %v1669
    %v1819 = vunpack.c.l.b16 %v1670
    %v1820 = vunpack.c.l.b16 %v1671
    %v1821 = vunpack.c.h.b16 %v1671
    %v1822 = vunpack.c.l.b16 %v1672
    %v1823 = vunpack.c.l.b16 %v1673
    %v1824 = vunpack.c.h.b16 %v1673
    %v1825 = vunpack.c.l.b16 %v1674
    %v1826 = vunpack.c.l.b16 %v1675
    %v1827 = vunpack.c.h.b16 %v1675
    %v1828 = vunpack.c.l.b16 %v1676
    %v1829 = vunpack.c.l.b16 %v1677
    %v1830 = vunpack.c.h.b16 %v1677
    %v1831 = vunpack.c.l.b16 %v1678
    %v1832 = vunpack.c.l.b16 %v1679
    %v1833 = vunpack.c.h.b16 %v1679
    %v1834 = vunpack.c.l.b16 %v1680
    %v1835 = vunpack.c.l.b16 %v1681
    %v1836 = vunpack.c.h.b16 %v1681
    %v1837 = vunpack.c.l.b16 %v1682
    %v1838 = vunpack.c.l.b16 %v1683
    %v1839 = vunpack.c.h.b16 %v1683
    %v1840 = vunpack.c.l.b16 %v1684
    %v1841 = vunpack.c.l.b16 %v1685
    %v1842 = vunpack.c.h.b16 %v1685
    %v1843 = vunpack.c.l.b16 %v1686
    %v1844 = vunpack.c.l.b16 %v1687
    %v1845 = vunpack.c.h.b16 %v1687
    %v1846 = vunpack.c.l.b16 %v1688
    %v1847 = vunpack.c.l.b16 %v1689
    %v1848 = vunpack.c.h.b16 %v1689
    %v1849 = vunpack.c.l.b16 %v1690
    %v1850 = vunpack.c.l.b16 %v1691
    %v1851 = vunpack.c.h.b16 %v1691
    %v1852 = vunpack.c.l.b16 %v1692
    %v1853 = vunpack.c.l.b16 %v1693
    %v1854 = vunpack.c.h.b16 %v1693
    %v1855 = vunpack.c.l.b16 %v1694
    %v1856 = vunpack.c.l.b16 %v1695
    %v1857 = vunpack.c.h.b16 %v1695
    %v1858 = vunpack.c.l.b16 %v1696
    %v1859 = vunpack.c.l.b16 %v1697
    %v1860 = vunpack.c.h.b16 %v1697
    %v1861 = vunpack.c.l.b16 %v1698
    %v1862 = vunpack.c.l.b16 %v1699
    %v1863 = vunpack.c.h.b16 %v1699
    %v1864 = vunpack.c.l.b16 %v1700
    %v1865 = vunpack.c.l.b16 %v1701
    %v1866 = vunpack.c.h.b16 %v1701
    %v1867 = vunpack.c.l.b16 %v1702
    %v1868 = vunpack.c.l.b16 %v1703
    %v1869 = vunpack.c.h.b16 %v1703
    %v1870 = vunpack.c.l.b16 %v1704
    %v1871 = vunpack.c.l.b16 %v1705
    %v1872 = vunpack.c.h.b16 %v1705
    %v1873 = vunpack.c.l.b16 %v1706
    %v1874 = vunpack.c.l.b16 %v1707
    %v1875 = vunpack.c.h.b16 %v1707
    %v1876 = vunpack.c.l.b16 %v1708
    %v1877 = vunpack.c.l.b16 %v1709
    %v1878 = vunpack.c.h.b16 %v1709
    %v1879 = vunpack.c.l.b16 %v1710
    %v1880 = vunpack.c.l.b16 %v1711
    %v1881 = vunpack.c.h.b16 %v1711
    %v1882 = vunpack.c.l.b16 %v1712
    %v1883 = vunpack.c.l.b16 %v1713
    %v1884 = vunpack.c.h.b16 %v1713
    %v1885 = vunpack.c.l.b16 %v1714
    %v1886 = vunpack.c.l.b16 %v1715
    %v1887 = vunpack.c.h.b16 %v1715
    %v1888 = vunpack.c.l.b16 %v1716
    %v1889 = vunpack.c.l.b16 %v1717
    %v1890 = vunpack.c.h.b16 %v1717
    %v1891 = vunpack.c.l.b16 %v1718
    %v1892 = vunpack.c.l.b16 %v1719
    %v1893 = vunpack.c.h.b16 %v1719
    %v1894 = vunpack.c.l.b16 %v1720
    %v1895 = vunpack.c.l.b16 %v1721
    %v1896 = vunpack.c.h.b16 %v1721
    %v1897 = vunpack.c.l.b16 %v1722
    %v1898 = vunpack.c.l.b16 %v1723
    %v1899 = vunpack.c.h.b16 %v1723
    %v1900 = vunpack.c.l.b16 %v1724
    %v1901 = vunpack.c.l.b16 %v1725
    %v1902 = vunpack.c.h.b16 %v1725
    %v1903 = vunpack.c.l.b16 %v1726
    %v1904 = vpack.c.b16 %v1805, %v1802
    %v1905 = vpack.c.b16 %v1806, %v1803
    %v1906 = vpack.c.b16 %v1807, %v1804
    %v1907 = vpack.c.b16 %v1811, %v1808
    %v1908 = vpack.c.b16 %v1812, %v1809
    %v1909 = vpack.c.b16 %v1813, %v1810
    %v1910 = vpack.c.b16 %v1817, %v1814
    %v1911 = vpack.c.b16 %v1818, %v1815
    %v1912 = vpack.c.b16 %v1819, %v1816
    %v1913 = vpack.c.b16 %v1823, %v1820
    %v1914 = vpack.c.b16 %v1824, %v1821
    %v1915 = vpack.c.b16 %v1825, %v1822
    %v1916 = vpack.c.b16 %v1829, %v1826
    %v1917 = vpack.c.b16 %v1830, %v1827
    %v1918 = vpack.c.b16 %v1831, %v1828
    %v1919 = vpack.c.b16 %v1835, %v1832
    %v1920 = vpack.c.b16 %v1836, %v1833
    %v1921 = vpack.c.b16 %v1837, %v1834
    %v1922 = vpack.c.b16 %v1841, %v1838
    %v1923 = vpack.c.b16 %v1842, %v1839
    %v1924 = vpack.c.b16 %v1843, %v1840
    %v1925 = vpack.c.b16 %v1847, %v1844
    %v1926 = vpack.c.b16 %v1848, %v1845
    %v1927 = vpack.c.b16 %v1849, %v1846
    %v1928 = vpack.c.b16 %v1853, %v1850
    %v1929 = vpack.c.b16 %v1854, %v1851
    %v1930 = vpack.c.b16 %v1855, %v1852
    %v1931 = vpack.c.b16 %v1859, %v1856
    %v1932 = vpack.c.b16 %v1860, %v1857
    %v1933 = vpack.c.b16 %v1861, %v1858
    %v1934 = vpack.c.b16 %v1865, %v1862
    %v1935 = vpack.c.b16 %v1866, %v1863
    %v1936 = vpack.c.b16 %v1867, %v1864
    %v1937 = vpack.c.b16 %v1871, %v1868
    %v1938 = vpack.c.b16 %v1872, %v1869
    %v1939 = vpack.c.b16 %v1873, %v1870
    %v1940 = vpack.c.b16 %v1877, %v1874
    %v1941 = vpack.c.b16 %v1878, %v1875
    %v1942 = vpack.c.b16 %v1879, %v1876
    %v1943 = vpack.c.b16 %v1883, %v1880
    %v1944 = vpack.c.b16 %v1884, %v1881
    %v1945 = vpack.c.b16 %v1885, %v1882
    %v1946 = vpack.c.b16 %v1889, %v1886
    %v1947 = vpack.c.b16 %v1890, %v1887
    %v1948 = vpack.c.b16 %v1891, %v1888
    %v1949 = vpack.c.b16 %v1895, %v1892
    %v1950 = vpack.c.b16 %v1896, %v1893
    %v1951 = vpack.c.b16 %v1897, %v1894
    %v1952 = vpack.c.b16 %v1901, %v1898
    %v1953 = vpack.c.b16 %v1902, %v1899
    %v1954 = vpack.c.b16 %v1903, %v1900
    %vm2006 = vcmask 130048
    %v2007 = vsel %vm2006, %v1731, 0
    %2009 = vmatpush.bf16.msra.mxu0 %v1925
    %2010 = vmatpush.bf16.msra.mxu0 %v1922
    %2011 = vmatpush.bf16.msra.mxu0 %v1919
    %2012 = vmatpush.bf16.msra.mxu0 %v1916
    %2013 = vmatpush.bf16.msra.mxu0 %v1913
    %2014 = vmatpush.bf16.msra.mxu0 %v1910
    %2015 = vmatpush.bf16.msra.mxu0 %v1907
    %2016 = vmatpush.bf16.msra.mxu0 %v1904
    %2017 = vmatmul.bf16.gmra.mxu0 %v1729
    %v2018 = vpop.f32.mrf.mxu0
    %v2019 = vadd.f32 0.0, %v2018
    %v2020 = vpop.f32.mrf.mxu0
    %2021 = vdwg.mxu0
    %2022 = vmatpush.bf16.msra.mxu0 %v1949
    %2023 = vmatpush.bf16.msra.mxu0 %v1946
    %2024 = vmatpush.bf16.msra.mxu0 %v1943
    %2025 = vmatpush.bf16.msra.mxu0 %v1940
    %2026 = vmatpush.bf16.msra.mxu0 %v1937
    %2027 = vmatpush.bf16.msra.mxu0 %v1934
    %2028 = vmatpush.bf16.msra.mxu0 %v1931
    %2029 = vmatpush.bf16.msra.mxu0 %v1928
    %2030 = vmatmul.bf16.gmra.mxu0 %v1730
    %v2031 = vpop.f32.mrf.mxu0
    %v2032 = vadd.f32 %v2019, %v2031
    %v2033 = vpop.f32.mrf.mxu0
    %2034 = vdwg.mxu0
    %2035 = vmatpush.bf16.msra.mxu0 0
    %2036 = vmatpush.bf16.msra.mxu0 0
    %2037 = vmatpush.bf16.msra.mxu0 0
    %2038 = vmatpush.bf16.msra.mxu0 0
    %2039 = vmatpush.bf16.msra.mxu0 0
    %2040 = vmatpush.bf16.msra.mxu0 0
    %2041 = vmatpush.bf16.msra.mxu0 0
    %2042 = vmatpush.bf16.msra.mxu0 %v1952
    %2043 = vmatmul.bf16.gmra.mxu0 %v2007
    %v2044 = vpop.f32.mrf.mxu0
    %v2045 = vadd.f32 %v2032, %v2044
    %v2046 = vpop.f32.mrf.mxu0
    %2047 = vdwg.mxu0
    %2048 = vmatpush.bf16.msra.mxu0 %v1926
    %2049 = vmatpush.bf16.msra.mxu0 %v1923
    %2050 = vmatpush.bf16.msra.mxu0 %v1920
    %2051 = vmatpush.bf16.msra.mxu0 %v1917
    %2052 = vmatpush.bf16.msra.mxu0 %v1914
    %2053 = vmatpush.bf16.msra.mxu0 %v1911
    %2054 = vmatpush.bf16.msra.mxu0 %v1908
    %2055 = vmatpush.bf16.msra.mxu0 %v1905
    %2056 = vmatmul.bf16.gmra.mxu0 %v1729
    %v2057 = vpop.f32.mrf.mxu0
    %v2058 = vadd.f32 0.0, %v2057
    %v2059 = vpop.f32.mrf.mxu0
    %2060 = vdwg.mxu0
    %2061 = vmatpush.bf16.msra.mxu0 %v1950
    %2062 = vmatpush.bf16.msra.mxu0 %v1947
    %2063 = vmatpush.bf16.msra.mxu0 %v1944
    %2064 = vmatpush.bf16.msra.mxu0 %v1941
    %2065 = vmatpush.bf16.msra.mxu0 %v1938
    %2066 = vmatpush.bf16.msra.mxu0 %v1935
    %2067 = vmatpush.bf16.msra.mxu0 %v1932
    %2068 = vmatpush.bf16.msra.mxu0 %v1929
    %2069 = vmatmul.bf16.gmra.mxu0 %v1730
    %v2070 = vpop.f32.mrf.mxu0
    %v2071 = vadd.f32 %v2058, %v2070
    %v2072 = vpop.f32.mrf.mxu0
    %2073 = vdwg.mxu0
    %2074 = vmatpush.bf16.msra.mxu0 0
    %2075 = vmatpush.bf16.msra.mxu0 0
    %2076 = vmatpush.bf16.msra.mxu0 0
    %2077 = vmatpush.bf16.msra.mxu0 0
    %2078 = vmatpush.bf16.msra.mxu0 0
    %2079 = vmatpush.bf16.msra.mxu0 0
    %2080 = vmatpush.bf16.msra.mxu0 0
    %2081 = vmatpush.bf16.msra.mxu0 %v1953
    %2082 = vmatmul.bf16.gmra.mxu0 %v2007
    %v2083 = vpop.f32.mrf.mxu0
    %v2084 = vadd.f32 %v2071, %v2083
    %v2085 = vpop.f32.mrf.mxu0
    %2086 = vdwg.mxu0
    %2087 = vmatpush.bf16.msra.mxu0 %v1927
    %2088 = vmatpush.bf16.msra.mxu0 %v1924
    %2089 = vmatpush.bf16.msra.mxu0 %v1921
    %2090 = vmatpush.bf16.msra.mxu0 %v1918
    %2091 = vmatpush.bf16.msra.mxu0 %v1915
    %2092 = vmatpush.bf16.msra.mxu0 %v1912
    %2093 = vmatpush.bf16.msra.mxu0 %v1909
    %2094 = vmatpush.bf16.msra.mxu0 %v1906
    %2095 = vmatmul.bf16.gmra.mxu0 %v1729
    %v2096 = vpop.f32.mrf.mxu0
    %v2097 = vadd.f32 0.0, %v2096
    %v2098 = vpop.f32.mrf.mxu0
    %2099 = vdwg.mxu0
    %2100 = vmatpush.bf16.msra.mxu0 %v1951
    %2101 = vmatpush.bf16.msra.mxu0 %v1948
    %2102 = vmatpush.bf16.msra.mxu0 %v1945
    %2103 = vmatpush.bf16.msra.mxu0 %v1942
    %2104 = vmatpush.bf16.msra.mxu0 %v1939
    %2105 = vmatpush.bf16.msra.mxu0 %v1936
    %2106 = vmatpush.bf16.msra.mxu0 %v1933
    %2107 = vmatpush.bf16.msra.mxu0 %v1930
    %2108 = vmatmul.bf16.gmra.mxu0 %v1730
    %v2109 = vpop.f32.mrf.mxu0
    %v2110 = vadd.f32 %v2097, %v2109
    %v2111 = vpop.f32.mrf.mxu0
    %2112 = vdwg.mxu0
    %2113 = vmatpush.bf16.msra.mxu0 0
    %2114 = vmatpush.bf16.msra.mxu0 0
    %2115 = vmatpush.bf16.msra.mxu0 0
    %2116 = vmatpush.bf16.msra.mxu0 0
    %2117 = vmatpush.bf16.msra.mxu0 0
    %2118 = vmatpush.bf16.msra.mxu0 0
    %2119 = vmatpush.bf16.msra.mxu0 0
    %2120 = vmatpush.bf16.msra.mxu0 %v1954
    %2121 = vmatmul.bf16.gmra.mxu0 %v2007
    %v2122 = vpop.f32.mrf.mxu0
    %v2123 = vadd.f32 %v2110, %v2122
    %v2124 = vpop.f32.mrf.mxu0
    %2125 = vdwg.mxu0
    %2127 = vst [vmem:[#allocation1] ss:$9 sm:$0xff] %v1585
    %v2128 = vld [vmem:[#allocation1] sm:$0xff]
    %v2129 = vld [vmem:[#allocation1 + $0x9] sm:$0xff]
    %v2130 = vld [vmem:[#allocation1 + $0x12] sm:$0xff]
    %v2201 = vunpack.c.l.b16 %v1586
    %v2202 = vunpack.c.h.b16 %v1586
    %v2203 = vunpack.c.l.b16 %v1587
    %v2204 = vunpack.c.l.b16 %v1588
    %v2205 = vunpack.c.h.b16 %v1588
    %v2206 = vunpack.c.l.b16 %v1589
    %v2207 = vunpack.c.l.b16 %v1590
    %v2208 = vunpack.c.h.b16 %v1590
    %v2209 = vunpack.c.l.b16 %v1591
    %v2210 = vunpack.c.l.b16 %v1592
    %v2211 = vunpack.c.h.b16 %v1592
    %v2212 = vunpack.c.l.b16 %v1593
    %v2213 = vunpack.c.l.b16 %v1594
    %v2214 = vunpack.c.h.b16 %v1594
    %v2215 = vunpack.c.l.b16 %v1595
    %v2216 = vunpack.c.l.b16 %v1596
    %v2217 = vunpack.c.h.b16 %v1596
    %v2218 = vunpack.c.l.b16 %v1597
    %v2219 = vunpack.c.l.b16 %v1598
    %v2220 = vunpack.c.h.b16 %v1598
    %v2221 = vunpack.c.l.b16 %v1599
    %v2222 = vunpack.c.l.b16 %v1600
    %v2223 = vunpack.c.h.b16 %v1600
    %v2224 = vunpack.c.l.b16 %v1601
    %v2225 = vunpack.c.l.b16 %v1602
    %v2226 = vunpack.c.h.b16 %v1602
    %v2227 = vunpack.c.l.b16 %v1603
    %v2228 = vunpack.c.l.b16 %v1604
    %v2229 = vunpack.c.h.b16 %v1604
    %v2230 = vunpack.c.l.b16 %v1605
    %v2231 = vunpack.c.l.b16 %v1606
    %v2232 = vunpack.c.h.b16 %v1606
    %v2233 = vunpack.c.l.b16 %v1607
    %v2234 = vunpack.c.l.b16 %v1608
    %v2235 = vunpack.c.h.b16 %v1608
    %v2236 = vunpack.c.l.b16 %v1609
    %v2237 = vunpack.c.l.b16 %v1610
    %v2238 = vunpack.c.h.b16 %v1610
    %v2239 = vunpack.c.l.b16 %v1611
    %v2240 = vunpack.c.l.b16 %v1612
    %v2241 = vunpack.c.h.b16 %v1612
    %v2242 = vunpack.c.l.b16 %v1613
    %v2243 = vunpack.c.l.b16 %v1614
    %v2244 = vunpack.c.h.b16 %v1614
    %v2245 = vunpack.c.l.b16 %v1615
    %v2246 = vunpack.c.l.b16 %v1616
    %v2247 = vunpack.c.h.b16 %v1616
    %v2248 = vunpack.c.l.b16 %v1617
    %v2249 = vunpack.c.l.b16 %v1618
    %v2250 = vunpack.c.h.b16 %v1618
    %v2251 = vunpack.c.l.b16 %v1619
    %v2252 = vunpack.c.l.b16 %v1620
    %v2253 = vunpack.c.h.b16 %v1620
    %v2254 = vunpack.c.l.b16 %v1621
    %v2255 = vunpack.c.l.b16 %v1622
    %v2256 = vunpack.c.h.b16 %v1622
    %v2257 = vunpack.c.l.b16 %v1623
    %v2258 = vunpack.c.l.b16 %v1624
    %v2259 = vunpack.c.h.b16 %v1624
    %v2260 = vunpack.c.l.b16 %v1625
    %v2261 = vunpack.c.l.b16 %v1626
    %v2262 = vunpack.c.h.b16 %v1626
    %v2263 = vunpack.c.l.b16 %v1627
    %v2264 = vunpack.c.l.b16 %v1628
    %v2265 = vunpack.c.h.b16 %v1628
    %v2266 = vunpack.c.l.b16 %v1629
    %v2267 = vunpack.c.l.b16 %v1630
    %v2268 = vunpack.c.h.b16 %v1630
    %v2269 = vunpack.c.l.b16 %v1631
    %v2270 = vunpack.c.l.b16 %v1632
    %v2271 = vunpack.c.h.b16 %v1632
    %v2272 = vunpack.c.l.b16 %v1633
    %v2273 = vunpack.c.l.b16 %v1634
    %v2274 = vunpack.c.h.b16 %v1634
    %v2275 = vunpack.c.l.b16 %v1635
    %v2276 = vunpack.c.l.b16 %v1636
    %v2277 = vunpack.c.h.b16 %v1636
    %v2278 = vunpack.c.l.b16 %v1637
    %v2279 = vunpack.c.l.b16 %v1638
    %v2280 = vunpack.c.h.b16 %v1638
    %v2281 = vunpack.c.l.b16 %v1639
    %v2282 = vunpack.c.l.b16 %v1640
    %v2283 = vunpack.c.h.b16 %v1640
    %v2284 = vunpack.c.l.b16 %v1641
    %v2285 = vunpack.c.l.b16 %v1642
    %v2286 = vunpack.c.h.b16 %v1642
    %v2287 = vunpack.c.l.b16 %v1643
    %v2288 = vunpack.c.l.b16 %v1644
    %v2289 = vunpack.c.h.b16 %v1644
    %v2290 = vunpack.c.l.b16 %v1645
    %v2291 = vunpack.c.l.b16 %v1646
    %v2292 = vunpack.c.h.b16 %v1646
    %v2293 = vunpack.c.l.b16 %v1647
    %v2294 = vunpack.c.l.b16 %v1648
    %v2295 = vunpack.c.h.b16 %v1648
    %v2296 = vunpack.c.l.b16 %v1649
    %v2297 = vunpack.c.l.b16 %v1650
    %v2298 = vunpack.c.h.b16 %v1650
    %v2299 = vunpack.c.l.b16 %v1651
    %v2300 = vunpack.c.l.b16 %v1652
    %v2301 = vunpack.c.h.b16 %v1652
    %v2302 = vunpack.c.l.b16 %v1653
    %v2303 = vpack.c.b16 %v2204, %v2201
    %v2304 = vpack.c.b16 %v2205, %v2202
    %v2305 = vpack.c.b16 %v2206, %v2203
    %v2306 = vpack.c.b16 %v2210, %v2207
    %v2307 = vpack.c.b16 %v2211, %v2208
    %v2308 = vpack.c.b16 %v2212, %v2209
    %v2309 = vpack.c.b16 %v2216, %v2213
    %v2310 = vpack.c.b16 %v2217, %v2214
    %v2311 = vpack.c.b16 %v2218, %v2215
    %v2312 = vpack.c.b16 %v2222, %v2219
    %v2313 = vpack.c.b16 %v2223, %v2220
    %v2314 = vpack.c.b16 %v2224, %v2221
    %v2315 = vpack.c.b16 %v2228, %v2225
    %v2316 = vpack.c.b16 %v2229, %v2226
    %v2317 = vpack.c.b16 %v2230, %v2227
    %v2318 = vpack.c.b16 %v2234, %v2231
    %v2319 = vpack.c.b16 %v2235, %v2232
    %v2320 = vpack.c.b16 %v2236, %v2233
    %v2321 = vpack.c.b16 %v2240, %v2237
    %v2322 = vpack.c.b16 %v2241, %v2238
    %v2323 = vpack.c.b16 %v2242, %v2239
    %v2324 = vpack.c.b16 %v2246, %v2243
    %v2325 = vpack.c.b16 %v2247, %v2244
    %v2326 = vpack.c.b16 %v2248, %v2245
    %v2327 = vpack.c.b16 %v2252, %v2249
    %v2328 = vpack.c.b16 %v2253, %v2250
    %v2329 = vpack.c.b16 %v2254, %v2251
    %v2330 = vpack.c.b16 %v2258, %v2255
    %v2331 = vpack.c.b16 %v2259, %v2256
    %v2332 = vpack.c.b16 %v2260, %v2257
    %v2333 = vpack.c.b16 %v2264, %v2261
    %v2334 = vpack.c.b16 %v2265, %v2262
    %v2335 = vpack.c.b16 %v2266, %v2263
    %v2336 = vpack.c.b16 %v2270, %v2267
    %v2337 = vpack.c.b16 %v2271, %v2268
    %v2338 = vpack.c.b16 %v2272, %v2269
    %v2339 = vpack.c.b16 %v2276, %v2273
    %v2340 = vpack.c.b16 %v2277, %v2274
    %v2341 = vpack.c.b16 %v2278, %v2275
    %v2342 = vpack.c.b16 %v2282, %v2279
    %v2343 = vpack.c.b16 %v2283, %v2280
    %v2344 = vpack.c.b16 %v2284, %v2281
    %v2345 = vpack.c.b16 %v2288, %v2285
    %v2346 = vpack.c.b16 %v2289, %v2286
    %v2347 = vpack.c.b16 %v2290, %v2287
    %v2348 = vpack.c.b16 %v2294, %v2291
    %v2349 = vpack.c.b16 %v2295, %v2292
    %v2350 = vpack.c.b16 %v2296, %v2293
    %v2351 = vpack.c.b16 %v2300, %v2297
    %v2352 = vpack.c.b16 %v2301, %v2298
    %v2353 = vpack.c.b16 %v2302, %v2299
    %v2405 = vsel %vm2006, %v2130, 0
    %2407 = vmatpush.bf16.msra.mxu0 %v2324
    %2408 = vmatpush.bf16.msra.mxu0 %v2321
    %2409 = vmatpush.bf16.msra.mxu0 %v2318
    %2410 = vmatpush.bf16.msra.mxu0 %v2315
    %2411 = vmatpush.bf16.msra.mxu0 %v2312
    %2412 = vmatpush.bf16.msra.mxu0 %v2309
    %2413 = vmatpush.bf16.msra.mxu0 %v2306
    %2414 = vmatpush.bf16.msra.mxu0 %v2303
    %2415 = vmatmul.bf16.gmra.mxu0 %v2128
    %v2416 = vpop.f32.mrf.mxu0
    %v2417 = vadd.f32 %v2045, %v2416
    %v2418 = vpop.f32.mrf.mxu0
    %2419 = vdwg.mxu0
    %2420 = vmatpush.bf16.msra.mxu0 %v2348
    %2421 = vmatpush.bf16.msra.mxu0 %v2345
    %2422 = vmatpush.bf16.msra.mxu0 %v2342
    %2423 = vmatpush.bf16.msra.mxu0 %v2339
    %2424 = vmatpush.bf16.msra.mxu0 %v2336
    %2425 = vmatpush.bf16.msra.mxu0 %v2333
    %2426 = vmatpush.bf16.msra.mxu0 %v2330
    %2427 = vmatpush.bf16.msra.mxu0 %v2327
    %2428 = vmatmul.bf16.gmra.mxu0 %v2129
    %v2429 = vpop.f32.mrf.mxu0
    %v2430 = vadd.f32 %v2417, %v2429
    %v2431 = vpop.f32.mrf.mxu0
    %2432 = vdwg.mxu0
    %2433 = vmatpush.bf16.msra.mxu0 0
    %2434 = vmatpush.bf16.msra.mxu0 0
    %2435 = vmatpush.bf16.msra.mxu0 0
    %2436 = vmatpush.bf16.msra.mxu0 0
    %2437 = vmatpush.bf16.msra.mxu0 0
    %2438 = vmatpush.bf16.msra.mxu0 0
    %2439 = vmatpush.bf16.msra.mxu0 0
    %2440 = vmatpush.bf16.msra.mxu0 %v2351
    %2441 = vmatmul.bf16.gmra.mxu0 %v2405
    %v2442 = vpop.f32.mrf.mxu0
    %v2443 = vadd.f32 %v2430, %v2442
    %v2444 = vpop.f32.mrf.mxu0
    %2445 = vdwg.mxu0
    %2446 = vmatpush.bf16.msra.mxu0 %v2325
    %2447 = vmatpush.bf16.msra.mxu0 %v2322
    %2448 = vmatpush.bf16.msra.mxu0 %v2319
    %2449 = vmatpush.bf16.msra.mxu0 %v2316
    %2450 = vmatpush.bf16.msra.mxu0 %v2313
    %2451 = vmatpush.bf16.msra.mxu0 %v2310
    %2452 = vmatpush.bf16.msra.mxu0 %v2307
    %2453 = vmatpush.bf16.msra.mxu0 %v2304
    %2454 = vmatmul.bf16.gmra.mxu0 %v2128
    %v2455 = vpop.f32.mrf.mxu0
    %v2456 = vadd.f32 %v2084, %v2455
    %v2457 = vpop.f32.mrf.mxu0
    %2458 = vdwg.mxu0
    %2459 = vmatpush.bf16.msra.mxu0 %v2349
    %2460 = vmatpush.bf16.msra.mxu0 %v2346
    %2461 = vmatpush.bf16.msra.mxu0 %v2343
    %2462 = vmatpush.bf16.msra.mxu0 %v2340
    %2463 = vmatpush.bf16.msra.mxu0 %v2337
    %2464 = vmatpush.bf16.msra.mxu0 %v2334
    %2465 = vmatpush.bf16.msra.mxu0 %v2331
    %2466 = vmatpush.bf16.msra.mxu0 %v2328
    %2467 = vmatmul.bf16.gmra.mxu0 %v2129
    %v2468 = vpop.f32.mrf.mxu0
    %v2469 = vadd.f32 %v2456, %v2468
    %v2470 = vpop.f32.mrf.mxu0
    %2471 = vdwg.mxu0
    %2472 = vmatpush.bf16.msra.mxu0 0
    %2473 = vmatpush.bf16.msra.mxu0 0
    %2474 = vmatpush.bf16.msra.mxu0 0
    %2475 = vmatpush.bf16.msra.mxu0 0
    %2476 = vmatpush.bf16.msra.mxu0 0
    %2477 = vmatpush.bf16.msra.mxu0 0
    %2478 = vmatpush.bf16.msra.mxu0 0
    %2479 = vmatpush.bf16.msra.mxu0 %v2352
    %2480 = vmatmul.bf16.gmra.mxu0 %v2405
    %v2481 = vpop.f32.mrf.mxu0
    %v2482 = vadd.f32 %v2469, %v2481
    %v2483 = vpop.f32.mrf.mxu0
    %2484 = vdwg.mxu0
    %2485 = vmatpush.bf16.msra.mxu0 %v2326
    %2486 = vmatpush.bf16.msra.mxu0 %v2323
    %2487 = vmatpush.bf16.msra.mxu0 %v2320
    %2488 = vmatpush.bf16.msra.mxu0 %v2317
    %2489 = vmatpush.bf16.msra.mxu0 %v2314
    %2490 = vmatpush.bf16.msra.mxu0 %v2311
    %2491 = vmatpush.bf16.msra.mxu0 %v2308
    %2492 = vmatpush.bf16.msra.mxu0 %v2305
    %2493 = vmatmul.bf16.gmra.mxu0 %v2128
    %v2494 = vpop.f32.mrf.mxu0
    %v2495 = vadd.f32 %v2123, %v2494
    %v2496 = vpop.f32.mrf.mxu0
    %2497 = vdwg.mxu0
    %2498 = vmatpush.bf16.msra.mxu0 %v2350
    %2499 = vmatpush.bf16.msra.mxu0 %v2347
    %2500 = vmatpush.bf16.msra.mxu0 %v2344
    %2501 = vmatpush.bf16.msra.mxu0 %v2341
    %2502 = vmatpush.bf16.msra.mxu0 %v2338
    %2503 = vmatpush.bf16.msra.mxu0 %v2335
    %2504 = vmatpush.bf16.msra.mxu0 %v2332
    %2505 = vmatpush.bf16.msra.mxu0 %v2329
    %2506 = vmatmul.bf16.gmra.mxu0 %v2129
    %v2507 = vpop.f32.mrf.mxu0
    %v2508 = vadd.f32 %v2495, %v2507
    %v2509 = vpop.f32.mrf.mxu0
    %2510 = vdwg.mxu0
    %2511 = vmatpush.bf16.msra.mxu0 0
    %2512 = vmatpush.bf16.msra.mxu0 0
    %2513 = vmatpush.bf16.msra.mxu0 0
    %2514 = vmatpush.bf16.msra.mxu0 0
    %2515 = vmatpush.bf16.msra.mxu0 0
    %2516 = vmatpush.bf16.msra.mxu0 0
    %2517 = vmatpush.bf16.msra.mxu0 0
    %2518 = vmatpush.bf16.msra.mxu0 %v2353
    %2519 = vmatmul.bf16.gmra.mxu0 %v2405
    %v2520 = vpop.f32.mrf.mxu0
    %v2521 = vadd.f32 %v2508, %v2520
    %v2522 = vpop.f32.mrf.mxu0
    %2523 = vdwg.mxu0
    %s2524 = sadd.s32 %s1582, 2
    %s2525 = smul.u32 %s2524, 3
    %s2526 = scalar_lea.vmem [#allocation2], %s2525
    %v2527 = vld [vmem:[%s2526] sm:$0x7]
    %s2528 = scalar_lea.vmem %s2, 816
    %v2529 = vld [vmem:[%s2528] sm:$0xff]
    %v2530 = vld [vmem:[%s2528 + $0x8] sm:$0xf]
    %v2531 = vld [vmem:[%s2528 + $0xc] sm:$0xff]
    %v2532 = vld [vmem:[%s2528 + $0x14] sm:$0xf]
    %v2533 = vld [vmem:[%s2528 + $0x18] sm:$0xff]
    %v2534 = vld [vmem:[%s2528 + $0x20] sm:$0xf]
    %v2535 = vld [vmem:[%s2528 + $0x24] sm:$0xff]
    %v2536 = vld [vmem:[%s2528 + $0x2c] sm:$0xf]
    %v2537 = vld [vmem:[%s2528 + $0x30] sm:$0xff]
    %v2538 = vld [vmem:[%s2528 + $0x38] sm:$0xf]
    %v2539 = vld [vmem:[%s2528 + $0x3c] sm:$0xff]
    %v2540 = vld [vmem:[%s2528 + $0x44] sm:$0xf]
    %v2541 = vld [vmem:[%s2528 + $0x48] sm:$0xff]
    %v2542 = vld [vmem:[%s2528 + $0x50] sm:$0xf]
    %v2543 = vld [vmem:[%s2528 + $0x54] sm:$0xff]
    %v2544 = vld [vmem:[%s2528 + $0x5c] sm:$0xf]
    %v2545 = vld [vmem:[%s2528 + $0x60] sm:$0xff]
    %v2546 = vld [vmem:[%s2528 + $0x68] sm:$0xf]
    %v2547 = vld [vmem:[%s2528 + $0x6c] sm:$0xff]
    %v2548 = vld [vmem:[%s2528 + $0x74] sm:$0xf]
    %v2549 = vld [vmem:[%s2528 + $0x78] sm:$0xff]
    %v2550 = vld [vmem:[%s2528 + $0x80] sm:$0xf]
    %v2551 = vld [vmem:[%s2528 + $0x84] sm:$0xff]
    %v2552 = vld [vmem:[%s2528 + $0x8c] sm:$0xf]
    %v2553 = vld [vmem:[%s2528 + $0x90] sm:$0xff]
    %v2554 = vld [vmem:[%s2528 + $0x98] sm:$0xf]
    %v2555 = vld [vmem:[%s2528 + $0x9c] sm:$0xff]
    %v2556 = vld [vmem:[%s2528 + $0xa4] sm:$0xf]
    %v2557 = vld [vmem:[%s2528 + $0xa8] sm:$0xff]
    %v2558 = vld [vmem:[%s2528 + $0xb0] sm:$0xf]
    %v2559 = vld [vmem:[%s2528 + $0xb4] sm:$0xff]
    %v2560 = vld [vmem:[%s2528 + $0xbc] sm:$0xf]
    %v2561 = vld [vmem:[%s2528 + $0xc0] sm:$0xff]
    %v2562 = vld [vmem:[%s2528 + $0xc8] sm:$0xf]
    %v2563 = vld [vmem:[%s2528 + $0xcc] sm:$0xff]
    %v2564 = vld [vmem:[%s2528 + $0xd4] sm:$0xf]
    %v2565 = vld [vmem:[%s2528 + $0xd8] sm:$0xff]
    %v2566 = vld [vmem:[%s2528 + $0xe0] sm:$0xf]
    %v2567 = vld [vmem:[%s2528 + $0xe4] sm:$0xff]
    %v2568 = vld [vmem:[%s2528 + $0xec] sm:$0xf]
    %v2569 = vld [vmem:[%s2528 + $0xf0] sm:$0xff]
    %v2570 = vld [vmem:[%s2528 + $0xf8] sm:$0xf]
    %v2571 = vld [vmem:[%s2528 + $0xfc] sm:$0xff]
    %v2572 = vld [vmem:[%s2528 + $0x104] sm:$0xf]
    %v2573 = vld [vmem:[%s2528 + $0x108] sm:$0xff]
    %v2574 = vld [vmem:[%s2528 + $0x110] sm:$0xf]
    %v2575 = vld [vmem:[%s2528 + $0x114] sm:$0xff]
    %v2576 = vld [vmem:[%s2528 + $0x11c] sm:$0xf]
    %v2577 = vld [vmem:[%s2528 + $0x120] sm:$0xff]
    %v2578 = vld [vmem:[%s2528 + $0x128] sm:$0xf]
    %v2579 = vld [vmem:[%s2528 + $0x12c] sm:$0xff]
    %v2580 = vld [vmem:[%s2528 + $0x134] sm:$0xf]
    %v2581 = vld [vmem:[%s2528 + $0x138] sm:$0xff]
    %v2582 = vld [vmem:[%s2528 + $0x140] sm:$0xf]
    %v2583 = vld [vmem:[%s2528 + $0x144] sm:$0xff]
    %v2584 = vld [vmem:[%s2528 + $0x14c] sm:$0xf]
    %v2585 = vld [vmem:[%s2528 + $0x150] sm:$0xff]
    %v2586 = vld [vmem:[%s2528 + $0x158] sm:$0xf]
    %v2587 = vld [vmem:[%s2528 + $0x15c] sm:$0xff]
    %v2588 = vld [vmem:[%s2528 + $0x164] sm:$0xf]
    %v2589 = vld [vmem:[%s2528 + $0x168] sm:$0xff]
    %v2590 = vld [vmem:[%s2528 + $0x170] sm:$0xf]
    %v2591 = vld [vmem:[%s2528 + $0x174] sm:$0xff]
    %v2592 = vld [vmem:[%s2528 + $0x17c] sm:$0xf]
    %v2593 = vld [vmem:[%s2528 + $0x180] sm:$0xff]
    %v2594 = vld [vmem:[%s2528 + $0x188] sm:$0xf]
    %v2595 = vld [vmem:[%s2528 + $0x18c] sm:$0xff]
    %v2596 = vld [vmem:[%s2528 + $0x194] sm:$0xf]
    %2598 = vst [vmem:[#allocation1] ss:$9 sm:$0xff] %v2527
    %v2599 = vld [vmem:[#allocation1] sm:$0xff]
    %v2600 = vld [vmem:[#allocation1 + $0x9] sm:$0xff]
    %v2601 = vld [vmem:[#allocation1 + $0x12] sm:$0xff]
    %v2672 = vunpack.c.l.b16 %v2529
    %v2673 = vunpack.c.h.b16 %v2529
    %v2674 = vunpack.c.l.b16 %v2530
    %v2675 = vunpack.c.l.b16 %v2531
    %v2676 = vunpack.c.h.b16 %v2531
    %v2677 = vunpack.c.l.b16 %v2532
    %v2678 = vunpack.c.l.b16 %v2533
    %v2679 = vunpack.c.h.b16 %v2533
    %v2680 = vunpack.c.l.b16 %v2534
    %v2681 = vunpack.c.l.b16 %v2535
    %v2682 = vunpack.c.h.b16 %v2535
    %v2683 = vunpack.c.l.b16 %v2536
    %v2684 = vunpack.c.l.b16 %v2537
    %v2685 = vunpack.c.h.b16 %v2537
    %v2686 = vunpack.c.l.b16 %v2538
    %v2687 = vunpack.c.l.b16 %v2539
    %v2688 = vunpack.c.h.b16 %v2539
    %v2689 = vunpack.c.l.b16 %v2540
    %v2690 = vunpack.c.l.b16 %v2541
    %v2691 = vunpack.c.h.b16 %v2541
    %v2692 = vunpack.c.l.b16 %v2542
    %v2693 = vunpack.c.l.b16 %v2543
    %v2694 = vunpack.c.h.b16 %v2543
    %v2695 = vunpack.c.l.b16 %v2544
    %v2696 = vunpack.c.l.b16 %v2545
    %v2697 = vunpack.c.h.b16 %v2545
    %v2698 = vunpack.c.l.b16 %v2546
    %v2699 = vunpack.c.l.b16 %v2547
    %v2700 = vunpack.c.h.b16 %v2547
    %v2701 = vunpack.c.l.b16 %v2548
    %v2702 = vunpack.c.l.b16 %v2549
    %v2703 = vunpack.c.h.b16 %v2549
    %v2704 = vunpack.c.l.b16 %v2550
    %v2705 = vunpack.c.l.b16 %v2551
    %v2706 = vunpack.c.h.b16 %v2551
    %v2707 = vunpack.c.l.b16 %v2552
    %v2708 = vunpack.c.l.b16 %v2553
    %v2709 = vunpack.c.h.b16 %v2553
    %v2710 = vunpack.c.l.b16 %v2554
    %v2711 = vunpack.c.l.b16 %v2555
    %v2712 = vunpack.c.h.b16 %v2555
    %v2713 = vunpack.c.l.b16 %v2556
    %v2714 = vunpack.c.l.b16 %v2557
    %v2715 = vunpack.c.h.b16 %v2557
    %v2716 = vunpack.c.l.b16 %v2558
    %v2717 = vunpack.c.l.b16 %v2559
    %v2718 = vunpack.c.h.b16 %v2559
    %v2719 = vunpack.c.l.b16 %v2560
    %v2720 = vunpack.c.l.b16 %v2561
    %v2721 = vunpack.c.h.b16 %v2561
    %v2722 = vunpack.c.l.b16 %v2562
    %v2723 = vunpack.c.l.b16 %v2563
    %v2724 = vunpack.c.h.b16 %v2563
    %v2725 = vunpack.c.l.b16 %v2564
    %v2726 = vunpack.c.l.b16 %v2565
    %v2727 = vunpack.c.h.b16 %v2565
    %v2728 = vunpack.c.l.b16 %v2566
    %v2729 = vunpack.c.l.b16 %v2567
    %v2730 = vunpack.c.h.b16 %v2567
    %v2731 = vunpack.c.l.b16 %v2568
    %v2732 = vunpack.c.l.b16 %v2569
    %v2733 = vunpack.c.h.b16 %v2569
    %v2734 = vunpack.c.l.b16 %v2570
    %v2735 = vunpack.c.l.b16 %v2571
    %v2736 = vunpack.c.h.b16 %v2571
    %v2737 = vunpack.c.l.b16 %v2572
    %v2738 = vunpack.c.l.b16 %v2573
    %v2739 = vunpack.c.h.b16 %v2573
    %v2740 = vunpack.c.l.b16 %v2574
    %v2741 = vunpack.c.l.b16 %v2575
    %v2742 = vunpack.c.h.b16 %v2575
    %v2743 = vunpack.c.l.b16 %v2576
    %v2744 = vunpack.c.l.b16 %v2577
    %v2745 = vunpack.c.h.b16 %v2577
    %v2746 = vunpack.c.l.b16 %v2578
    %v2747 = vunpack.c.l.b16 %v2579
    %v2748 = vunpack.c.h.b16 %v2579
    %v2749 = vunpack.c.l.b16 %v2580
    %v2750 = vunpack.c.l.b16 %v2581
    %v2751 = vunpack.c.h.b16 %v2581
    %v2752 = vunpack.c.l.b16 %v2582
    %v2753 = vunpack.c.l.b16 %v2583
    %v2754 = vunpack.c.h.b16 %v2583
    %v2755 = vunpack.c.l.b16 %v2584
    %v2756 = vunpack.c.l.b16 %v2585
    %v2757 = vunpack.c.h.b16 %v2585
    %v2758 = vunpack.c.l.b16 %v2586
    %v2759 = vunpack.c.l.b16 %v2587
    %v2760 = vunpack.c.h.b16 %v2587
    %v2761 = vunpack.c.l.b16 %v2588
    %v2762 = vunpack.c.l.b16 %v2589
    %v2763 = vunpack.c.h.b16 %v2589
    %v2764 = vunpack.c.l.b16 %v2590
    %v2765 = vunpack.c.l.b16 %v2591
    %v2766 = vunpack.c.h.b16 %v2591
    %v2767 = vunpack.c.l.b16 %v2592
    %v2768 = vunpack.c.l.b16 %v2593
    %v2769 = vunpack.c.h.b16 %v2593
    %v2770 = vunpack.c.l.b16 %v2594
    %v2771 = vunpack.c.l.b16 %v2595
    %v2772 = vunpack.c.h.b16 %v2595
    %v2773 = vunpack.c.l.b16 %v2596
    %v2774 = vpack.c.b16 %v2675, %v2672
    %v2775 = vpack.c.b16 %v2676, %v2673
    %v2776 = vpack.c.b16 %v2677, %v2674
    %v2777 = vpack.c.b16 %v2681, %v2678
    %v2778 = vpack.c.b16 %v2682, %v2679
    %v2779 = vpack.c.b16 %v2683, %v2680
    %v2780 = vpack.c.b16 %v2687, %v2684
    %v2781 = vpack.c.b16 %v2688, %v2685
    %v2782 = vpack.c.b16 %v2689, %v2686
    %v2783 = vpack.c.b16 %v2693, %v2690
    %v2784 = vpack.c.b16 %v2694, %v2691
    %v2785 = vpack.c.b16 %v2695, %v2692
    %v2786 = vpack.c.b16 %v2699, %v2696
    %v2787 = vpack.c.b16 %v2700, %v2697
    %v2788 = vpack.c.b16 %v2701, %v2698
    %v2789 = vpack.c.b16 %v2705, %v2702
    %v2790 = vpack.c.b16 %v2706, %v2703
    %v2791 = vpack.c.b16 %v2707, %v2704
    %v2792 = vpack.c.b16 %v2711, %v2708
    %v2793 = vpack.c.b16 %v2712, %v2709
    %v2794 = vpack.c.b16 %v2713, %v2710
    %v2795 = vpack.c.b16 %v2717, %v2714
    %v2796 = vpack.c.b16 %v2718, %v2715
    %v2797 = vpack.c.b16 %v2719, %v2716
    %v2798 = vpack.c.b16 %v2723, %v2720
    %v2799 = vpack.c.b16 %v2724, %v2721
    %v2800 = vpack.c.b16 %v2725, %v2722
    %v2801 = vpack.c.b16 %v2729, %v2726
    %v2802 = vpack.c.b16 %v2730, %v2727
    %v2803 = vpack.c.b16 %v2731, %v2728
    %v2804 = vpack.c.b16 %v2735, %v2732
    %v2805 = vpack.c.b16 %v2736, %v2733
    %v2806 = vpack.c.b16 %v2737, %v2734
    %v2807 = vpack.c.b16 %v2741, %v2738
    %v2808 = vpack.c.b16 %v2742, %v2739
    %v2809 = vpack.c.b16 %v2743, %v2740
    %v2810 = vpack.c.b16 %v2747, %v2744
    %v2811 = vpack.c.b16 %v2748, %v2745
    %v2812 = vpack.c.b16 %v2749, %v2746
    %v2813 = vpack.c.b16 %v2753, %v2750
    %v2814 = vpack.c.b16 %v2754, %v2751
    %v2815 = vpack.c.b16 %v2755, %v2752
    %v2816 = vpack.c.b16 %v2759, %v2756
    %v2817 = vpack.c.b16 %v2760, %v2757
    %v2818 = vpack.c.b16 %v2761, %v2758
    %v2819 = vpack.c.b16 %v2765, %v2762
    %v2820 = vpack.c.b16 %v2766, %v2763
    %v2821 = vpack.c.b16 %v2767, %v2764
    %v2822 = vpack.c.b16 %v2771, %v2768
    %v2823 = vpack.c.b16 %v2772, %v2769
    %v2824 = vpack.c.b16 %v2773, %v2770
    %v2876 = vsel %vm2006, %v2601, 0
    %2878 = vmatpush.bf16.msra.mxu0 %v2795
    %2879 = vmatpush.bf16.msra.mxu0 %v2792
    %2880 = vmatpush.bf16.msra.mxu0 %v2789
    %2881 = vmatpush.bf16.msra.mxu0 %v2786
    %2882 = vmatpush.bf16.msra.mxu0 %v2783
    %2883 = vmatpush.bf16.msra.mxu0 %v2780
    %2884 = vmatpush.bf16.msra.mxu0 %v2777
    %2885 = vmatpush.bf16.msra.mxu0 %v2774
    %2886 = vmatmul.bf16.gmra.mxu0 %v2599
    %v2887 = vpop.f32.mrf.mxu0
    %v2888 = vadd.f32 0.0, %v2887
    %v2889 = vpop.f32.mrf.mxu0
    %2890 = vdwg.mxu0
    %2891 = vmatpush.bf16.msra.mxu0 %v2819
    %2892 = vmatpush.bf16.msra.mxu0 %v2816
    %2893 = vmatpush.bf16.msra.mxu0 %v2813
    %2894 = vmatpush.bf16.msra.mxu0 %v2810
    %2895 = vmatpush.bf16.msra.mxu0 %v2807
    %2896 = vmatpush.bf16.msra.mxu0 %v2804
    %2897 = vmatpush.bf16.msra.mxu0 %v2801
    %2898 = vmatpush.bf16.msra.mxu0 %v2798
    %2899 = vmatmul.bf16.gmra.mxu0 %v2600
    %v2900 = vpop.f32.mrf.mxu0
    %v2901 = vadd.f32 %v2888, %v2900
    %v2902 = vpop.f32.mrf.mxu0
    %2903 = vdwg.mxu0
    %2904 = vmatpush.bf16.msra.mxu0 0
    %2905 = vmatpush.bf16.msra.mxu0 0
    %2906 = vmatpush.bf16.msra.mxu0 0
    %2907 = vmatpush.bf16.msra.mxu0 0
    %2908 = vmatpush.bf16.msra.mxu0 0
    %2909 = vmatpush.bf16.msra.mxu0 0
    %2910 = vmatpush.bf16.msra.mxu0 0
    %2911 = vmatpush.bf16.msra.mxu0 %v2822
    %2912 = vmatmul.bf16.gmra.mxu0 %v2876
    %v2913 = vpop.f32.mrf.mxu0
    %v2914 = vadd.f32 %v2901, %v2913
    %v2915 = vpop.f32.mrf.mxu0
    %2916 = vdwg.mxu0
    %2917 = vmatpush.bf16.msra.mxu0 %v2796
    %2918 = vmatpush.bf16.msra.mxu0 %v2793
    %2919 = vmatpush.bf16.msra.mxu0 %v2790
    %2920 = vmatpush.bf16.msra.mxu0 %v2787
    %2921 = vmatpush.bf16.msra.mxu0 %v2784
    %2922 = vmatpush.bf16.msra.mxu0 %v2781
    %2923 = vmatpush.bf16.msra.mxu0 %v2778
    %2924 = vmatpush.bf16.msra.mxu0 %v2775
    %2925 = vmatmul.bf16.gmra.mxu0 %v2599
    %v2926 = vpop.f32.mrf.mxu0
    %v2927 = vadd.f32 0.0, %v2926
    %v2928 = vpop.f32.mrf.mxu0
    %2929 = vdwg.mxu0
    %2930 = vmatpush.bf16.msra.mxu0 %v2820
    %2931 = vmatpush.bf16.msra.mxu0 %v2817
    %2932 = vmatpush.bf16.msra.mxu0 %v2814
    %2933 = vmatpush.bf16.msra.mxu0 %v2811
    %2934 = vmatpush.bf16.msra.mxu0 %v2808
    %2935 = vmatpush.bf16.msra.mxu0 %v2805
    %2936 = vmatpush.bf16.msra.mxu0 %v2802
    %2937 = vmatpush.bf16.msra.mxu0 %v2799
    %2938 = vmatmul.bf16.gmra.mxu0 %v2600
    %v2939 = vpop.f32.mrf.mxu0
    %v2940 = vadd.f32 %v2927, %v2939
    %v2941 = vpop.f32.mrf.mxu0
    %2942 = vdwg.mxu0
    %2943 = vmatpush.bf16.msra.mxu0 0
    %2944 = vmatpush.bf16.msra.mxu0 0
    %2945 = vmatpush.bf16.msra.mxu0 0
    %2946 = vmatpush.bf16.msra.mxu0 0
    %2947 = vmatpush.bf16.msra.mxu0 0
    %2948 = vmatpush.bf16.msra.mxu0 0
    %2949 = vmatpush.bf16.msra.mxu0 0
    %2950 = vmatpush.bf16.msra.mxu0 %v2823
    %2951 = vmatmul.bf16.gmra.mxu0 %v2876
    %v2952 = vpop.f32.mrf.mxu0
    %v2953 = vadd.f32 %v2940, %v2952
    %v2954 = vpop.f32.mrf.mxu0
    %2955 = vdwg.mxu0
    %2956 = vmatpush.bf16.msra.mxu0 %v2797
    %2957 = vmatpush.bf16.msra.mxu0 %v2794
    %2958 = vmatpush.bf16.msra.mxu0 %v2791
    %2959 = vmatpush.bf16.msra.mxu0 %v2788
    %2960 = vmatpush.bf16.msra.mxu0 %v2785
    %2961 = vmatpush.bf16.msra.mxu0 %v2782
    %2962 = vmatpush.bf16.msra.mxu0 %v2779
    %2963 = vmatpush.bf16.msra.mxu0 %v2776
    %2964 = vmatmul.bf16.gmra.mxu0 %v2599
    %v2965 = vpop.f32.mrf.mxu0
    %v2966 = vadd.f32 0.0, %v2965
    %v2967 = vpop.f32.mrf.mxu0
    %2968 = vdwg.mxu0
    %2969 = vmatpush.bf16.msra.mxu0 %v2821
    %2970 = vmatpush.bf16.msra.mxu0 %v2818
    %2971 = vmatpush.bf16.msra.mxu0 %v2815
    %2972 = vmatpush.bf16.msra.mxu0 %v2812
    %2973 = vmatpush.bf16.msra.mxu0 %v2809
    %2974 = vmatpush.bf16.msra.mxu0 %v2806
    %2975 = vmatpush.bf16.msra.mxu0 %v2803
    %2976 = vmatpush.bf16.msra.mxu0 %v2800
    %2977 = vmatmul.bf16.gmra.mxu0 %v2600
    %v2978 = vpop.f32.mrf.mxu0
    %v2979 = vadd.f32 %v2966, %v2978
    %v2980 = vpop.f32.mrf.mxu0
    %2981 = vdwg.mxu0
    %2982 = vmatpush.bf16.msra.mxu0 0
    %2983 = vmatpush.bf16.msra.mxu0 0
    %2984 = vmatpush.bf16.msra.mxu0 0
    %2985 = vmatpush.bf16.msra.mxu0 0
    %2986 = vmatpush.bf16.msra.mxu0 0
    %2987 = vmatpush.bf16.msra.mxu0 0
    %2988 = vmatpush.bf16.msra.mxu0 0
    %2989 = vmatpush.bf16.msra.mxu0 %v2824
    %2990 = vmatmul.bf16.gmra.mxu0 %v2876
    %v2991 = vpop.f32.mrf.mxu0
    %v2992 = vadd.f32 %v2979, %v2991
    %v2993 = vpop.f32.mrf.mxu0
    %2994 = vdwg.mxu0
    %v2995 = vadd.f32 %v2443, %v2914
    %v2996 = vadd.f32 %v2482, %v2953
    %v2997 = vadd.f32 %v2521, %v2992
    %s2998 = sadd.s32 %s1582, 3
    %s2999 = smul.u32 %s2998, 3
    %s3000 = scalar_lea.vmem [#allocation2], %s2999
    %v3001 = vld [vmem:[%s3000] sm:$0x7]
    %s3002 = scalar_lea.vmem %s2, 1224
    %v3003 = vld [vmem:[%s3002] sm:$0xff]
    %v3004 = vld [vmem:[%s3002 + $0x8] sm:$0xf]
    %v3005 = vld [vmem:[%s3002 + $0xc] sm:$0xff]
    %v3006 = vld [vmem:[%s3002 + $0x14] sm:$0xf]
    %v3007 = vld [vmem:[%s3002 + $0x18] sm:$0xff]
    %v3008 = vld [vmem:[%s3002 + $0x20] sm:$0xf]
    %v3009 = vld [vmem:[%s3002 + $0x24] sm:$0xff]
    %v3010 = vld [vmem:[%s3002 + $0x2c] sm:$0xf]
    %v3011 = vld [vmem:[%s3002 + $0x30] sm:$0xff]
    %v3012 = vld [vmem:[%s3002 + $0x38] sm:$0xf]
    %v3013 = vld [vmem:[%s3002 + $0x3c] sm:$0xff]
    %v3014 = vld [vmem:[%s3002 + $0x44] sm:$0xf]
    %v3015 = vld [vmem:[%s3002 + $0x48] sm:$0xff]
    %v3016 = vld [vmem:[%s3002 + $0x50] sm:$0xf]
    %v3017 = vld [vmem:[%s3002 + $0x54] sm:$0xff]
    %v3018 = vld [vmem:[%s3002 + $0x5c] sm:$0xf]
    %v3019 = vld [vmem:[%s3002 + $0x60] sm:$0xff]
    %v3020 = vld [vmem:[%s3002 + $0x68] sm:$0xf]
    %v3021 = vld [vmem:[%s3002 + $0x6c] sm:$0xff]
    %v3022 = vld [vmem:[%s3002 + $0x74] sm:$0xf]
    %v3023 = vld [vmem:[%s3002 + $0x78] sm:$0xff]
    %v3024 = vld [vmem:[%s3002 + $0x80] sm:$0xf]
    %v3025 = vld [vmem:[%s3002 + $0x84] sm:$0xff]
    %v3026 = vld [vmem:[%s3002 + $0x8c] sm:$0xf]
    %v3027 = vld [vmem:[%s3002 + $0x90] sm:$0xff]
    %v3028 = vld [vmem:[%s3002 + $0x98] sm:$0xf]
    %v3029 = vld [vmem:[%s3002 + $0x9c] sm:$0xff]
    %v3030 = vld [vmem:[%s3002 + $0xa4] sm:$0xf]
    %v3031 = vld [vmem:[%s3002 + $0xa8] sm:$0xff]
    %v3032 = vld [vmem:[%s3002 + $0xb0] sm:$0xf]
    %v3033 = vld [vmem:[%s3002 + $0xb4] sm:$0xff]
    %v3034 = vld [vmem:[%s3002 + $0xbc] sm:$0xf]
    %v3035 = vld [vmem:[%s3002 + $0xc0] sm:$0xff]
    %v3036 = vld [vmem:[%s3002 + $0xc8] sm:$0xf]
    %v3037 = vld [vmem:[%s3002 + $0xcc] sm:$0xff]
    %v3038 = vld [vmem:[%s3002 + $0xd4] sm:$0xf]
    %v3039 = vld [vmem:[%s3002 + $0xd8] sm:$0xff]
    %v3040 = vld [vmem:[%s3002 + $0xe0] sm:$0xf]
    %v3041 = vld [vmem:[%s3002 + $0xe4] sm:$0xff]
    %v3042 = vld [vmem:[%s3002 + $0xec] sm:$0xf]
    %v3043 = vld [vmem:[%s3002 + $0xf0] sm:$0xff]
    %v3044 = vld [vmem:[%s3002 + $0xf8] sm:$0xf]
    %v3045 = vld [vmem:[%s3002 + $0xfc] sm:$0xff]
    %v3046 = vld [vmem:[%s3002 + $0x104] sm:$0xf]
    %v3047 = vld [vmem:[%s3002 + $0x108] sm:$0xff]
    %v3048 = vld [vmem:[%s3002 + $0x110] sm:$0xf]
    %v3049 = vld [vmem:[%s3002 + $0x114] sm:$0xff]
    %v3050 = vld [vmem:[%s3002 + $0x11c] sm:$0xf]
    %v3051 = vld [vmem:[%s3002 + $0x120] sm:$0xff]
    %v3052 = vld [vmem:[%s3002 + $0x128] sm:$0xf]
    %v3053 = vld [vmem:[%s3002 + $0x12c] sm:$0xff]
    %v3054 = vld [vmem:[%s3002 + $0x134] sm:$0xf]
    %v3055 = vld [vmem:[%s3002 + $0x138] sm:$0xff]
    %v3056 = vld [vmem:[%s3002 + $0x140] sm:$0xf]
    %v3057 = vld [vmem:[%s3002 + $0x144] sm:$0xff]
    %v3058 = vld [vmem:[%s3002 + $0x14c] sm:$0xf]
    %v3059 = vld [vmem:[%s3002 + $0x150] sm:$0xff]
    %v3060 = vld [vmem:[%s3002 + $0x158] sm:$0xf]
    %v3061 = vld [vmem:[%s3002 + $0x15c] sm:$0xff]
    %v3062 = vld [vmem:[%s3002 + $0x164] sm:$0xf]
    %v3063 = vld [vmem:[%s3002 + $0x168] sm:$0xff]
    %v3064 = vld [vmem:[%s3002 + $0x170] sm:$0xf]
    %v3065 = vld [vmem:[%s3002 + $0x174] sm:$0xff]
    %v3066 = vld [vmem:[%s3002 + $0x17c] sm:$0xf]
    %v3067 = vld [vmem:[%s3002 + $0x180] sm:$0xff]
    %v3068 = vld [vmem:[%s3002 + $0x188] sm:$0xf]
    %v3069 = vld [vmem:[%s3002 + $0x18c] sm:$0xff]
    %v3070 = vld [vmem:[%s3002 + $0x194] sm:$0xf]
    %3072 = vst [vmem:[#allocation1] ss:$9 sm:$0xff] %v3001
    %v3073 = vld [vmem:[#allocation1] sm:$0xff]
    %v3074 = vld [vmem:[#allocation1 + $0x9] sm:$0xff]
    %v3075 = vld [vmem:[#allocation1 + $0x12] sm:$0xff]
    %v3146 = vunpack.c.l.b16 %v3003
    %v3147 = vunpack.c.h.b16 %v3003
    %v3148 = vunpack.c.l.b16 %v3004
    %v3149 = vunpack.c.l.b16 %v3005
    %v3150 = vunpack.c.h.b16 %v3005
    %v3151 = vunpack.c.l.b16 %v3006
    %v3152 = vunpack.c.l.b16 %v3007
    %v3153 = vunpack.c.h.b16 %v3007
    %v3154 = vunpack.c.l.b16 %v3008
    %v3155 = vunpack.c.l.b16 %v3009
    %v3156 = vunpack.c.h.b16 %v3009
    %v3157 = vunpack.c.l.b16 %v3010
    %v3158 = vunpack.c.l.b16 %v3011
    %v3159 = vunpack.c.h.b16 %v3011
    %v3160 = vunpack.c.l.b16 %v3012
    %v3161 = vunpack.c.l.b16 %v3013
    %v3162 = vunpack.c.h.b16 %v3013
    %v3163 = vunpack.c.l.b16 %v3014
    %v3164 = vunpack.c.l.b16 %v3015
    %v3165 = vunpack.c.h.b16 %v3015
    %v3166 = vunpack.c.l.b16 %v3016
    %v3167 = vunpack.c.l.b16 %v3017
    %v3168 = vunpack.c.h.b16 %v3017
    %v3169 = vunpack.c.l.b16 %v3018
    %v3170 = vunpack.c.l.b16 %v3019
    %v3171 = vunpack.c.h.b16 %v3019
    %v3172 = vunpack.c.l.b16 %v3020
    %v3173 = vunpack.c.l.b16 %v3021
    %v3174 = vunpack.c.h.b16 %v3021
    %v3175 = vunpack.c.l.b16 %v3022
    %v3176 = vunpack.c.l.b16 %v3023
    %v3177 = vunpack.c.h.b16 %v3023
    %v3178 = vunpack.c.l.b16 %v3024
    %v3179 = vunpack.c.l.b16 %v3025
    %v3180 = vunpack.c.h.b16 %v3025
    %v3181 = vunpack.c.l.b16 %v3026
    %v3182 = vunpack.c.l.b16 %v3027
    %v3183 = vunpack.c.h.b16 %v3027
    %v3184 = vunpack.c.l.b16 %v3028
    %v3185 = vunpack.c.l.b16 %v3029
    %v3186 = vunpack.c.h.b16 %v3029
    %v3187 = vunpack.c.l.b16 %v3030
    %v3188 = vunpack.c.l.b16 %v3031
    %v3189 = vunpack.c.h.b16 %v3031
    %v3190 = vunpack.c.l.b16 %v3032
    %v3191 = vunpack.c.l.b16 %v3033
    %v3192 = vunpack.c.h.b16 %v3033
    %v3193 = vunpack.c.l.b16 %v3034
    %v3194 = vunpack.c.l.b16 %v3035
    %v3195 = vunpack.c.h.b16 %v3035
    %v3196 = vunpack.c.l.b16 %v3036
    %v3197 = vunpack.c.l.b16 %v3037
    %v3198 = vunpack.c.h.b16 %v3037
    %v3199 = vunpack.c.l.b16 %v3038
    %v3200 = vunpack.c.l.b16 %v3039
    %v3201 = vunpack.c.h.b16 %v3039
    %v3202 = vunpack.c.l.b16 %v3040
    %v3203 = vunpack.c.l.b16 %v3041
    %v3204 = vunpack.c.h.b16 %v3041
    %v3205 = vunpack.c.l.b16 %v3042
    %v3206 = vunpack.c.l.b16 %v3043
    %v3207 = vunpack.c.h.b16 %v3043
    %v3208 = vunpack.c.l.b16 %v3044
    %v3209 = vunpack.c.l.b16 %v3045
    %v3210 = vunpack.c.h.b16 %v3045
    %v3211 = vunpack.c.l.b16 %v3046
    %v3212 = vunpack.c.l.b16 %v3047
    %v3213 = vunpack.c.h.b16 %v3047
    %v3214 = vunpack.c.l.b16 %v3048
    %v3215 = vunpack.c.l.b16 %v3049
    %v3216 = vunpack.c.h.b16 %v3049
    %v3217 = vunpack.c.l.b16 %v3050
    %v3218 = vunpack.c.l.b16 %v3051
    %v3219 = vunpack.c.h.b16 %v3051
    %v3220 = vunpack.c.l.b16 %v3052
    %v3221 = vunpack.c.l.b16 %v3053
    %v3222 = vunpack.c.h.b16 %v3053
    %v3223 = vunpack.c.l.b16 %v3054
    %v3224 = vunpack.c.l.b16 %v3055
    %v3225 = vunpack.c.h.b16 %v3055
    %v3226 = vunpack.c.l.b16 %v3056
    %v3227 = vunpack.c.l.b16 %v3057
    %v3228 = vunpack.c.h.b16 %v3057
    %v3229 = vunpack.c.l.b16 %v3058
    %v3230 = vunpack.c.l.b16 %v3059
    %v3231 = vunpack.c.h.b16 %v3059
    %v3232 = vunpack.c.l.b16 %v3060
    %v3233 = vunpack.c.l.b16 %v3061
    %v3234 = vunpack.c.h.b16 %v3061
    %v3235 = vunpack.c.l.b16 %v3062
    %v3236 = vunpack.c.l.b16 %v3063
    %v3237 = vunpack.c.h.b16 %v3063
    %v3238 = vunpack.c.l.b16 %v3064
    %v3239 = vunpack.c.l.b16 %v3065
    %v3240 = vunpack.c.h.b16 %v3065
    %v3241 = vunpack.c.l.b16 %v3066
    %v3242 = vunpack.c.l.b16 %v3067
    %v3243 = vunpack.c.h.b16 %v3067
    %v3244 = vunpack.c.l.b16 %v3068
    %v3245 = vunpack.c.l.b16 %v3069
    %v3246 = vunpack.c.h.b16 %v3069
    %v3247 = vunpack.c.l.b16 %v3070
    %v3248 = vpack.c.b16 %v3149, %v3146
    %v3249 = vpack.c.b16 %v3150, %v3147
    %v3250 = vpack.c.b16 %v3151, %v3148
    %v3251 = vpack.c.b16 %v3155, %v3152
    %v3252 = vpack.c.b16 %v3156, %v3153
    %v3253 = vpack.c.b16 %v3157, %v3154
    %v3254 = vpack.c.b16 %v3161, %v3158
    %v3255 = vpack.c.b16 %v3162, %v3159
    %v3256 = vpack.c.b16 %v3163, %v3160
    %v3257 = vpack.c.b16 %v3167, %v3164
    %v3258 = vpack.c.b16 %v3168, %v3165
    %v3259 = vpack.c.b16 %v3169, %v3166
    %v3260 = vpack.c.b16 %v3173, %v3170
    %v3261 = vpack.c.b16 %v3174, %v3171
    %v3262 = vpack.c.b16 %v3175, %v3172
    %v3263 = vpack.c.b16 %v3179, %v3176
    %v3264 = vpack.c.b16 %v3180, %v3177
    %v3265 = vpack.c.b16 %v3181, %v3178
    %v3266 = vpack.c.b16 %v3185, %v3182
    %v3267 = vpack.c.b16 %v3186, %v3183
    %v3268 = vpack.c.b16 %v3187, %v3184
    %v3269 = vpack.c.b16 %v3191, %v3188
    %v3270 = vpack.c.b16 %v3192, %v3189
    %v3271 = vpack.c.b16 %v3193, %v3190
    %v3272 = vpack.c.b16 %v3197, %v3194
    %v3273 = vpack.c.b16 %v3198, %v3195
    %v3274 = vpack.c.b16 %v3199, %v3196
    %v3275 = vpack.c.b16 %v3203, %v3200
    %v3276 = vpack.c.b16 %v3204, %v3201
    %v3277 = vpack.c.b16 %v3205, %v3202
    %v3278 = vpack.c.b16 %v3209, %v3206
    %v3279 = vpack.c.b16 %v3210, %v3207
    %v3280 = vpack.c.b16 %v3211, %v3208
    %v3281 = vpack.c.b16 %v3215, %v3212
    %v3282 = vpack.c.b16 %v3216, %v3213
    %v3283 = vpack.c.b16 %v3217, %v3214
    %v3284 = vpack.c.b16 %v3221, %v3218
    %v3285 = vpack.c.b16 %v3222, %v3219
    %v3286 = vpack.c.b16 %v3223, %v3220
    %v3287 = vpack.c.b16 %v3227, %v3224
    %v3288 = vpack.c.b16 %v3228, %v3225
    %v3289 = vpack.c.b16 %v3229, %v3226
    %v3290 = vpack.c.b16 %v3233, %v3230
    %v3291 = vpack.c.b16 %v3234, %v3231
    %v3292 = vpack.c.b16 %v3235, %v3232
    %v3293 = vpack.c.b16 %v3239, %v3236
    %v3294 = vpack.c.b16 %v3240, %v3237
    %v3295 = vpack.c.b16 %v3241, %v3238
    %v3296 = vpack.c.b16 %v3245, %v3242
    %v3297 = vpack.c.b16 %v3246, %v3243
    %v3298 = vpack.c.b16 %v3247, %v3244
    %v3350 = vsel %vm2006, %v3075, 0
    %3352 = vmatpush.bf16.msra.mxu0 %v3269
    %3353 = vmatpush.bf16.msra.mxu0 %v3266
    %3354 = vmatpush.bf16.msra.mxu0 %v3263
    %3355 = vmatpush.bf16.msra.mxu0 %v3260
    %3356 = vmatpush.bf16.msra.mxu0 %v3257
    %3357 = vmatpush.bf16.msra.mxu0 %v3254
    %3358 = vmatpush.bf16.msra.mxu0 %v3251
    %3359 = vmatpush.bf16.msra.mxu0 %v3248
    %3360 = vmatmul.bf16.gmra.mxu0 %v3073
    %v3361 = vpop.f32.mrf.mxu0
    %v3362 = vadd.f32 0.0, %v3361
    %v3363 = vpop.f32.mrf.mxu0
    %3364 = vdwg.mxu0
    %3365 = vmatpush.bf16.msra.mxu0 %v3293
    %3366 = vmatpush.bf16.msra.mxu0 %v3290
    %3367 = vmatpush.bf16.msra.mxu0 %v3287
    %3368 = vmatpush.bf16.msra.mxu0 %v3284
    %3369 = vmatpush.bf16.msra.mxu0 %v3281
    %3370 = vmatpush.bf16.msra.mxu0 %v3278
    %3371 = vmatpush.bf16.msra.mxu0 %v3275
    %3372 = vmatpush.bf16.msra.mxu0 %v3272
    %3373 = vmatmul.bf16.gmra.mxu0 %v3074
    %v3374 = vpop.f32.mrf.mxu0
    %v3375 = vadd.f32 %v3362, %v3374
    %v3376 = vpop.f32.mrf.mxu0
    %3377 = vdwg.mxu0
    %3378 = vmatpush.bf16.msra.mxu0 0
    %3379 = vmatpush.bf16.msra.mxu0 0
    %3380 = vmatpush.bf16.msra.mxu0 0
    %3381 = vmatpush.bf16.msra.mxu0 0
    %3382 = vmatpush.bf16.msra.mxu0 0
    %3383 = vmatpush.bf16.msra.mxu0 0
    %3384 = vmatpush.bf16.msra.mxu0 0
    %3385 = vmatpush.bf16.msra.mxu0 %v3296
    %3386 = vmatmul.bf16.gmra.mxu0 %v3350
    %v3387 = vpop.f32.mrf.mxu0
    %v3388 = vadd.f32 %v3375, %v3387
    %v3389 = vpop.f32.mrf.mxu0
    %3390 = vdwg.mxu0
    %3391 = vmatpush.bf16.msra.mxu0 %v3270
    %3392 = vmatpush.bf16.msra.mxu0 %v3267
    %3393 = vmatpush.bf16.msra.mxu0 %v3264
    %3394 = vmatpush.bf16.msra.mxu0 %v3261
    %3395 = vmatpush.bf16.msra.mxu0 %v3258
    %3396 = vmatpush.bf16.msra.mxu0 %v3255
    %3397 = vmatpush.bf16.msra.mxu0 %v3252
    %3398 = vmatpush.bf16.msra.mxu0 %v3249
    %3399 = vmatmul.bf16.gmra.mxu0 %v3073
    %v3400 = vpop.f32.mrf.mxu0
    %v3401 = vadd.f32 0.0, %v3400
    %v3402 = vpop.f32.mrf.mxu0
    %3403 = vdwg.mxu0
    %3404 = vmatpush.bf16.msra.mxu0 %v3294
    %3405 = vmatpush.bf16.msra.mxu0 %v3291
    %3406 = vmatpush.bf16.msra.mxu0 %v3288
    %3407 = vmatpush.bf16.msra.mxu0 %v3285
    %3408 = vmatpush.bf16.msra.mxu0 %v3282
    %3409 = vmatpush.bf16.msra.mxu0 %v3279
    %3410 = vmatpush.bf16.msra.mxu0 %v3276
    %3411 = vmatpush.bf16.msra.mxu0 %v3273
    %3412 = vmatmul.bf16.gmra.mxu0 %v3074
    %v3413 = vpop.f32.mrf.mxu0
    %v3414 = vadd.f32 %v3401, %v3413
    %v3415 = vpop.f32.mrf.mxu0
    %3416 = vdwg.mxu0
    %3417 = vmatpush.bf16.msra.mxu0 0
    %3418 = vmatpush.bf16.msra.mxu0 0
    %3419 = vmatpush.bf16.msra.mxu0 0
    %3420 = vmatpush.bf16.msra.mxu0 0
    %3421 = vmatpush.bf16.msra.mxu0 0
    %3422 = vmatpush.bf16.msra.mxu0 0
    %3423 = vmatpush.bf16.msra.mxu0 0
    %3424 = vmatpush.bf16.msra.mxu0 %v3297
    %3425 = vmatmul.bf16.gmra.mxu0 %v3350
    %v3426 = vpop.f32.mrf.mxu0
    %v3427 = vadd.f32 %v3414, %v3426
    %v3428 = vpop.f32.mrf.mxu0
    %3429 = vdwg.mxu0
    %3430 = vmatpush.bf16.msra.mxu0 %v3271
    %3431 = vmatpush.bf16.msra.mxu0 %v3268
    %3432 = vmatpush.bf16.msra.mxu0 %v3265
    %3433 = vmatpush.bf16.msra.mxu0 %v3262
    %3434 = vmatpush.bf16.msra.mxu0 %v3259
    %3435 = vmatpush.bf16.msra.mxu0 %v3256
    %3436 = vmatpush.bf16.msra.mxu0 %v3253
    %3437 = vmatpush.bf16.msra.mxu0 %v3250
    %3438 = vmatmul.bf16.gmra.mxu0 %v3073
    %v3439 = vpop.f32.mrf.mxu0
    %v3440 = vadd.f32 0.0, %v3439
    %v3441 = vpop.f32.mrf.mxu0
    %3442 = vdwg.mxu0
    %3443 = vmatpush.bf16.msra.mxu0 %v3295
    %3444 = vmatpush.bf16.msra.mxu0 %v3292
    %3445 = vmatpush.bf16.msra.mxu0 %v3289
    %3446 = vmatpush.bf16.msra.mxu0 %v3286
    %3447 = vmatpush.bf16.msra.mxu0 %v3283
    %3448 = vmatpush.bf16.msra.mxu0 %v3280
    %3449 = vmatpush.bf16.msra.mxu0 %v3277
    %3450 = vmatpush.bf16.msra.mxu0 %v3274
    %3451 = vmatmul.bf16.gmra.mxu0 %v3074
    %v3452 = vpop.f32.mrf.mxu0
    %v3453 = vadd.f32 %v3440, %v3452
    %v3454 = vpop.f32.mrf.mxu0
    %3455 = vdwg.mxu0
    %3456 = vmatpush.bf16.msra.mxu0 0
    %3457 = vmatpush.bf16.msra.mxu0 0
    %3458 = vmatpush.bf16.msra.mxu0 0
    %3459 = vmatpush.bf16.msra.mxu0 0
    %3460 = vmatpush.bf16.msra.mxu0 0
    %3461 = vmatpush.bf16.msra.mxu0 0
    %3462 = vmatpush.bf16.msra.mxu0 0
    %3463 = vmatpush.bf16.msra.mxu0 %v3298
    %3464 = vmatmul.bf16.gmra.mxu0 %v3350
    %v3465 = vpop.f32.mrf.mxu0
    %v3466 = vadd.f32 %v3453, %v3465
    %v3467 = vpop.f32.mrf.mxu0
    %3468 = vdwg.mxu0
    %v3469 = vadd.f32 %v2995, %v3388
    %v3470 = vadd.f32 %v2996, %v3427
    %v3471 = vadd.f32 %v2997, %v3466
    %v3475 = vrot.slane %v3470, 6
    %v3476 = vrot.slane %v3471, 4
    %vm3477 = vcmask 1041408
    %v3478 = vsel %vm3477, %v3469, %v3475
    %vm3479 = vcmask 1043456
    %v3480 = vsel %vm3479, %v3478, %v3476
    %s3482 = smul.u32 %s1571, 3
    %s3483 = smul.addr %s3482, 2
    %s3484 = scalar_lea.vmem [#allocation6], %s3483
    %vm3485 = vcmask 1043458
    %vm3486 = vmor %vm3485, %vm3477
    %vm3487 = vcmask 259076
    %vm3488 = vmor %vm3487, %vm3486
    %3489 = vst.msk [vmem:[%s3484] sm:$0x3f] %vm3488, %v3480
    %v3490 = vadd.f32 %v1576, %v3469
    %v3491 = vadd.f32 %v1577, %v3470
    %v3492 = vadd.f32 %v1578, %v3471
    %v3493 = vmul.f32 %v3469, %v3469
    %v3494 = vmul.f32 %v3470, %v3470
    %v3495 = vmul.f32 %v3471, %v3471
    %v3496 = vadd.f32 %v1579, %v3493
    %v3497 = vadd.f32 %v1580, %v3494
    %v3498 = vadd.f32 %v1581, %v3495
  $region85: #{discriminator_forward.1} parent=0 // loop_footer
    %s1575 = sadd.s32 1, %s1571
  $region86: #{discriminator_forward.1} parent=0 // loop_footer_branch
    %1570 = sbr.rel target = $region82
  $region87: #{discriminator_forward.1} parent=0 // loop_exit
    _
  %vm3499 = vcmask 1041408
  %v3500 = vsel %vm3499, %v1576, 0.0
  %v3501 = vrot.slane %v3500, 4
  %v3502 = vadd.f32 %v3500, %v3501
  %v3503 = vrot.slane %v3502, 2
  %v3504 = vadd.f32 %v3502, %v3503
  %v3505 = vrot.slane %v3504, 1
  %v3506 = vadd.f32 %v3504, %v3505
  %v3507 = vsel %vm3499, %v1577, 0.0
  %v3508 = vrot.slane %v3507, 4
  %v3509 = vadd.f32 %v3507, %v3508
  %v3510 = vrot.slane %v3509, 2
  %v3511 = vadd.f32 %v3509, %v3510
  %v3512 = vrot.slane %v3511, 1
  %v3513 = vadd.f32 %v3511, %v3512
  %vm3514 = vcmask 254976
  %v3515 = vsel %vm3514, %v1578, 0.0
  %v3516 = vrot.slane %v3515, 4
  %v3517 = vadd.f32 %v3515, %v3516
  %v3518 = vrot.slane %v3517, 2
  %v3519 = vadd.f32 %v3517, %v3518
  %v3520 = vrot.slane %v3519, 1
  %v3521 = vadd.f32 %v3519, %v3520
  %v3522 = vld [vmem:[%s6] sm:$0xff]
  %v3523 = vld [vmem:[%s6 + $0x8] sm:$0xff]
  %v3524 = vld [vmem:[%s6 + $0x10] sm:$0xff]
  %v3525 = vld [vmem:[%s6 + $0x18] sm:$0xff]
  %v3526 = vld [vmem:[%s6 + $0x20] sm:$0xff]
  %v3527 = vld [vmem:[%s6 + $0x28] sm:$0xff]
  %v3528 = vld [vmem:[%s6 + $0x30] sm:$0xff]
  %v3529 = vld [vmem:[%s6 + $0x38] sm:$0xff]
  %v3530 = vld [vmem:[%s6 + $0x40] sm:$0xff]
  %v3531 = vld [vmem:[%s6 + $0x48] sm:$0xff]
  %v3532 = vld [vmem:[%s6 + $0x50] sm:$0xff]
  %v3533 = vld [vmem:[%s6 + $0x58] sm:$0xff]
  %v3534 = vld [vmem:[%s6 + $0x60] sm:$0xff]
  %v3535 = vld [vmem:[%s6 + $0x68] sm:$0xff]
  %v3536 = vld [vmem:[%s6 + $0x70] sm:$0xff]
  %v3537 = vld [vmem:[%s6 + $0x78] sm:$0xff]
  %v3538 = vld [vmem:[%s6 + $0x80] sm:$0xff]
  %v3539 = vld [vmem:[%s6 + $0x88] sm:$0xff]
  %v3540 = vld [vmem:[%s6 + $0x90] sm:$0xff]
  %v3541 = vld [vmem:[%s6 + $0x98] sm:$0xff]
  %v3542 = vld [vmem:[%s6 + $0xa0] sm:$0xff]
  %v3543 = vld [vmem:[%s6 + $0xa8] sm:$0xff]
  %v3544 = vld [vmem:[%s6 + $0xb0] sm:$0xff]
  %v3545 = vld [vmem:[%s6 + $0xb8] sm:$0xff]
  %v3546 = vld [vmem:[%s6 + $0xc0] sm:$0xff]
  %v3547 = vld [vmem:[%s6 + $0xc8] sm:$0xff]
  %v3548 = vld [vmem:[%s6 + $0xd0] sm:$0xff]
  %v3549 = vld [vmem:[%s6 + $0xd8] sm:$0xff]
  %v3550 = vld [vmem:[%s6 + $0xe0] sm:$0xff]
  %v3551 = vld [vmem:[%s6 + $0xe8] sm:$0xff]
  %v3552 = vld [vmem:[%s6 + $0xf0] sm:$0xff]
  %v3553 = vld [vmem:[%s6 + $0xf8] sm:$0xff]
  %v3554 = vld [vmem:[%s6 + $0x100] sm:$0xff]
  %v3555 = vld [vmem:[%s6 + $0x108] sm:$0xff]
  %v3556 = vld [vmem:[%s6 + $0x110] sm:$0xff]
  %v3557 = vld [vmem:[%s6 + $0x118] sm:$0xff]
  %vm3558 = vcmask 261120
  %v3560 = vsel %vm3558, %v3521, 0
  %3562 = vmatpush.msra.mxu0 %v3537
  %3563 = vmatpush.msra.mxu0 %v3536
  %3564 = vmatpush.msra.mxu0 %v3535
  %3565 = vmatpush.msra.mxu0 %v3534
  %3566 = vmatpush.msra.mxu0 %v3533
  %3567 = vmatpush.msra.mxu0 %v3532
  %3568 = vmatpush.msra.mxu0 %v3531
  %3569 = vmatpush.msra.mxu0 %v3530
  %3570 = vmatpush.msra.mxu0 %v3529
  %3571 = vmatpush.msra.mxu0 %v3528
  %3572 = vmatpush.msra.mxu0 %v3527
  %3573 = vmatpush.msra.mxu0 %v3526
  %3574 = vmatpush.msra.mxu0 %v3525
  %3575 = vmatpush.msra.mxu0 %v3524
  %3576 = vmatpush.msra.mxu0 %v3523
  %3577 = vmatpush.msra.mxu0 %v3522
  %3578 = vmatmul.f32.gmra.mxu0 %v3506
  %v3579 = vpop.f32.mrf.mxu0
  %v3580 = vadd.f32 0.0, %v3579
  %3581 = vdwg.mxu0
  %3582 = vmatpush.msra.mxu0 %v3553
  %3583 = vmatpush.msra.mxu0 %v3552
  %3584 = vmatpush.msra.mxu0 %v3551
  %3585 = vmatpush.msra.mxu0 %v3550
  %3586 = vmatpush.msra.mxu0 %v3549
  %3587 = vmatpush.msra.mxu0 %v3548
  %3588 = vmatpush.msra.mxu0 %v3547
  %3589 = vmatpush.msra.mxu0 %v3546
  %3590 = vmatpush.msra.mxu0 %v3545
  %3591 = vmatpush.msra.mxu0 %v3544
  %3592 = vmatpush.msra.mxu0 %v3543
  %3593 = vmatpush.msra.mxu0 %v3542
  %3594 = vmatpush.msra.mxu0 %v3541
  %3595 = vmatpush.msra.mxu0 %v3540
  %3596 = vmatpush.msra.mxu0 %v3539
  %3597 = vmatpush.msra.mxu0 %v3538
  %3598 = vmatmul.f32.gmra.mxu0 %v3513
  %v3599 = vpop.f32.mrf.mxu0
  %v3600 = vadd.f32 %v3580, %v3599
  %3601 = vdwg.mxu0
  %3602 = vmatpush.msra.mxu0 0.0
  %3603 = vmatpush.msra.mxu0 0.0
  %3604 = vmatpush.msra.mxu0 0.0
  %3605 = vmatpush.msra.mxu0 0.0
  %3606 = vmatpush.msra.mxu0 0.0
  %3607 = vmatpush.msra.mxu0 0.0
  %3608 = vmatpush.msra.mxu0 0.0
  %3609 = vmatpush.msra.mxu0 0.0
  %3610 = vmatpush.msra.mxu0 0.0
  %3611 = vmatpush.msra.mxu0 0.0
  %3612 = vmatpush.msra.mxu0 0.0
  %3613 = vmatpush.msra.mxu0 0.0
  %3614 = vmatpush.msra.mxu0 %v3557
  %3615 = vmatpush.msra.mxu0 %v3556
  %3616 = vmatpush.msra.mxu0 %v3555
  %3617 = vmatpush.msra.mxu0 %v3554
  %3618 = vmatmul.f32.gmra.mxu0 %v3560
  %v3619 = vpop.f32.mrf.mxu0
  %v3620 = vadd.f32 %v3600, %v3619
  %3621 = vdwg.mxu0
  %v3622 = vsel %vm3499, %v1579, 0.0
  %v3623 = vrot.slane %v3622, 4
  %v3624 = vadd.f32 %v3622, %v3623
  %v3625 = vrot.slane %v3624, 2
  %v3626 = vadd.f32 %v3624, %v3625
  %v3627 = vrot.slane %v3626, 1
  %v3628 = vadd.f32 %v3626, %v3627
  %v3629 = vsel %vm3499, %v1580, 0.0
  %v3630 = vrot.slane %v3629, 4
  %v3631 = vadd.f32 %v3629, %v3630
  %v3632 = vrot.slane %v3631, 2
  %v3633 = vadd.f32 %v3631, %v3632
  %v3634 = vrot.slane %v3633, 1
  %v3635 = vadd.f32 %v3633, %v3634
  %v3636 = vsel %vm3514, %v1581, 0.0
  %v3637 = vrot.slane %v3636, 4
  %v3638 = vadd.f32 %v3636, %v3637
  %v3639 = vrot.slane %v3638, 2
  %v3640 = vadd.f32 %v3638, %v3639
  %v3641 = vrot.slane %v3640, 1
  %v3642 = vadd.f32 %v3640, %v3641
  %v3644 = vsel %vm3558, %v3642, 0
  %3646 = vmatpush.msra.mxu0 %v3537
  %3647 = vmatpush.msra.mxu0 %v3536
  %3648 = vmatpush.msra.mxu0 %v3535
  %3649 = vmatpush.msra.mxu0 %v3534
  %3650 = vmatpush.msra.mxu0 %v3533
  %3651 = vmatpush.msra.mxu0 %v3532
  %3652 = vmatpush.msra.mxu0 %v3531
  %3653 = vmatpush.msra.mxu0 %v3530
  %3654 = vmatpush.msra.mxu0 %v3529
  %3655 = vmatpush.msra.mxu0 %v3528
  %3656 = vmatpush.msra.mxu0 %v3527
  %3657 = vmatpush.msra.mxu0 %v3526
  %3658 = vmatpush.msra.mxu0 %v3525
  %3659 = vmatpush.msra.mxu0 %v3524
  %3660 = vmatpush.msra.mxu0 %v3523
  %3661 = vmatpush.msra.mxu0 %v3522
  %3662 = vmatmul.f32.gmra.mxu0 %v3628
  %v3663 = vpop.f32.mrf.mxu0
  %v3664 = vadd.f32 0.0, %v3663
  %3665 = vdwg.mxu0
  %3666 = vmatpush.msra.mxu0 %v3553
  %3667 = vmatpush.msra.mxu0 %v3552
  %3668 = vmatpush.msra.mxu0 %v3551
  %3669 = vmatpush.msra.mxu0 %v3550
  %3670 = vmatpush.msra.mxu0 %v3549
  %3671 = vmatpush.msra.mxu0 %v3548
  %3672 = vmatpush.msra.mxu0 %v3547
  %3673 = vmatpush.msra.mxu0 %v3546
  %3674 = vmatpush.msra.mxu0 %v3545
  %3675 = vmatpush.msra.mxu0 %v3544
  %3676 = vmatpush.msra.mxu0 %v3543
  %3677 = vmatpush.msra.mxu0 %v3542
  %3678 = vmatpush.msra.mxu0 %v3541
  %3679 = vmatpush.msra.mxu0 %v3540
  %3680 = vmatpush.msra.mxu0 %v3539
  %3681 = vmatpush.msra.mxu0 %v3538
  %3682 = vmatmul.f32.gmra.mxu0 %v3635
  %v3683 = vpop.f32.mrf.mxu0
  %v3684 = vadd.f32 %v3664, %v3683
  %3685 = vdwg.mxu0
  %3686 = vmatpush.msra.mxu0 0.0
  %3687 = vmatpush.msra.mxu0 0.0
  %3688 = vmatpush.msra.mxu0 0.0
  %3689 = vmatpush.msra.mxu0 0.0
  %3690 = vmatpush.msra.mxu0 0.0
  %3691 = vmatpush.msra.mxu0 0.0
  %3692 = vmatpush.msra.mxu0 0.0
  %3693 = vmatpush.msra.mxu0 0.0
  %3694 = vmatpush.msra.mxu0 0.0
  %3695 = vmatpush.msra.mxu0 0.0
  %3696 = vmatpush.msra.mxu0 0.0
  %3697 = vmatpush.msra.mxu0 0.0
  %3698 = vmatpush.msra.mxu0 %v3557
  %3699 = vmatpush.msra.mxu0 %v3556
  %3700 = vmatpush.msra.mxu0 %v3555
  %3701 = vmatpush.msra.mxu0 %v3554
  %3702 = vmatmul.f32.gmra.mxu0 %v3644
  %v3703 = vpop.f32.mrf.mxu0
  %v3704 = vadd.f32 %v3684, %v3703
  %3705 = vdwg.mxu0
  %v3706 = vrcp.pop 512.0
  %v3707 = vmul.f32 512.0, %v3706
  %v3708 = vsub.f32 1.0, %v3707
  %v3709 = vmul.f32 %v3706, %v3708
  %v3710 = vadd.f32 %v3706, %v3709
  %vm3711 = vweird.f32 %v3706
  %v3712 = vsel %vm3711, %v3706, %v3710
  %v3713 = vmul.f32 %v3620, %v3712
  %v3714 = vmul.f32 %v3704, %v3712
  %v3715 = vmul.f32 %v3713, %v3713
  %v3716 = vsub.f32 %v3714, %v3715
  %v3717 = vld [vmem:[%s12] sm:$0x1]
  %v3718 = vadd.f32 %v3716, 1e-05
  %v3719 = vrsqrt.pop %v3718
  %v3720 = vmul.f32 %v3719, %v3718
  %v3721 = vmul.f32 %v3720, %v3719
  %v3722 = vmul.f32 0.5, %v3721
  %v3723 = vsub.f32 1.5, %v3722
  %v3724 = vmul.f32 %v3719, %v3723
  %vm3725 = vweird.f32 %v3718
  %vm3726 = vweird.f32 %v3719
  %vm3727 = vmor %vm3725, %vm3726
  %v3728 = vsel %vm3727, %v3719, %v3724
  %v3729 = vmul.f32 %v3717, %v3728
  %v3730 = vld [vmem:[%s13] sm:$0x1]
  %v3731 = vmul.f32 %v3713, %v3729
  %v3732 = vsub.f32 %v3730, %v3731
  %v3733 = vld [vmem:[%s7] sm:$0xff]
  %v3734 = vld [vmem:[%s7 + $0x8] sm:$0xff]
  %v3735 = vld [vmem:[%s7 + $0x10] sm:$0xff]
  %v3736 = vld [vmem:[%s7 + $0x18] sm:$0xff]
  %v3737 = vld [vmem:[%s7 + $0x20] sm:$0xff]
  %v3738 = vld [vmem:[%s7 + $0x28] sm:$0xff]
  %vm3739 = vcmask 130048
  %v3741 = vsel %vm3739, %v3729, 0
  %3743 = vmatpush.msra.mxu0 0.0
  %3744 = vmatpush.msra.mxu0 0.0
  %3745 = vmatpush.msra.mxu0 0.0
  %3746 = vmatpush.msra.mxu0 0.0
  %3747 = vmatpush.msra.mxu0 0.0
  %3748 = vmatpush.msra.mxu0 0.0
  %3749 = vmatpush.msra.mxu0 0.0
  %3750 = vmatpush.msra.mxu0 0.0
  %3751 = vmatpush.msra.mxu0 0.0
  %3752 = vmatpush.msra.mxu0 0.0
  %3753 = vmatpush.msra.mxu0 0.0
  %3754 = vmatpush.msra.mxu0 0.0
  %3755 = vmatpush.msra.mxu0 0.0
  %3756 = vmatpush.msra.mxu0 0.0
  %3757 = vmatpush.msra.mxu0 %v3736
  %3758 = vmatpush.msra.mxu0 %v3733
  %3759 = vmatmul.f32.gmra.mxu0 %v3741
  %v3760 = vpop.f32.mrf.mxu0
  %v3761 = vadd.f32 0.0, %v3760
  %3762 = vdwg.mxu0
  %3763 = vmatpush.msra.mxu0 0.0
  %3764 = vmatpush.msra.mxu0 0.0
  %3765 = vmatpush.msra.mxu0 0.0
  %3766 = vmatpush.msra.mxu0 0.0
  %3767 = vmatpush.msra.mxu0 0.0
  %3768 = vmatpush.msra.mxu0 0.0
  %3769 = vmatpush.msra.mxu0 0.0
  %3770 = vmatpush.msra.mxu0 0.0
  %3771 = vmatpush.msra.mxu0 0.0
  %3772 = vmatpush.msra.mxu0 0.0
  %3773 = vmatpush.msra.mxu0 0.0
  %3774 = vmatpush.msra.mxu0 0.0
  %3775 = vmatpush.msra.mxu0 0.0
  %3776 = vmatpush.msra.mxu0 0.0
  %3777 = vmatpush.msra.mxu0 %v3737
  %3778 = vmatpush.msra.mxu0 %v3734
  %3779 = vmatmul.f32.gmra.mxu0 %v3741
  %v3780 = vpop.f32.mrf.mxu0
  %v3781 = vadd.f32 0.0, %v3780
  %3782 = vdwg.mxu0
  %3783 = vmatpush.msra.mxu0 0.0
  %3784 = vmatpush.msra.mxu0 0.0
  %3785 = vmatpush.msra.mxu0 0.0
  %3786 = vmatpush.msra.mxu0 0.0
  %3787 = vmatpush.msra.mxu0 0.0
  %3788 = vmatpush.msra.mxu0 0.0
  %3789 = vmatpush.msra.mxu0 0.0
  %3790 = vmatpush.msra.mxu0 0.0
  %3791 = vmatpush.msra.mxu0 0.0
  %3792 = vmatpush.msra.mxu0 0.0
  %3793 = vmatpush.msra.mxu0 0.0
  %3794 = vmatpush.msra.mxu0 0.0
  %3795 = vmatpush.msra.mxu0 0.0
  %3796 = vmatpush.msra.mxu0 0.0
  %3797 = vmatpush.msra.mxu0 %v3738
  %3798 = vmatpush.msra.mxu0 %v3735
  %3799 = vmatmul.f32.gmra.mxu0 %v3741
  %v3800 = vpop.f32.mrf.mxu0
  %v3801 = vadd.f32 0.0, %v3800
  %3802 = vdwg.mxu0
  %v3804 = vsel %vm3739, %v3732, 0
  %3806 = vmatpush.msra.mxu0 0.0
  %3807 = vmatpush.msra.mxu0 0.0
  %3808 = vmatpush.msra.mxu0 0.0
  %3809 = vmatpush.msra.mxu0 0.0
  %3810 = vmatpush.msra.mxu0 0.0
  %3811 = vmatpush.msra.mxu0 0.0
  %3812 = vmatpush.msra.mxu0 0.0
  %3813 = vmatpush.msra.mxu0 0.0
  %3814 = vmatpush.msra.mxu0 0.0
  %3815 = vmatpush.msra.mxu0 0.0
  %3816 = vmatpush.msra.mxu0 0.0
  %3817 = vmatpush.msra.mxu0 0.0
  %3818 = vmatpush.msra.mxu0 0.0
  %3819 = vmatpush.msra.mxu0 0.0
  %3820 = vmatpush.msra.mxu0 %v3736
  %3821 = vmatpush.msra.mxu0 %v3733
  %3822 = vmatmul.f32.gmra.mxu0 %v3804
  %v3823 = vpop.f32.mrf.mxu0
  %v3824 = vadd.f32 0.0, %v3823
  %3825 = vdwg.mxu0
  %3826 = vmatpush.msra.mxu0 0.0
  %3827 = vmatpush.msra.mxu0 0.0
  %3828 = vmatpush.msra.mxu0 0.0
  %3829 = vmatpush.msra.mxu0 0.0
  %3830 = vmatpush.msra.mxu0 0.0
  %3831 = vmatpush.msra.mxu0 0.0
  %3832 = vmatpush.msra.mxu0 0.0
  %3833 = vmatpush.msra.mxu0 0.0
  %3834 = vmatpush.msra.mxu0 0.0
  %3835 = vmatpush.msra.mxu0 0.0
  %3836 = vmatpush.msra.mxu0 0.0
  %3837 = vmatpush.msra.mxu0 0.0
  %3838 = vmatpush.msra.mxu0 0.0
  %3839 = vmatpush.msra.mxu0 0.0
  %3840 = vmatpush.msra.mxu0 %v3737
  %3841 = vmatpush.msra.mxu0 %v3734
  %3842 = vmatmul.f32.gmra.mxu0 %v3804
  %v3843 = vpop.f32.mrf.mxu0
  %v3844 = vadd.f32 0.0, %v3843
  %3845 = vdwg.mxu0
  %3846 = vmatpush.msra.mxu0 0.0
  %3847 = vmatpush.msra.mxu0 0.0
  %3848 = vmatpush.msra.mxu0 0.0
  %3849 = vmatpush.msra.mxu0 0.0
  %3850 = vmatpush.msra.mxu0 0.0
  %3851 = vmatpush.msra.mxu0 0.0
  %3852 = vmatpush.msra.mxu0 0.0
  %3853 = vmatpush.msra.mxu0 0.0
  %3854 = vmatpush.msra.mxu0 0.0
  %3855 = vmatpush.msra.mxu0 0.0
  %3856 = vmatpush.msra.mxu0 0.0
  %3857 = vmatpush.msra.mxu0 0.0
  %3858 = vmatpush.msra.mxu0 0.0
  %3859 = vmatpush.msra.mxu0 0.0
  %3860 = vmatpush.msra.mxu0 %v3738
  %3861 = vmatpush.msra.mxu0 %v3735
  %3862 = vmatmul.f32.gmra.mxu0 %v3804
  %v3863 = vpop.f32.mrf.mxu0
  %v3864 = vadd.f32 0.0, %v3863
  %3865 = vdwg.mxu0
  loop: start=0, step=1, limit=16
  $region88: #{discriminator_forward.1} parent=0 // loop_pre_header
    _
  $region89: #{discriminator_forward.1} parent=0 // loop_header
    %s3867 = sphi 0, %s3871
    %p3868 = scmp.ge.s32.totalorder %s3867, 16
  $region90: #{discriminator_forward.1} parent=0 // loop_header_branch
    %3870 = sbr.rel (%p3868) target = $region94
  $region91: #{discriminator_forward.1} parent=0 // loop_body
    %s3872 = smul.u32 %s3867, 3
    %s3873 = smul.addr %s3872, 2
    %s3874 = scalar_lea.vmem [#allocation6], %s3873
    %v3875 = vld [vmem:[%s3874] sm:$0x3f]
    %v3876 = vperm.slane %v3761, 0
    %v3877 = vperm.slane %v3781, 0
    %v3878 = vperm.slane %v3801, 0
    %v3882 = vrot.slane %v3877, 6
    %v3883 = vrot.slane %v3878, 4
    %v3884 = vsel %vm3499, %v3876, %v3882
    %vm3885 = vcmask 1043456
    %v3886 = vsel %vm3885, %v3884, %v3883
    %v3888 = vmul.f32 %v3875, %v3886
    %v3889 = vperm.slane %v3824, 0
    %v3890 = vperm.slane %v3844, 0
    %v3891 = vperm.slane %v3864, 0
    %v3895 = vrot.slane %v3890, 6
    %v3896 = vrot.slane %v3891, 4
    %v3897 = vsel %vm3499, %v3889, %v3895
    %v3898 = vsel %vm3885, %v3897, %v3896
    %v3900 = vadd.f32 %v3888, %v3898
    %vm3901 = vcmp.ge.f32.partialorder %v3900, 0.0
    %v3902 = vmul.f32 %v3900, 0.2
    %v3903 = vsel %vm3901, %v3900, %v3902
    %3905 = vst [vmem:[#allocation1] ss:$4 sm:$0xff] %v3903
    %v3906 = vld.sshfl [vmem:[#allocation1] sm:$0xff pattern:$0x73625140]
    %v3907 = vld.sshfl [vmem:[#allocation1 + $0x8] sm:$0xff pattern:$0x73625140]
    %v3908 = vld.sshfl [vmem:[#allocation1 + $0x10] sm:$0xff pattern:$0x73625140]
    %v3912 = vpack.c.bf16 %v3907, %v3906
    %v3913 = vpack.c.bf16 %v3908, %v3908
    %s3914 = sadd.s32 %s3867, 1
    %v3917 = vrot.slane %v3912, 3
    %v3918 = vrot.slane %v3913, 6
    %v3919 = vrot.slane %v3913, 1
    %v3922 = vsel %vm60, %v3912, %v3917
    %vm3923 = vcmask 1042434
    %v3926 = vsel %vm3923, %v3918, %v3919
    %v3927 = vsel %vm3499, %v3922, %v3926
    %s3929 = smul.u32 %s3914, 3
    %s3930 = scalar_lea.vmem [#allocation3], %s3929
    %3931 = vst.msk [vmem:[%s3930] sm:$0x7] %vm100, %v3927
  $region92: #{discriminator_forward.1} parent=0 // loop_footer
    %s3871 = sadd.s32 1, %s3867
  $region93: #{discriminator_forward.1} parent=0 // loop_footer_branch
    %3866 = sbr.rel target = $region89
  $region94: #{discriminator_forward.1} parent=0 // loop_exit
    _
  loop: start=0, step=1, limit=8
  $region95: #{discriminator_forward.1} parent=0 // loop_pre_header
    _
  $region96: #{discriminator_forward.1} parent=0 // loop_header
    %s3933 = sphi 0, %s3937
    %p3934 = scmp.ge.s32.totalorder %s3933, 8
    %v3938 = vphi 0.0, %v5930
    %v3939 = vphi 0.0, %v5931
    %v3940 = vphi 0.0, %v5932
    %v3941 = vphi 0.0, %v5936
    %v3942 = vphi 0.0, %v5937
    %v3943 = vphi 0.0, %v5938
  $region97: #{discriminator_forward.1} parent=0 // loop_header_branch
    %3936 = sbr.rel (%p3934) target = $region101
  $region98: #{discriminator_forward.1} parent=0 // loop_body
    %s3944 = smul.u32 %s3933, 2
    %s3945 = smul.u32 %s3944, 3
    %s3946 = scalar_lea.vmem [#allocation3], %s3945
    %v3947 = vld [vmem:[%s3946] sm:$0x7]
    %v3948 = vld [vmem:[%s3] sm:$0xff]
    %v3949 = vld [vmem:[%s3 + $0x8] sm:$0xf]
    %v3950 = vld [vmem:[%s3 + $0xc] sm:$0xff]
    %v3951 = vld [vmem:[%s3 + $0x14] sm:$0xf]
    %v3952 = vld [vmem:[%s3 + $0x18] sm:$0xff]
    %v3953 = vld [vmem:[%s3 + $0x20] sm:$0xf]
    %v3954 = vld [vmem:[%s3 + $0x24] sm:$0xff]
    %v3955 = vld [vmem:[%s3 + $0x2c] sm:$0xf]
    %v3956 = vld [vmem:[%s3 + $0x30] sm:$0xff]
    %v3957 = vld [vmem:[%s3 + $0x38] sm:$0xf]
    %v3958 = vld [vmem:[%s3 + $0x3c] sm:$0xff]
    %v3959 = vld [vmem:[%s3 + $0x44] sm:$0xf]
    %v3960 = vld [vmem:[%s3 + $0x48] sm:$0xff]
    %v3961 = vld [vmem:[%s3 + $0x50] sm:$0xf]
    %v3962 = vld [vmem:[%s3 + $0x54] sm:$0xff]
    %v3963 = vld [vmem:[%s3 + $0x5c] sm:$0xf]
    %v3964 = vld [vmem:[%s3 + $0x60] sm:$0xff]
    %v3965 = vld [vmem:[%s3 + $0x68] sm:$0xf]
    %v3966 = vld [vmem:[%s3 + $0x6c] sm:$0xff]
    %v3967 = vld [vmem:[%s3 + $0x74] sm:$0xf]
    %v3968 = vld [vmem:[%s3 + $0x78] sm:$0xff]
    %v3969 = vld [vmem:[%s3 + $0x80] sm:$0xf]
    %v3970 = vld [vmem:[%s3 + $0x84] sm:$0xff]
    %v3971 = vld [vmem:[%s3 + $0x8c] sm:$0xf]
    %v3972 = vld [vmem:[%s3 + $0x90] sm:$0xff]
    %v3973 = vld [vmem:[%s3 + $0x98] sm:$0xf]
    %v3974 = vld [vmem:[%s3 + $0x9c] sm:$0xff]
    %v3975 = vld [vmem:[%s3 + $0xa4] sm:$0xf]
    %v3976 = vld [vmem:[%s3 + $0xa8] sm:$0xff]
    %v3977 = vld [vmem:[%s3 + $0xb0] sm:$0xf]
    %v3978 = vld [vmem:[%s3 + $0xb4] sm:$0xff]
    %v3979 = vld [vmem:[%s3 + $0xbc] sm:$0xf]
    %v3980 = vld [vmem:[%s3 + $0xc0] sm:$0xff]
    %v3981 = vld [vmem:[%s3 + $0xc8] sm:$0xf]
    %v3982 = vld [vmem:[%s3 + $0xcc] sm:$0xff]
    %v3983 = vld [vmem:[%s3 + $0xd4] sm:$0xf]
    %v3984 = vld [vmem:[%s3 + $0xd8] sm:$0xff]
    %v3985 = vld [vmem:[%s3 + $0xe0] sm:$0xf]
    %v3986 = vld [vmem:[%s3 + $0xe4] sm:$0xff]
    %v3987 = vld [vmem:[%s3 + $0xec] sm:$0xf]
    %v3988 = vld [vmem:[%s3 + $0xf0] sm:$0xff]
    %v3989 = vld [vmem:[%s3 + $0xf8] sm:$0xf]
    %v3990 = vld [vmem:[%s3 + $0xfc] sm:$0xff]
    %v3991 = vld [vmem:[%s3 + $0x104] sm:$0xf]
    %v3992 = vld [vmem:[%s3 + $0x108] sm:$0xff]
    %v3993 = vld [vmem:[%s3 + $0x110] sm:$0xf]
    %v3994 = vld [vmem:[%s3 + $0x114] sm:$0xff]
    %v3995 = vld [vmem:[%s3 + $0x11c] sm:$0xf]
    %v3996 = vld [vmem:[%s3 + $0x120] sm:$0xff]
    %v3997 = vld [vmem:[%s3 + $0x128] sm:$0xf]
    %v3998 = vld [vmem:[%s3 + $0x12c] sm:$0xff]
    %v3999 = vld [vmem:[%s3 + $0x134] sm:$0xf]
    %v4000 = vld [vmem:[%s3 + $0x138] sm:$0xff]
    %v4001 = vld [vmem:[%s3 + $0x140] sm:$0xf]
    %v4002 = vld [vmem:[%s3 + $0x144] sm:$0xff]
    %v4003 = vld [vmem:[%s3 + $0x14c] sm:$0xf]
    %v4004 = vld [vmem:[%s3 + $0x150] sm:$0xff]
    %v4005 = vld [vmem:[%s3 + $0x158] sm:$0xf]
    %v4006 = vld [vmem:[%s3 + $0x15c] sm:$0xff]
    %v4007 = vld [vmem:[%s3 + $0x164] sm:$0xf]
    %v4008 = vld [vmem:[%s3 + $0x168] sm:$0xff]
    %v4009 = vld [vmem:[%s3 + $0x170] sm:$0xf]
    %v4010 = vld [vmem:[%s3 + $0x174] sm:$0xff]
    %v4011 = vld [vmem:[%s3 + $0x17c] sm:$0xf]
    %v4012 = vld [vmem:[%s3 + $0x180] sm:$0xff]
    %v4013 = vld [vmem:[%s3 + $0x188] sm:$0xf]
    %v4014 = vld [vmem:[%s3 + $0x18c] sm:$0xff]
    %v4015 = vld [vmem:[%s3 + $0x194] sm:$0xf]
    %v4016 = vld [vmem:[%s3 + $0x198] sm:$0xff]
    %v4017 = vld [vmem:[%s3 + $0x1a0] sm:$0xf]
    %v4018 = vld [vmem:[%s3 + $0x1a4] sm:$0xff]
    %v4019 = vld [vmem:[%s3 + $0x1ac] sm:$0xf]
    %s4020 = sadd.s32 %s3944, 1
    %s4021 = smul.u32 %s4020, 3
    %s4022 = scalar_lea.vmem [#allocation3], %s4021
    %v4023 = vld [vmem:[%s4022] sm:$0x7]
    %s4024 = scalar_lea.vmem %s3, 432
    %v4025 = vld [vmem:[%s4024] sm:$0xff]
    %v4026 = vld [vmem:[%s4024 + $0x8] sm:$0xf]
    %v4027 = vld [vmem:[%s4024 + $0xc] sm:$0xff]
    %v4028 = vld [vmem:[%s4024 + $0x14] sm:$0xf]
    %v4029 = vld [vmem:[%s4024 + $0x18] sm:$0xff]
    %v4030 = vld [vmem:[%s4024 + $0x20] sm:$0xf]
    %v4031 = vld [vmem:[%s4024 + $0x24] sm:$0xff]
    %v4032 = vld [vmem:[%s4024 + $0x2c] sm:$0xf]
    %v4033 = vld [vmem:[%s4024 + $0x30] sm:$0xff]
    %v4034 = vld [vmem:[%s4024 + $0x38] sm:$0xf]
    %v4035 = vld [vmem:[%s4024 + $0x3c] sm:$0xff]
    %v4036 = vld [vmem:[%s4024 + $0x44] sm:$0xf]
    %v4037 = vld [vmem:[%s4024 + $0x48] sm:$0xff]
    %v4038 = vld [vmem:[%s4024 + $0x50] sm:$0xf]
    %v4039 = vld [vmem:[%s4024 + $0x54] sm:$0xff]
    %v4040 = vld [vmem:[%s4024 + $0x5c] sm:$0xf]
    %v4041 = vld [vmem:[%s4024 + $0x60] sm:$0xff]
    %v4042 = vld [vmem:[%s4024 + $0x68] sm:$0xf]
    %v4043 = vld [vmem:[%s4024 + $0x6c] sm:$0xff]
    %v4044 = vld [vmem:[%s4024 + $0x74] sm:$0xf]
    %v4045 = vld [vmem:[%s4024 + $0x78] sm:$0xff]
    %v4046 = vld [vmem:[%s4024 + $0x80] sm:$0xf]
    %v4047 = vld [vmem:[%s4024 + $0x84] sm:$0xff]
    %v4048 = vld [vmem:[%s4024 + $0x8c] sm:$0xf]
    %v4049 = vld [vmem:[%s4024 + $0x90] sm:$0xff]
    %v4050 = vld [vmem:[%s4024 + $0x98] sm:$0xf]
    %v4051 = vld [vmem:[%s4024 + $0x9c] sm:$0xff]
    %v4052 = vld [vmem:[%s4024 + $0xa4] sm:$0xf]
    %v4053 = vld [vmem:[%s4024 + $0xa8] sm:$0xff]
    %v4054 = vld [vmem:[%s4024 + $0xb0] sm:$0xf]
    %v4055 = vld [vmem:[%s4024 + $0xb4] sm:$0xff]
    %v4056 = vld [vmem:[%s4024 + $0xbc] sm:$0xf]
    %v4057 = vld [vmem:[%s4024 + $0xc0] sm:$0xff]
    %v4058 = vld [vmem:[%s4024 + $0xc8] sm:$0xf]
    %v4059 = vld [vmem:[%s4024 + $0xcc] sm:$0xff]
    %v4060 = vld [vmem:[%s4024 + $0xd4] sm:$0xf]
    %v4061 = vld [vmem:[%s4024 + $0xd8] sm:$0xff]
    %v4062 = vld [vmem:[%s4024 + $0xe0] sm:$0xf]
    %v4063 = vld [vmem:[%s4024 + $0xe4] sm:$0xff]
    %v4064 = vld [vmem:[%s4024 + $0xec] sm:$0xf]
    %v4065 = vld [vmem:[%s4024 + $0xf0] sm:$0xff]
    %v4066 = vld [vmem:[%s4024 + $0xf8] sm:$0xf]
    %v4067 = vld [vmem:[%s4024 + $0xfc] sm:$0xff]
    %v4068 = vld [vmem:[%s4024 + $0x104] sm:$0xf]
    %v4069 = vld [vmem:[%s4024 + $0x108] sm:$0xff]
    %v4070 = vld [vmem:[%s4024 + $0x110] sm:$0xf]
    %v4071 = vld [vmem:[%s4024 + $0x114] sm:$0xff]
    %v4072 = vld [vmem:[%s4024 + $0x11c] sm:$0xf]
    %v4073 = vld [vmem:[%s4024 + $0x120] sm:$0xff]
    %v4074 = vld [vmem:[%s4024 + $0x128] sm:$0xf]
    %v4075 = vld [vmem:[%s4024 + $0x12c] sm:$0xff]
    %v4076 = vld [vmem:[%s4024 + $0x134] sm:$0xf]
    %v4077 = vld [vmem:[%s4024 + $0x138] sm:$0xff]
    %v4078 = vld [vmem:[%s4024 + $0x140] sm:$0xf]
    %v4079 = vld [vmem:[%s4024 + $0x144] sm:$0xff]
    %v4080 = vld [vmem:[%s4024 + $0x14c] sm:$0xf]
    %v4081 = vld [vmem:[%s4024 + $0x150] sm:$0xff]
    %v4082 = vld [vmem:[%s4024 + $0x158] sm:$0xf]
    %v4083 = vld [vmem:[%s4024 + $0x15c] sm:$0xff]
    %v4084 = vld [vmem:[%s4024 + $0x164] sm:$0xf]
    %v4085 = vld [vmem:[%s4024 + $0x168] sm:$0xff]
    %v4086 = vld [vmem:[%s4024 + $0x170] sm:$0xf]
    %v4087 = vld [vmem:[%s4024 + $0x174] sm:$0xff]
    %v4088 = vld [vmem:[%s4024 + $0x17c] sm:$0xf]
    %v4089 = vld [vmem:[%s4024 + $0x180] sm:$0xff]
    %v4090 = vld [vmem:[%s4024 + $0x188] sm:$0xf]
    %v4091 = vld [vmem:[%s4024 + $0x18c] sm:$0xff]
    %v4092 = vld [vmem:[%s4024 + $0x194] sm:$0xf]
    %v4093 = vld [vmem:[%s4024 + $0x198] sm:$0xff]
    %v4094 = vld [vmem:[%s4024 + $0x1a0] sm:$0xf]
    %v4095 = vld [vmem:[%s4024 + $0x1a4] sm:$0xff]
    %v4096 = vld [vmem:[%s4024 + $0x1ac] sm:$0xf]
    %4098 = vst [vmem:[#allocation1] ss:$9 sm:$0xff] %v4023
    %v4099 = vld [vmem:[#allocation1] sm:$0xff]
    %v4100 = vld [vmem:[#allocation1 + $0x9] sm:$0xff]
    %v4101 = vld [vmem:[#allocation1 + $0x12] sm:$0xff]
    %v4176 = vunpack.c.l.b16 %v4025
    %v4177 = vunpack.c.h.b16 %v4025
    %v4178 = vunpack.c.l.b16 %v4026
    %v4179 = vunpack.c.l.b16 %v4027
    %v4180 = vunpack.c.h.b16 %v4027
    %v4181 = vunpack.c.l.b16 %v4028
    %v4182 = vunpack.c.l.b16 %v4029
    %v4183 = vunpack.c.h.b16 %v4029
    %v4184 = vunpack.c.l.b16 %v4030
    %v4185 = vunpack.c.l.b16 %v4031
    %v4186 = vunpack.c.h.b16 %v4031
    %v4187 = vunpack.c.l.b16 %v4032
    %v4188 = vunpack.c.l.b16 %v4033
    %v4189 = vunpack.c.h.b16 %v4033
    %v4190 = vunpack.c.l.b16 %v4034
    %v4191 = vunpack.c.l.b16 %v4035
    %v4192 = vunpack.c.h.b16 %v4035
    %v4193 = vunpack.c.l.b16 %v4036
    %v4194 = vunpack.c.l.b16 %v4037
    %v4195 = vunpack.c.h.b16 %v4037
    %v4196 = vunpack.c.l.b16 %v4038
    %v4197 = vunpack.c.l.b16 %v4039
    %v4198 = vunpack.c.h.b16 %v4039
    %v4199 = vunpack.c.l.b16 %v4040
    %v4200 = vunpack.c.l.b16 %v4041
    %v4201 = vunpack.c.h.b16 %v4041
    %v4202 = vunpack.c.l.b16 %v4042
    %v4203 = vunpack.c.l.b16 %v4043
    %v4204 = vunpack.c.h.b16 %v4043
    %v4205 = vunpack.c.l.b16 %v4044
    %v4206 = vunpack.c.l.b16 %v4045
    %v4207 = vunpack.c.h.b16 %v4045
    %v4208 = vunpack.c.l.b16 %v4046
    %v4209 = vunpack.c.l.b16 %v4047
    %v4210 = vunpack.c.h.b16 %v4047
    %v4211 = vunpack.c.l.b16 %v4048
    %v4212 = vunpack.c.l.b16 %v4049
    %v4213 = vunpack.c.h.b16 %v4049
    %v4214 = vunpack.c.l.b16 %v4050
    %v4215 = vunpack.c.l.b16 %v4051
    %v4216 = vunpack.c.h.b16 %v4051
    %v4217 = vunpack.c.l.b16 %v4052
    %v4218 = vunpack.c.l.b16 %v4053
    %v4219 = vunpack.c.h.b16 %v4053
    %v4220 = vunpack.c.l.b16 %v4054
    %v4221 = vunpack.c.l.b16 %v4055
    %v4222 = vunpack.c.h.b16 %v4055
    %v4223 = vunpack.c.l.b16 %v4056
    %v4224 = vunpack.c.l.b16 %v4057
    %v4225 = vunpack.c.h.b16 %v4057
    %v4226 = vunpack.c.l.b16 %v4058
    %v4227 = vunpack.c.l.b16 %v4059
    %v4228 = vunpack.c.h.b16 %v4059
    %v4229 = vunpack.c.l.b16 %v4060
    %v4230 = vunpack.c.l.b16 %v4061
    %v4231 = vunpack.c.h.b16 %v4061
    %v4232 = vunpack.c.l.b16 %v4062
    %v4233 = vunpack.c.l.b16 %v4063
    %v4234 = vunpack.c.h.b16 %v4063
    %v4235 = vunpack.c.l.b16 %v4064
    %v4236 = vunpack.c.l.b16 %v4065
    %v4237 = vunpack.c.h.b16 %v4065
    %v4238 = vunpack.c.l.b16 %v4066
    %v4239 = vunpack.c.l.b16 %v4067
    %v4240 = vunpack.c.h.b16 %v4067
    %v4241 = vunpack.c.l.b16 %v4068
    %v4242 = vunpack.c.l.b16 %v4069
    %v4243 = vunpack.c.h.b16 %v4069
    %v4244 = vunpack.c.l.b16 %v4070
    %v4245 = vunpack.c.l.b16 %v4071
    %v4246 = vunpack.c.h.b16 %v4071
    %v4247 = vunpack.c.l.b16 %v4072
    %v4248 = vunpack.c.l.b16 %v4073
    %v4249 = vunpack.c.h.b16 %v4073
    %v4250 = vunpack.c.l.b16 %v4074
    %v4251 = vunpack.c.l.b16 %v4075
    %v4252 = vunpack.c.h.b16 %v4075
    %v4253 = vunpack.c.l.b16 %v4076
    %v4254 = vunpack.c.l.b16 %v4077
    %v4255 = vunpack.c.h.b16 %v4077
    %v4256 = vunpack.c.l.b16 %v4078
    %v4257 = vunpack.c.l.b16 %v4079
    %v4258 = vunpack.c.h.b16 %v4079
    %v4259 = vunpack.c.l.b16 %v4080
    %v4260 = vunpack.c.l.b16 %v4081
    %v4261 = vunpack.c.h.b16 %v4081
    %v4262 = vunpack.c.l.b16 %v4082
    %v4263 = vunpack.c.l.b16 %v4083
    %v4264 = vunpack.c.h.b16 %v4083
    %v4265 = vunpack.c.l.b16 %v4084
    %v4266 = vunpack.c.l.b16 %v4085
    %v4267 = vunpack.c.h.b16 %v4085
    %v4268 = vunpack.c.l.b16 %v4086
    %v4269 = vunpack.c.l.b16 %v4087
    %v4270 = vunpack.c.h.b16 %v4087
    %v4271 = vunpack.c.l.b16 %v4088
    %v4272 = vunpack.c.l.b16 %v4089
    %v4273 = vunpack.c.h.b16 %v4089
    %v4274 = vunpack.c.l.b16 %v4090
    %v4275 = vunpack.c.l.b16 %v4091
    %v4276 = vunpack.c.h.b16 %v4091
    %v4277 = vunpack.c.l.b16 %v4092
    %v4278 = vunpack.c.l.b16 %v4093
    %v4279 = vunpack.c.h.b16 %v4093
    %v4280 = vunpack.c.l.b16 %v4094
    %v4281 = vunpack.c.l.b16 %v4095
    %v4282 = vunpack.c.h.b16 %v4095
    %v4283 = vunpack.c.l.b16 %v4096
    %v4284 = vpack.c.b16 %v4179, %v4176
    %v4285 = vpack.c.b16 %v4180, %v4177
    %v4286 = vpack.c.b16 %v4181, %v4178
    %v4287 = vpack.c.b16 %v4185, %v4182
    %v4288 = vpack.c.b16 %v4186, %v4183
    %v4289 = vpack.c.b16 %v4187, %v4184
    %v4290 = vpack.c.b16 %v4191, %v4188
    %v4291 = vpack.c.b16 %v4192, %v4189
    %v4292 = vpack.c.b16 %v4193, %v4190
    %v4293 = vpack.c.b16 %v4197, %v4194
    %v4294 = vpack.c.b16 %v4198, %v4195
    %v4295 = vpack.c.b16 %v4199, %v4196
    %v4296 = vpack.c.b16 %v4203, %v4200
    %v4297 = vpack.c.b16 %v4204, %v4201
    %v4298 = vpack.c.b16 %v4205, %v4202
    %v4299 = vpack.c.b16 %v4209, %v4206
    %v4300 = vpack.c.b16 %v4210, %v4207
    %v4301 = vpack.c.b16 %v4211, %v4208
    %v4302 = vpack.c.b16 %v4215, %v4212
    %v4303 = vpack.c.b16 %v4216, %v4213
    %v4304 = vpack.c.b16 %v4217, %v4214
    %v4305 = vpack.c.b16 %v4221, %v4218
    %v4306 = vpack.c.b16 %v4222, %v4219
    %v4307 = vpack.c.b16 %v4223, %v4220
    %v4308 = vpack.c.b16 %v4227, %v4224
    %v4309 = vpack.c.b16 %v4228, %v4225
    %v4310 = vpack.c.b16 %v4229, %v4226
    %v4311 = vpack.c.b16 %v4233, %v4230
    %v4312 = vpack.c.b16 %v4234, %v4231
    %v4313 = vpack.c.b16 %v4235, %v4232
    %v4314 = vpack.c.b16 %v4239, %v4236
    %v4315 = vpack.c.b16 %v4240, %v4237
    %v4316 = vpack.c.b16 %v4241, %v4238
    %v4317 = vpack.c.b16 %v4245, %v4242
    %v4318 = vpack.c.b16 %v4246, %v4243
    %v4319 = vpack.c.b16 %v4247, %v4244
    %v4320 = vpack.c.b16 %v4251, %v4248
    %v4321 = vpack.c.b16 %v4252, %v4249
    %v4322 = vpack.c.b16 %v4253, %v4250
    %v4323 = vpack.c.b16 %v4257, %v4254
    %v4324 = vpack.c.b16 %v4258, %v4255
    %v4325 = vpack.c.b16 %v4259, %v4256
    %v4326 = vpack.c.b16 %v4263, %v4260
    %v4327 = vpack.c.b16 %v4264, %v4261
    %v4328 = vpack.c.b16 %v4265, %v4262
    %v4329 = vpack.c.b16 %v4269, %v4266
    %v4330 = vpack.c.b16 %v4270, %v4267
    %v4331 = vpack.c.b16 %v4271, %v4268
    %v4332 = vpack.c.b16 %v4275, %v4272
    %v4333 = vpack.c.b16 %v4276, %v4273
    %v4334 = vpack.c.b16 %v4277, %v4274
    %v4335 = vpack.c.b16 %v4281, %v4278
    %v4336 = vpack.c.b16 %v4282, %v4279
    %v4337 = vpack.c.b16 %v4283, %v4280
    %v4392 = vsel %vm3558, %v4101, 0
    %4394 = vmatpush.bf16.msra.mxu0 %v4305
    %4395 = vmatpush.bf16.msra.mxu0 %v4302
    %4396 = vmatpush.bf16.msra.mxu0 %v4299
    %4397 = vmatpush.bf16.msra.mxu0 %v4296
    %4398 = vmatpush.bf16.msra.mxu0 %v4293
    %4399 = vmatpush.bf16.msra.mxu0 %v4290
    %4400 = vmatpush.bf16.msra.mxu0 %v4287
    %4401 = vmatpush.bf16.msra.mxu0 %v4284
    %4402 = vmatmul.bf16.gmra.mxu0 %v4099
    %v4403 = vpop.f32.mrf.mxu0
    %v4404 = vadd.f32 0.0, %v4403
    %v4405 = vpop.f32.mrf.mxu0
    %4406 = vdwg.mxu0
    %4407 = vmatpush.bf16.msra.mxu0 %v4329
    %4408 = vmatpush.bf16.msra.mxu0 %v4326
    %4409 = vmatpush.bf16.msra.mxu0 %v4323
    %4410 = vmatpush.bf16.msra.mxu0 %v4320
    %4411 = vmatpush.bf16.msra.mxu0 %v4317
    %4412 = vmatpush.bf16.msra.mxu0 %v4314
    %4413 = vmatpush.bf16.msra.mxu0 %v4311
    %4414 = vmatpush.bf16.msra.mxu0 %v4308
    %4415 = vmatmul.bf16.gmra.mxu0 %v4100
    %v4416 = vpop.f32.mrf.mxu0
    %v4417 = vadd.f32 %v4404, %v4416
    %v4418 = vpop.f32.mrf.mxu0
    %4419 = vdwg.mxu0
    %4420 = vmatpush.bf16.msra.mxu0 0
    %4421 = vmatpush.bf16.msra.mxu0 0
    %4422 = vmatpush.bf16.msra.mxu0 0
    %4423 = vmatpush.bf16.msra.mxu0 0
    %4424 = vmatpush.bf16.msra.mxu0 0
    %4425 = vmatpush.bf16.msra.mxu0 0
    %4426 = vmatpush.bf16.msra.mxu0 %v4335
    %4427 = vmatpush.bf16.msra.mxu0 %v4332
    %4428 = vmatmul.bf16.gmra.mxu0 %v4392
    %v4429 = vpop.f32.mrf.mxu0
    %v4430 = vadd.f32 %v4417, %v4429
    %v4431 = vpop.f32.mrf.mxu0
    %4432 = vdwg.mxu0
    %4433 = vmatpush.bf16.msra.mxu0 %v4306
    %4434 = vmatpush.bf16.msra.mxu0 %v4303
    %4435 = vmatpush.bf16.msra.mxu0 %v4300
    %4436 = vmatpush.bf16.msra.mxu0 %v4297
    %4437 = vmatpush.bf16.msra.mxu0 %v4294
    %4438 = vmatpush.bf16.msra.mxu0 %v4291
    %4439 = vmatpush.bf16.msra.mxu0 %v4288
    %4440 = vmatpush.bf16.msra.mxu0 %v4285
    %4441 = vmatmul.bf16.gmra.mxu0 %v4099
    %v4442 = vpop.f32.mrf.mxu0
    %v4443 = vadd.f32 0.0, %v4442
    %v4444 = vpop.f32.mrf.mxu0
    %4445 = vdwg.mxu0
    %4446 = vmatpush.bf16.msra.mxu0 %v4330
    %4447 = vmatpush.bf16.msra.mxu0 %v4327
    %4448 = vmatpush.bf16.msra.mxu0 %v4324
    %4449 = vmatpush.bf16.msra.mxu0 %v4321
    %4450 = vmatpush.bf16.msra.mxu0 %v4318
    %4451 = vmatpush.bf16.msra.mxu0 %v4315
    %4452 = vmatpush.bf16.msra.mxu0 %v4312
    %4453 = vmatpush.bf16.msra.mxu0 %v4309
    %4454 = vmatmul.bf16.gmra.mxu0 %v4100
    %v4455 = vpop.f32.mrf.mxu0
    %v4456 = vadd.f32 %v4443, %v4455
    %v4457 = vpop.f32.mrf.mxu0
    %4458 = vdwg.mxu0
    %4459 = vmatpush.bf16.msra.mxu0 0
    %4460 = vmatpush.bf16.msra.mxu0 0
    %4461 = vmatpush.bf16.msra.mxu0 0
    %4462 = vmatpush.bf16.msra.mxu0 0
    %4463 = vmatpush.bf16.msra.mxu0 0
    %4464 = vmatpush.bf16.msra.mxu0 0
    %4465 = vmatpush.bf16.msra.mxu0 %v4336
    %4466 = vmatpush.bf16.msra.mxu0 %v4333
    %4467 = vmatmul.bf16.gmra.mxu0 %v4392
    %v4468 = vpop.f32.mrf.mxu0
    %v4469 = vadd.f32 %v4456, %v4468
    %v4470 = vpop.f32.mrf.mxu0
    %4471 = vdwg.mxu0
    %4472 = vmatpush.bf16.msra.mxu0 %v4307
    %4473 = vmatpush.bf16.msra.mxu0 %v4304
    %4474 = vmatpush.bf16.msra.mxu0 %v4301
    %4475 = vmatpush.bf16.msra.mxu0 %v4298
    %4476 = vmatpush.bf16.msra.mxu0 %v4295
    %4477 = vmatpush.bf16.msra.mxu0 %v4292
    %4478 = vmatpush.bf16.msra.mxu0 %v4289
    %4479 = vmatpush.bf16.msra.mxu0 %v4286
    %4480 = vmatmul.bf16.gmra.mxu0 %v4099
    %v4481 = vpop.f32.mrf.mxu0
    %v4482 = vadd.f32 0.0, %v4481
    %v4483 = vpop.f32.mrf.mxu0
    %4484 = vdwg.mxu0
    %4485 = vmatpush.bf16.msra.mxu0 %v4331
    %4486 = vmatpush.bf16.msra.mxu0 %v4328
    %4487 = vmatpush.bf16.msra.mxu0 %v4325
    %4488 = vmatpush.bf16.msra.mxu0 %v4322
    %4489 = vmatpush.bf16.msra.mxu0 %v4319
    %4490 = vmatpush.bf16.msra.mxu0 %v4316
    %4491 = vmatpush.bf16.msra.mxu0 %v4313
    %4492 = vmatpush.bf16.msra.mxu0 %v4310
    %4493 = vmatmul.bf16.gmra.mxu0 %v4100
    %v4494 = vpop.f32.mrf.mxu0
    %v4495 = vadd.f32 %v4482, %v4494
    %v4496 = vpop.f32.mrf.mxu0
    %4497 = vdwg.mxu0
    %4498 = vmatpush.bf16.msra.mxu0 0
    %4499 = vmatpush.bf16.msra.mxu0 0
    %4500 = vmatpush.bf16.msra.mxu0 0
    %4501 = vmatpush.bf16.msra.mxu0 0
    %4502 = vmatpush.bf16.msra.mxu0 0
    %4503 = vmatpush.bf16.msra.mxu0 0
    %4504 = vmatpush.bf16.msra.mxu0 %v4337
    %4505 = vmatpush.bf16.msra.mxu0 %v4334
    %4506 = vmatmul.bf16.gmra.mxu0 %v4392
    %v4507 = vpop.f32.mrf.mxu0
    %v4508 = vadd.f32 %v4495, %v4507
    %v4509 = vpop.f32.mrf.mxu0
    %4510 = vdwg.mxu0
    %4512 = vst [vmem:[#allocation1] ss:$9 sm:$0xff] %v3947
    %v4513 = vld [vmem:[#allocation1] sm:$0xff]
    %v4514 = vld [vmem:[#allocation1 + $0x9] sm:$0xff]
    %v4515 = vld [vmem:[#allocation1 + $0x12] sm:$0xff]
    %v4590 = vunpack.c.l.b16 %v3948
    %v4591 = vunpack.c.h.b16 %v3948
    %v4592 = vunpack.c.l.b16 %v3949
    %v4593 = vunpack.c.l.b16 %v3950
    %v4594 = vunpack.c.h.b16 %v3950
    %v4595 = vunpack.c.l.b16 %v3951
    %v4596 = vunpack.c.l.b16 %v3952
    %v4597 = vunpack.c.h.b16 %v3952
    %v4598 = vunpack.c.l.b16 %v3953
    %v4599 = vunpack.c.l.b16 %v3954
    %v4600 = vunpack.c.h.b16 %v3954
    %v4601 = vunpack.c.l.b16 %v3955
    %v4602 = vunpack.c.l.b16 %v3956
    %v4603 = vunpack.c.h.b16 %v3956
    %v4604 = vunpack.c.l.b16 %v3957
    %v4605 = vunpack.c.l.b16 %v3958
    %v4606 = vunpack.c.h.b16 %v3958
    %v4607 = vunpack.c.l.b16 %v3959
    %v4608 = vunpack.c.l.b16 %v3960
    %v4609 = vunpack.c.h.b16 %v3960
    %v4610 = vunpack.c.l.b16 %v3961
    %v4611 = vunpack.c.l.b16 %v3962
    %v4612 = vunpack.c.h.b16 %v3962
    %v4613 = vunpack.c.l.b16 %v3963
    %v4614 = vunpack.c.l.b16 %v3964
    %v4615 = vunpack.c.h.b16 %v3964
    %v4616 = vunpack.c.l.b16 %v3965
    %v4617 = vunpack.c.l.b16 %v3966
    %v4618 = vunpack.c.h.b16 %v3966
    %v4619 = vunpack.c.l.b16 %v3967
    %v4620 = vunpack.c.l.b16 %v3968
    %v4621 = vunpack.c.h.b16 %v3968
    %v4622 = vunpack.c.l.b16 %v3969
    %v4623 = vunpack.c.l.b16 %v3970
    %v4624 = vunpack.c.h.b16 %v3970
    %v4625 = vunpack.c.l.b16 %v3971
    %v4626 = vunpack.c.l.b16 %v3972
    %v4627 = vunpack.c.h.b16 %v3972
    %v4628 = vunpack.c.l.b16 %v3973
    %v4629 = vunpack.c.l.b16 %v3974
    %v4630 = vunpack.c.h.b16 %v3974
    %v4631 = vunpack.c.l.b16 %v3975
    %v4632 = vunpack.c.l.b16 %v3976
    %v4633 = vunpack.c.h.b16 %v3976
    %v4634 = vunpack.c.l.b16 %v3977
    %v4635 = vunpack.c.l.b16 %v3978
    %v4636 = vunpack.c.h.b16 %v3978
    %v4637 = vunpack.c.l.b16 %v3979
    %v4638 = vunpack.c.l.b16 %v3980
    %v4639 = vunpack.c.h.b16 %v3980
    %v4640 = vunpack.c.l.b16 %v3981
    %v4641 = vunpack.c.l.b16 %v3982
    %v4642 = vunpack.c.h.b16 %v3982
    %v4643 = vunpack.c.l.b16 %v3983
    %v4644 = vunpack.c.l.b16 %v3984
    %v4645 = vunpack.c.h.b16 %v3984
    %v4646 = vunpack.c.l.b16 %v3985
    %v4647 = vunpack.c.l.b16 %v3986
    %v4648 = vunpack.c.h.b16 %v3986
    %v4649 = vunpack.c.l.b16 %v3987
    %v4650 = vunpack.c.l.b16 %v3988
    %v4651 = vunpack.c.h.b16 %v3988
    %v4652 = vunpack.c.l.b16 %v3989
    %v4653 = vunpack.c.l.b16 %v3990
    %v4654 = vunpack.c.h.b16 %v3990
    %v4655 = vunpack.c.l.b16 %v3991
    %v4656 = vunpack.c.l.b16 %v3992
    %v4657 = vunpack.c.h.b16 %v3992
    %v4658 = vunpack.c.l.b16 %v3993
    %v4659 = vunpack.c.l.b16 %v3994
    %v4660 = vunpack.c.h.b16 %v3994
    %v4661 = vunpack.c.l.b16 %v3995
    %v4662 = vunpack.c.l.b16 %v3996
    %v4663 = vunpack.c.h.b16 %v3996
    %v4664 = vunpack.c.l.b16 %v3997
    %v4665 = vunpack.c.l.b16 %v3998
    %v4666 = vunpack.c.h.b16 %v3998
    %v4667 = vunpack.c.l.b16 %v3999
    %v4668 = vunpack.c.l.b16 %v4000
    %v4669 = vunpack.c.h.b16 %v4000
    %v4670 = vunpack.c.l.b16 %v4001
    %v4671 = vunpack.c.l.b16 %v4002
    %v4672 = vunpack.c.h.b16 %v4002
    %v4673 = vunpack.c.l.b16 %v4003
    %v4674 = vunpack.c.l.b16 %v4004
    %v4675 = vunpack.c.h.b16 %v4004
    %v4676 = vunpack.c.l.b16 %v4005
    %v4677 = vunpack.c.l.b16 %v4006
    %v4678 = vunpack.c.h.b16 %v4006
    %v4679 = vunpack.c.l.b16 %v4007
    %v4680 = vunpack.c.l.b16 %v4008
    %v4681 = vunpack.c.h.b16 %v4008
    %v4682 = vunpack.c.l.b16 %v4009
    %v4683 = vunpack.c.l.b16 %v4010
    %v4684 = vunpack.c.h.b16 %v4010
    %v4685 = vunpack.c.l.b16 %v4011
    %v4686 = vunpack.c.l.b16 %v4012
    %v4687 = vunpack.c.h.b16 %v4012
    %v4688 = vunpack.c.l.b16 %v4013
    %v4689 = vunpack.c.l.b16 %v4014
    %v4690 = vunpack.c.h.b16 %v4014
    %v4691 = vunpack.c.l.b16 %v4015
    %v4692 = vunpack.c.l.b16 %v4016
    %v4693 = vunpack.c.h.b16 %v4016
    %v4694 = vunpack.c.l.b16 %v4017
    %v4695 = vunpack.c.l.b16 %v4018
    %v4696 = vunpack.c.h.b16 %v4018
    %v4697 = vunpack.c.l.b16 %v4019
    %v4698 = vpack.c.b16 %v4593, %v4590
    %v4699 = vpack.c.b16 %v4594, %v4591
    %v4700 = vpack.c.b16 %v4595, %v4592
    %v4701 = vpack.c.b16 %v4599, %v4596
    %v4702 = vpack.c.b16 %v4600, %v4597
    %v4703 = vpack.c.b16 %v4601, %v4598
    %v4704 = vpack.c.b16 %v4605, %v4602
    %v4705 = vpack.c.b16 %v4606, %v4603
    %v4706 = vpack.c.b16 %v4607, %v4604
    %v4707 = vpack.c.b16 %v4611, %v4608
    %v4708 = vpack.c.b16 %v4612, %v4609
    %v4709 = vpack.c.b16 %v4613, %v4610
    %v4710 = vpack.c.b16 %v4617, %v4614
    %v4711 = vpack.c.b16 %v4618, %v4615
    %v4712 = vpack.c.b16 %v4619, %v4616
    %v4713 = vpack.c.b16 %v4623, %v4620
    %v4714 = vpack.c.b16 %v4624, %v4621
    %v4715 = vpack.c.b16 %v4625, %v4622
    %v4716 = vpack.c.b16 %v4629, %v4626
    %v4717 = vpack.c.b16 %v4630, %v4627
    %v4718 = vpack.c.b16 %v4631, %v4628
    %v4719 = vpack.c.b16 %v4635, %v4632
    %v4720 = vpack.c.b16 %v4636, %v4633
    %v4721 = vpack.c.b16 %v4637, %v4634
    %v4722 = vpack.c.b16 %v4641, %v4638
    %v4723 = vpack.c.b16 %v4642, %v4639
    %v4724 = vpack.c.b16 %v4643, %v4640
    %v4725 = vpack.c.b16 %v4647, %v4644
    %v4726 = vpack.c.b16 %v4648, %v4645
    %v4727 = vpack.c.b16 %v4649, %v4646
    %v4728 = vpack.c.b16 %v4653, %v4650
    %v4729 = vpack.c.b16 %v4654, %v4651
    %v4730 = vpack.c.b16 %v4655, %v4652
    %v4731 = vpack.c.b16 %v4659, %v4656
    %v4732 = vpack.c.b16 %v4660, %v4657
    %v4733 = vpack.c.b16 %v4661, %v4658
    %v4734 = vpack.c.b16 %v4665, %v4662
    %v4735 = vpack.c.b16 %v4666, %v4663
    %v4736 = vpack.c.b16 %v4667, %v4664
    %v4737 = vpack.c.b16 %v4671, %v4668
    %v4738 = vpack.c.b16 %v4672, %v4669
    %v4739 = vpack.c.b16 %v4673, %v4670
    %v4740 = vpack.c.b16 %v4677, %v4674
    %v4741 = vpack.c.b16 %v4678, %v4675
    %v4742 = vpack.c.b16 %v4679, %v4676
    %v4743 = vpack.c.b16 %v4683, %v4680
    %v4744 = vpack.c.b16 %v4684, %v4681
    %v4745 = vpack.c.b16 %v4685, %v4682
    %v4746 = vpack.c.b16 %v4689, %v4686
    %v4747 = vpack.c.b16 %v4690, %v4687
    %v4748 = vpack.c.b16 %v4691, %v4688
    %v4749 = vpack.c.b16 %v4695, %v4692
    %v4750 = vpack.c.b16 %v4696, %v4693
    %v4751 = vpack.c.b16 %v4697, %v4694
    %v4806 = vsel %vm3558, %v4515, 0
    %4808 = vmatpush.bf16.msra.mxu0 %v4719
    %4809 = vmatpush.bf16.msra.mxu0 %v4716
    %4810 = vmatpush.bf16.msra.mxu0 %v4713
    %4811 = vmatpush.bf16.msra.mxu0 %v4710
    %4812 = vmatpush.bf16.msra.mxu0 %v4707
    %4813 = vmatpush.bf16.msra.mxu0 %v4704
    %4814 = vmatpush.bf16.msra.mxu0 %v4701
    %4815 = vmatpush.bf16.msra.mxu0 %v4698
    %4816 = vmatmul.bf16.gmra.mxu0 %v4513
    %v4817 = vpop.f32.mrf.mxu0
    %v4818 = vadd.f32 %v4430, %v4817
    %v4819 = vpop.f32.mrf.mxu0
    %4820 = vdwg.mxu0
    %4821 = vmatpush.bf16.msra.mxu0 %v4743
    %4822 = vmatpush.bf16.msra.mxu0 %v4740
    %4823 = vmatpush.bf16.msra.mxu0 %v4737
    %4824 = vmatpush.bf16.msra.mxu0 %v4734
    %4825 = vmatpush.bf16.msra.mxu0 %v4731
    %4826 = vmatpush.bf16.msra.mxu0 %v4728
    %4827 = vmatpush.bf16.msra.mxu0 %v4725
    %4828 = vmatpush.bf16.msra.mxu0 %v4722
    %4829 = vmatmul.bf16.gmra.mxu0 %v4514
    %v4830 = vpop.f32.mrf.mxu0
    %v4831 = vadd.f32 %v4818, %v4830
    %v4832 = vpop.f32.mrf.mxu0
    %4833 = vdwg.mxu0
    %4834 = vmatpush.bf16.msra.mxu0 0
    %4835 = vmatpush.bf16.msra.mxu0 0
    %4836 = vmatpush.bf16.msra.mxu0 0
    %4837 = vmatpush.bf16.msra.mxu0 0
    %4838 = vmatpush.bf16.msra.mxu0 0
    %4839 = vmatpush.bf16.msra.mxu0 0
    %4840 = vmatpush.bf16.msra.mxu0 %v4749
    %4841 = vmatpush.bf16.msra.mxu0 %v4746
    %4842 = vmatmul.bf16.gmra.mxu0 %v4806
    %v4843 = vpop.f32.mrf.mxu0
    %v4844 = vadd.f32 %v4831, %v4843
    %v4845 = vpop.f32.mrf.mxu0
    %4846 = vdwg.mxu0
    %4847 = vmatpush.bf16.msra.mxu0 %v4720
    %4848 = vmatpush.bf16.msra.mxu0 %v4717
    %4849 = vmatpush.bf16.msra.mxu0 %v4714
    %4850 = vmatpush.bf16.msra.mxu0 %v4711
    %4851 = vmatpush.bf16.msra.mxu0 %v4708
    %4852 = vmatpush.bf16.msra.mxu0 %v4705
    %4853 = vmatpush.bf16.msra.mxu0 %v4702
    %4854 = vmatpush.bf16.msra.mxu0 %v4699
    %4855 = vmatmul.bf16.gmra.mxu0 %v4513
    %v4856 = vpop.f32.mrf.mxu0
    %v4857 = vadd.f32 %v4469, %v4856
    %v4858 = vpop.f32.mrf.mxu0
    %4859 = vdwg.mxu0
    %4860 = vmatpush.bf16.msra.mxu0 %v4744
    %4861 = vmatpush.bf16.msra.mxu0 %v4741
    %4862 = vmatpush.bf16.msra.mxu0 %v4738
    %4863 = vmatpush.bf16.msra.mxu0 %v4735
    %4864 = vmatpush.bf16.msra.mxu0 %v4732
    %4865 = vmatpush.bf16.msra.mxu0 %v4729
    %4866 = vmatpush.bf16.msra.mxu0 %v4726
    %4867 = vmatpush.bf16.msra.mxu0 %v4723
    %4868 = vmatmul.bf16.gmra.mxu0 %v4514
    %v4869 = vpop.f32.mrf.mxu0
    %v4870 = vadd.f32 %v4857, %v4869
    %v4871 = vpop.f32.mrf.mxu0
    %4872 = vdwg.mxu0
    %4873 = vmatpush.bf16.msra.mxu0 0
    %4874 = vmatpush.bf16.msra.mxu0 0
    %4875 = vmatpush.bf16.msra.mxu0 0
    %4876 = vmatpush.bf16.msra.mxu0 0
    %4877 = vmatpush.bf16.msra.mxu0 0
    %4878 = vmatpush.bf16.msra.mxu0 0
    %4879 = vmatpush.bf16.msra.mxu0 %v4750
    %4880 = vmatpush.bf16.msra.mxu0 %v4747
    %4881 = vmatmul.bf16.gmra.mxu0 %v4806
    %v4882 = vpop.f32.mrf.mxu0
    %v4883 = vadd.f32 %v4870, %v4882
    %v4884 = vpop.f32.mrf.mxu0
    %4885 = vdwg.mxu0
    %4886 = vmatpush.bf16.msra.mxu0 %v4721
    %4887 = vmatpush.bf16.msra.mxu0 %v4718
    %4888 = vmatpush.bf16.msra.mxu0 %v4715
    %4889 = vmatpush.bf16.msra.mxu0 %v4712
    %4890 = vmatpush.bf16.msra.mxu0 %v4709
    %4891 = vmatpush.bf16.msra.mxu0 %v4706
    %4892 = vmatpush.bf16.msra.mxu0 %v4703
    %4893 = vmatpush.bf16.msra.mxu0 %v4700
    %4894 = vmatmul.bf16.gmra.mxu0 %v4513
    %v4895 = vpop.f32.mrf.mxu0
    %v4896 = vadd.f32 %v4508, %v4895
    %v4897 = vpop.f32.mrf.mxu0
    %4898 = vdwg.mxu0
    %4899 = vmatpush.bf16.msra.mxu0 %v4745
    %4900 = vmatpush.bf16.msra.mxu0 %v4742
    %4901 = vmatpush.bf16.msra.mxu0 %v4739
    %4902 = vmatpush.bf16.msra.mxu0 %v4736
    %4903 = vmatpush.bf16.msra.mxu0 %v4733
    %4904 = vmatpush.bf16.msra.mxu0 %v4730
    %4905 = vmatpush.bf16.msra.mxu0 %v4727
    %4906 = vmatpush.bf16.msra.mxu0 %v4724
    %4907 = vmatmul.bf16.gmra.mxu0 %v4514
    %v4908 = vpop.f32.mrf.mxu0
    %v4909 = vadd.f32 %v4896, %v4908
    %v4910 = vpop.f32.mrf.mxu0
    %4911 = vdwg.mxu0
    %4912 = vmatpush.bf16.msra.mxu0 0
    %4913 = vmatpush.bf16.msra.mxu0 0
    %4914 = vmatpush.bf16.msra.mxu0 0
    %4915 = vmatpush.bf16.msra.mxu0 0
    %4916 = vmatpush.bf16.msra.mxu0 0
    %4917 = vmatpush.bf16.msra.mxu0 0
    %4918 = vmatpush.bf16.msra.mxu0 %v4751
    %4919 = vmatpush.bf16.msra.mxu0 %v4748
    %4920 = vmatmul.bf16.gmra.mxu0 %v4806
    %v4921 = vpop.f32.mrf.mxu0
    %v4922 = vadd.f32 %v4909, %v4921
    %v4923 = vpop.f32.mrf.mxu0
    %4924 = vdwg.mxu0
    %s4925 = sadd.s32 %s3944, 2
    %s4926 = smul.u32 %s4925, 3
    %s4927 = scalar_lea.vmem [#allocation3], %s4926
    %v4928 = vld [vmem:[%s4927] sm:$0x7]
    %s4929 = scalar_lea.vmem %s3, 864
    %v4930 = vld [vmem:[%s4929] sm:$0xff]
    %v4931 = vld [vmem:[%s4929 + $0x8] sm:$0xf]
    %v4932 = vld [vmem:[%s4929 + $0xc] sm:$0xff]
    %v4933 = vld [vmem:[%s4929 + $0x14] sm:$0xf]
    %v4934 = vld [vmem:[%s4929 + $0x18] sm:$0xff]
    %v4935 = vld [vmem:[%s4929 + $0x20] sm:$0xf]
    %v4936 = vld [vmem:[%s4929 + $0x24] sm:$0xff]
    %v4937 = vld [vmem:[%s4929 + $0x2c] sm:$0xf]
    %v4938 = vld [vmem:[%s4929 + $0x30] sm:$0xff]
    %v4939 = vld [vmem:[%s4929 + $0x38] sm:$0xf]
    %v4940 = vld [vmem:[%s4929 + $0x3c] sm:$0xff]
    %v4941 = vld [vmem:[%s4929 + $0x44] sm:$0xf]
    %v4942 = vld [vmem:[%s4929 + $0x48] sm:$0xff]
    %v4943 = vld [vmem:[%s4929 + $0x50] sm:$0xf]
    %v4944 = vld [vmem:[%s4929 + $0x54] sm:$0xff]
    %v4945 = vld [vmem:[%s4929 + $0x5c] sm:$0xf]
    %v4946 = vld [vmem:[%s4929 + $0x60] sm:$0xff]
    %v4947 = vld [vmem:[%s4929 + $0x68] sm:$0xf]
    %v4948 = vld [vmem:[%s4929 + $0x6c] sm:$0xff]
    %v4949 = vld [vmem:[%s4929 + $0x74] sm:$0xf]
    %v4950 = vld [vmem:[%s4929 + $0x78] sm:$0xff]
    %v4951 = vld [vmem:[%s4929 + $0x80] sm:$0xf]
    %v4952 = vld [vmem:[%s4929 + $0x84] sm:$0xff]
    %v4953 = vld [vmem:[%s4929 + $0x8c] sm:$0xf]
    %v4954 = vld [vmem:[%s4929 + $0x90] sm:$0xff]
    %v4955 = vld [vmem:[%s4929 + $0x98] sm:$0xf]
    %v4956 = vld [vmem:[%s4929 + $0x9c] sm:$0xff]
    %v4957 = vld [vmem:[%s4929 + $0xa4] sm:$0xf]
    %v4958 = vld [vmem:[%s4929 + $0xa8] sm:$0xff]
    %v4959 = vld [vmem:[%s4929 + $0xb0] sm:$0xf]
    %v4960 = vld [vmem:[%s4929 + $0xb4] sm:$0xff]
    %v4961 = vld [vmem:[%s4929 + $0xbc] sm:$0xf]
    %v4962 = vld [vmem:[%s4929 + $0xc0] sm:$0xff]
    %v4963 = vld [vmem:[%s4929 + $0xc8] sm:$0xf]
    %v4964 = vld [vmem:[%s4929 + $0xcc] sm:$0xff]
    %v4965 = vld [vmem:[%s4929 + $0xd4] sm:$0xf]
    %v4966 = vld [vmem:[%s4929 + $0xd8] sm:$0xff]
    %v4967 = vld [vmem:[%s4929 + $0xe0] sm:$0xf]
    %v4968 = vld [vmem:[%s4929 + $0xe4] sm:$0xff]
    %v4969 = vld [vmem:[%s4929 + $0xec] sm:$0xf]
    %v4970 = vld [vmem:[%s4929 + $0xf0] sm:$0xff]
    %v4971 = vld [vmem:[%s4929 + $0xf8] sm:$0xf]
    %v4972 = vld [vmem:[%s4929 + $0xfc] sm:$0xff]
    %v4973 = vld [vmem:[%s4929 + $0x104] sm:$0xf]
    %v4974 = vld [vmem:[%s4929 + $0x108] sm:$0xff]
    %v4975 = vld [vmem:[%s4929 + $0x110] sm:$0xf]
    %v4976 = vld [vmem:[%s4929 + $0x114] sm:$0xff]
    %v4977 = vld [vmem:[%s4929 + $0x11c] sm:$0xf]
    %v4978 = vld [vmem:[%s4929 + $0x120] sm:$0xff]
    %v4979 = vld [vmem:[%s4929 + $0x128] sm:$0xf]
    %v4980 = vld [vmem:[%s4929 + $0x12c] sm:$0xff]
    %v4981 = vld [vmem:[%s4929 + $0x134] sm:$0xf]
    %v4982 = vld [vmem:[%s4929 + $0x138] sm:$0xff]
    %v4983 = vld [vmem:[%s4929 + $0x140] sm:$0xf]
    %v4984 = vld [vmem:[%s4929 + $0x144] sm:$0xff]
    %v4985 = vld [vmem:[%s4929 + $0x14c] sm:$0xf]
    %v4986 = vld [vmem:[%s4929 + $0x150] sm:$0xff]
    %v4987 = vld [vmem:[%s4929 + $0x158] sm:$0xf]
    %v4988 = vld [vmem:[%s4929 + $0x15c] sm:$0xff]
    %v4989 = vld [vmem:[%s4929 + $0x164] sm:$0xf]
    %v4990 = vld [vmem:[%s4929 + $0x168] sm:$0xff]
    %v4991 = vld [vmem:[%s4929 + $0x170] sm:$0xf]
    %v4992 = vld [vmem:[%s4929 + $0x174] sm:$0xff]
    %v4993 = vld [vmem:[%s4929 + $0x17c] sm:$0xf]
    %v4994 = vld [vmem:[%s4929 + $0x180] sm:$0xff]
    %v4995 = vld [vmem:[%s4929 + $0x188] sm:$0xf]
    %v4996 = vld [vmem:[%s4929 + $0x18c] sm:$0xff]
    %v4997 = vld [vmem:[%s4929 + $0x194] sm:$0xf]
    %v4998 = vld [vmem:[%s4929 + $0x198] sm:$0xff]
    %v4999 = vld [vmem:[%s4929 + $0x1a0] sm:$0xf]
    %v5000 = vld [vmem:[%s4929 + $0x1a4] sm:$0xff]
    %v5001 = vld [vmem:[%s4929 + $0x1ac] sm:$0xf]
    %5003 = vst [vmem:[#allocation1] ss:$9 sm:$0xff] %v4928
    %v5004 = vld [vmem:[#allocation1] sm:$0xff]
    %v5005 = vld [vmem:[#allocation1 + $0x9] sm:$0xff]
    %v5006 = vld [vmem:[#allocation1 + $0x12] sm:$0xff]
    %v5081 = vunpack.c.l.b16 %v4930
    %v5082 = vunpack.c.h.b16 %v4930
    %v5083 = vunpack.c.l.b16 %v4931
    %v5084 = vunpack.c.l.b16 %v4932
    %v5085 = vunpack.c.h.b16 %v4932
    %v5086 = vunpack.c.l.b16 %v4933
    %v5087 = vunpack.c.l.b16 %v4934
    %v5088 = vunpack.c.h.b16 %v4934
    %v5089 = vunpack.c.l.b16 %v4935
    %v5090 = vunpack.c.l.b16 %v4936
    %v5091 = vunpack.c.h.b16 %v4936
    %v5092 = vunpack.c.l.b16 %v4937
    %v5093 = vunpack.c.l.b16 %v4938
    %v5094 = vunpack.c.h.b16 %v4938
    %v5095 = vunpack.c.l.b16 %v4939
    %v5096 = vunpack.c.l.b16 %v4940
    %v5097 = vunpack.c.h.b16 %v4940
    %v5098 = vunpack.c.l.b16 %v4941
    %v5099 = vunpack.c.l.b16 %v4942
    %v5100 = vunpack.c.h.b16 %v4942
    %v5101 = vunpack.c.l.b16 %v4943
    %v5102 = vunpack.c.l.b16 %v4944
    %v5103 = vunpack.c.h.b16 %v4944
    %v5104 = vunpack.c.l.b16 %v4945
    %v5105 = vunpack.c.l.b16 %v4946
    %v5106 = vunpack.c.h.b16 %v4946
    %v5107 = vunpack.c.l.b16 %v4947
    %v5108 = vunpack.c.l.b16 %v4948
    %v5109 = vunpack.c.h.b16 %v4948
    %v5110 = vunpack.c.l.b16 %v4949
    %v5111 = vunpack.c.l.b16 %v4950
    %v5112 = vunpack.c.h.b16 %v4950
    %v5113 = vunpack.c.l.b16 %v4951
    %v5114 = vunpack.c.l.b16 %v4952
    %v5115 = vunpack.c.h.b16 %v4952
    %v5116 = vunpack.c.l.b16 %v4953
    %v5117 = vunpack.c.l.b16 %v4954
    %v5118 = vunpack.c.h.b16 %v4954
    %v5119 = vunpack.c.l.b16 %v4955
    %v5120 = vunpack.c.l.b16 %v4956
    %v5121 = vunpack.c.h.b16 %v4956
    %v5122 = vunpack.c.l.b16 %v4957
    %v5123 = vunpack.c.l.b16 %v4958
    %v5124 = vunpack.c.h.b16 %v4958
    %v5125 = vunpack.c.l.b16 %v4959
    %v5126 = vunpack.c.l.b16 %v4960
    %v5127 = vunpack.c.h.b16 %v4960
    %v5128 = vunpack.c.l.b16 %v4961
    %v5129 = vunpack.c.l.b16 %v4962
    %v5130 = vunpack.c.h.b16 %v4962
    %v5131 = vunpack.c.l.b16 %v4963
    %v5132 = vunpack.c.l.b16 %v4964
    %v5133 = vunpack.c.h.b16 %v4964
    %v5134 = vunpack.c.l.b16 %v4965
    %v5135 = vunpack.c.l.b16 %v4966
    %v5136 = vunpack.c.h.b16 %v4966
    %v5137 = vunpack.c.l.b16 %v4967
    %v5138 = vunpack.c.l.b16 %v4968
    %v5139 = vunpack.c.h.b16 %v4968
    %v5140 = vunpack.c.l.b16 %v4969
    %v5141 = vunpack.c.l.b16 %v4970
    %v5142 = vunpack.c.h.b16 %v4970
    %v5143 = vunpack.c.l.b16 %v4971
    %v5144 = vunpack.c.l.b16 %v4972
    %v5145 = vunpack.c.h.b16 %v4972
    %v5146 = vunpack.c.l.b16 %v4973
    %v5147 = vunpack.c.l.b16 %v4974
    %v5148 = vunpack.c.h.b16 %v4974
    %v5149 = vunpack.c.l.b16 %v4975
    %v5150 = vunpack.c.l.b16 %v4976
    %v5151 = vunpack.c.h.b16 %v4976
    %v5152 = vunpack.c.l.b16 %v4977
    %v5153 = vunpack.c.l.b16 %v4978
    %v5154 = vunpack.c.h.b16 %v4978
    %v5155 = vunpack.c.l.b16 %v4979
    %v5156 = vunpack.c.l.b16 %v4980
    %v5157 = vunpack.c.h.b16 %v4980
    %v5158 = vunpack.c.l.b16 %v4981
    %v5159 = vunpack.c.l.b16 %v4982
    %v5160 = vunpack.c.h.b16 %v4982
    %v5161 = vunpack.c.l.b16 %v4983
    %v5162 = vunpack.c.l.b16 %v4984
    %v5163 = vunpack.c.h.b16 %v4984
    %v5164 = vunpack.c.l.b16 %v4985
    %v5165 = vunpack.c.l.b16 %v4986
    %v5166 = vunpack.c.h.b16 %v4986
    %v5167 = vunpack.c.l.b16 %v4987
    %v5168 = vunpack.c.l.b16 %v4988
    %v5169 = vunpack.c.h.b16 %v4988
    %v5170 = vunpack.c.l.b16 %v4989
    %v5171 = vunpack.c.l.b16 %v4990
    %v5172 = vunpack.c.h.b16 %v4990
    %v5173 = vunpack.c.l.b16 %v4991
    %v5174 = vunpack.c.l.b16 %v4992
    %v5175 = vunpack.c.h.b16 %v4992
    %v5176 = vunpack.c.l.b16 %v4993
    %v5177 = vunpack.c.l.b16 %v4994
    %v5178 = vunpack.c.h.b16 %v4994
    %v5179 = vunpack.c.l.b16 %v4995
    %v5180 = vunpack.c.l.b16 %v4996
    %v5181 = vunpack.c.h.b16 %v4996
    %v5182 = vunpack.c.l.b16 %v4997
    %v5183 = vunpack.c.l.b16 %v4998
    %v5184 = vunpack.c.h.b16 %v4998
    %v5185 = vunpack.c.l.b16 %v4999
    %v5186 = vunpack.c.l.b16 %v5000
    %v5187 = vunpack.c.h.b16 %v5000
    %v5188 = vunpack.c.l.b16 %v5001
    %v5189 = vpack.c.b16 %v5084, %v5081
    %v5190 = vpack.c.b16 %v5085, %v5082
    %v5191 = vpack.c.b16 %v5086, %v5083
    %v5192 = vpack.c.b16 %v5090, %v5087
    %v5193 = vpack.c.b16 %v5091, %v5088
    %v5194 = vpack.c.b16 %v5092, %v5089
    %v5195 = vpack.c.b16 %v5096, %v5093
    %v5196 = vpack.c.b16 %v5097, %v5094
    %v5197 = vpack.c.b16 %v5098, %v5095
    %v5198 = vpack.c.b16 %v5102, %v5099
    %v5199 = vpack.c.b16 %v5103, %v5100
    %v5200 = vpack.c.b16 %v5104, %v5101
    %v5201 = vpack.c.b16 %v5108, %v5105
    %v5202 = vpack.c.b16 %v5109, %v5106
    %v5203 = vpack.c.b16 %v5110, %v5107
    %v5204 = vpack.c.b16 %v5114, %v5111
    %v5205 = vpack.c.b16 %v5115, %v5112
    %v5206 = vpack.c.b16 %v5116, %v5113
    %v5207 = vpack.c.b16 %v5120, %v5117
    %v5208 = vpack.c.b16 %v5121, %v5118
    %v5209 = vpack.c.b16 %v5122, %v5119
    %v5210 = vpack.c.b16 %v5126, %v5123
    %v5211 = vpack.c.b16 %v5127, %v5124
    %v5212 = vpack.c.b16 %v5128, %v5125
    %v5213 = vpack.c.b16 %v5132, %v5129
    %v5214 = vpack.c.b16 %v5133, %v5130
    %v5215 = vpack.c.b16 %v5134, %v5131
    %v5216 = vpack.c.b16 %v5138, %v5135
    %v5217 = vpack.c.b16 %v5139, %v5136
    %v5218 = vpack.c.b16 %v5140, %v5137
    %v5219 = vpack.c.b16 %v5144, %v5141
    %v5220 = vpack.c.b16 %v5145, %v5142
    %v5221 = vpack.c.b16 %v5146, %v5143
    %v5222 = vpack.c.b16 %v5150, %v5147
    %v5223 = vpack.c.b16 %v5151, %v5148
    %v5224 = vpack.c.b16 %v5152, %v5149
    %v5225 = vpack.c.b16 %v5156, %v5153
    %v5226 = vpack.c.b16 %v5157, %v5154
    %v5227 = vpack.c.b16 %v5158, %v5155
    %v5228 = vpack.c.b16 %v5162, %v5159
    %v5229 = vpack.c.b16 %v5163, %v5160
    %v5230 = vpack.c.b16 %v5164, %v5161
    %v5231 = vpack.c.b16 %v5168, %v5165
    %v5232 = vpack.c.b16 %v5169, %v5166
    %v5233 = vpack.c.b16 %v5170, %v5167
    %v5234 = vpack.c.b16 %v5174, %v5171
    %v5235 = vpack.c.b16 %v5175, %v5172
    %v5236 = vpack.c.b16 %v5176, %v5173
    %v5237 = vpack.c.b16 %v5180, %v5177
    %v5238 = vpack.c.b16 %v5181, %v5178
    %v5239 = vpack.c.b16 %v5182, %v5179
    %v5240 = vpack.c.b16 %v5186, %v5183
    %v5241 = vpack.c.b16 %v5187, %v5184
    %v5242 = vpack.c.b16 %v5188, %v5185
    %v5297 = vsel %vm3558, %v5006, 0
    %5299 = vmatpush.bf16.msra.mxu0 %v5210
    %5300 = vmatpush.bf16.msra.mxu0 %v5207
    %5301 = vmatpush.bf16.msra.mxu0 %v5204
    %5302 = vmatpush.bf16.msra.mxu0 %v5201
    %5303 = vmatpush.bf16.msra.mxu0 %v5198
    %5304 = vmatpush.bf16.msra.mxu0 %v5195
    %5305 = vmatpush.bf16.msra.mxu0 %v5192
    %5306 = vmatpush.bf16.msra.mxu0 %v5189
    %5307 = vmatmul.bf16.gmra.mxu0 %v5004
    %v5308 = vpop.f32.mrf.mxu0
    %v5309 = vadd.f32 0.0, %v5308
    %v5310 = vpop.f32.mrf.mxu0
    %5311 = vdwg.mxu0
    %5312 = vmatpush.bf16.msra.mxu0 %v5234
    %5313 = vmatpush.bf16.msra.mxu0 %v5231
    %5314 = vmatpush.bf16.msra.mxu0 %v5228
    %5315 = vmatpush.bf16.msra.mxu0 %v5225
    %5316 = vmatpush.bf16.msra.mxu0 %v5222
    %5317 = vmatpush.bf16.msra.mxu0 %v5219
    %5318 = vmatpush.bf16.msra.mxu0 %v5216
    %5319 = vmatpush.bf16.msra.mxu0 %v5213
    %5320 = vmatmul.bf16.gmra.mxu0 %v5005
    %v5321 = vpop.f32.mrf.mxu0
    %v5322 = vadd.f32 %v5309, %v5321
    %v5323 = vpop.f32.mrf.mxu0
    %5324 = vdwg.mxu0
    %5325 = vmatpush.bf16.msra.mxu0 0
    %5326 = vmatpush.bf16.msra.mxu0 0
    %5327 = vmatpush.bf16.msra.mxu0 0
    %5328 = vmatpush.bf16.msra.mxu0 0
    %5329 = vmatpush.bf16.msra.mxu0 0
    %5330 = vmatpush.bf16.msra.mxu0 0
    %5331 = vmatpush.bf16.msra.mxu0 %v5240
    %5332 = vmatpush.bf16.msra.mxu0 %v5237
    %5333 = vmatmul.bf16.gmra.mxu0 %v5297
    %v5334 = vpop.f32.mrf.mxu0
    %v5335 = vadd.f32 %v5322, %v5334
    %v5336 = vpop.f32.mrf.mxu0
    %5337 = vdwg.mxu0
    %5338 = vmatpush.bf16.msra.mxu0 %v5211
    %5339 = vmatpush.bf16.msra.mxu0 %v5208
    %5340 = vmatpush.bf16.msra.mxu0 %v5205
    %5341 = vmatpush.bf16.msra.mxu0 %v5202
    %5342 = vmatpush.bf16.msra.mxu0 %v5199
    %5343 = vmatpush.bf16.msra.mxu0 %v5196
    %5344 = vmatpush.bf16.msra.mxu0 %v5193
    %5345 = vmatpush.bf16.msra.mxu0 %v5190
    %5346 = vmatmul.bf16.gmra.mxu0 %v5004
    %v5347 = vpop.f32.mrf.mxu0
    %v5348 = vadd.f32 0.0, %v5347
    %v5349 = vpop.f32.mrf.mxu0
    %5350 = vdwg.mxu0
    %5351 = vmatpush.bf16.msra.mxu0 %v5235
    %5352 = vmatpush.bf16.msra.mxu0 %v5232
    %5353 = vmatpush.bf16.msra.mxu0 %v5229
    %5354 = vmatpush.bf16.msra.mxu0 %v5226
    %5355 = vmatpush.bf16.msra.mxu0 %v5223
    %5356 = vmatpush.bf16.msra.mxu0 %v5220
    %5357 = vmatpush.bf16.msra.mxu0 %v5217
    %5358 = vmatpush.bf16.msra.mxu0 %v5214
    %5359 = vmatmul.bf16.gmra.mxu0 %v5005
    %v5360 = vpop.f32.mrf.mxu0
    %v5361 = vadd.f32 %v5348, %v5360
    %v5362 = vpop.f32.mrf.mxu0
    %5363 = vdwg.mxu0
    %5364 = vmatpush.bf16.msra.mxu0 0
    %5365 = vmatpush.bf16.msra.mxu0 0
    %5366 = vmatpush.bf16.msra.mxu0 0
    %5367 = vmatpush.bf16.msra.mxu0 0
    %5368 = vmatpush.bf16.msra.mxu0 0
    %5369 = vmatpush.bf16.msra.mxu0 0
    %5370 = vmatpush.bf16.msra.mxu0 %v5241
    %5371 = vmatpush.bf16.msra.mxu0 %v5238
    %5372 = vmatmul.bf16.gmra.mxu0 %v5297
    %v5373 = vpop.f32.mrf.mxu0
    %v5374 = vadd.f32 %v5361, %v5373
    %v5375 = vpop.f32.mrf.mxu0
    %5376 = vdwg.mxu0
    %5377 = vmatpush.bf16.msra.mxu0 %v5212
    %5378 = vmatpush.bf16.msra.mxu0 %v5209
    %5379 = vmatpush.bf16.msra.mxu0 %v5206
    %5380 = vmatpush.bf16.msra.mxu0 %v5203
    %5381 = vmatpush.bf16.msra.mxu0 %v5200
    %5382 = vmatpush.bf16.msra.mxu0 %v5197
    %5383 = vmatpush.bf16.msra.mxu0 %v5194
    %5384 = vmatpush.bf16.msra.mxu0 %v5191
    %5385 = vmatmul.bf16.gmra.mxu0 %v5004
    %v5386 = vpop.f32.mrf.mxu0
    %v5387 = vadd.f32 0.0, %v5386
    %v5388 = vpop.f32.mrf.mxu0
    %5389 = vdwg.mxu0
    %5390 = vmatpush.bf16.msra.mxu0 %v5236
    %5391 = vmatpush.bf16.msra.mxu0 %v5233
    %5392 = vmatpush.bf16.msra.mxu0 %v5230
    %5393 = vmatpush.bf16.msra.mxu0 %v5227
    %5394 = vmatpush.bf16.msra.mxu0 %v5224
    %5395 = vmatpush.bf16.msra.mxu0 %v5221
    %5396 = vmatpush.bf16.msra.mxu0 %v5218
    %5397 = vmatpush.bf16.msra.mxu0 %v5215
    %5398 = vmatmul.bf16.gmra.mxu0 %v5005
    %v5399 = vpop.f32.mrf.mxu0
    %v5400 = vadd.f32 %v5387, %v5399
    %v5401 = vpop.f32.mrf.mxu0
    %5402 = vdwg.mxu0
    %5403 = vmatpush.bf16.msra.mxu0 0
    %5404 = vmatpush.bf16.msra.mxu0 0
    %5405 = vmatpush.bf16.msra.mxu0 0
    %5406 = vmatpush.bf16.msra.mxu0 0
    %5407 = vmatpush.bf16.msra.mxu0 0
    %5408 = vmatpush.bf16.msra.mxu0 0
    %5409 = vmatpush.bf16.msra.mxu0 %v5242
    %5410 = vmatpush.bf16.msra.mxu0 %v5239
    %5411 = vmatmul.bf16.gmra.mxu0 %v5297
    %v5412 = vpop.f32.mrf.mxu0
    %v5413 = vadd.f32 %v5400, %v5412
    %v5414 = vpop.f32.mrf.mxu0
    %5415 = vdwg.mxu0
    %v5416 = vadd.f32 %v4844, %v5335
    %v5417 = vadd.f32 %v4883, %v5374
    %v5418 = vadd.f32 %v4922, %v5413
    %s5419 = sadd.s32 %s3944, 3
    %s5420 = smul.u32 %s5419, 3
    %s5421 = scalar_lea.vmem [#allocation3], %s5420
    %v5422 = vld [vmem:[%s5421] sm:$0x7]
    %s5423 = scalar_lea.vmem %s3, 1296
    %v5424 = vld [vmem:[%s5423] sm:$0xff]
    %v5425 = vld [vmem:[%s5423 + $0x8] sm:$0xf]
    %v5426 = vld [vmem:[%s5423 + $0xc] sm:$0xff]
    %v5427 = vld [vmem:[%s5423 + $0x14] sm:$0xf]
    %v5428 = vld [vmem:[%s5423 + $0x18] sm:$0xff]
    %v5429 = vld [vmem:[%s5423 + $0x20] sm:$0xf]
    %v5430 = vld [vmem:[%s5423 + $0x24] sm:$0xff]
    %v5431 = vld [vmem:[%s5423 + $0x2c] sm:$0xf]
    %v5432 = vld [vmem:[%s5423 + $0x30] sm:$0xff]
    %v5433 = vld [vmem:[%s5423 + $0x38] sm:$0xf]
    %v5434 = vld [vmem:[%s5423 + $0x3c] sm:$0xff]
    %v5435 = vld [vmem:[%s5423 + $0x44] sm:$0xf]
    %v5436 = vld [vmem:[%s5423 + $0x48] sm:$0xff]
    %v5437 = vld [vmem:[%s5423 + $0x50] sm:$0xf]
    %v5438 = vld [vmem:[%s5423 + $0x54] sm:$0xff]
    %v5439 = vld [vmem:[%s5423 + $0x5c] sm:$0xf]
    %v5440 = vld [vmem:[%s5423 + $0x60] sm:$0xff]
    %v5441 = vld [vmem:[%s5423 + $0x68] sm:$0xf]
    %v5442 = vld [vmem:[%s5423 + $0x6c] sm:$0xff]
    %v5443 = vld [vmem:[%s5423 + $0x74] sm:$0xf]
    %v5444 = vld [vmem:[%s5423 + $0x78] sm:$0xff]
    %v5445 = vld [vmem:[%s5423 + $0x80] sm:$0xf]
    %v5446 = vld [vmem:[%s5423 + $0x84] sm:$0xff]
    %v5447 = vld [vmem:[%s5423 + $0x8c] sm:$0xf]
    %v5448 = vld [vmem:[%s5423 + $0x90] sm:$0xff]
    %v5449 = vld [vmem:[%s5423 + $0x98] sm:$0xf]
    %v5450 = vld [vmem:[%s5423 + $0x9c] sm:$0xff]
    %v5451 = vld [vmem:[%s5423 + $0xa4] sm:$0xf]
    %v5452 = vld [vmem:[%s5423 + $0xa8] sm:$0xff]
    %v5453 = vld [vmem:[%s5423 + $0xb0] sm:$0xf]
    %v5454 = vld [vmem:[%s5423 + $0xb4] sm:$0xff]
    %v5455 = vld [vmem:[%s5423 + $0xbc] sm:$0xf]
    %v5456 = vld [vmem:[%s5423 + $0xc0] sm:$0xff]
    %v5457 = vld [vmem:[%s5423 + $0xc8] sm:$0xf]
    %v5458 = vld [vmem:[%s5423 + $0xcc] sm:$0xff]
    %v5459 = vld [vmem:[%s5423 + $0xd4] sm:$0xf]
    %v5460 = vld [vmem:[%s5423 + $0xd8] sm:$0xff]
    %v5461 = vld [vmem:[%s5423 + $0xe0] sm:$0xf]
    %v5462 = vld [vmem:[%s5423 + $0xe4] sm:$0xff]
    %v5463 = vld [vmem:[%s5423 + $0xec] sm:$0xf]
    %v5464 = vld [vmem:[%s5423 + $0xf0] sm:$0xff]
    %v5465 = vld [vmem:[%s5423 + $0xf8] sm:$0xf]
    %v5466 = vld [vmem:[%s5423 + $0xfc] sm:$0xff]
    %v5467 = vld [vmem:[%s5423 + $0x104] sm:$0xf]
    %v5468 = vld [vmem:[%s5423 + $0x108] sm:$0xff]
    %v5469 = vld [vmem:[%s5423 + $0x110] sm:$0xf]
    %v5470 = vld [vmem:[%s5423 + $0x114] sm:$0xff]
    %v5471 = vld [vmem:[%s5423 + $0x11c] sm:$0xf]
    %v5472 = vld [vmem:[%s5423 + $0x120] sm:$0xff]
    %v5473 = vld [vmem:[%s5423 + $0x128] sm:$0xf]
    %v5474 = vld [vmem:[%s5423 + $0x12c] sm:$0xff]
    %v5475 = vld [vmem:[%s5423 + $0x134] sm:$0xf]
    %v5476 = vld [vmem:[%s5423 + $0x138] sm:$0xff]
    %v5477 = vld [vmem:[%s5423 + $0x140] sm:$0xf]
    %v5478 = vld [vmem:[%s5423 + $0x144] sm:$0xff]
    %v5479 = vld [vmem:[%s5423 + $0x14c] sm:$0xf]
    %v5480 = vld [vmem:[%s5423 + $0x150] sm:$0xff]
    %v5481 = vld [vmem:[%s5423 + $0x158] sm:$0xf]
    %v5482 = vld [vmem:[%s5423 + $0x15c] sm:$0xff]
    %v5483 = vld [vmem:[%s5423 + $0x164] sm:$0xf]
    %v5484 = vld [vmem:[%s5423 + $0x168] sm:$0xff]
    %v5485 = vld [vmem:[%s5423 + $0x170] sm:$0xf]
    %v5486 = vld [vmem:[%s5423 + $0x174] sm:$0xff]
    %v5487 = vld [vmem:[%s5423 + $0x17c] sm:$0xf]
    %v5488 = vld [vmem:[%s5423 + $0x180] sm:$0xff]
    %v5489 = vld [vmem:[%s5423 + $0x188] sm:$0xf]
    %v5490 = vld [vmem:[%s5423 + $0x18c] sm:$0xff]
    %v5491 = vld [vmem:[%s5423 + $0x194] sm:$0xf]
    %v5492 = vld [vmem:[%s5423 + $0x198] sm:$0xff]
    %v5493 = vld [vmem:[%s5423 + $0x1a0] sm:$0xf]
    %v5494 = vld [vmem:[%s5423 + $0x1a4] sm:$0xff]
    %v5495 = vld [vmem:[%s5423 + $0x1ac] sm:$0xf]
    %5497 = vst [vmem:[#allocation1] ss:$9 sm:$0xff] %v5422
    %v5498 = vld [vmem:[#allocation1] sm:$0xff]
    %v5499 = vld [vmem:[#allocation1 + $0x9] sm:$0xff]
    %v5500 = vld [vmem:[#allocation1 + $0x12] sm:$0xff]
    %v5575 = vunpack.c.l.b16 %v5424
    %v5576 = vunpack.c.h.b16 %v5424
    %v5577 = vunpack.c.l.b16 %v5425
    %v5578 = vunpack.c.l.b16 %v5426
    %v5579 = vunpack.c.h.b16 %v5426
    %v5580 = vunpack.c.l.b16 %v5427
    %v5581 = vunpack.c.l.b16 %v5428
    %v5582 = vunpack.c.h.b16 %v5428
    %v5583 = vunpack.c.l.b16 %v5429
    %v5584 = vunpack.c.l.b16 %v5430
    %v5585 = vunpack.c.h.b16 %v5430
    %v5586 = vunpack.c.l.b16 %v5431
    %v5587 = vunpack.c.l.b16 %v5432
    %v5588 = vunpack.c.h.b16 %v5432
    %v5589 = vunpack.c.l.b16 %v5433
    %v5590 = vunpack.c.l.b16 %v5434
    %v5591 = vunpack.c.h.b16 %v5434
    %v5592 = vunpack.c.l.b16 %v5435
    %v5593 = vunpack.c.l.b16 %v5436
    %v5594 = vunpack.c.h.b16 %v5436
    %v5595 = vunpack.c.l.b16 %v5437
    %v5596 = vunpack.c.l.b16 %v5438
    %v5597 = vunpack.c.h.b16 %v5438
    %v5598 = vunpack.c.l.b16 %v5439
    %v5599 = vunpack.c.l.b16 %v5440
    %v5600 = vunpack.c.h.b16 %v5440
    %v5601 = vunpack.c.l.b16 %v5441
    %v5602 = vunpack.c.l.b16 %v5442
    %v5603 = vunpack.c.h.b16 %v5442
    %v5604 = vunpack.c.l.b16 %v5443
    %v5605 = vunpack.c.l.b16 %v5444
    %v5606 = vunpack.c.h.b16 %v5444
    %v5607 = vunpack.c.l.b16 %v5445
    %v5608 = vunpack.c.l.b16 %v5446
    %v5609 = vunpack.c.h.b16 %v5446
    %v5610 = vunpack.c.l.b16 %v5447
    %v5611 = vunpack.c.l.b16 %v5448
    %v5612 = vunpack.c.h.b16 %v5448
    %v5613 = vunpack.c.l.b16 %v5449
    %v5614 = vunpack.c.l.b16 %v5450
    %v5615 = vunpack.c.h.b16 %v5450
    %v5616 = vunpack.c.l.b16 %v5451
    %v5617 = vunpack.c.l.b16 %v5452
    %v5618 = vunpack.c.h.b16 %v5452
    %v5619 = vunpack.c.l.b16 %v5453
    %v5620 = vunpack.c.l.b16 %v5454
    %v5621 = vunpack.c.h.b16 %v5454
    %v5622 = vunpack.c.l.b16 %v5455
    %v5623 = vunpack.c.l.b16 %v5456
    %v5624 = vunpack.c.h.b16 %v5456
    %v5625 = vunpack.c.l.b16 %v5457
    %v5626 = vunpack.c.l.b16 %v5458
    %v5627 = vunpack.c.h.b16 %v5458
    %v5628 = vunpack.c.l.b16 %v5459
    %v5629 = vunpack.c.l.b16 %v5460
    %v5630 = vunpack.c.h.b16 %v5460
    %v5631 = vunpack.c.l.b16 %v5461
    %v5632 = vunpack.c.l.b16 %v5462
    %v5633 = vunpack.c.h.b16 %v5462
    %v5634 = vunpack.c.l.b16 %v5463
    %v5635 = vunpack.c.l.b16 %v5464
    %v5636 = vunpack.c.h.b16 %v5464
    %v5637 = vunpack.c.l.b16 %v5465
    %v5638 = vunpack.c.l.b16 %v5466
    %v5639 = vunpack.c.h.b16 %v5466
    %v5640 = vunpack.c.l.b16 %v5467
    %v5641 = vunpack.c.l.b16 %v5468
    %v5642 = vunpack.c.h.b16 %v5468
    %v5643 = vunpack.c.l.b16 %v5469
    %v5644 = vunpack.c.l.b16 %v5470
    %v5645 = vunpack.c.h.b16 %v5470
    %v5646 = vunpack.c.l.b16 %v5471
    %v5647 = vunpack.c.l.b16 %v5472
    %v5648 = vunpack.c.h.b16 %v5472
    %v5649 = vunpack.c.l.b16 %v5473
    %v5650 = vunpack.c.l.b16 %v5474
    %v5651 = vunpack.c.h.b16 %v5474
    %v5652 = vunpack.c.l.b16 %v5475
    %v5653 = vunpack.c.l.b16 %v5476
    %v5654 = vunpack.c.h.b16 %v5476
    %v5655 = vunpack.c.l.b16 %v5477
    %v5656 = vunpack.c.l.b16 %v5478
    %v5657 = vunpack.c.h.b16 %v5478
    %v5658 = vunpack.c.l.b16 %v5479
    %v5659 = vunpack.c.l.b16 %v5480
    %v5660 = vunpack.c.h.b16 %v5480
    %v5661 = vunpack.c.l.b16 %v5481
    %v5662 = vunpack.c.l.b16 %v5482
    %v5663 = vunpack.c.h.b16 %v5482
    %v5664 = vunpack.c.l.b16 %v5483
    %v5665 = vunpack.c.l.b16 %v5484
    %v5666 = vunpack.c.h.b16 %v5484
    %v5667 = vunpack.c.l.b16 %v5485
    %v5668 = vunpack.c.l.b16 %v5486
    %v5669 = vunpack.c.h.b16 %v5486
    %v5670 = vunpack.c.l.b16 %v5487
    %v5671 = vunpack.c.l.b16 %v5488
    %v5672 = vunpack.c.h.b16 %v5488
    %v5673 = vunpack.c.l.b16 %v5489
    %v5674 = vunpack.c.l.b16 %v5490
    %v5675 = vunpack.c.h.b16 %v5490
    %v5676 = vunpack.c.l.b16 %v5491
    %v5677 = vunpack.c.l.b16 %v5492
    %v5678 = vunpack.c.h.b16 %v5492
    %v5679 = vunpack.c.l.b16 %v5493
    %v5680 = vunpack.c.l.b16 %v5494
    %v5681 = vunpack.c.h.b16 %v5494
    %v5682 = vunpack.c.l.b16 %v5495
    %v5683 = vpack.c.b16 %v5578, %v5575
    %v5684 = vpack.c.b16 %v5579, %v5576
    %v5685 = vpack.c.b16 %v5580, %v5577
    %v5686 = vpack.c.b16 %v5584, %v5581
    %v5687 = vpack.c.b16 %v5585, %v5582
    %v5688 = vpack.c.b16 %v5586, %v5583
    %v5689 = vpack.c.b16 %v5590, %v5587
    %v5690 = vpack.c.b16 %v5591, %v5588
    %v5691 = vpack.c.b16 %v5592, %v5589
    %v5692 = vpack.c.b16 %v5596, %v5593
    %v5693 = vpack.c.b16 %v5597, %v5594
    %v5694 = vpack.c.b16 %v5598, %v5595
    %v5695 = vpack.c.b16 %v5602, %v5599
    %v5696 = vpack.c.b16 %v5603, %v5600
    %v5697 = vpack.c.b16 %v5604, %v5601
    %v5698 = vpack.c.b16 %v5608, %v5605
    %v5699 = vpack.c.b16 %v5609, %v5606
    %v5700 = vpack.c.b16 %v5610, %v5607
    %v5701 = vpack.c.b16 %v5614, %v5611
    %v5702 = vpack.c.b16 %v5615, %v5612
    %v5703 = vpack.c.b16 %v5616, %v5613
    %v5704 = vpack.c.b16 %v5620, %v5617
    %v5705 = vpack.c.b16 %v5621, %v5618
    %v5706 = vpack.c.b16 %v5622, %v5619
    %v5707 = vpack.c.b16 %v5626, %v5623
    %v5708 = vpack.c.b16 %v5627, %v5624
    %v5709 = vpack.c.b16 %v5628, %v5625
    %v5710 = vpack.c.b16 %v5632, %v5629
    %v5711 = vpack.c.b16 %v5633, %v5630
    %v5712 = vpack.c.b16 %v5634, %v5631
    %v5713 = vpack.c.b16 %v5638, %v5635
    %v5714 = vpack.c.b16 %v5639, %v5636
    %v5715 = vpack.c.b16 %v5640, %v5637
    %v5716 = vpack.c.b16 %v5644, %v5641
    %v5717 = vpack.c.b16 %v5645, %v5642
    %v5718 = vpack.c.b16 %v5646, %v5643
    %v5719 = vpack.c.b16 %v5650, %v5647
    %v5720 = vpack.c.b16 %v5651, %v5648
    %v5721 = vpack.c.b16 %v5652, %v5649
    %v5722 = vpack.c.b16 %v5656, %v5653
    %v5723 = vpack.c.b16 %v5657, %v5654
    %v5724 = vpack.c.b16 %v5658, %v5655
    %v5725 = vpack.c.b16 %v5662, %v5659
    %v5726 = vpack.c.b16 %v5663, %v5660
    %v5727 = vpack.c.b16 %v5664, %v5661
    %v5728 = vpack.c.b16 %v5668, %v5665
    %v5729 = vpack.c.b16 %v5669, %v5666
    %v5730 = vpack.c.b16 %v5670, %v5667
    %v5731 = vpack.c.b16 %v5674, %v5671
    %v5732 = vpack.c.b16 %v5675, %v5672
    %v5733 = vpack.c.b16 %v5676, %v5673
    %v5734 = vpack.c.b16 %v5680, %v5677
    %v5735 = vpack.c.b16 %v5681, %v5678
    %v5736 = vpack.c.b16 %v5682, %v5679
    %v5791 = vsel %vm3558, %v5500, 0
    %5793 = vmatpush.bf16.msra.mxu0 %v5704
    %5794 = vmatpush.bf16.msra.mxu0 %v5701
    %5795 = vmatpush.bf16.msra.mxu0 %v5698
    %5796 = vmatpush.bf16.msra.mxu0 %v5695
    %5797 = vmatpush.bf16.msra.mxu0 %v5692
    %5798 = vmatpush.bf16.msra.mxu0 %v5689
    %5799 = vmatpush.bf16.msra.mxu0 %v5686
    %5800 = vmatpush.bf16.msra.mxu0 %v5683
    %5801 = vmatmul.bf16.gmra.mxu0 %v5498
    %v5802 = vpop.f32.mrf.mxu0
    %v5803 = vadd.f32 0.0, %v5802
    %v5804 = vpop.f32.mrf.mxu0
    %5805 = vdwg.mxu0
    %5806 = vmatpush.bf16.msra.mxu0 %v5728
    %5807 = vmatpush.bf16.msra.mxu0 %v5725
    %5808 = vmatpush.bf16.msra.mxu0 %v5722
    %5809 = vmatpush.bf16.msra.mxu0 %v5719
    %5810 = vmatpush.bf16.msra.mxu0 %v5716
    %5811 = vmatpush.bf16.msra.mxu0 %v5713
    %5812 = vmatpush.bf16.msra.mxu0 %v5710
    %5813 = vmatpush.bf16.msra.mxu0 %v5707
    %5814 = vmatmul.bf16.gmra.mxu0 %v5499
    %v5815 = vpop.f32.mrf.mxu0
    %v5816 = vadd.f32 %v5803, %v5815
    %v5817 = vpop.f32.mrf.mxu0
    %5818 = vdwg.mxu0
    %5819 = vmatpush.bf16.msra.mxu0 0
    %5820 = vmatpush.bf16.msra.mxu0 0
    %5821 = vmatpush.bf16.msra.mxu0 0
    %5822 = vmatpush.bf16.msra.mxu0 0
    %5823 = vmatpush.bf16.msra.mxu0 0
    %5824 = vmatpush.bf16.msra.mxu0 0
    %5825 = vmatpush.bf16.msra.mxu0 %v5734
    %5826 = vmatpush.bf16.msra.mxu0 %v5731
    %5827 = vmatmul.bf16.gmra.mxu0 %v5791
    %v5828 = vpop.f32.mrf.mxu0
    %v5829 = vadd.f32 %v5816, %v5828
    %v5830 = vpop.f32.mrf.mxu0
    %5831 = vdwg.mxu0
    %5832 = vmatpush.bf16.msra.mxu0 %v5705
    %5833 = vmatpush.bf16.msra.mxu0 %v5702
    %5834 = vmatpush.bf16.msra.mxu0 %v5699
    %5835 = vmatpush.bf16.msra.mxu0 %v5696
    %5836 = vmatpush.bf16.msra.mxu0 %v5693
    %5837 = vmatpush.bf16.msra.mxu0 %v5690
    %5838 = vmatpush.bf16.msra.mxu0 %v5687
    %5839 = vmatpush.bf16.msra.mxu0 %v5684
    %5840 = vmatmul.bf16.gmra.mxu0 %v5498
    %v5841 = vpop.f32.mrf.mxu0
    %v5842 = vadd.f32 0.0, %v5841
    %v5843 = vpop.f32.mrf.mxu0
    %5844 = vdwg.mxu0
    %5845 = vmatpush.bf16.msra.mxu0 %v5729
    %5846 = vmatpush.bf16.msra.mxu0 %v5726
    %5847 = vmatpush.bf16.msra.mxu0 %v5723
    %5848 = vmatpush.bf16.msra.mxu0 %v5720
    %5849 = vmatpush.bf16.msra.mxu0 %v5717
    %5850 = vmatpush.bf16.msra.mxu0 %v5714
    %5851 = vmatpush.bf16.msra.mxu0 %v5711
    %5852 = vmatpush.bf16.msra.mxu0 %v5708
    %5853 = vmatmul.bf16.gmra.mxu0 %v5499
    %v5854 = vpop.f32.mrf.mxu0
    %v5855 = vadd.f32 %v5842, %v5854
    %v5856 = vpop.f32.mrf.mxu0
    %5857 = vdwg.mxu0
    %5858 = vmatpush.bf16.msra.mxu0 0
    %5859 = vmatpush.bf16.msra.mxu0 0
    %5860 = vmatpush.bf16.msra.mxu0 0
    %5861 = vmatpush.bf16.msra.mxu0 0
    %5862 = vmatpush.bf16.msra.mxu0 0
    %5863 = vmatpush.bf16.msra.mxu0 0
    %5864 = vmatpush.bf16.msra.mxu0 %v5735
    %5865 = vmatpush.bf16.msra.mxu0 %v5732
    %5866 = vmatmul.bf16.gmra.mxu0 %v5791
    %v5867 = vpop.f32.mrf.mxu0
    %v5868 = vadd.f32 %v5855, %v5867
    %v5869 = vpop.f32.mrf.mxu0
    %5870 = vdwg.mxu0
    %5871 = vmatpush.bf16.msra.mxu0 %v5706
    %5872 = vmatpush.bf16.msra.mxu0 %v5703
    %5873 = vmatpush.bf16.msra.mxu0 %v5700
    %5874 = vmatpush.bf16.msra.mxu0 %v5697
    %5875 = vmatpush.bf16.msra.mxu0 %v5694
    %5876 = vmatpush.bf16.msra.mxu0 %v5691
    %5877 = vmatpush.bf16.msra.mxu0 %v5688
    %5878 = vmatpush.bf16.msra.mxu0 %v5685
    %5879 = vmatmul.bf16.gmra.mxu0 %v5498
    %v5880 = vpop.f32.mrf.mxu0
    %v5881 = vadd.f32 0.0, %v5880
    %v5882 = vpop.f32.mrf.mxu0
    %5883 = vdwg.mxu0
    %5884 = vmatpush.bf16.msra.mxu0 %v5730
    %5885 = vmatpush.bf16.msra.mxu0 %v5727
    %5886 = vmatpush.bf16.msra.mxu0 %v5724
    %5887 = vmatpush.bf16.msra.mxu0 %v5721
    %5888 = vmatpush.bf16.msra.mxu0 %v5718
    %5889 = vmatpush.bf16.msra.mxu0 %v5715
    %5890 = vmatpush.bf16.msra.mxu0 %v5712
    %5891 = vmatpush.bf16.msra.mxu0 %v5709
    %5892 = vmatmul.bf16.gmra.mxu0 %v5499
    %v5893 = vpop.f32.mrf.mxu0
    %v5894 = vadd.f32 %v5881, %v5893
    %v5895 = vpop.f32.mrf.mxu0
    %5896 = vdwg.mxu0
    %5897 = vmatpush.bf16.msra.mxu0 0
    %5898 = vmatpush.bf16.msra.mxu0 0
    %5899 = vmatpush.bf16.msra.mxu0 0
    %5900 = vmatpush.bf16.msra.mxu0 0
    %5901 = vmatpush.bf16.msra.mxu0 0
    %5902 = vmatpush.bf16.msra.mxu0 0
    %5903 = vmatpush.bf16.msra.mxu0 %v5736
    %5904 = vmatpush.bf16.msra.mxu0 %v5733
    %5905 = vmatmul.bf16.gmra.mxu0 %v5791
    %v5906 = vpop.f32.mrf.mxu0
    %v5907 = vadd.f32 %v5894, %v5906
    %v5908 = vpop.f32.mrf.mxu0
    %5909 = vdwg.mxu0
    %v5910 = vadd.f32 %v5416, %v5829
    %v5911 = vadd.f32 %v5417, %v5868
    %v5912 = vadd.f32 %v5418, %v5907
    %v5916 = vrot.slane %v5911, 6
    %v5917 = vrot.slane %v5912, 4
    %v5918 = vsel %vm3499, %v5910, %v5916
    %vm5919 = vcmask 1043456
    %v5920 = vsel %vm5919, %v5918, %v5917
    %s5922 = smul.u32 %s3933, 3
    %s5923 = smul.addr %s5922, 2
    %s5924 = scalar_lea.vmem [#allocation7], %s5923
    %vm5925 = vcmask 1043458
    %vm5926 = vmor %vm5925, %vm3499
    %vm5927 = vcmask 521220
    %vm5928 = vmor %vm5927, %vm5926
    %5929 = vst.msk [vmem:[%s5924] sm:$0x3f] %vm5928, %v5920
    %v5930 = vadd.f32 %v3938, %v5910
    %v5931 = vadd.f32 %v3939, %v5911
    %v5932 = vadd.f32 %v3940, %v5912
    %v5933 = vmul.f32 %v5910, %v5910
    %v5934 = vmul.f32 %v5911, %v5911
    %v5935 = vmul.f32 %v5912, %v5912
    %v5936 = vadd.f32 %v3941, %v5933
    %v5937 = vadd.f32 %v3942, %v5934
    %v5938 = vadd.f32 %v3943, %v5935
  $region99: #{discriminator_forward.1} parent=0 // loop_footer
    %s3937 = sadd.s32 1, %s3933
  $region100: #{discriminator_forward.1} parent=0 // loop_footer_branch
    %3932 = sbr.rel target = $region96
  $region101: #{discriminator_forward.1} parent=0 // loop_exit
    _
  %v5939 = vsel %vm3499, %v3938, 0.0
  %v5940 = vrot.slane %v5939, 4
  %v5941 = vadd.f32 %v5939, %v5940
  %v5942 = vrot.slane %v5941, 2
  %v5943 = vadd.f32 %v5941, %v5942
  %v5944 = vrot.slane %v5943, 1
  %v5945 = vadd.f32 %v5943, %v5944
  %v5946 = vsel %vm3499, %v3939, 0.0
  %v5947 = vrot.slane %v5946, 4
  %v5948 = vadd.f32 %v5946, %v5947
  %v5949 = vrot.slane %v5948, 2
  %v5950 = vadd.f32 %v5948, %v5949
  %v5951 = vrot.slane %v5950, 1
  %v5952 = vadd.f32 %v5950, %v5951
  %vm5953 = vcmask 517120
  %v5954 = vsel %vm5953, %v3940, 0.0
  %v5955 = vrot.slane %v5954, 4
  %v5956 = vadd.f32 %v5954, %v5955
  %v5957 = vrot.slane %v5956, 2
  %v5958 = vadd.f32 %v5956, %v5957
  %v5959 = vrot.slane %v5958, 1
  %v5960 = vadd.f32 %v5958, %v5959
  %v5961 = vld [vmem:[%s8] sm:$0xff]
  %v5962 = vld [vmem:[%s8 + $0x8] sm:$0xff]
  %v5963 = vld [vmem:[%s8 + $0x10] sm:$0xff]
  %v5964 = vld [vmem:[%s8 + $0x18] sm:$0xff]
  %v5965 = vld [vmem:[%s8 + $0x20] sm:$0xff]
  %v5966 = vld [vmem:[%s8 + $0x28] sm:$0xff]
  %v5967 = vld [vmem:[%s8 + $0x30] sm:$0xff]
  %v5968 = vld [vmem:[%s8 + $0x38] sm:$0xff]
  %v5969 = vld [vmem:[%s8 + $0x40] sm:$0xff]
  %v5970 = vld [vmem:[%s8 + $0x48] sm:$0xff]
  %v5971 = vld [vmem:[%s8 + $0x50] sm:$0xff]
  %v5972 = vld [vmem:[%s8 + $0x58] sm:$0xff]
  %v5973 = vld [vmem:[%s8 + $0x60] sm:$0xff]
  %v5974 = vld [vmem:[%s8 + $0x68] sm:$0xff]
  %v5975 = vld [vmem:[%s8 + $0x70] sm:$0xff]
  %v5976 = vld [vmem:[%s8 + $0x78] sm:$0xff]
  %v5977 = vld [vmem:[%s8 + $0x80] sm:$0xff]
  %v5978 = vld [vmem:[%s8 + $0x88] sm:$0xff]
  %v5979 = vld [vmem:[%s8 + $0x90] sm:$0xff]
  %v5980 = vld [vmem:[%s8 + $0x98] sm:$0xff]
  %v5981 = vld [vmem:[%s8 + $0xa0] sm:$0xff]
  %v5982 = vld [vmem:[%s8 + $0xa8] sm:$0xff]
  %v5983 = vld [vmem:[%s8 + $0xb0] sm:$0xff]
  %v5984 = vld [vmem:[%s8 + $0xb8] sm:$0xff]
  %v5985 = vld [vmem:[%s8 + $0xc0] sm:$0xff]
  %v5986 = vld [vmem:[%s8 + $0xc8] sm:$0xff]
  %v5987 = vld [vmem:[%s8 + $0xd0] sm:$0xff]
  %v5988 = vld [vmem:[%s8 + $0xd8] sm:$0xff]
  %v5989 = vld [vmem:[%s8 + $0xe0] sm:$0xff]
  %v5990 = vld [vmem:[%s8 + $0xe8] sm:$0xff]
  %v5991 = vld [vmem:[%s8 + $0xf0] sm:$0xff]
  %v5992 = vld [vmem:[%s8 + $0xf8] sm:$0xff]
  %v5993 = vld [vmem:[%s8 + $0x100] sm:$0xff]
  %v5994 = vld [vmem:[%s8 + $0x108] sm:$0xff]
  %v5995 = vld [vmem:[%s8 + $0x110] sm:$0xff]
  %v5996 = vld [vmem:[%s8 + $0x118] sm:$0xff]
  %v5997 = vld [vmem:[%s8 + $0x120] sm:$0xff]
  %v5998 = vld [vmem:[%s8 + $0x128] sm:$0xff]
  %v5999 = vld [vmem:[%s8 + $0x130] sm:$0xff]
  %v6000 = vld [vmem:[%s8 + $0x138] sm:$0xff]
  %vm6001 = vcmask 523264
  %v6003 = vsel %vm6001, %v5960, 0
  %6005 = vmatpush.msra.mxu0 %v5976
  %6006 = vmatpush.msra.mxu0 %v5975
  %6007 = vmatpush.msra.mxu0 %v5974
  %6008 = vmatpush.msra.mxu0 %v5973
  %6009 = vmatpush.msra.mxu0 %v5972
  %6010 = vmatpush.msra.mxu0 %v5971
  %6011 = vmatpush.msra.mxu0 %v5970
  %6012 = vmatpush.msra.mxu0 %v5969
  %6013 = vmatpush.msra.mxu0 %v5968
  %6014 = vmatpush.msra.mxu0 %v5967
  %6015 = vmatpush.msra.mxu0 %v5966
  %6016 = vmatpush.msra.mxu0 %v5965
  %6017 = vmatpush.msra.mxu0 %v5964
  %6018 = vmatpush.msra.mxu0 %v5963
  %6019 = vmatpush.msra.mxu0 %v5962
  %6020 = vmatpush.msra.mxu0 %v5961
  %6021 = vmatmul.f32.gmra.mxu0 %v5945
  %v6022 = vpop.f32.mrf.mxu0
  %v6023 = vadd.f32 0.0, %v6022
  %6024 = vdwg.mxu0
  %6025 = vmatpush.msra.mxu0 %v5992
  %6026 = vmatpush.msra.mxu0 %v5991
  %6027 = vmatpush.msra.mxu0 %v5990
  %6028 = vmatpush.msra.mxu0 %v5989
  %6029 = vmatpush.msra.mxu0 %v5988
  %6030 = vmatpush.msra.mxu0 %v5987
  %6031 = vmatpush.msra.mxu0 %v5986
  %6032 = vmatpush.msra.mxu0 %v5985
  %6033 = vmatpush.msra.mxu0 %v5984
  %6034 = vmatpush.msra.mxu0 %v5983
  %6035 = vmatpush.msra.mxu0 %v5982
  %6036 = vmatpush.msra.mxu0 %v5981
  %6037 = vmatpush.msra.mxu0 %v5980
  %6038 = vmatpush.msra.mxu0 %v5979
  %6039 = vmatpush.msra.mxu0 %v5978
  %6040 = vmatpush.msra.mxu0 %v5977
  %6041 = vmatmul.f32.gmra.mxu0 %v5952
  %v6042 = vpop.f32.mrf.mxu0
  %v6043 = vadd.f32 %v6023, %v6042
  %6044 = vdwg.mxu0
  %6045 = vmatpush.msra.mxu0 0.0
  %6046 = vmatpush.msra.mxu0 0.0
  %6047 = vmatpush.msra.mxu0 0.0
  %6048 = vmatpush.msra.mxu0 0.0
  %6049 = vmatpush.msra.mxu0 0.0
  %6050 = vmatpush.msra.mxu0 0.0
  %6051 = vmatpush.msra.mxu0 0.0
  %6052 = vmatpush.msra.mxu0 0.0
  %6053 = vmatpush.msra.mxu0 %v6000
  %6054 = vmatpush.msra.mxu0 %v5999
  %6055 = vmatpush.msra.mxu0 %v5998
  %6056 = vmatpush.msra.mxu0 %v5997
  %6057 = vmatpush.msra.mxu0 %v5996
  %6058 = vmatpush.msra.mxu0 %v5995
  %6059 = vmatpush.msra.mxu0 %v5994
  %6060 = vmatpush.msra.mxu0 %v5993
  %6061 = vmatmul.f32.gmra.mxu0 %v6003
  %v6062 = vpop.f32.mrf.mxu0
  %v6063 = vadd.f32 %v6043, %v6062
  %6064 = vdwg.mxu0
  %v6065 = vsel %vm3499, %v3941, 0.0
  %v6066 = vrot.slane %v6065, 4
  %v6067 = vadd.f32 %v6065, %v6066
  %v6068 = vrot.slane %v6067, 2
  %v6069 = vadd.f32 %v6067, %v6068
  %v6070 = vrot.slane %v6069, 1
  %v6071 = vadd.f32 %v6069, %v6070
  %v6072 = vsel %vm3499, %v3942, 0.0
  %v6073 = vrot.slane %v6072, 4
  %v6074 = vadd.f32 %v6072, %v6073
  %v6075 = vrot.slane %v6074, 2
  %v6076 = vadd.f32 %v6074, %v6075
  %v6077 = vrot.slane %v6076, 1
  %v6078 = vadd.f32 %v6076, %v6077
  %v6079 = vsel %vm5953, %v3943, 0.0
  %v6080 = vrot.slane %v6079, 4
  %v6081 = vadd.f32 %v6079, %v6080
  %v6082 = vrot.slane %v6081, 2
  %v6083 = vadd.f32 %v6081, %v6082
  %v6084 = vrot.slane %v6083, 1
  %v6085 = vadd.f32 %v6083, %v6084
  %v6087 = vsel %vm6001, %v6085, 0
  %6089 = vmatpush.msra.mxu0 %v5976
  %6090 = vmatpush.msra.mxu0 %v5975
  %6091 = vmatpush.msra.mxu0 %v5974
  %6092 = vmatpush.msra.mxu0 %v5973
  %6093 = vmatpush.msra.mxu0 %v5972
  %6094 = vmatpush.msra.mxu0 %v5971
  %6095 = vmatpush.msra.mxu0 %v5970
  %6096 = vmatpush.msra.mxu0 %v5969
  %6097 = vmatpush.msra.mxu0 %v5968
  %6098 = vmatpush.msra.mxu0 %v5967
  %6099 = vmatpush.msra.mxu0 %v5966
  %6100 = vmatpush.msra.mxu0 %v5965
  %6101 = vmatpush.msra.mxu0 %v5964
  %6102 = vmatpush.msra.mxu0 %v5963
  %6103 = vmatpush.msra.mxu0 %v5962
  %6104 = vmatpush.msra.mxu0 %v5961
  %6105 = vmatmul.f32.gmra.mxu0 %v6071
  %v6106 = vpop.f32.mrf.mxu0
  %v6107 = vadd.f32 0.0, %v6106
  %6108 = vdwg.mxu0
  %6109 = vmatpush.msra.mxu0 %v5992
  %6110 = vmatpush.msra.mxu0 %v5991
  %6111 = vmatpush.msra.mxu0 %v5990
  %6112 = vmatpush.msra.mxu0 %v5989
  %6113 = vmatpush.msra.mxu0 %v5988
  %6114 = vmatpush.msra.mxu0 %v5987
  %6115 = vmatpush.msra.mxu0 %v5986
  %6116 = vmatpush.msra.mxu0 %v5985
  %6117 = vmatpush.msra.mxu0 %v5984
  %6118 = vmatpush.msra.mxu0 %v5983
  %6119 = vmatpush.msra.mxu0 %v5982
  %6120 = vmatpush.msra.mxu0 %v5981
  %6121 = vmatpush.msra.mxu0 %v5980
  %6122 = vmatpush.msra.mxu0 %v5979
  %6123 = vmatpush.msra.mxu0 %v5978
  %6124 = vmatpush.msra.mxu0 %v5977
  %6125 = vmatmul.f32.gmra.mxu0 %v6078
  %v6126 = vpop.f32.mrf.mxu0
  %v6127 = vadd.f32 %v6107, %v6126
  %6128 = vdwg.mxu0
  %6129 = vmatpush.msra.mxu0 0.0
  %6130 = vmatpush.msra.mxu0 0.0
  %6131 = vmatpush.msra.mxu0 0.0
  %6132 = vmatpush.msra.mxu0 0.0
  %6133 = vmatpush.msra.mxu0 0.0
  %6134 = vmatpush.msra.mxu0 0.0
  %6135 = vmatpush.msra.mxu0 0.0
  %6136 = vmatpush.msra.mxu0 0.0
  %6137 = vmatpush.msra.mxu0 %v6000
  %6138 = vmatpush.msra.mxu0 %v5999
  %6139 = vmatpush.msra.mxu0 %v5998
  %6140 = vmatpush.msra.mxu0 %v5997
  %6141 = vmatpush.msra.mxu0 %v5996
  %6142 = vmatpush.msra.mxu0 %v5995
  %6143 = vmatpush.msra.mxu0 %v5994
  %6144 = vmatpush.msra.mxu0 %v5993
  %6145 = vmatmul.f32.gmra.mxu0 %v6087
  %v6146 = vpop.f32.mrf.mxu0
  %v6147 = vadd.f32 %v6127, %v6146
  %6148 = vdwg.mxu0
  %v6149 = vrcp.pop 128.0
  %v6150 = vmul.f32 128.0, %v6149
  %v6151 = vsub.f32 1.0, %v6150
  %v6152 = vmul.f32 %v6149, %v6151
  %v6153 = vadd.f32 %v6149, %v6152
  %vm6154 = vweird.f32 %v6149
  %v6155 = vsel %vm6154, %v6149, %v6153
  %v6156 = vmul.f32 %v6063, %v6155
  %v6157 = vmul.f32 %v6147, %v6155
  %v6158 = vmul.f32 %v6156, %v6156
  %v6159 = vsub.f32 %v6157, %v6158
  %v6160 = vld [vmem:[%s14] sm:$0x1]
  %v6161 = vadd.f32 %v6159, 1e-05
  %v6162 = vrsqrt.pop %v6161
  %v6163 = vmul.f32 %v6162, %v6161
  %v6164 = vmul.f32 %v6163, %v6162
  %v6165 = vmul.f32 0.5, %v6164
  %v6166 = vsub.f32 1.5, %v6165
  %v6167 = vmul.f32 %v6162, %v6166
  %vm6168 = vweird.f32 %v6161
  %vm6169 = vweird.f32 %v6162
  %vm6170 = vmor %vm6168, %vm6169
  %v6171 = vsel %vm6170, %v6162, %v6167
  %v6172 = vmul.f32 %v6160, %v6171
  %v6173 = vld [vmem:[%s15] sm:$0x1]
  %v6174 = vmul.f32 %v6156, %v6172
  %v6175 = vsub.f32 %v6173, %v6174
  %v6176 = vld [vmem:[%s9] sm:$0xff]
  %v6177 = vld [vmem:[%s9 + $0x8] sm:$0xff]
  %v6178 = vld [vmem:[%s9 + $0x10] sm:$0xff]
  %v6179 = vld [vmem:[%s9 + $0x18] sm:$0xff]
  %v6180 = vld [vmem:[%s9 + $0x20] sm:$0xff]
  %v6181 = vld [vmem:[%s9 + $0x28] sm:$0xff]
  %v6182 = vld [vmem:[%s9 + $0x30] sm:$0xff]
  %v6183 = vld [vmem:[%s9 + $0x38] sm:$0xff]
  %v6184 = vld [vmem:[%s9 + $0x40] sm:$0xff]
  %v6185 = vld [vmem:[%s9 + $0x48] sm:$0xff]
  %v6186 = vld [vmem:[%s9 + $0x50] sm:$0xff]
  %v6187 = vld [vmem:[%s9 + $0x58] sm:$0xff]
  %v6189 = vsel %vm3558, %v6172, 0
  %6191 = vmatpush.msra.mxu0 0.0
  %6192 = vmatpush.msra.mxu0 0.0
  %6193 = vmatpush.msra.mxu0 0.0
  %6194 = vmatpush.msra.mxu0 0.0
  %6195 = vmatpush.msra.mxu0 0.0
  %6196 = vmatpush.msra.mxu0 0.0
  %6197 = vmatpush.msra.mxu0 0.0
  %6198 = vmatpush.msra.mxu0 0.0
  %6199 = vmatpush.msra.mxu0 0.0
  %6200 = vmatpush.msra.mxu0 0.0
  %6201 = vmatpush.msra.mxu0 0.0
  %6202 = vmatpush.msra.mxu0 0.0
  %6203 = vmatpush.msra.mxu0 %v6185
  %6204 = vmatpush.msra.mxu0 %v6182
  %6205 = vmatpush.msra.mxu0 %v6179
  %6206 = vmatpush.msra.mxu0 %v6176
  %6207 = vmatmul.f32.gmra.mxu0 %v6189
  %v6208 = vpop.f32.mrf.mxu0
  %v6209 = vadd.f32 0.0, %v6208
  %6210 = vdwg.mxu0
  %6211 = vmatpush.msra.mxu0 0.0
  %6212 = vmatpush.msra.mxu0 0.0
  %6213 = vmatpush.msra.mxu0 0.0
  %6214 = vmatpush.msra.mxu0 0.0
  %6215 = vmatpush.msra.mxu0 0.0
  %6216 = vmatpush.msra.mxu0 0.0
  %6217 = vmatpush.msra.mxu0 0.0
  %6218 = vmatpush.msra.mxu0 0.0
  %6219 = vmatpush.msra.mxu0 0.0
  %6220 = vmatpush.msra.mxu0 0.0
  %6221 = vmatpush.msra.mxu0 0.0
  %6222 = vmatpush.msra.mxu0 0.0
  %6223 = vmatpush.msra.mxu0 %v6186
  %6224 = vmatpush.msra.mxu0 %v6183
  %6225 = vmatpush.msra.mxu0 %v6180
  %6226 = vmatpush.msra.mxu0 %v6177
  %6227 = vmatmul.f32.gmra.mxu0 %v6189
  %v6228 = vpop.f32.mrf.mxu0
  %v6229 = vadd.f32 0.0, %v6228
  %6230 = vdwg.mxu0
  %6231 = vmatpush.msra.mxu0 0.0
  %6232 = vmatpush.msra.mxu0 0.0
  %6233 = vmatpush.msra.mxu0 0.0
  %6234 = vmatpush.msra.mxu0 0.0
  %6235 = vmatpush.msra.mxu0 0.0
  %6236 = vmatpush.msra.mxu0 0.0
  %6237 = vmatpush.msra.mxu0 0.0
  %6238 = vmatpush.msra.mxu0 0.0
  %6239 = vmatpush.msra.mxu0 0.0
  %6240 = vmatpush.msra.mxu0 0.0
  %6241 = vmatpush.msra.mxu0 0.0
  %6242 = vmatpush.msra.mxu0 0.0
  %6243 = vmatpush.msra.mxu0 %v6187
  %6244 = vmatpush.msra.mxu0 %v6184
  %6245 = vmatpush.msra.mxu0 %v6181
  %6246 = vmatpush.msra.mxu0 %v6178
  %6247 = vmatmul.f32.gmra.mxu0 %v6189
  %v6248 = vpop.f32.mrf.mxu0
  %v6249 = vadd.f32 0.0, %v6248
  %6250 = vdwg.mxu0
  %v6252 = vsel %vm3558, %v6175, 0
  %6254 = vmatpush.msra.mxu0 0.0
  %6255 = vmatpush.msra.mxu0 0.0
  %6256 = vmatpush.msra.mxu0 0.0
  %6257 = vmatpush.msra.mxu0 0.0
  %6258 = vmatpush.msra.mxu0 0.0
  %6259 = vmatpush.msra.mxu0 0.0
  %6260 = vmatpush.msra.mxu0 0.0
  %6261 = vmatpush.msra.mxu0 0.0
  %6262 = vmatpush.msra.mxu0 0.0
  %6263 = vmatpush.msra.mxu0 0.0
  %6264 = vmatpush.msra.mxu0 0.0
  %6265 = vmatpush.msra.mxu0 0.0
  %6266 = vmatpush.msra.mxu0 %v6185
  %6267 = vmatpush.msra.mxu0 %v6182
  %6268 = vmatpush.msra.mxu0 %v6179
  %6269 = vmatpush.msra.mxu0 %v6176
  %6270 = vmatmul.f32.gmra.mxu0 %v6252
  %v6271 = vpop.f32.mrf.mxu0
  %v6272 = vadd.f32 0.0, %v6271
  %6273 = vdwg.mxu0
  %6274 = vmatpush.msra.mxu0 0.0
  %6275 = vmatpush.msra.mxu0 0.0
  %6276 = vmatpush.msra.mxu0 0.0
  %6277 = vmatpush.msra.mxu0 0.0
  %6278 = vmatpush.msra.mxu0 0.0
  %6279 = vmatpush.msra.mxu0 0.0
  %6280 = vmatpush.msra.mxu0 0.0
  %6281 = vmatpush.msra.mxu0 0.0
  %6282 = vmatpush.msra.mxu0 0.0
  %6283 = vmatpush.msra.mxu0 0.0
  %6284 = vmatpush.msra.mxu0 0.0
  %6285 = vmatpush.msra.mxu0 0.0
  %6286 = vmatpush.msra.mxu0 %v6186
  %6287 = vmatpush.msra.mxu0 %v6183
  %6288 = vmatpush.msra.mxu0 %v6180
  %6289 = vmatpush.msra.mxu0 %v6177
  %6290 = vmatmul.f32.gmra.mxu0 %v6252
  %v6291 = vpop.f32.mrf.mxu0
  %v6292 = vadd.f32 0.0, %v6291
  %6293 = vdwg.mxu0
  %6294 = vmatpush.msra.mxu0 0.0
  %6295 = vmatpush.msra.mxu0 0.0
  %6296 = vmatpush.msra.mxu0 0.0
  %6297 = vmatpush.msra.mxu0 0.0
  %6298 = vmatpush.msra.mxu0 0.0
  %6299 = vmatpush.msra.mxu0 0.0
  %6300 = vmatpush.msra.mxu0 0.0
  %6301 = vmatpush.msra.mxu0 0.0
  %6302 = vmatpush.msra.mxu0 0.0
  %6303 = vmatpush.msra.mxu0 0.0
  %6304 = vmatpush.msra.mxu0 0.0
  %6305 = vmatpush.msra.mxu0 0.0
  %6306 = vmatpush.msra.mxu0 %v6187
  %6307 = vmatpush.msra.mxu0 %v6184
  %6308 = vmatpush.msra.mxu0 %v6181
  %6309 = vmatpush.msra.mxu0 %v6178
  %6310 = vmatmul.f32.gmra.mxu0 %v6252
  %v6311 = vpop.f32.mrf.mxu0
  %v6312 = vadd.f32 0.0, %v6311
  %6313 = vdwg.mxu0
  loop: start=0, step=1, limit=8
  $region102: #{discriminator_forward.1} parent=0 // loop_pre_header
    _
  $region103: #{discriminator_forward.1} parent=0 // loop_header
    %s6315 = sphi 0, %s6319
    %p6316 = scmp.ge.s32.totalorder %s6315, 8
  $region104: #{discriminator_forward.1} parent=0 // loop_header_branch
    %6318 = sbr.rel (%p6316) target = $region108
  $region105: #{discriminator_forward.1} parent=0 // loop_body
    %s6320 = smul.u32 %s6315, 3
    %s6321 = smul.addr %s6320, 2
    %s6322 = scalar_lea.vmem [#allocation7], %s6321
    %v6323 = vld [vmem:[%s6322] sm:$0x3f]
    %v6324 = vperm.slane %v6209, 0
    %v6325 = vperm.slane %v6229, 0
    %v6326 = vperm.slane %v6249, 0
    %v6330 = vrot.slane %v6325, 6
    %v6331 = vrot.slane %v6326, 4
    %v6332 = vsel %vm3499, %v6324, %v6330
    %vm6333 = vcmask 1043456
    %v6334 = vsel %vm6333, %v6332, %v6331
    %v6336 = vmul.f32 %v6323, %v6334
    %v6337 = vperm.slane %v6272, 0
    %v6338 = vperm.slane %v6292, 0
    %v6339 = vperm.slane %v6312, 0
    %v6343 = vrot.slane %v6338, 6
    %v6344 = vrot.slane %v6339, 4
    %v6345 = vsel %vm3499, %v6337, %v6343
    %v6346 = vsel %vm6333, %v6345, %v6344
    %v6348 = vadd.f32 %v6336, %v6346
    %vm6349 = vcmp.ge.f32.partialorder %v6348, 0.0
    %v6350 = vmul.f32 %v6348, 0.2
    %v6351 = vsel %vm6349, %v6348, %v6350
    %6353 = vst [vmem:[#allocation1] ss:$4 sm:$0xff] %v6351
    %v6354 = vld.sshfl [vmem:[#allocation1] sm:$0xff pattern:$0x73625140]
    %v6355 = vld.sshfl [vmem:[#allocation1 + $0x8] sm:$0xff pattern:$0x73625140]
    %v6356 = vld.sshfl [vmem:[#allocation1 + $0x10] sm:$0xff pattern:$0x73625140]
    %v6360 = vpack.c.bf16 %v6355, %v6354
    %v6361 = vpack.c.bf16 %v6356, %v6356
    %s6362 = sadd.s32 %s6315, 1
    %v6365 = vrot.slane %v6360, 3
    %v6366 = vrot.slane %v6361, 6
    %v6367 = vrot.slane %v6361, 1
    %v6370 = vsel %vm60, %v6360, %v6365
    %vm6371 = vcmask 1042434
    %v6374 = vsel %vm6371, %v6366, %v6367
    %v6375 = vsel %vm3499, %v6370, %v6374
    %s6377 = smul.u32 %s6362, 3
    %s6378 = scalar_lea.vmem [#allocation4], %s6377
    %6379 = vst.msk [vmem:[%s6378] sm:$0x7] %vm120, %v6375
  $region106: #{discriminator_forward.1} parent=0 // loop_footer
    %s6319 = sadd.s32 1, %s6315
  $region107: #{discriminator_forward.1} parent=0 // loop_footer_branch
    %6314 = sbr.rel target = $region103
  $region108: #{discriminator_forward.1} parent=0 // loop_exit
    _
  loop: start=0, step=1, limit=4
  $region109: #{discriminator_forward.1} parent=0 // loop_pre_header
    _
  $region110: #{discriminator_forward.1} parent=0 // loop_header
    %s6381 = sphi 0, %s6385
    %p6382 = scmp.ge.s32.totalorder %s6381, 4
    %v6386 = vphi 0.0, %v7729
    %v6387 = vphi 0.0, %v7730
    %v6388 = vphi 0.0, %v7733
    %v6389 = vphi 0.0, %v7734
  $region111: #{discriminator_forward.1} parent=0 // loop_header_branch
    %6384 = sbr.rel (%p6382) target = $region115
  $region112: #{discriminator_forward.1} parent=0 // loop_body
    %s6390 = smul.u32 %s6381, 2
    %s6391 = smul.u32 %s6390, 3
    %s6392 = scalar_lea.vmem [#allocation4], %s6391
    %v6393 = vld [vmem:[%s6392] sm:$0x7]
    %v6394 = vld [vmem:[%s4] sm:$0xff]
    %v6395 = vld [vmem:[%s4 + $0x8] sm:$0xff]
    %v6396 = vld [vmem:[%s4 + $0x10] sm:$0xff]
    %v6397 = vld [vmem:[%s4 + $0x18] sm:$0xff]
    %v6398 = vld [vmem:[%s4 + $0x20] sm:$0xff]
    %v6399 = vld [vmem:[%s4 + $0x28] sm:$0xff]
    %v6400 = vld [vmem:[%s4 + $0x30] sm:$0xff]
    %v6401 = vld [vmem:[%s4 + $0x38] sm:$0xff]
    %v6402 = vld [vmem:[%s4 + $0x40] sm:$0xff]
    %v6403 = vld [vmem:[%s4 + $0x48] sm:$0xff]
    %v6404 = vld [vmem:[%s4 + $0x50] sm:$0xff]
    %v6405 = vld [vmem:[%s4 + $0x58] sm:$0xff]
    %v6406 = vld [vmem:[%s4 + $0x60] sm:$0xff]
    %v6407 = vld [vmem:[%s4 + $0x68] sm:$0xff]
    %v6408 = vld [vmem:[%s4 + $0x70] sm:$0xff]
    %v6409 = vld [vmem:[%s4 + $0x78] sm:$0xff]
    %v6410 = vld [vmem:[%s4 + $0x80] sm:$0xff]
    %v6411 = vld [vmem:[%s4 + $0x88] sm:$0xff]
    %v6412 = vld [vmem:[%s4 + $0x90] sm:$0xff]
    %v6413 = vld [vmem:[%s4 + $0x98] sm:$0xff]
    %v6414 = vld [vmem:[%s4 + $0xa0] sm:$0xff]
    %v6415 = vld [vmem:[%s4 + $0xa8] sm:$0xff]
    %v6416 = vld [vmem:[%s4 + $0xb0] sm:$0xff]
    %v6417 = vld [vmem:[%s4 + $0xb8] sm:$0xff]
    %v6418 = vld [vmem:[%s4 + $0xc0] sm:$0xff]
    %v6419 = vld [vmem:[%s4 + $0xc8] sm:$0xff]
    %v6420 = vld [vmem:[%s4 + $0xd0] sm:$0xff]
    %v6421 = vld [vmem:[%s4 + $0xd8] sm:$0xff]
    %v6422 = vld [vmem:[%s4 + $0xe0] sm:$0xff]
    %v6423 = vld [vmem:[%s4 + $0xe8] sm:$0xff]
    %v6424 = vld [vmem:[%s4 + $0xf0] sm:$0xff]
    %v6425 = vld [vmem:[%s4 + $0xf8] sm:$0xff]
    %v6426 = vld [vmem:[%s4 + $0x100] sm:$0xff]
    %v6427 = vld [vmem:[%s4 + $0x108] sm:$0xff]
    %v6428 = vld [vmem:[%s4 + $0x110] sm:$0xff]
    %v6429 = vld [vmem:[%s4 + $0x118] sm:$0xff]
    %v6430 = vld [vmem:[%s4 + $0x120] sm:$0xff]
    %v6431 = vld [vmem:[%s4 + $0x128] sm:$0xff]
    %v6432 = vld [vmem:[%s4 + $0x130] sm:$0xff]
    %v6433 = vld [vmem:[%s4 + $0x138] sm:$0xff]
    %s6434 = sadd.s32 %s6390, 1
    %s6435 = smul.u32 %s6434, 3
    %s6436 = scalar_lea.vmem [#allocation4], %s6435
    %v6437 = vld [vmem:[%s6436] sm:$0x7]
    %s6438 = scalar_lea.vmem %s4, 320
    %v6439 = vld [vmem:[%s6438] sm:$0xff]
    %v6440 = vld [vmem:[%s6438 + $0x8] sm:$0xff]
    %v6441 = vld [vmem:[%s6438 + $0x10] sm:$0xff]
    %v6442 = vld [vmem:[%s6438 + $0x18] sm:$0xff]
    %v6443 = vld [vmem:[%s6438 + $0x20] sm:$0xff]
    %v6444 = vld [vmem:[%s6438 + $0x28] sm:$0xff]
    %v6445 = vld [vmem:[%s6438 + $0x30] sm:$0xff]
    %v6446 = vld [vmem:[%s6438 + $0x38] sm:$0xff]
    %v6447 = vld [vmem:[%s6438 + $0x40] sm:$0xff]
    %v6448 = vld [vmem:[%s6438 + $0x48] sm:$0xff]
    %v6449 = vld [vmem:[%s6438 + $0x50] sm:$0xff]
    %v6450 = vld [vmem:[%s6438 + $0x58] sm:$0xff]
    %v6451 = vld [vmem:[%s6438 + $0x60] sm:$0xff]
    %v6452 = vld [vmem:[%s6438 + $0x68] sm:$0xff]
    %v6453 = vld [vmem:[%s6438 + $0x70] sm:$0xff]
    %v6454 = vld [vmem:[%s6438 + $0x78] sm:$0xff]
    %v6455 = vld [vmem:[%s6438 + $0x80] sm:$0xff]
    %v6456 = vld [vmem:[%s6438 + $0x88] sm:$0xff]
    %v6457 = vld [vmem:[%s6438 + $0x90] sm:$0xff]
    %v6458 = vld [vmem:[%s6438 + $0x98] sm:$0xff]
    %v6459 = vld [vmem:[%s6438 + $0xa0] sm:$0xff]
    %v6460 = vld [vmem:[%s6438 + $0xa8] sm:$0xff]
    %v6461 = vld [vmem:[%s6438 + $0xb0] sm:$0xff]
    %v6462 = vld [vmem:[%s6438 + $0xb8] sm:$0xff]
    %v6463 = vld [vmem:[%s6438 + $0xc0] sm:$0xff]
    %v6464 = vld [vmem:[%s6438 + $0xc8] sm:$0xff]
    %v6465 = vld [vmem:[%s6438 + $0xd0] sm:$0xff]
    %v6466 = vld [vmem:[%s6438 + $0xd8] sm:$0xff]
    %v6467 = vld [vmem:[%s6438 + $0xe0] sm:$0xff]
    %v6468 = vld [vmem:[%s6438 + $0xe8] sm:$0xff]
    %v6469 = vld [vmem:[%s6438 + $0xf0] sm:$0xff]
    %v6470 = vld [vmem:[%s6438 + $0xf8] sm:$0xff]
    %v6471 = vld [vmem:[%s6438 + $0x100] sm:$0xff]
    %v6472 = vld [vmem:[%s6438 + $0x108] sm:$0xff]
    %v6473 = vld [vmem:[%s6438 + $0x110] sm:$0xff]
    %v6474 = vld [vmem:[%s6438 + $0x118] sm:$0xff]
    %v6475 = vld [vmem:[%s6438 + $0x120] sm:$0xff]
    %v6476 = vld [vmem:[%s6438 + $0x128] sm:$0xff]
    %v6477 = vld [vmem:[%s6438 + $0x130] sm:$0xff]
    %v6478 = vld [vmem:[%s6438 + $0x138] sm:$0xff]
    %6480 = vst [vmem:[#allocation1] ss:$9 sm:$0xff] %v6437
    %v6481 = vld [vmem:[#allocation1] sm:$0xff]
    %v6482 = vld [vmem:[#allocation1 + $0x9] sm:$0xff]
    %v6483 = vld [vmem:[#allocation1 + $0x12] sm:$0xff]
    %v6526 = vunpack.c.l.b16 %v6439
    %v6527 = vunpack.c.h.b16 %v6439
    %v6528 = vunpack.c.l.b16 %v6440
    %v6529 = vunpack.c.h.b16 %v6440
    %v6530 = vunpack.c.l.b16 %v6441
    %v6531 = vunpack.c.h.b16 %v6441
    %v6532 = vunpack.c.l.b16 %v6442
    %v6533 = vunpack.c.h.b16 %v6442
    %v6534 = vunpack.c.l.b16 %v6443
    %v6535 = vunpack.c.h.b16 %v6443
    %v6536 = vunpack.c.l.b16 %v6444
    %v6537 = vunpack.c.h.b16 %v6444
    %v6538 = vunpack.c.l.b16 %v6445
    %v6539 = vunpack.c.h.b16 %v6445
    %v6540 = vunpack.c.l.b16 %v6446
    %v6541 = vunpack.c.h.b16 %v6446
    %v6542 = vunpack.c.l.b16 %v6447
    %v6543 = vunpack.c.h.b16 %v6447
    %v6544 = vunpack.c.l.b16 %v6448
    %v6545 = vunpack.c.h.b16 %v6448
    %v6546 = vunpack.c.l.b16 %v6449
    %v6547 = vunpack.c.h.b16 %v6449
    %v6548 = vunpack.c.l.b16 %v6450
    %v6549 = vunpack.c.h.b16 %v6450
    %v6550 = vunpack.c.l.b16 %v6451
    %v6551 = vunpack.c.h.b16 %v6451
    %v6552 = vunpack.c.l.b16 %v6452
    %v6553 = vunpack.c.h.b16 %v6452
    %v6554 = vunpack.c.l.b16 %v6453
    %v6555 = vunpack.c.h.b16 %v6453
    %v6556 = vunpack.c.l.b16 %v6454
    %v6557 = vunpack.c.h.b16 %v6454
    %v6558 = vunpack.c.l.b16 %v6455
    %v6559 = vunpack.c.h.b16 %v6455
    %v6560 = vunpack.c.l.b16 %v6456
    %v6561 = vunpack.c.h.b16 %v6456
    %v6562 = vunpack.c.l.b16 %v6457
    %v6563 = vunpack.c.h.b16 %v6457
    %v6564 = vunpack.c.l.b16 %v6458
    %v6565 = vunpack.c.h.b16 %v6458
    %v6566 = vunpack.c.l.b16 %v6459
    %v6567 = vunpack.c.h.b16 %v6459
    %v6568 = vunpack.c.l.b16 %v6460
    %v6569 = vunpack.c.h.b16 %v6460
    %v6570 = vunpack.c.l.b16 %v6461
    %v6571 = vunpack.c.h.b16 %v6461
    %v6572 = vunpack.c.l.b16 %v6462
    %v6573 = vunpack.c.h.b16 %v6462
    %v6574 = vunpack.c.l.b16 %v6463
    %v6575 = vunpack.c.h.b16 %v6463
    %v6576 = vunpack.c.l.b16 %v6464
    %v6577 = vunpack.c.h.b16 %v6464
    %v6578 = vunpack.c.l.b16 %v6465
    %v6579 = vunpack.c.h.b16 %v6465
    %v6580 = vunpack.c.l.b16 %v6466
    %v6581 = vunpack.c.h.b16 %v6466
    %v6582 = vunpack.c.l.b16 %v6467
    %v6583 = vunpack.c.h.b16 %v6467
    %v6584 = vunpack.c.l.b16 %v6468
    %v6585 = vunpack.c.h.b16 %v6468
    %v6586 = vunpack.c.l.b16 %v6469
    %v6587 = vunpack.c.h.b16 %v6469
    %v6588 = vunpack.c.l.b16 %v6470
    %v6589 = vunpack.c.h.b16 %v6470
    %v6590 = vunpack.c.l.b16 %v6471
    %v6591 = vunpack.c.h.b16 %v6471
    %v6592 = vunpack.c.l.b16 %v6472
    %v6593 = vunpack.c.h.b16 %v6472
    %v6594 = vunpack.c.l.b16 %v6473
    %v6595 = vunpack.c.h.b16 %v6473
    %v6596 = vunpack.c.l.b16 %v6474
    %v6597 = vunpack.c.h.b16 %v6474
    %v6598 = vunpack.c.l.b16 %v6475
    %v6599 = vunpack.c.h.b16 %v6475
    %v6600 = vunpack.c.l.b16 %v6476
    %v6601 = vunpack.c.h.b16 %v6476
    %v6602 = vunpack.c.l.b16 %v6477
    %v6603 = vunpack.c.h.b16 %v6477
    %v6604 = vunpack.c.l.b16 %v6478
    %v6605 = vunpack.c.h.b16 %v6478
    %v6606 = vpack.c.b16 %v6528, %v6526
    %v6607 = vpack.c.b16 %v6529, %v6527
    %v6608 = vpack.c.b16 %v6532, %v6530
    %v6609 = vpack.c.b16 %v6533, %v6531
    %v6610 = vpack.c.b16 %v6536, %v6534
    %v6611 = vpack.c.b16 %v6537, %v6535
    %v6612 = vpack.c.b16 %v6540, %v6538
    %v6613 = vpack.c.b16 %v6541, %v6539
    %v6614 = vpack.c.b16 %v6544, %v6542
    %v6615 = vpack.c.b16 %v6545, %v6543
    %v6616 = vpack.c.b16 %v6548, %v6546
    %v6617 = vpack.c.b16 %v6549, %v6547
    %v6618 = vpack.c.b16 %v6552, %v6550
    %v6619 = vpack.c.b16 %v6553, %v6551
    %v6620 = vpack.c.b16 %v6556, %v6554
    %v6621 = vpack.c.b16 %v6557, %v6555
    %v6622 = vpack.c.b16 %v6560, %v6558
    %v6623 = vpack.c.b16 %v6561, %v6559
    %v6624 = vpack.c.b16 %v6564, %v6562
    %v6625 = vpack.c.b16 %v6565, %v6563
    %v6626 = vpack.c.b16 %v6568, %v6566
    %v6627 = vpack.c.b16 %v6569, %v6567
    %v6628 = vpack.c.b16 %v6572, %v6570
    %v6629 = vpack.c.b16 %v6573, %v6571
    %v6630 = vpack.c.b16 %v6576, %v6574
    %v6631 = vpack.c.b16 %v6577, %v6575
    %v6632 = vpack.c.b16 %v6580, %v6578
    %v6633 = vpack.c.b16 %v6581, %v6579
    %v6634 = vpack.c.b16 %v6584, %v6582
    %v6635 = vpack.c.b16 %v6585, %v6583
    %v6636 = vpack.c.b16 %v6588, %v6586
    %v6637 = vpack.c.b16 %v6589, %v6587
    %v6638 = vpack.c.b16 %v6592, %v6590
    %v6639 = vpack.c.b16 %v6593, %v6591
    %v6640 = vpack.c.b16 %v6596, %v6594
    %v6641 = vpack.c.b16 %v6597, %v6595
    %v6642 = vpack.c.b16 %v6600, %v6598
    %v6643 = vpack.c.b16 %v6601, %v6599
    %v6644 = vpack.c.b16 %v6604, %v6602
    %v6645 = vpack.c.b16 %v6605, %v6603
    %v6686 = vsel %vm6001, %v6483, 0
    %6688 = vmatpush.bf16.msra.mxu0 %v6620
    %6689 = vmatpush.bf16.msra.mxu0 %v6618
    %6690 = vmatpush.bf16.msra.mxu0 %v6616
    %6691 = vmatpush.bf16.msra.mxu0 %v6614
    %6692 = vmatpush.bf16.msra.mxu0 %v6612
    %6693 = vmatpush.bf16.msra.mxu0 %v6610
    %6694 = vmatpush.bf16.msra.mxu0 %v6608
    %6695 = vmatpush.bf16.msra.mxu0 %v6606
    %6696 = vmatmul.bf16.gmra.mxu0 %v6481
    %v6697 = vpop.f32.mrf.mxu0
    %v6698 = vadd.f32 0.0, %v6697
    %v6699 = vpop.f32.mrf.mxu0
    %6700 = vdwg.mxu0
    %6701 = vmatpush.bf16.msra.mxu0 %v6636
    %6702 = vmatpush.bf16.msra.mxu0 %v6634
    %6703 = vmatpush.bf16.msra.mxu0 %v6632
    %6704 = vmatpush.bf16.msra.mxu0 %v6630
    %6705 = vmatpush.bf16.msra.mxu0 %v6628
    %6706 = vmatpush.bf16.msra.mxu0 %v6626
    %6707 = vmatpush.bf16.msra.mxu0 %v6624
    %6708 = vmatpush.bf16.msra.mxu0 %v6622
    %6709 = vmatmul.bf16.gmra.mxu0 %v6482
    %v6710 = vpop.f32.mrf.mxu0
    %v6711 = vadd.f32 %v6698, %v6710
    %v6712 = vpop.f32.mrf.mxu0
    %6713 = vdwg.mxu0
    %6714 = vmatpush.bf16.msra.mxu0 0
    %6715 = vmatpush.bf16.msra.mxu0 0
    %6716 = vmatpush.bf16.msra.mxu0 0
    %6717 = vmatpush.bf16.msra.mxu0 0
    %6718 = vmatpush.bf16.msra.mxu0 %v6644
    %6719 = vmatpush.bf16.msra.mxu0 %v6642
    %6720 = vmatpush.bf16.msra.mxu0 %v6640
    %6721 = vmatpush.bf16.msra.mxu0 %v6638
    %6722 = vmatmul.bf16.gmra.mxu0 %v6686
    %v6723 = vpop.f32.mrf.mxu0
    %v6724 = vadd.f32 %v6711, %v6723
    %v6725 = vpop.f32.mrf.mxu0
    %6726 = vdwg.mxu0
    %6727 = vmatpush.bf16.msra.mxu0 %v6621
    %6728 = vmatpush.bf16.msra.mxu0 %v6619
    %6729 = vmatpush.bf16.msra.mxu0 %v6617
    %6730 = vmatpush.bf16.msra.mxu0 %v6615
    %6731 = vmatpush.bf16.msra.mxu0 %v6613
    %6732 = vmatpush.bf16.msra.mxu0 %v6611
    %6733 = vmatpush.bf16.msra.mxu0 %v6609
    %6734 = vmatpush.bf16.msra.mxu0 %v6607
    %6735 = vmatmul.bf16.gmra.mxu0 %v6481
    %v6736 = vpop.f32.mrf.mxu0
    %v6737 = vadd.f32 0.0, %v6736
    %v6738 = vpop.f32.mrf.mxu0
    %6739 = vdwg.mxu0
    %6740 = vmatpush.bf16.msra.mxu0 %v6637
    %6741 = vmatpush.bf16.msra.mxu0 %v6635
    %6742 = vmatpush.bf16.msra.mxu0 %v6633
    %6743 = vmatpush.bf16.msra.mxu0 %v6631
    %6744 = vmatpush.bf16.msra.mxu0 %v6629
    %6745 = vmatpush.bf16.msra.mxu0 %v6627
    %6746 = vmatpush.bf16.msra.mxu0 %v6625
    %6747 = vmatpush.bf16.msra.mxu0 %v6623
    %6748 = vmatmul.bf16.gmra.mxu0 %v6482
    %v6749 = vpop.f32.mrf.mxu0
    %v6750 = vadd.f32 %v6737, %v6749
    %v6751 = vpop.f32.mrf.mxu0
    %6752 = vdwg.mxu0
    %6753 = vmatpush.bf16.msra.mxu0 0
    %6754 = vmatpush.bf16.msra.mxu0 0
    %6755 = vmatpush.bf16.msra.mxu0 0
    %6756 = vmatpush.bf16.msra.mxu0 0
    %6757 = vmatpush.bf16.msra.mxu0 %v6645
    %6758 = vmatpush.bf16.msra.mxu0 %v6643
    %6759 = vmatpush.bf16.msra.mxu0 %v6641
    %6760 = vmatpush.bf16.msra.mxu0 %v6639
    %6761 = vmatmul.bf16.gmra.mxu0 %v6686
    %v6762 = vpop.f32.mrf.mxu0
    %v6763 = vadd.f32 %v6750, %v6762
    %v6764 = vpop.f32.mrf.mxu0
    %6765 = vdwg.mxu0
    %6767 = vst [vmem:[#allocation1] ss:$9 sm:$0xff] %v6393
    %v6768 = vld [vmem:[#allocation1] sm:$0xff]
    %v6769 = vld [vmem:[#allocation1 + $0x9] sm:$0xff]
    %v6770 = vld [vmem:[#allocation1 + $0x12] sm:$0xff]
    %v6813 = vunpack.c.l.b16 %v6394
    %v6814 = vunpack.c.h.b16 %v6394
    %v6815 = vunpack.c.l.b16 %v6395
    %v6816 = vunpack.c.h.b16 %v6395
    %v6817 = vunpack.c.l.b16 %v6396
    %v6818 = vunpack.c.h.b16 %v6396
    %v6819 = vunpack.c.l.b16 %v6397
    %v6820 = vunpack.c.h.b16 %v6397
    %v6821 = vunpack.c.l.b16 %v6398
    %v6822 = vunpack.c.h.b16 %v6398
    %v6823 = vunpack.c.l.b16 %v6399
    %v6824 = vunpack.c.h.b16 %v6399
    %v6825 = vunpack.c.l.b16 %v6400
    %v6826 = vunpack.c.h.b16 %v6400
    %v6827 = vunpack.c.l.b16 %v6401
    %v6828 = vunpack.c.h.b16 %v6401
    %v6829 = vunpack.c.l.b16 %v6402
    %v6830 = vunpack.c.h.b16 %v6402
    %v6831 = vunpack.c.l.b16 %v6403
    %v6832 = vunpack.c.h.b16 %v6403
    %v6833 = vunpack.c.l.b16 %v6404
    %v6834 = vunpack.c.h.b16 %v6404
    %v6835 = vunpack.c.l.b16 %v6405
    %v6836 = vunpack.c.h.b16 %v6405
    %v6837 = vunpack.c.l.b16 %v6406
    %v6838 = vunpack.c.h.b16 %v6406
    %v6839 = vunpack.c.l.b16 %v6407
    %v6840 = vunpack.c.h.b16 %v6407
    %v6841 = vunpack.c.l.b16 %v6408
    %v6842 = vunpack.c.h.b16 %v6408
    %v6843 = vunpack.c.l.b16 %v6409
    %v6844 = vunpack.c.h.b16 %v6409
    %v6845 = vunpack.c.l.b16 %v6410
    %v6846 = vunpack.c.h.b16 %v6410
    %v6847 = vunpack.c.l.b16 %v6411
    %v6848 = vunpack.c.h.b16 %v6411
    %v6849 = vunpack.c.l.b16 %v6412
    %v6850 = vunpack.c.h.b16 %v6412
    %v6851 = vunpack.c.l.b16 %v6413
    %v6852 = vunpack.c.h.b16 %v6413
    %v6853 = vunpack.c.l.b16 %v6414
    %v6854 = vunpack.c.h.b16 %v6414
    %v6855 = vunpack.c.l.b16 %v6415
    %v6856 = vunpack.c.h.b16 %v6415
    %v6857 = vunpack.c.l.b16 %v6416
    %v6858 = vunpack.c.h.b16 %v6416
    %v6859 = vunpack.c.l.b16 %v6417
    %v6860 = vunpack.c.h.b16 %v6417
    %v6861 = vunpack.c.l.b16 %v6418
    %v6862 = vunpack.c.h.b16 %v6418
    %v6863 = vunpack.c.l.b16 %v6419
    %v6864 = vunpack.c.h.b16 %v6419
    %v6865 = vunpack.c.l.b16 %v6420
    %v6866 = vunpack.c.h.b16 %v6420
    %v6867 = vunpack.c.l.b16 %v6421
    %v6868 = vunpack.c.h.b16 %v6421
    %v6869 = vunpack.c.l.b16 %v6422
    %v6870 = vunpack.c.h.b16 %v6422
    %v6871 = vunpack.c.l.b16 %v6423
    %v6872 = vunpack.c.h.b16 %v6423
    %v6873 = vunpack.c.l.b16 %v6424
    %v6874 = vunpack.c.h.b16 %v6424
    %v6875 = vunpack.c.l.b16 %v6425
    %v6876 = vunpack.c.h.b16 %v6425
    %v6877 = vunpack.c.l.b16 %v6426
    %v6878 = vunpack.c.h.b16 %v6426
    %v6879 = vunpack.c.l.b16 %v6427
    %v6880 = vunpack.c.h.b16 %v6427
    %v6881 = vunpack.c.l.b16 %v6428
    %v6882 = vunpack.c.h.b16 %v6428
    %v6883 = vunpack.c.l.b16 %v6429
    %v6884 = vunpack.c.h.b16 %v6429
    %v6885 = vunpack.c.l.b16 %v6430
    %v6886 = vunpack.c.h.b16 %v6430
    %v6887 = vunpack.c.l.b16 %v6431
    %v6888 = vunpack.c.h.b16 %v6431
    %v6889 = vunpack.c.l.b16 %v6432
    %v6890 = vunpack.c.h.b16 %v6432
    %v6891 = vunpack.c.l.b16 %v6433
    %v6892 = vunpack.c.h.b16 %v6433
    %v6893 = vpack.c.b16 %v6815, %v6813
    %v6894 = vpack.c.b16 %v6816, %v6814
    %v6895 = vpack.c.b16 %v6819, %v6817
    %v6896 = vpack.c.b16 %v6820, %v6818
    %v6897 = vpack.c.b16 %v6823, %v6821
    %v6898 = vpack.c.b16 %v6824, %v6822
    %v6899 = vpack.c.b16 %v6827, %v6825
    %v6900 = vpack.c.b16 %v6828, %v6826
    %v6901 = vpack.c.b16 %v6831, %v6829
    %v6902 = vpack.c.b16 %v6832, %v6830
    %v6903 = vpack.c.b16 %v6835, %v6833
    %v6904 = vpack.c.b16 %v6836, %v6834
    %v6905 = vpack.c.b16 %v6839, %v6837
    %v6906 = vpack.c.b16 %v6840, %v6838
    %v6907 = vpack.c.b16 %v6843, %v6841
    %v6908 = vpack.c.b16 %v6844, %v6842
    %v6909 = vpack.c.b16 %v6847, %v6845
    %v6910 = vpack.c.b16 %v6848, %v6846
    %v6911 = vpack.c.b16 %v6851, %v6849
    %v6912 = vpack.c.b16 %v6852, %v6850
    %v6913 = vpack.c.b16 %v6855, %v6853
    %v6914 = vpack.c.b16 %v6856, %v6854
    %v6915 = vpack.c.b16 %v6859, %v6857
    %v6916 = vpack.c.b16 %v6860, %v6858
    %v6917 = vpack.c.b16 %v6863, %v6861
    %v6918 = vpack.c.b16 %v6864, %v6862
    %v6919 = vpack.c.b16 %v6867, %v6865
    %v6920 = vpack.c.b16 %v6868, %v6866
    %v6921 = vpack.c.b16 %v6871, %v6869
    %v6922 = vpack.c.b16 %v6872, %v6870
    %v6923 = vpack.c.b16 %v6875, %v6873
    %v6924 = vpack.c.b16 %v6876, %v6874
    %v6925 = vpack.c.b16 %v6879, %v6877
    %v6926 = vpack.c.b16 %v6880, %v6878
    %v6927 = vpack.c.b16 %v6883, %v6881
    %v6928 = vpack.c.b16 %v6884, %v6882
    %v6929 = vpack.c.b16 %v6887, %v6885
    %v6930 = vpack.c.b16 %v6888, %v6886
    %v6931 = vpack.c.b16 %v6891, %v6889
    %v6932 = vpack.c.b16 %v6892, %v6890
    %v6973 = vsel %vm6001, %v6770, 0
    %6975 = vmatpush.bf16.msra.mxu0 %v6907
    %6976 = vmatpush.bf16.msra.mxu0 %v6905
    %6977 = vmatpush.bf16.msra.mxu0 %v6903
    %6978 = vmatpush.bf16.msra.mxu0 %v6901
    %6979 = vmatpush.bf16.msra.mxu0 %v6899
    %6980 = vmatpush.bf16.msra.mxu0 %v6897
    %6981 = vmatpush.bf16.msra.mxu0 %v6895
    %6982 = vmatpush.bf16.msra.mxu0 %v6893
    %6983 = vmatmul.bf16.gmra.mxu0 %v6768
    %v6984 = vpop.f32.mrf.mxu0
    %v6985 = vadd.f32 %v6724, %v6984
    %v6986 = vpop.f32.mrf.mxu0
    %6987 = vdwg.mxu0
    %6988 = vmatpush.bf16.msra.mxu0 %v6923
    %6989 = vmatpush.bf16.msra.mxu0 %v6921
    %6990 = vmatpush.bf16.msra.mxu0 %v6919
    %6991 = vmatpush.bf16.msra.mxu0 %v6917
    %6992 = vmatpush.bf16.msra.mxu0 %v6915
    %6993 = vmatpush.bf16.msra.mxu0 %v6913
    %6994 = vmatpush.bf16.msra.mxu0 %v6911
    %6995 = vmatpush.bf16.msra.mxu0 %v6909
    %6996 = vmatmul.bf16.gmra.mxu0 %v6769
    %v6997 = vpop.f32.mrf.mxu0
    %v6998 = vadd.f32 %v6985, %v6997
    %v6999 = vpop.f32.mrf.mxu0
    %7000 = vdwg.mxu0
    %7001 = vmatpush.bf16.msra.mxu0 0
    %7002 = vmatpush.bf16.msra.mxu0 0
    %7003 = vmatpush.bf16.msra.mxu0 0
    %7004 = vmatpush.bf16.msra.mxu0 0
    %7005 = vmatpush.bf16.msra.mxu0 %v6931
    %7006 = vmatpush.bf16.msra.mxu0 %v6929
    %7007 = vmatpush.bf16.msra.mxu0 %v6927
    %7008 = vmatpush.bf16.msra.mxu0 %v6925
    %7009 = vmatmul.bf16.gmra.mxu0 %v6973
    %v7010 = vpop.f32.mrf.mxu0
    %v7011 = vadd.f32 %v6998, %v7010
    %v7012 = vpop.f32.mrf.mxu0
    %7013 = vdwg.mxu0
    %7014 = vmatpush.bf16.msra.mxu0 %v6908
    %7015 = vmatpush.bf16.msra.mxu0 %v6906
    %7016 = vmatpush.bf16.msra.mxu0 %v6904
    %7017 = vmatpush.bf16.msra.mxu0 %v6902
    %7018 = vmatpush.bf16.msra.mxu0 %v6900
    %7019 = vmatpush.bf16.msra.mxu0 %v6898
    %7020 = vmatpush.bf16.msra.mxu0 %v6896
    %7021 = vmatpush.bf16.msra.mxu0 %v6894
    %7022 = vmatmul.bf16.gmra.mxu0 %v6768
    %v7023 = vpop.f32.mrf.mxu0
    %v7024 = vadd.f32 %v6763, %v7023
    %v7025 = vpop.f32.mrf.mxu0
    %7026 = vdwg.mxu0
    %7027 = vmatpush.bf16.msra.mxu0 %v6924
    %7028 = vmatpush.bf16.msra.mxu0 %v6922
    %7029 = vmatpush.bf16.msra.mxu0 %v6920
    %7030 = vmatpush.bf16.msra.mxu0 %v6918
    %7031 = vmatpush.bf16.msra.mxu0 %v6916
    %7032 = vmatpush.bf16.msra.mxu0 %v6914
    %7033 = vmatpush.bf16.msra.mxu0 %v6912
    %7034 = vmatpush.bf16.msra.mxu0 %v6910
    %7035 = vmatmul.bf16.gmra.mxu0 %v6769
    %v7036 = vpop.f32.mrf.mxu0
    %v7037 = vadd.f32 %v7024, %v7036
    %v7038 = vpop.f32.mrf.mxu0
    %7039 = vdwg.mxu0
    %7040 = vmatpush.bf16.msra.mxu0 0
    %7041 = vmatpush.bf16.msra.mxu0 0
    %7042 = vmatpush.bf16.msra.mxu0 0
    %7043 = vmatpush.bf16.msra.mxu0 0
    %7044 = vmatpush.bf16.msra.mxu0 %v6932
    %7045 = vmatpush.bf16.msra.mxu0 %v6930
    %7046 = vmatpush.bf16.msra.mxu0 %v6928
    %7047 = vmatpush.bf16.msra.mxu0 %v6926
    %7048 = vmatmul.bf16.gmra.mxu0 %v6973
    %v7049 = vpop.f32.mrf.mxu0
    %v7050 = vadd.f32 %v7037, %v7049
    %v7051 = vpop.f32.mrf.mxu0
    %7052 = vdwg.mxu0
    %s7053 = sadd.s32 %s6390, 2
    %s7054 = smul.u32 %s7053, 3
    %s7055 = scalar_lea.vmem [#allocation4], %s7054
    %v7056 = vld [vmem:[%s7055] sm:$0x7]
    %s7057 = scalar_lea.vmem %s4, 640
    %v7058 = vld [vmem:[%s7057] sm:$0xff]
    %v7059 = vld [vmem:[%s7057 + $0x8] sm:$0xff]
    %v7060 = vld [vmem:[%s7057 + $0x10] sm:$0xff]
    %v7061 = vld [vmem:[%s7057 + $0x18] sm:$0xff]
    %v7062 = vld [vmem:[%s7057 + $0x20] sm:$0xff]
    %v7063 = vld [vmem:[%s7057 + $0x28] sm:$0xff]
    %v7064 = vld [vmem:[%s7057 + $0x30] sm:$0xff]
    %v7065 = vld [vmem:[%s7057 + $0x38] sm:$0xff]
    %v7066 = vld [vmem:[%s7057 + $0x40] sm:$0xff]
    %v7067 = vld [vmem:[%s7057 + $0x48] sm:$0xff]
    %v7068 = vld [vmem:[%s7057 + $0x50] sm:$0xff]
    %v7069 = vld [vmem:[%s7057 + $0x58] sm:$0xff]
    %v7070 = vld [vmem:[%s7057 + $0x60] sm:$0xff]
    %v7071 = vld [vmem:[%s7057 + $0x68] sm:$0xff]
    %v7072 = vld [vmem:[%s7057 + $0x70] sm:$0xff]
    %v7073 = vld [vmem:[%s7057 + $0x78] sm:$0xff]
    %v7074 = vld [vmem:[%s7057 + $0x80] sm:$0xff]
    %v7075 = vld [vmem:[%s7057 + $0x88] sm:$0xff]
    %v7076 = vld [vmem:[%s7057 + $0x90] sm:$0xff]
    %v7077 = vld [vmem:[%s7057 + $0x98] sm:$0xff]
    %v7078 = vld [vmem:[%s7057 + $0xa0] sm:$0xff]
    %v7079 = vld [vmem:[%s7057 + $0xa8] sm:$0xff]
    %v7080 = vld [vmem:[%s7057 + $0xb0] sm:$0xff]
    %v7081 = vld [vmem:[%s7057 + $0xb8] sm:$0xff]
    %v7082 = vld [vmem:[%s7057 + $0xc0] sm:$0xff]
    %v7083 = vld [vmem:[%s7057 + $0xc8] sm:$0xff]
    %v7084 = vld [vmem:[%s7057 + $0xd0] sm:$0xff]
    %v7085 = vld [vmem:[%s7057 + $0xd8] sm:$0xff]
    %v7086 = vld [vmem:[%s7057 + $0xe0] sm:$0xff]
    %v7087 = vld [vmem:[%s7057 + $0xe8] sm:$0xff]
    %v7088 = vld [vmem:[%s7057 + $0xf0] sm:$0xff]
    %v7089 = vld [vmem:[%s7057 + $0xf8] sm:$0xff]
    %v7090 = vld [vmem:[%s7057 + $0x100] sm:$0xff]
    %v7091 = vld [vmem:[%s7057 + $0x108] sm:$0xff]
    %v7092 = vld [vmem:[%s7057 + $0x110] sm:$0xff]
    %v7093 = vld [vmem:[%s7057 + $0x118] sm:$0xff]
    %v7094 = vld [vmem:[%s7057 + $0x120] sm:$0xff]
    %v7095 = vld [vmem:[%s7057 + $0x128] sm:$0xff]
    %v7096 = vld [vmem:[%s7057 + $0x130] sm:$0xff]
    %v7097 = vld [vmem:[%s7057 + $0x138] sm:$0xff]
    %7099 = vst [vmem:[#allocation1] ss:$9 sm:$0xff] %v7056
    %v7100 = vld [vmem:[#allocation1] sm:$0xff]
    %v7101 = vld [vmem:[#allocation1 + $0x9] sm:$0xff]
    %v7102 = vld [vmem:[#allocation1 + $0x12] sm:$0xff]
    %v7145 = vunpack.c.l.b16 %v7058
    %v7146 = vunpack.c.h.b16 %v7058
    %v7147 = vunpack.c.l.b16 %v7059
    %v7148 = vunpack.c.h.b16 %v7059
    %v7149 = vunpack.c.l.b16 %v7060
    %v7150 = vunpack.c.h.b16 %v7060
    %v7151 = vunpack.c.l.b16 %v7061
    %v7152 = vunpack.c.h.b16 %v7061
    %v7153 = vunpack.c.l.b16 %v7062
    %v7154 = vunpack.c.h.b16 %v7062
    %v7155 = vunpack.c.l.b16 %v7063
    %v7156 = vunpack.c.h.b16 %v7063
    %v7157 = vunpack.c.l.b16 %v7064
    %v7158 = vunpack.c.h.b16 %v7064
    %v7159 = vunpack.c.l.b16 %v7065
    %v7160 = vunpack.c.h.b16 %v7065
    %v7161 = vunpack.c.l.b16 %v7066
    %v7162 = vunpack.c.h.b16 %v7066
    %v7163 = vunpack.c.l.b16 %v7067
    %v7164 = vunpack.c.h.b16 %v7067
    %v7165 = vunpack.c.l.b16 %v7068
    %v7166 = vunpack.c.h.b16 %v7068
    %v7167 = vunpack.c.l.b16 %v7069
    %v7168 = vunpack.c.h.b16 %v7069
    %v7169 = vunpack.c.l.b16 %v7070
    %v7170 = vunpack.c.h.b16 %v7070
    %v7171 = vunpack.c.l.b16 %v7071
    %v7172 = vunpack.c.h.b16 %v7071
    %v7173 = vunpack.c.l.b16 %v7072
    %v7174 = vunpack.c.h.b16 %v7072
    %v7175 = vunpack.c.l.b16 %v7073
    %v7176 = vunpack.c.h.b16 %v7073
    %v7177 = vunpack.c.l.b16 %v7074
    %v7178 = vunpack.c.h.b16 %v7074
    %v7179 = vunpack.c.l.b16 %v7075
    %v7180 = vunpack.c.h.b16 %v7075
    %v7181 = vunpack.c.l.b16 %v7076
    %v7182 = vunpack.c.h.b16 %v7076
    %v7183 = vunpack.c.l.b16 %v7077
    %v7184 = vunpack.c.h.b16 %v7077
    %v7185 = vunpack.c.l.b16 %v7078
    %v7186 = vunpack.c.h.b16 %v7078
    %v7187 = vunpack.c.l.b16 %v7079
    %v7188 = vunpack.c.h.b16 %v7079
    %v7189 = vunpack.c.l.b16 %v7080
    %v7190 = vunpack.c.h.b16 %v7080
    %v7191 = vunpack.c.l.b16 %v7081
    %v7192 = vunpack.c.h.b16 %v7081
    %v7193 = vunpack.c.l.b16 %v7082
    %v7194 = vunpack.c.h.b16 %v7082
    %v7195 = vunpack.c.l.b16 %v7083
    %v7196 = vunpack.c.h.b16 %v7083
    %v7197 = vunpack.c.l.b16 %v7084
    %v7198 = vunpack.c.h.b16 %v7084
    %v7199 = vunpack.c.l.b16 %v7085
    %v7200 = vunpack.c.h.b16 %v7085
    %v7201 = vunpack.c.l.b16 %v7086
    %v7202 = vunpack.c.h.b16 %v7086
    %v7203 = vunpack.c.l.b16 %v7087
    %v7204 = vunpack.c.h.b16 %v7087
    %v7205 = vunpack.c.l.b16 %v7088
    %v7206 = vunpack.c.h.b16 %v7088
    %v7207 = vunpack.c.l.b16 %v7089
    %v7208 = vunpack.c.h.b16 %v7089
    %v7209 = vunpack.c.l.b16 %v7090
    %v7210 = vunpack.c.h.b16 %v7090
    %v7211 = vunpack.c.l.b16 %v7091
    %v7212 = vunpack.c.h.b16 %v7091
    %v7213 = vunpack.c.l.b16 %v7092
    %v7214 = vunpack.c.h.b16 %v7092
    %v7215 = vunpack.c.l.b16 %v7093
    %v7216 = vunpack.c.h.b16 %v7093
    %v7217 = vunpack.c.l.b16 %v7094
    %v7218 = vunpack.c.h.b16 %v7094
    %v7219 = vunpack.c.l.b16 %v7095
    %v7220 = vunpack.c.h.b16 %v7095
    %v7221 = vunpack.c.l.b16 %v7096
    %v7222 = vunpack.c.h.b16 %v7096
    %v7223 = vunpack.c.l.b16 %v7097
    %v7224 = vunpack.c.h.b16 %v7097
    %v7225 = vpack.c.b16 %v7147, %v7145
    %v7226 = vpack.c.b16 %v7148, %v7146
    %v7227 = vpack.c.b16 %v7151, %v7149
    %v7228 = vpack.c.b16 %v7152, %v7150
    %v7229 = vpack.c.b16 %v7155, %v7153
    %v7230 = vpack.c.b16 %v7156, %v7154
    %v7231 = vpack.c.b16 %v7159, %v7157
    %v7232 = vpack.c.b16 %v7160, %v7158
    %v7233 = vpack.c.b16 %v7163, %v7161
    %v7234 = vpack.c.b16 %v7164, %v7162
    %v7235 = vpack.c.b16 %v7167, %v7165
    %v7236 = vpack.c.b16 %v7168, %v7166
    %v7237 = vpack.c.b16 %v7171, %v7169
    %v7238 = vpack.c.b16 %v7172, %v7170
    %v7239 = vpack.c.b16 %v7175, %v7173
    %v7240 = vpack.c.b16 %v7176, %v7174
    %v7241 = vpack.c.b16 %v7179, %v7177
    %v7242 = vpack.c.b16 %v7180, %v7178
    %v7243 = vpack.c.b16 %v7183, %v7181
    %v7244 = vpack.c.b16 %v7184, %v7182
    %v7245 = vpack.c.b16 %v7187, %v7185
    %v7246 = vpack.c.b16 %v7188, %v7186
    %v7247 = vpack.c.b16 %v7191, %v7189
    %v7248 = vpack.c.b16 %v7192, %v7190
    %v7249 = vpack.c.b16 %v7195, %v7193
    %v7250 = vpack.c.b16 %v7196, %v7194
    %v7251 = vpack.c.b16 %v7199, %v7197
    %v7252 = vpack.c.b16 %v7200, %v7198
    %v7253 = vpack.c.b16 %v7203, %v7201
    %v7254 = vpack.c.b16 %v7204, %v7202
    %v7255 = vpack.c.b16 %v7207, %v7205
    %v7256 = vpack.c.b16 %v7208, %v7206
    %v7257 = vpack.c.b16 %v7211, %v7209
    %v7258 = vpack.c.b16 %v7212, %v7210
    %v7259 = vpack.c.b16 %v7215, %v7213
    %v7260 = vpack.c.b16 %v7216, %v7214
    %v7261 = vpack.c.b16 %v7219, %v7217
    %v7262 = vpack.c.b16 %v7220, %v7218
    %v7263 = vpack.c.b16 %v7223, %v7221
    %v7264 = vpack.c.b16 %v7224, %v7222
    %v7305 = vsel %vm6001, %v7102, 0
    %7307 = vmatpush.bf16.msra.mxu0 %v7239
    %7308 = vmatpush.bf16.msra.mxu0 %v7237
    %7309 = vmatpush.bf16.msra.mxu0 %v7235
    %7310 = vmatpush.bf16.msra.mxu0 %v7233
    %7311 = vmatpush.bf16.msra.mxu0 %v7231
    %7312 = vmatpush.bf16.msra.mxu0 %v7229
    %7313 = vmatpush.bf16.msra.mxu0 %v7227
    %7314 = vmatpush.bf16.msra.mxu0 %v7225
    %7315 = vmatmul.bf16.gmra.mxu0 %v7100
    %v7316 = vpop.f32.mrf.mxu0
    %v7317 = vadd.f32 0.0, %v7316
    %v7318 = vpop.f32.mrf.mxu0
    %7319 = vdwg.mxu0
    %7320 = vmatpush.bf16.msra.mxu0 %v7255
    %7321 = vmatpush.bf16.msra.mxu0 %v7253
    %7322 = vmatpush.bf16.msra.mxu0 %v7251
    %7323 = vmatpush.bf16.msra.mxu0 %v7249
    %7324 = vmatpush.bf16.msra.mxu0 %v7247
    %7325 = vmatpush.bf16.msra.mxu0 %v7245
    %7326 = vmatpush.bf16.msra.mxu0 %v7243
    %7327 = vmatpush.bf16.msra.mxu0 %v7241
    %7328 = vmatmul.bf16.gmra.mxu0 %v7101
    %v7329 = vpop.f32.mrf.mxu0
    %v7330 = vadd.f32 %v7317, %v7329
    %v7331 = vpop.f32.mrf.mxu0
    %7332 = vdwg.mxu0
    %7333 = vmatpush.bf16.msra.mxu0 0
    %7334 = vmatpush.bf16.msra.mxu0 0
    %7335 = vmatpush.bf16.msra.mxu0 0
    %7336 = vmatpush.bf16.msra.mxu0 0
    %7337 = vmatpush.bf16.msra.mxu0 %v7263
    %7338 = vmatpush.bf16.msra.mxu0 %v7261
    %7339 = vmatpush.bf16.msra.mxu0 %v7259
    %7340 = vmatpush.bf16.msra.mxu0 %v7257
    %7341 = vmatmul.bf16.gmra.mxu0 %v7305
    %v7342 = vpop.f32.mrf.mxu0
    %v7343 = vadd.f32 %v7330, %v7342
    %v7344 = vpop.f32.mrf.mxu0
    %7345 = vdwg.mxu0
    %7346 = vmatpush.bf16.msra.mxu0 %v7240
    %7347 = vmatpush.bf16.msra.mxu0 %v7238
    %7348 = vmatpush.bf16.msra.mxu0 %v7236
    %7349 = vmatpush.bf16.msra.mxu0 %v7234
    %7350 = vmatpush.bf16.msra.mxu0 %v7232
    %7351 = vmatpush.bf16.msra.mxu0 %v7230
    %7352 = vmatpush.bf16.msra.mxu0 %v7228
    %7353 = vmatpush.bf16.msra.mxu0 %v7226
    %7354 = vmatmul.bf16.gmra.mxu0 %v7100
    %v7355 = vpop.f32.mrf.mxu0
    %v7356 = vadd.f32 0.0, %v7355
    %v7357 = vpop.f32.mrf.mxu0
    %7358 = vdwg.mxu0
    %7359 = vmatpush.bf16.msra.mxu0 %v7256
    %7360 = vmatpush.bf16.msra.mxu0 %v7254
    %7361 = vmatpush.bf16.msra.mxu0 %v7252
    %7362 = vmatpush.bf16.msra.mxu0 %v7250
    %7363 = vmatpush.bf16.msra.mxu0 %v7248
    %7364 = vmatpush.bf16.msra.mxu0 %v7246
    %7365 = vmatpush.bf16.msra.mxu0 %v7244
    %7366 = vmatpush.bf16.msra.mxu0 %v7242
    %7367 = vmatmul.bf16.gmra.mxu0 %v7101
    %v7368 = vpop.f32.mrf.mxu0
    %v7369 = vadd.f32 %v7356, %v7368
    %v7370 = vpop.f32.mrf.mxu0
    %7371 = vdwg.mxu0
    %7372 = vmatpush.bf16.msra.mxu0 0
    %7373 = vmatpush.bf16.msra.mxu0 0
    %7374 = vmatpush.bf16.msra.mxu0 0
    %7375 = vmatpush.bf16.msra.mxu0 0
    %7376 = vmatpush.bf16.msra.mxu0 %v7264
    %7377 = vmatpush.bf16.msra.mxu0 %v7262
    %7378 = vmatpush.bf16.msra.mxu0 %v7260
    %7379 = vmatpush.bf16.msra.mxu0 %v7258
    %7380 = vmatmul.bf16.gmra.mxu0 %v7305
    %v7381 = vpop.f32.mrf.mxu0
    %v7382 = vadd.f32 %v7369, %v7381
    %v7383 = vpop.f32.mrf.mxu0
    %7384 = vdwg.mxu0
    %v7385 = vadd.f32 %v7011, %v7343
    %v7386 = vadd.f32 %v7050, %v7382
    %s7387 = sadd.s32 %s6390, 3
    %s7388 = smul.u32 %s7387, 3
    %s7389 = scalar_lea.vmem [#allocation4], %s7388
    %v7390 = vld [vmem:[%s7389] sm:$0x7]
    %s7391 = scalar_lea.vmem %s4, 960
    %v7392 = vld [vmem:[%s7391] sm:$0xff]
    %v7393 = vld [vmem:[%s7391 + $0x8] sm:$0xff]
    %v7394 = vld [vmem:[%s7391 + $0x10] sm:$0xff]
    %v7395 = vld [vmem:[%s7391 + $0x18] sm:$0xff]
    %v7396 = vld [vmem:[%s7391 + $0x20] sm:$0xff]
    %v7397 = vld [vmem:[%s7391 + $0x28] sm:$0xff]
    %v7398 = vld [vmem:[%s7391 + $0x30] sm:$0xff]
    %v7399 = vld [vmem:[%s7391 + $0x38] sm:$0xff]
    %v7400 = vld [vmem:[%s7391 + $0x40] sm:$0xff]
    %v7401 = vld [vmem:[%s7391 + $0x48] sm:$0xff]
    %v7402 = vld [vmem:[%s7391 + $0x50] sm:$0xff]
    %v7403 = vld [vmem:[%s7391 + $0x58] sm:$0xff]
    %v7404 = vld [vmem:[%s7391 + $0x60] sm:$0xff]
    %v7405 = vld [vmem:[%s7391 + $0x68] sm:$0xff]
    %v7406 = vld [vmem:[%s7391 + $0x70] sm:$0xff]
    %v7407 = vld [vmem:[%s7391 + $0x78] sm:$0xff]
    %v7408 = vld [vmem:[%s7391 + $0x80] sm:$0xff]
    %v7409 = vld [vmem:[%s7391 + $0x88] sm:$0xff]
    %v7410 = vld [vmem:[%s7391 + $0x90] sm:$0xff]
    %v7411 = vld [vmem:[%s7391 + $0x98] sm:$0xff]
    %v7412 = vld [vmem:[%s7391 + $0xa0] sm:$0xff]
    %v7413 = vld [vmem:[%s7391 + $0xa8] sm:$0xff]
    %v7414 = vld [vmem:[%s7391 + $0xb0] sm:$0xff]
    %v7415 = vld [vmem:[%s7391 + $0xb8] sm:$0xff]
    %v7416 = vld [vmem:[%s7391 + $0xc0] sm:$0xff]
    %v7417 = vld [vmem:[%s7391 + $0xc8] sm:$0xff]
    %v7418 = vld [vmem:[%s7391 + $0xd0] sm:$0xff]
    %v7419 = vld [vmem:[%s7391 + $0xd8] sm:$0xff]
    %v7420 = vld [vmem:[%s7391 + $0xe0] sm:$0xff]
    %v7421 = vld [vmem:[%s7391 + $0xe8] sm:$0xff]
    %v7422 = vld [vmem:[%s7391 + $0xf0] sm:$0xff]
    %v7423 = vld [vmem:[%s7391 + $0xf8] sm:$0xff]
    %v7424 = vld [vmem:[%s7391 + $0x100] sm:$0xff]
    %v7425 = vld [vmem:[%s7391 + $0x108] sm:$0xff]
    %v7426 = vld [vmem:[%s7391 + $0x110] sm:$0xff]
    %v7427 = vld [vmem:[%s7391 + $0x118] sm:$0xff]
    %v7428 = vld [vmem:[%s7391 + $0x120] sm:$0xff]
    %v7429 = vld [vmem:[%s7391 + $0x128] sm:$0xff]
    %v7430 = vld [vmem:[%s7391 + $0x130] sm:$0xff]
    %v7431 = vld [vmem:[%s7391 + $0x138] sm:$0xff]
    %7433 = vst [vmem:[#allocation1] ss:$9 sm:$0xff] %v7390
    %v7434 = vld [vmem:[#allocation1] sm:$0xff]
    %v7435 = vld [vmem:[#allocation1 + $0x9] sm:$0xff]
    %v7436 = vld [vmem:[#allocation1 + $0x12] sm:$0xff]
    %v7479 = vunpack.c.l.b16 %v7392
    %v7480 = vunpack.c.h.b16 %v7392
    %v7481 = vunpack.c.l.b16 %v7393
    %v7482 = vunpack.c.h.b16 %v7393
    %v7483 = vunpack.c.l.b16 %v7394
    %v7484 = vunpack.c.h.b16 %v7394
    %v7485 = vunpack.c.l.b16 %v7395
    %v7486 = vunpack.c.h.b16 %v7395
    %v7487 = vunpack.c.l.b16 %v7396
    %v7488 = vunpack.c.h.b16 %v7396
    %v7489 = vunpack.c.l.b16 %v7397
    %v7490 = vunpack.c.h.b16 %v7397
    %v7491 = vunpack.c.l.b16 %v7398
    %v7492 = vunpack.c.h.b16 %v7398
    %v7493 = vunpack.c.l.b16 %v7399
    %v7494 = vunpack.c.h.b16 %v7399
    %v7495 = vunpack.c.l.b16 %v7400
    %v7496 = vunpack.c.h.b16 %v7400
    %v7497 = vunpack.c.l.b16 %v7401
    %v7498 = vunpack.c.h.b16 %v7401
    %v7499 = vunpack.c.l.b16 %v7402
    %v7500 = vunpack.c.h.b16 %v7402
    %v7501 = vunpack.c.l.b16 %v7403
    %v7502 = vunpack.c.h.b16 %v7403
    %v7503 = vunpack.c.l.b16 %v7404
    %v7504 = vunpack.c.h.b16 %v7404
    %v7505 = vunpack.c.l.b16 %v7405
    %v7506 = vunpack.c.h.b16 %v7405
    %v7507 = vunpack.c.l.b16 %v7406
    %v7508 = vunpack.c.h.b16 %v7406
    %v7509 = vunpack.c.l.b16 %v7407
    %v7510 = vunpack.c.h.b16 %v7407
    %v7511 = vunpack.c.l.b16 %v7408
    %v7512 = vunpack.c.h.b16 %v7408
    %v7513 = vunpack.c.l.b16 %v7409
    %v7514 = vunpack.c.h.b16 %v7409
    %v7515 = vunpack.c.l.b16 %v7410
    %v7516 = vunpack.c.h.b16 %v7410
    %v7517 = vunpack.c.l.b16 %v7411
    %v7518 = vunpack.c.h.b16 %v7411
    %v7519 = vunpack.c.l.b16 %v7412
    %v7520 = vunpack.c.h.b16 %v7412
    %v7521 = vunpack.c.l.b16 %v7413
    %v7522 = vunpack.c.h.b16 %v7413
    %v7523 = vunpack.c.l.b16 %v7414
    %v7524 = vunpack.c.h.b16 %v7414
    %v7525 = vunpack.c.l.b16 %v7415
    %v7526 = vunpack.c.h.b16 %v7415
    %v7527 = vunpack.c.l.b16 %v7416
    %v7528 = vunpack.c.h.b16 %v7416
    %v7529 = vunpack.c.l.b16 %v7417
    %v7530 = vunpack.c.h.b16 %v7417
    %v7531 = vunpack.c.l.b16 %v7418
    %v7532 = vunpack.c.h.b16 %v7418
    %v7533 = vunpack.c.l.b16 %v7419
    %v7534 = vunpack.c.h.b16 %v7419
    %v7535 = vunpack.c.l.b16 %v7420
    %v7536 = vunpack.c.h.b16 %v7420
    %v7537 = vunpack.c.l.b16 %v7421
    %v7538 = vunpack.c.h.b16 %v7421
    %v7539 = vunpack.c.l.b16 %v7422
    %v7540 = vunpack.c.h.b16 %v7422
    %v7541 = vunpack.c.l.b16 %v7423
    %v7542 = vunpack.c.h.b16 %v7423
    %v7543 = vunpack.c.l.b16 %v7424
    %v7544 = vunpack.c.h.b16 %v7424
    %v7545 = vunpack.c.l.b16 %v7425
    %v7546 = vunpack.c.h.b16 %v7425
    %v7547 = vunpack.c.l.b16 %v7426
    %v7548 = vunpack.c.h.b16 %v7426
    %v7549 = vunpack.c.l.b16 %v7427
    %v7550 = vunpack.c.h.b16 %v7427
    %v7551 = vunpack.c.l.b16 %v7428
    %v7552 = vunpack.c.h.b16 %v7428
    %v7553 = vunpack.c.l.b16 %v7429
    %v7554 = vunpack.c.h.b16 %v7429
    %v7555 = vunpack.c.l.b16 %v7430
    %v7556 = vunpack.c.h.b16 %v7430
    %v7557 = vunpack.c.l.b16 %v7431
    %v7558 = vunpack.c.h.b16 %v7431
    %v7559 = vpack.c.b16 %v7481, %v7479
    %v7560 = vpack.c.b16 %v7482, %v7480
    %v7561 = vpack.c.b16 %v7485, %v7483
    %v7562 = vpack.c.b16 %v7486, %v7484
    %v7563 = vpack.c.b16 %v7489, %v7487
    %v7564 = vpack.c.b16 %v7490, %v7488
    %v7565 = vpack.c.b16 %v7493, %v7491
    %v7566 = vpack.c.b16 %v7494, %v7492
    %v7567 = vpack.c.b16 %v7497, %v7495
    %v7568 = vpack.c.b16 %v7498, %v7496
    %v7569 = vpack.c.b16 %v7501, %v7499
    %v7570 = vpack.c.b16 %v7502, %v7500
    %v7571 = vpack.c.b16 %v7505, %v7503
    %v7572 = vpack.c.b16 %v7506, %v7504
    %v7573 = vpack.c.b16 %v7509, %v7507
    %v7574 = vpack.c.b16 %v7510, %v7508
    %v7575 = vpack.c.b16 %v7513, %v7511
    %v7576 = vpack.c.b16 %v7514, %v7512
    %v7577 = vpack.c.b16 %v7517, %v7515
    %v7578 = vpack.c.b16 %v7518, %v7516
    %v7579 = vpack.c.b16 %v7521, %v7519
    %v7580 = vpack.c.b16 %v7522, %v7520
    %v7581 = vpack.c.b16 %v7525, %v7523
    %v7582 = vpack.c.b16 %v7526, %v7524
    %v7583 = vpack.c.b16 %v7529, %v7527
    %v7584 = vpack.c.b16 %v7530, %v7528
    %v7585 = vpack.c.b16 %v7533, %v7531
    %v7586 = vpack.c.b16 %v7534, %v7532
    %v7587 = vpack.c.b16 %v7537, %v7535
    %v7588 = vpack.c.b16 %v7538, %v7536
    %v7589 = vpack.c.b16 %v7541, %v7539
    %v7590 = vpack.c.b16 %v7542, %v7540
    %v7591 = vpack.c.b16 %v7545, %v7543
    %v7592 = vpack.c.b16 %v7546, %v7544
    %v7593 = vpack.c.b16 %v7549, %v7547
    %v7594 = vpack.c.b16 %v7550, %v7548
    %v7595 = vpack.c.b16 %v7553, %v7551
    %v7596 = vpack.c.b16 %v7554, %v7552
    %v7597 = vpack.c.b16 %v7557, %v7555
    %v7598 = vpack.c.b16 %v7558, %v7556
    %v7639 = vsel %vm6001, %v7436, 0
    %7641 = vmatpush.bf16.msra.mxu0 %v7573
    %7642 = vmatpush.bf16.msra.mxu0 %v7571
    %7643 = vmatpush.bf16.msra.mxu0 %v7569
    %7644 = vmatpush.bf16.msra.mxu0 %v7567
    %7645 = vmatpush.bf16.msra.mxu0 %v7565
    %7646 = vmatpush.bf16.msra.mxu0 %v7563
    %7647 = vmatpush.bf16.msra.mxu0 %v7561
    %7648 = vmatpush.bf16.msra.mxu0 %v7559
    %7649 = vmatmul.bf16.gmra.mxu0 %v7434
    %v7650 = vpop.f32.mrf.mxu0
    %v7651 = vadd.f32 0.0, %v7650
    %v7652 = vpop.f32.mrf.mxu0
    %7653 = vdwg.mxu0
    %7654 = vmatpush.bf16.msra.mxu0 %v7589
    %7655 = vmatpush.bf16.msra.mxu0 %v7587
    %7656 = vmatpush.bf16.msra.mxu0 %v7585
    %7657 = vmatpush.bf16.msra.mxu0 %v7583
    %7658 = vmatpush.bf16.msra.mxu0 %v7581
    %7659 = vmatpush.bf16.msra.mxu0 %v7579
    %7660 = vmatpush.bf16.msra.mxu0 %v7577
    %7661 = vmatpush.bf16.msra.mxu0 %v7575
    %7662 = vmatmul.bf16.gmra.mxu0 %v7435
    %v7663 = vpop.f32.mrf.mxu0
    %v7664 = vadd.f32 %v7651, %v7663
    %v7665 = vpop.f32.mrf.mxu0
    %7666 = vdwg.mxu0
    %7667 = vmatpush.bf16.msra.mxu0 0
    %7668 = vmatpush.bf16.msra.mxu0 0
    %7669 = vmatpush.bf16.msra.mxu0 0
    %7670 = vmatpush.bf16.msra.mxu0 0
    %7671 = vmatpush.bf16.msra.mxu0 %v7597
    %7672 = vmatpush.bf16.msra.mxu0 %v7595
    %7673 = vmatpush.bf16.msra.mxu0 %v7593
    %7674 = vmatpush.bf16.msra.mxu0 %v7591
    %7675 = vmatmul.bf16.gmra.mxu0 %v7639
    %v7676 = vpop.f32.mrf.mxu0
    %v7677 = vadd.f32 %v7664, %v7676
    %v7678 = vpop.f32.mrf.mxu0
    %7679 = vdwg.mxu0
    %7680 = vmatpush.bf16.msra.mxu0 %v7574
    %7681 = vmatpush.bf16.msra.mxu0 %v7572
    %7682 = vmatpush.bf16.msra.mxu0 %v7570
    %7683 = vmatpush.bf16.msra.mxu0 %v7568
    %7684 = vmatpush.bf16.msra.mxu0 %v7566
    %7685 = vmatpush.bf16.msra.mxu0 %v7564
    %7686 = vmatpush.bf16.msra.mxu0 %v7562
    %7687 = vmatpush.bf16.msra.mxu0 %v7560
    %7688 = vmatmul.bf16.gmra.mxu0 %v7434
    %v7689 = vpop.f32.mrf.mxu0
    %v7690 = vadd.f32 0.0, %v7689
    %v7691 = vpop.f32.mrf.mxu0
    %7692 = vdwg.mxu0
    %7693 = vmatpush.bf16.msra.mxu0 %v7590
    %7694 = vmatpush.bf16.msra.mxu0 %v7588
    %7695 = vmatpush.bf16.msra.mxu0 %v7586
    %7696 = vmatpush.bf16.msra.mxu0 %v7584
    %7697 = vmatpush.bf16.msra.mxu0 %v7582
    %7698 = vmatpush.bf16.msra.mxu0 %v7580
    %7699 = vmatpush.bf16.msra.mxu0 %v7578
    %7700 = vmatpush.bf16.msra.mxu0 %v7576
    %7701 = vmatmul.bf16.gmra.mxu0 %v7435
    %v7702 = vpop.f32.mrf.mxu0
    %v7703 = vadd.f32 %v7690, %v7702
    %v7704 = vpop.f32.mrf.mxu0
    %7705 = vdwg.mxu0
    %7706 = vmatpush.bf16.msra.mxu0 0
    %7707 = vmatpush.bf16.msra.mxu0 0
    %7708 = vmatpush.bf16.msra.mxu0 0
    %7709 = vmatpush.bf16.msra.mxu0 0
    %7710 = vmatpush.bf16.msra.mxu0 %v7598
    %7711 = vmatpush.bf16.msra.mxu0 %v7596
    %7712 = vmatpush.bf16.msra.mxu0 %v7594
    %7713 = vmatpush.bf16.msra.mxu0 %v7592
    %7714 = vmatmul.bf16.gmra.mxu0 %v7639
    %v7715 = vpop.f32.mrf.mxu0
    %v7716 = vadd.f32 %v7703, %v7715
    %v7717 = vpop.f32.mrf.mxu0
    %7718 = vdwg.mxu0
    %v7719 = vadd.f32 %v7385, %v7677
    %v7720 = vadd.f32 %v7386, %v7716
    %v7723 = vrot.slane %v7720, 6
    %v7724 = vsel %vm3499, %v7719, %v7723
    %s7726 = smul.addr %s6390, 2
    %s7727 = scalar_lea.vmem [#allocation8], %s7726
    %7728 = vst [vmem:[%s7727] sm:$0xf] %v7724
    %v7729 = vadd.f32 %v6386, %v7719
    %v7730 = vadd.f32 %v6387, %v7720
    %v7731 = vmul.f32 %v7719, %v7719
    %v7732 = vmul.f32 %v7720, %v7720
    %v7733 = vadd.f32 %v6388, %v7731
    %v7734 = vadd.f32 %v6389, %v7732
  $region113: #{discriminator_forward.1} parent=0 // loop_footer
    %s6385 = sadd.s32 1, %s6381
  $region114: #{discriminator_forward.1} parent=0 // loop_footer_branch
    %6380 = sbr.rel target = $region110
  $region115: #{discriminator_forward.1} parent=0 // loop_exit
    _
  %v7735 = vsel %vm3499, %v6386, 0.0
  %v7736 = vrot.slane %v7735, 4
  %v7737 = vadd.f32 %v7735, %v7736
  %v7738 = vrot.slane %v7737, 2
  %v7739 = vadd.f32 %v7737, %v7738
  %v7740 = vrot.slane %v7739, 1
  %v7741 = vadd.f32 %v7739, %v7740
  %v7742 = vsel %vm3499, %v6387, 0.0
  %v7743 = vrot.slane %v7742, 4
  %v7744 = vadd.f32 %v7742, %v7743
  %v7745 = vrot.slane %v7744, 2
  %v7746 = vadd.f32 %v7744, %v7745
  %v7747 = vrot.slane %v7746, 1
  %v7748 = vadd.f32 %v7746, %v7747
  %v7749 = vld [vmem:[%s10] sm:$0xff]
  %v7750 = vld [vmem:[%s10 + $0x8] sm:$0xff]
  %v7751 = vld [vmem:[%s10 + $0x10] sm:$0xff]
  %v7752 = vld [vmem:[%s10 + $0x18] sm:$0xff]
  %v7753 = vld [vmem:[%s10 + $0x20] sm:$0xff]
  %v7754 = vld [vmem:[%s10 + $0x28] sm:$0xff]
  %v7755 = vld [vmem:[%s10 + $0x30] sm:$0xff]
  %v7756 = vld [vmem:[%s10 + $0x38] sm:$0xff]
  %v7757 = vld [vmem:[%s10 + $0x40] sm:$0xff]
  %v7758 = vld [vmem:[%s10 + $0x48] sm:$0xff]
  %v7759 = vld [vmem:[%s10 + $0x50] sm:$0xff]
  %v7760 = vld [vmem:[%s10 + $0x58] sm:$0xff]
  %v7761 = vld [vmem:[%s10 + $0x60] sm:$0xff]
  %v7762 = vld [vmem:[%s10 + $0x68] sm:$0xff]
  %v7763 = vld [vmem:[%s10 + $0x70] sm:$0xff]
  %v7764 = vld [vmem:[%s10 + $0x78] sm:$0xff]
  %v7765 = vld [vmem:[%s10 + $0x80] sm:$0xff]
  %v7766 = vld [vmem:[%s10 + $0x88] sm:$0xff]
  %v7767 = vld [vmem:[%s10 + $0x90] sm:$0xff]
  %v7768 = vld [vmem:[%s10 + $0x98] sm:$0xff]
  %v7769 = vld [vmem:[%s10 + $0xa0] sm:$0xff]
  %v7770 = vld [vmem:[%s10 + $0xa8] sm:$0xff]
  %v7771 = vld [vmem:[%s10 + $0xb0] sm:$0xff]
  %v7772 = vld [vmem:[%s10 + $0xb8] sm:$0xff]
  %v7773 = vld [vmem:[%s10 + $0xc0] sm:$0xff]
  %v7774 = vld [vmem:[%s10 + $0xc8] sm:$0xff]
  %v7775 = vld [vmem:[%s10 + $0xd0] sm:$0xff]
  %v7776 = vld [vmem:[%s10 + $0xd8] sm:$0xff]
  %v7777 = vld [vmem:[%s10 + $0xe0] sm:$0xff]
  %v7778 = vld [vmem:[%s10 + $0xe8] sm:$0xff]
  %v7779 = vld [vmem:[%s10 + $0xf0] sm:$0xff]
  %v7780 = vld [vmem:[%s10 + $0xf8] sm:$0xff]
  %7781 = vmatpush.msra.mxu0 %v7764
  %7782 = vmatpush.msra.mxu0 %v7763
  %7783 = vmatpush.msra.mxu0 %v7762
  %7784 = vmatpush.msra.mxu0 %v7761
  %7785 = vmatpush.msra.mxu0 %v7760
  %7786 = vmatpush.msra.mxu0 %v7759
  %7787 = vmatpush.msra.mxu0 %v7758
  %7788 = vmatpush.msra.mxu0 %v7757
  %7789 = vmatpush.msra.mxu0 %v7756
  %7790 = vmatpush.msra.mxu0 %v7755
  %7791 = vmatpush.msra.mxu0 %v7754
  %7792 = vmatpush.msra.mxu0 %v7753
  %7793 = vmatpush.msra.mxu0 %v7752
  %7794 = vmatpush.msra.mxu0 %v7751
  %7795 = vmatpush.msra.mxu0 %v7750
  %7796 = vmatpush.msra.mxu0 %v7749
  %7797 = vmatmul.f32.gmra.mxu0 %v7741
  %v7798 = vpop.f32.mrf.mxu0
  %v7799 = vadd.f32 0.0, %v7798
  %7800 = vdwg.mxu0
  %7801 = vmatpush.msra.mxu0 %v7780
  %7802 = vmatpush.msra.mxu0 %v7779
  %7803 = vmatpush.msra.mxu0 %v7778
  %7804 = vmatpush.msra.mxu0 %v7777
  %7805 = vmatpush.msra.mxu0 %v7776
  %7806 = vmatpush.msra.mxu0 %v7775
  %7807 = vmatpush.msra.mxu0 %v7774
  %7808 = vmatpush.msra.mxu0 %v7773
  %7809 = vmatpush.msra.mxu0 %v7772
  %7810 = vmatpush.msra.mxu0 %v7771
  %7811 = vmatpush.msra.mxu0 %v7770
  %7812 = vmatpush.msra.mxu0 %v7769
  %7813 = vmatpush.msra.mxu0 %v7768
  %7814 = vmatpush.msra.mxu0 %v7767
  %7815 = vmatpush.msra.mxu0 %v7766
  %7816 = vmatpush.msra.mxu0 %v7765
  %7817 = vmatmul.f32.gmra.mxu0 %v7748
  %v7818 = vpop.f32.mrf.mxu0
  %v7819 = vadd.f32 %v7799, %v7818
  %7820 = vdwg.mxu0
  %v7821 = vsel %vm3499, %v6388, 0.0
  %v7822 = vrot.slane %v7821, 4
  %v7823 = vadd.f32 %v7821, %v7822
  %v7824 = vrot.slane %v7823, 2
  %v7825 = vadd.f32 %v7823, %v7824
  %v7826 = vrot.slane %v7825, 1
  %v7827 = vadd.f32 %v7825, %v7826
  %v7828 = vsel %vm3499, %v6389, 0.0
  %v7829 = vrot.slane %v7828, 4
  %v7830 = vadd.f32 %v7828, %v7829
  %v7831 = vrot.slane %v7830, 2
  %v7832 = vadd.f32 %v7830, %v7831
  %v7833 = vrot.slane %v7832, 1
  %v7834 = vadd.f32 %v7832, %v7833
  %7835 = vmatpush.msra.mxu0 %v7764
  %7836 = vmatpush.msra.mxu0 %v7763
  %7837 = vmatpush.msra.mxu0 %v7762
  %7838 = vmatpush.msra.mxu0 %v7761
  %7839 = vmatpush.msra.mxu0 %v7760
  %7840 = vmatpush.msra.mxu0 %v7759
  %7841 = vmatpush.msra.mxu0 %v7758
  %7842 = vmatpush.msra.mxu0 %v7757
  %7843 = vmatpush.msra.mxu0 %v7756
  %7844 = vmatpush.msra.mxu0 %v7755
  %7845 = vmatpush.msra.mxu0 %v7754
  %7846 = vmatpush.msra.mxu0 %v7753
  %7847 = vmatpush.msra.mxu0 %v7752
  %7848 = vmatpush.msra.mxu0 %v7751
  %7849 = vmatpush.msra.mxu0 %v7750
  %7850 = vmatpush.msra.mxu0 %v7749
  %7851 = vmatmul.f32.gmra.mxu0 %v7827
  %v7852 = vpop.f32.mrf.mxu0
  %v7853 = vadd.f32 0.0, %v7852
  %7854 = vdwg.mxu0
  %7855 = vmatpush.msra.mxu0 %v7780
  %7856 = vmatpush.msra.mxu0 %v7779
  %7857 = vmatpush.msra.mxu0 %v7778
  %7858 = vmatpush.msra.mxu0 %v7777
  %7859 = vmatpush.msra.mxu0 %v7776
  %7860 = vmatpush.msra.mxu0 %v7775
  %7861 = vmatpush.msra.mxu0 %v7774
  %7862 = vmatpush.msra.mxu0 %v7773
  %7863 = vmatpush.msra.mxu0 %v7772
  %7864 = vmatpush.msra.mxu0 %v7771
  %7865 = vmatpush.msra.mxu0 %v7770
  %7866 = vmatpush.msra.mxu0 %v7769
  %7867 = vmatpush.msra.mxu0 %v7768
  %7868 = vmatpush.msra.mxu0 %v7767
  %7869 = vmatpush.msra.mxu0 %v7766
  %7870 = vmatpush.msra.mxu0 %v7765
  %7871 = vmatmul.f32.gmra.mxu0 %v7834
  %v7872 = vpop.f32.mrf.mxu0
  %v7873 = vadd.f32 %v7853, %v7872
  %7874 = vdwg.mxu0
  %v7875 = vrcp.pop 32.0
  %v7876 = vmul.f32 32.0, %v7875
  %v7877 = vsub.f32 1.0, %v7876
  %v7878 = vmul.f32 %v7875, %v7877
  %v7879 = vadd.f32 %v7875, %v7878
  %vm7880 = vweird.f32 %v7875
  %v7881 = vsel %vm7880, %v7875, %v7879
  %v7882 = vmul.f32 %v7819, %v7881
  %v7883 = vmul.f32 %v7873, %v7881
  %v7884 = vmul.f32 %v7882, %v7882
  %v7885 = vsub.f32 %v7883, %v7884
  %v7886 = vld [vmem:[%s16] sm:$0x1]
  %v7887 = vadd.f32 %v7885, 1e-05
  %v7888 = vrsqrt.pop %v7887
  %v7889 = vmul.f32 %v7888, %v7887
  %v7890 = vmul.f32 %v7889, %v7888
  %v7891 = vmul.f32 0.5, %v7890
  %v7892 = vsub.f32 1.5, %v7891
  %v7893 = vmul.f32 %v7888, %v7892
  %vm7894 = vweird.f32 %v7887
  %vm7895 = vweird.f32 %v7888
  %vm7896 = vmor %vm7894, %vm7895
  %v7897 = vsel %vm7896, %v7888, %v7893
  %v7898 = vmul.f32 %v7886, %v7897
  %v7899 = vld [vmem:[%s17] sm:$0x1]
  %v7900 = vmul.f32 %v7882, %v7898
  %v7901 = vsub.f32 %v7899, %v7900
  %v7902 = vld [vmem:[%s11] sm:$0xff]
  %v7903 = vld [vmem:[%s11 + $0x8] sm:$0xff]
  %v7904 = vld [vmem:[%s11 + $0x10] sm:$0xff]
  %v7905 = vld [vmem:[%s11 + $0x18] sm:$0xff]
  %v7906 = vld [vmem:[%s11 + $0x20] sm:$0xff]
  %v7907 = vld [vmem:[%s11 + $0x28] sm:$0xff]
  %v7908 = vld [vmem:[%s11 + $0x30] sm:$0xff]
  %v7909 = vld [vmem:[%s11 + $0x38] sm:$0xff]
  %v7910 = vld [vmem:[%s11 + $0x40] sm:$0xff]
  %v7911 = vld [vmem:[%s11 + $0x48] sm:$0xff]
  %v7912 = vld [vmem:[%s11 + $0x50] sm:$0xff]
  %v7913 = vld [vmem:[%s11 + $0x58] sm:$0xff]
  %v7914 = vld [vmem:[%s11 + $0x60] sm:$0xff]
  %v7915 = vld [vmem:[%s11 + $0x68] sm:$0xff]
  %v7916 = vld [vmem:[%s11 + $0x70] sm:$0xff]
  %v7917 = vld [vmem:[%s11 + $0x78] sm:$0xff]
  %v7919 = vsel %vm6001, %v7898, 0
  %7921 = vmatpush.msra.mxu0 0.0
  %7922 = vmatpush.msra.mxu0 0.0
  %7923 = vmatpush.msra.mxu0 0.0
  %7924 = vmatpush.msra.mxu0 0.0
  %7925 = vmatpush.msra.mxu0 0.0
  %7926 = vmatpush.msra.mxu0 0.0
  %7927 = vmatpush.msra.mxu0 0.0
  %7928 = vmatpush.msra.mxu0 0.0
  %7929 = vmatpush.msra.mxu0 %v7916
  %7930 = vmatpush.msra.mxu0 %v7914
  %7931 = vmatpush.msra.mxu0 %v7912
  %7932 = vmatpush.msra.mxu0 %v7910
  %7933 = vmatpush.msra.mxu0 %v7908
  %7934 = vmatpush.msra.mxu0 %v7906
  %7935 = vmatpush.msra.mxu0 %v7904
  %7936 = vmatpush.msra.mxu0 %v7902
  %7937 = vmatmul.f32.gmra.mxu0 %v7919
  %v7938 = vpop.f32.mrf.mxu0
  %v7939 = vadd.f32 0.0, %v7938
  %7940 = vdwg.mxu0
  %7941 = vmatpush.msra.mxu0 0.0
  %7942 = vmatpush.msra.mxu0 0.0
  %7943 = vmatpush.msra.mxu0 0.0
  %7944 = vmatpush.msra.mxu0 0.0
  %7945 = vmatpush.msra.mxu0 0.0
  %7946 = vmatpush.msra.mxu0 0.0
  %7947 = vmatpush.msra.mxu0 0.0
  %7948 = vmatpush.msra.mxu0 0.0
  %7949 = vmatpush.msra.mxu0 %v7917
  %7950 = vmatpush.msra.mxu0 %v7915
  %7951 = vmatpush.msra.mxu0 %v7913
  %7952 = vmatpush.msra.mxu0 %v7911
  %7953 = vmatpush.msra.mxu0 %v7909
  %7954 = vmatpush.msra.mxu0 %v7907
  %7955 = vmatpush.msra.mxu0 %v7905
  %7956 = vmatpush.msra.mxu0 %v7903
  %7957 = vmatmul.f32.gmra.mxu0 %v7919
  %v7958 = vpop.f32.mrf.mxu0
  %v7959 = vadd.f32 0.0, %v7958
  %7960 = vdwg.mxu0
  %v7962 = vsel %vm6001, %v7901, 0
  %7964 = vmatpush.msra.mxu0 0.0
  %7965 = vmatpush.msra.mxu0 0.0
  %7966 = vmatpush.msra.mxu0 0.0
  %7967 = vmatpush.msra.mxu0 0.0
  %7968 = vmatpush.msra.mxu0 0.0
  %7969 = vmatpush.msra.mxu0 0.0
  %7970 = vmatpush.msra.mxu0 0.0
  %7971 = vmatpush.msra.mxu0 0.0
  %7972 = vmatpush.msra.mxu0 %v7916
  %7973 = vmatpush.msra.mxu0 %v7914
  %7974 = vmatpush.msra.mxu0 %v7912
  %7975 = vmatpush.msra.mxu0 %v7910
  %7976 = vmatpush.msra.mxu0 %v7908
  %7977 = vmatpush.msra.mxu0 %v7906
  %7978 = vmatpush.msra.mxu0 %v7904
  %7979 = vmatpush.msra.mxu0 %v7902
  %7980 = vmatmul.f32.gmra.mxu0 %v7962
  %v7981 = vpop.f32.mrf.mxu0
  %v7982 = vadd.f32 0.0, %v7981
  %7983 = vdwg.mxu0
  %7984 = vmatpush.msra.mxu0 0.0
  %7985 = vmatpush.msra.mxu0 0.0
  %7986 = vmatpush.msra.mxu0 0.0
  %7987 = vmatpush.msra.mxu0 0.0
  %7988 = vmatpush.msra.mxu0 0.0
  %7989 = vmatpush.msra.mxu0 0.0
  %7990 = vmatpush.msra.mxu0 0.0
  %7991 = vmatpush.msra.mxu0 0.0
  %7992 = vmatpush.msra.mxu0 %v7917
  %7993 = vmatpush.msra.mxu0 %v7915
  %7994 = vmatpush.msra.mxu0 %v7913
  %7995 = vmatpush.msra.mxu0 %v7911
  %7996 = vmatpush.msra.mxu0 %v7909
  %7997 = vmatpush.msra.mxu0 %v7907
  %7998 = vmatpush.msra.mxu0 %v7905
  %7999 = vmatpush.msra.mxu0 %v7903
  %8000 = vmatmul.f32.gmra.mxu0 %v7962
  %v8001 = vpop.f32.mrf.mxu0
  %v8002 = vadd.f32 0.0, %v8001
  %8003 = vdwg.mxu0
  loop: start=0, step=1, limit=4
  $region116: #{discriminator_forward.1} parent=0 // loop_pre_header
    _
  $region117: #{discriminator_forward.1} parent=0 // loop_header
    %s8005 = sphi 0, %s8009
    %p8006 = scmp.ge.s32.totalorder %s8005, 4
  $region118: #{discriminator_forward.1} parent=0 // loop_header_branch
    %8008 = sbr.rel (%p8006) target = $region122
  $region119: #{discriminator_forward.1} parent=0 // loop_body
    %s8010 = smul.u32 %s8005, 2
    %s8011 = smul.addr %s8010, 2
    %s8012 = scalar_lea.vmem [#allocation8], %s8011
    %v8013 = vld [vmem:[%s8012] sm:$0xf]
    %v8014 = vperm.slane %v7939, 0
    %v8015 = vperm.slane %v7959, 0
    %v8018 = vrot.slane %v8015, 6
    %v8019 = vsel %vm3499, %v8014, %v8018
    %v8021 = vmul.f32 %v8013, %v8019
    %v8022 = vperm.slane %v7982, 0
    %v8023 = vperm.slane %v8002, 0
    %v8026 = vrot.slane %v8023, 6
    %v8027 = vsel %vm3499, %v8022, %v8026
    %v8029 = vadd.f32 %v8021, %v8027
    %vm8030 = vcmp.ge.f32.partialorder %v8029, 0.0
    %v8031 = vmul.f32 %v8029, 0.2
    %v8032 = vsel %vm8030, %v8029, %v8031
    %8034 = vst [vmem:[#allocation1] ss:$4 sm:$0xff] %v8032
    %v8035 = vld.sshfl [vmem:[#allocation1] sm:$0xff pattern:$0x73625140]
    %v8036 = vld.sshfl [vmem:[#allocation1 + $0x8] sm:$0xff pattern:$0x73625140]
    %v8039 = vpack.c.bf16 %v8036, %v8035
    %v8041 = vrot.slane %v8039, 3
    %v8044 = vsel %vm60, %v8039, %v8041
    %s8046 = scalar_lea.vmem [#allocation5], %s8010
    %8047 = vst [vmem:[%s8046] sm:$0x3] %v8044
  $region120: #{discriminator_forward.1} parent=0 // loop_footer
    %s8009 = sadd.s32 1, %s8005
  $region121: #{discriminator_forward.1} parent=0 // loop_footer_branch
    %8004 = sbr.rel target = $region117
  $region122: #{discriminator_forward.1} parent=0 // loop_exit
    _
  %v8048 = vld [vmem:[#allocation5] sm:$0x3]
  %v8049 = vld [vmem:[%s5] sm:$0xf]
  %v8050 = vld [vmem:[%s5 + $0x4] sm:$0xf]
  %v8051 = vld [vmem:[%s5 + $0x8] sm:$0xf]
  %v8052 = vld [vmem:[%s5 + $0xc] sm:$0xf]
  %v8053 = vld [vmem:[%s5 + $0x10] sm:$0xf]
  %v8054 = vld [vmem:[%s5 + $0x14] sm:$0xf]
  %v8055 = vld [vmem:[%s5 + $0x18] sm:$0xf]
  %v8056 = vld [vmem:[%s5 + $0x1c] sm:$0xf]
  %v8057 = vld [vmem:[%s5 + $0x20] sm:$0xf]
  %v8058 = vld [vmem:[%s5 + $0x24] sm:$0xf]
  %v8059 = vld [vmem:[%s5 + $0x28] sm:$0xf]
  %v8060 = vld [vmem:[%s5 + $0x2c] sm:$0xf]
  %v8061 = vld [vmem:[%s5 + $0x30] sm:$0xf]
  %v8062 = vld [vmem:[%s5 + $0x34] sm:$0xf]
  %v8063 = vld [vmem:[%s5 + $0x38] sm:$0xf]
  %v8064 = vld [vmem:[%s5 + $0x3c] sm:$0xf]
  %v8065 = vld [vmem:[%s5 + $0x40] sm:$0xf]
  %v8066 = vld [vmem:[%s5 + $0x44] sm:$0xf]
  %v8067 = vld [vmem:[%s5 + $0x48] sm:$0xf]
  %v8068 = vld [vmem:[%s5 + $0x4c] sm:$0xf]
  %v8069 = vld [vmem:[%s5 + $0x50] sm:$0xf]
  %v8070 = vld [vmem:[%s5 + $0x54] sm:$0xf]
  %v8071 = vld [vmem:[%s5 + $0x58] sm:$0xf]
  %v8072 = vld [vmem:[%s5 + $0x5c] sm:$0xf]
  %v8073 = vld [vmem:[%s5 + $0x60] sm:$0xf]
  %v8074 = vld [vmem:[%s5 + $0x64] sm:$0xf]
  %v8075 = vld [vmem:[%s5 + $0x68] sm:$0xf]
  %v8076 = vld [vmem:[%s5 + $0x6c] sm:$0xf]
  %v8077 = vld [vmem:[%s5 + $0x70] sm:$0xf]
  %v8078 = vld [vmem:[%s5 + $0x74] sm:$0xf]
  %v8079 = vld [vmem:[%s5 + $0x78] sm:$0xf]
  %v8080 = vld [vmem:[%s5 + $0x7c] sm:$0xf]
  %s8081 = scalar_lea.vmem [#allocation5], 2
  %v8082 = vld [vmem:[%s8081] sm:$0x3]
  %s8083 = scalar_lea.vmem %s5, 128
  %v8084 = vld [vmem:[%s8083] sm:$0xf]
  %v8085 = vld [vmem:[%s8083 + $0x4] sm:$0xf]
  %v8086 = vld [vmem:[%s8083 + $0x8] sm:$0xf]
  %v8087 = vld [vmem:[%s8083 + $0xc] sm:$0xf]
  %v8088 = vld [vmem:[%s8083 + $0x10] sm:$0xf]
  %v8089 = vld [vmem:[%s8083 + $0x14] sm:$0xf]
  %v8090 = vld [vmem:[%s8083 + $0x18] sm:$0xf]
  %v8091 = vld [vmem:[%s8083 + $0x1c] sm:$0xf]
  %v8092 = vld [vmem:[%s8083 + $0x20] sm:$0xf]
  %v8093 = vld [vmem:[%s8083 + $0x24] sm:$0xf]
  %v8094 = vld [vmem:[%s8083 + $0x28] sm:$0xf]
  %v8095 = vld [vmem:[%s8083 + $0x2c] sm:$0xf]
  %v8096 = vld [vmem:[%s8083 + $0x30] sm:$0xf]
  %v8097 = vld [vmem:[%s8083 + $0x34] sm:$0xf]
  %v8098 = vld [vmem:[%s8083 + $0x38] sm:$0xf]
  %v8099 = vld [vmem:[%s8083 + $0x3c] sm:$0xf]
  %v8100 = vld [vmem:[%s8083 + $0x40] sm:$0xf]
  %v8101 = vld [vmem:[%s8083 + $0x44] sm:$0xf]
  %v8102 = vld [vmem:[%s8083 + $0x48] sm:$0xf]
  %v8103 = vld [vmem:[%s8083 + $0x4c] sm:$0xf]
  %v8104 = vld [vmem:[%s8083 + $0x50] sm:$0xf]
  %v8105 = vld [vmem:[%s8083 + $0x54] sm:$0xf]
  %v8106 = vld [vmem:[%s8083 + $0x58] sm:$0xf]
  %v8107 = vld [vmem:[%s8083 + $0x5c] sm:$0xf]
  %v8108 = vld [vmem:[%s8083 + $0x60] sm:$0xf]
  %v8109 = vld [vmem:[%s8083 + $0x64] sm:$0xf]
  %v8110 = vld [vmem:[%s8083 + $0x68] sm:$0xf]
  %v8111 = vld [vmem:[%s8083 + $0x6c] sm:$0xf]
  %v8112 = vld [vmem:[%s8083 + $0x70] sm:$0xf]
  %v8113 = vld [vmem:[%s8083 + $0x74] sm:$0xf]
  %v8114 = vld [vmem:[%s8083 + $0x78] sm:$0xf]
  %v8115 = vld [vmem:[%s8083 + $0x7c] sm:$0xf]
  %8117 = vst [vmem:[#allocation1] ss:$9 sm:$0xff] %v8082
  %v8118 = vld [vmem:[#allocation1] sm:$0xff]
  %v8119 = vld [vmem:[#allocation1 + $0x9] sm:$0xff]
  %v8154 = vunpack.c.l.b16 %v8084
  %v8155 = vunpack.c.l.b16 %v8085
  %v8156 = vunpack.c.l.b16 %v8086
  %v8157 = vunpack.c.l.b16 %v8087
  %v8158 = vunpack.c.l.b16 %v8088
  %v8159 = vunpack.c.l.b16 %v8089
  %v8160 = vunpack.c.l.b16 %v8090
  %v8161 = vunpack.c.l.b16 %v8091
  %v8162 = vunpack.c.l.b16 %v8092
  %v8163 = vunpack.c.l.b16 %v8093
  %v8164 = vunpack.c.l.b16 %v8094
  %v8165 = vunpack.c.l.b16 %v8095
  %v8166 = vunpack.c.l.b16 %v8096
  %v8167 = vunpack.c.l.b16 %v8097
  %v8168 = vunpack.c.l.b16 %v8098
  %v8169 = vunpack.c.l.b16 %v8099
  %v8170 = vunpack.c.l.b16 %v8100
  %v8171 = vunpack.c.l.b16 %v8101
  %v8172 = vunpack.c.l.b16 %v8102
  %v8173 = vunpack.c.l.b16 %v8103
  %v8174 = vunpack.c.l.b16 %v8104
  %v8175 = vunpack.c.l.b16 %v8105
  %v8176 = vunpack.c.l.b16 %v8106
  %v8177 = vunpack.c.l.b16 %v8107
  %v8178 = vunpack.c.l.b16 %v8108
  %v8179 = vunpack.c.l.b16 %v8109
  %v8180 = vunpack.c.l.b16 %v8110
  %v8181 = vunpack.c.l.b16 %v8111
  %v8182 = vunpack.c.l.b16 %v8112
  %v8183 = vunpack.c.l.b16 %v8113
  %v8184 = vunpack.c.l.b16 %v8114
  %v8185 = vunpack.c.l.b16 %v8115
  %v8186 = vpack.c.b16 %v8155, %v8154
  %v8187 = vpack.c.b16 %v8157, %v8156
  %v8188 = vpack.c.b16 %v8159, %v8158
  %v8189 = vpack.c.b16 %v8161, %v8160
  %v8190 = vpack.c.b16 %v8163, %v8162
  %v8191 = vpack.c.b16 %v8165, %v8164
  %v8192 = vpack.c.b16 %v8167, %v8166
  %v8193 = vpack.c.b16 %v8169, %v8168
  %v8194 = vpack.c.b16 %v8171, %v8170
  %v8195 = vpack.c.b16 %v8173, %v8172
  %v8196 = vpack.c.b16 %v8175, %v8174
  %v8197 = vpack.c.b16 %v8177, %v8176
  %v8198 = vpack.c.b16 %v8179, %v8178
  %v8199 = vpack.c.b16 %v8181, %v8180
  %v8200 = vpack.c.b16 %v8183, %v8182
  %v8201 = vpack.c.b16 %v8185, %v8184
  %8218 = vmatpush.bf16.msra.mxu0 %v8193
  %8219 = vmatpush.bf16.msra.mxu0 %v8192
  %8220 = vmatpush.bf16.msra.mxu0 %v8191
  %8221 = vmatpush.bf16.msra.mxu0 %v8190
  %8222 = vmatpush.bf16.msra.mxu0 %v8189
  %8223 = vmatpush.bf16.msra.mxu0 %v8188
  %8224 = vmatpush.bf16.msra.mxu0 %v8187
  %8225 = vmatpush.bf16.msra.mxu0 %v8186
  %8226 = vmatmul.bf16.gmra.mxu0 %v8118
  %v8227 = vpop.f32.mrf.mxu0
  %v8228 = vadd.f32 0.0, %v8227
  %v8229 = vpop.f32.mrf.mxu0
  %8230 = vdwg.mxu0
  %8231 = vmatpush.bf16.msra.mxu0 %v8201
  %8232 = vmatpush.bf16.msra.mxu0 %v8200
  %8233 = vmatpush.bf16.msra.mxu0 %v8199
  %8234 = vmatpush.bf16.msra.mxu0 %v8198
  %8235 = vmatpush.bf16.msra.mxu0 %v8197
  %8236 = vmatpush.bf16.msra.mxu0 %v8196
  %8237 = vmatpush.bf16.msra.mxu0 %v8195
  %8238 = vmatpush.bf16.msra.mxu0 %v8194
  %8239 = vmatmul.bf16.gmra.mxu0 %v8119
  %v8240 = vpop.f32.mrf.mxu0
  %v8241 = vadd.f32 %v8228, %v8240
  %v8242 = vpop.f32.mrf.mxu0
  %8243 = vdwg.mxu0
  %8245 = vst [vmem:[#allocation1] ss:$9 sm:$0xff] %v8048
  %v8246 = vld [vmem:[#allocation1] sm:$0xff]
  %v8247 = vld [vmem:[#allocation1 + $0x9] sm:$0xff]
  %v8282 = vunpack.c.l.b16 %v8049
  %v8283 = vunpack.c.l.b16 %v8050
  %v8284 = vunpack.c.l.b16 %v8051
  %v8285 = vunpack.c.l.b16 %v8052
  %v8286 = vunpack.c.l.b16 %v8053
  %v8287 = vunpack.c.l.b16 %v8054
  %v8288 = vunpack.c.l.b16 %v8055
  %v8289 = vunpack.c.l.b16 %v8056
  %v8290 = vunpack.c.l.b16 %v8057
  %v8291 = vunpack.c.l.b16 %v8058
  %v8292 = vunpack.c.l.b16 %v8059
  %v8293 = vunpack.c.l.b16 %v8060
  %v8294 = vunpack.c.l.b16 %v8061
  %v8295 = vunpack.c.l.b16 %v8062
  %v8296 = vunpack.c.l.b16 %v8063
  %v8297 = vunpack.c.l.b16 %v8064
  %v8298 = vunpack.c.l.b16 %v8065
  %v8299 = vunpack.c.l.b16 %v8066
  %v8300 = vunpack.c.l.b16 %v8067
  %v8301 = vunpack.c.l.b16 %v8068
  %v8302 = vunpack.c.l.b16 %v8069
  %v8303 = vunpack.c.l.b16 %v8070
  %v8304 = vunpack.c.l.b16 %v8071
  %v8305 = vunpack.c.l.b16 %v8072
  %v8306 = vunpack.c.l.b16 %v8073
  %v8307 = vunpack.c.l.b16 %v8074
  %v8308 = vunpack.c.l.b16 %v8075
  %v8309 = vunpack.c.l.b16 %v8076
  %v8310 = vunpack.c.l.b16 %v8077
  %v8311 = vunpack.c.l.b16 %v8078
  %v8312 = vunpack.c.l.b16 %v8079
  %v8313 = vunpack.c.l.b16 %v8080
  %v8314 = vpack.c.b16 %v8283, %v8282
  %v8315 = vpack.c.b16 %v8285, %v8284
  %v8316 = vpack.c.b16 %v8287, %v8286
  %v8317 = vpack.c.b16 %v8289, %v8288
  %v8318 = vpack.c.b16 %v8291, %v8290
  %v8319 = vpack.c.b16 %v8293, %v8292
  %v8320 = vpack.c.b16 %v8295, %v8294
  %v8321 = vpack.c.b16 %v8297, %v8296
  %v8322 = vpack.c.b16 %v8299, %v8298
  %v8323 = vpack.c.b16 %v8301, %v8300
  %v8324 = vpack.c.b16 %v8303, %v8302
  %v8325 = vpack.c.b16 %v8305, %v8304
  %v8326 = vpack.c.b16 %v8307, %v8306
  %v8327 = vpack.c.b16 %v8309, %v8308
  %v8328 = vpack.c.b16 %v8311, %v8310
  %v8329 = vpack.c.b16 %v8313, %v8312
  %8346 = vmatpush.bf16.msra.mxu0 %v8321
  %8347 = vmatpush.bf16.msra.mxu0 %v8320
  %8348 = vmatpush.bf16.msra.mxu0 %v8319
  %8349 = vmatpush.bf16.msra.mxu0 %v8318
  %8350 = vmatpush.bf16.msra.mxu0 %v8317
  %8351 = vmatpush.bf16.msra.mxu0 %v8316
  %8352 = vmatpush.bf16.msra.mxu0 %v8315
  %8353 = vmatpush.bf16.msra.mxu0 %v8314
  %8354 = vmatmul.bf16.gmra.mxu0 %v8246
  %v8355 = vpop.f32.mrf.mxu0
  %v8356 = vadd.f32 %v8241, %v8355
  %v8357 = vpop.f32.mrf.mxu0
  %8358 = vdwg.mxu0
  %8359 = vmatpush.bf16.msra.mxu0 %v8329
  %8360 = vmatpush.bf16.msra.mxu0 %v8328
  %8361 = vmatpush.bf16.msra.mxu0 %v8327
  %8362 = vmatpush.bf16.msra.mxu0 %v8326
  %8363 = vmatpush.bf16.msra.mxu0 %v8325
  %8364 = vmatpush.bf16.msra.mxu0 %v8324
  %8365 = vmatpush.bf16.msra.mxu0 %v8323
  %8366 = vmatpush.bf16.msra.mxu0 %v8322
  %8367 = vmatmul.bf16.gmra.mxu0 %v8247
  %v8368 = vpop.f32.mrf.mxu0
  %v8369 = vadd.f32 %v8356, %v8368
  %v8370 = vpop.f32.mrf.mxu0
  %8371 = vdwg.mxu0
  %s8372 = scalar_lea.vmem [#allocation5], 4
  %v8373 = vld [vmem:[%s8372] sm:$0x3]
  %s8374 = scalar_lea.vmem %s5, 256
  %v8375 = vld [vmem:[%s8374] sm:$0xf]
  %v8376 = vld [vmem:[%s8374 + $0x4] sm:$0xf]
  %v8377 = vld [vmem:[%s8374 + $0x8] sm:$0xf]
  %v8378 = vld [vmem:[%s8374 + $0xc] sm:$0xf]
  %v8379 = vld [vmem:[%s8374 + $0x10] sm:$0xf]
  %v8380 = vld [vmem:[%s8374 + $0x14] sm:$0xf]
  %v8381 = vld [vmem:[%s8374 + $0x18] sm:$0xf]
  %v8382 = vld [vmem:[%s8374 + $0x1c] sm:$0xf]
  %v8383 = vld [vmem:[%s8374 + $0x20] sm:$0xf]
  %v8384 = vld [vmem:[%s8374 + $0x24] sm:$0xf]
  %v8385 = vld [vmem:[%s8374 + $0x28] sm:$0xf]
  %v8386 = vld [vmem:[%s8374 + $0x2c] sm:$0xf]
  %v8387 = vld [vmem:[%s8374 + $0x30] sm:$0xf]
  %v8388 = vld [vmem:[%s8374 + $0x34] sm:$0xf]
  %v8389 = vld [vmem:[%s8374 + $0x38] sm:$0xf]
  %v8390 = vld [vmem:[%s8374 + $0x3c] sm:$0xf]
  %v8391 = vld [vmem:[%s8374 + $0x40] sm:$0xf]
  %v8392 = vld [vmem:[%s8374 + $0x44] sm:$0xf]
  %v8393 = vld [vmem:[%s8374 + $0x48] sm:$0xf]
  %v8394 = vld [vmem:[%s8374 + $0x4c] sm:$0xf]
  %v8395 = vld [vmem:[%s8374 + $0x50] sm:$0xf]
  %v8396 = vld [vmem:[%s8374 + $0x54] sm:$0xf]
  %v8397 = vld [vmem:[%s8374 + $0x58] sm:$0xf]
  %v8398 = vld [vmem:[%s8374 + $0x5c] sm:$0xf]
  %v8399 = vld [vmem:[%s8374 + $0x60] sm:$0xf]
  %v8400 = vld [vmem:[%s8374 + $0x64] sm:$0xf]
  %v8401 = vld [vmem:[%s8374 + $0x68] sm:$0xf]
  %v8402 = vld [vmem:[%s8374 + $0x6c] sm:$0xf]
  %v8403 = vld [vmem:[%s8374 + $0x70] sm:$0xf]
  %v8404 = vld [vmem:[%s8374 + $0x74] sm:$0xf]
  %v8405 = vld [vmem:[%s8374 + $0x78] sm:$0xf]
  %v8406 = vld [vmem:[%s8374 + $0x7c] sm:$0xf]
  %8408 = vst [vmem:[#allocation1] ss:$9 sm:$0xff] %v8373
  %v8409 = vld [vmem:[#allocation1] sm:$0xff]
  %v8410 = vld [vmem:[#allocation1 + $0x9] sm:$0xff]
  %v8445 = vunpack.c.l.b16 %v8375
  %v8446 = vunpack.c.l.b16 %v8376
  %v8447 = vunpack.c.l.b16 %v8377
  %v8448 = vunpack.c.l.b16 %v8378
  %v8449 = vunpack.c.l.b16 %v8379
  %v8450 = vunpack.c.l.b16 %v8380
  %v8451 = vunpack.c.l.b16 %v8381
  %v8452 = vunpack.c.l.b16 %v8382
  %v8453 = vunpack.c.l.b16 %v8383
  %v8454 = vunpack.c.l.b16 %v8384
  %v8455 = vunpack.c.l.b16 %v8385
  %v8456 = vunpack.c.l.b16 %v8386
  %v8457 = vunpack.c.l.b16 %v8387
  %v8458 = vunpack.c.l.b16 %v8388
  %v8459 = vunpack.c.l.b16 %v8389
  %v8460 = vunpack.c.l.b16 %v8390
  %v8461 = vunpack.c.l.b16 %v8391
  %v8462 = vunpack.c.l.b16 %v8392
  %v8463 = vunpack.c.l.b16 %v8393
  %v8464 = vunpack.c.l.b16 %v8394
  %v8465 = vunpack.c.l.b16 %v8395
  %v8466 = vunpack.c.l.b16 %v8396
  %v8467 = vunpack.c.l.b16 %v8397
  %v8468 = vunpack.c.l.b16 %v8398
  %v8469 = vunpack.c.l.b16 %v8399
  %v8470 = vunpack.c.l.b16 %v8400
  %v8471 = vunpack.c.l.b16 %v8401
  %v8472 = vunpack.c.l.b16 %v8402
  %v8473 = vunpack.c.l.b16 %v8403
  %v8474 = vunpack.c.l.b16 %v8404
  %v8475 = vunpack.c.l.b16 %v8405
  %v8476 = vunpack.c.l.b16 %v8406
  %v8477 = vpack.c.b16 %v8446, %v8445
  %v8478 = vpack.c.b16 %v8448, %v8447
  %v8479 = vpack.c.b16 %v8450, %v8449
  %v8480 = vpack.c.b16 %v8452, %v8451
  %v8481 = vpack.c.b16 %v8454, %v8453
  %v8482 = vpack.c.b16 %v8456, %v8455
  %v8483 = vpack.c.b16 %v8458, %v8457
  %v8484 = vpack.c.b16 %v8460, %v8459
  %v8485 = vpack.c.b16 %v8462, %v8461
  %v8486 = vpack.c.b16 %v8464, %v8463
  %v8487 = vpack.c.b16 %v8466, %v8465
  %v8488 = vpack.c.b16 %v8468, %v8467
  %v8489 = vpack.c.b16 %v8470, %v8469
  %v8490 = vpack.c.b16 %v8472, %v8471
  %v8491 = vpack.c.b16 %v8474, %v8473
  %v8492 = vpack.c.b16 %v8476, %v8475
  %8509 = vmatpush.bf16.msra.mxu0 %v8484
  %8510 = vmatpush.bf16.msra.mxu0 %v8483
  %8511 = vmatpush.bf16.msra.mxu0 %v8482
  %8512 = vmatpush.bf16.msra.mxu0 %v8481
  %8513 = vmatpush.bf16.msra.mxu0 %v8480
  %8514 = vmatpush.bf16.msra.mxu0 %v8479
  %8515 = vmatpush.bf16.msra.mxu0 %v8478
  %8516 = vmatpush.bf16.msra.mxu0 %v8477
  %8517 = vmatmul.bf16.gmra.mxu0 %v8409
  %v8518 = vpop.f32.mrf.mxu0
  %v8519 = vadd.f32 0.0, %v8518
  %v8520 = vpop.f32.mrf.mxu0
  %8521 = vdwg.mxu0
  %8522 = vmatpush.bf16.msra.mxu0 %v8492
  %8523 = vmatpush.bf16.msra.mxu0 %v8491
  %8524 = vmatpush.bf16.msra.mxu0 %v8490
  %8525 = vmatpush.bf16.msra.mxu0 %v8489
  %8526 = vmatpush.bf16.msra.mxu0 %v8488
  %8527 = vmatpush.bf16.msra.mxu0 %v8487
  %8528 = vmatpush.bf16.msra.mxu0 %v8486
  %8529 = vmatpush.bf16.msra.mxu0 %v8485
  %8530 = vmatmul.bf16.gmra.mxu0 %v8410
  %v8531 = vpop.f32.mrf.mxu0
  %v8532 = vadd.f32 %v8519, %v8531
  %v8533 = vpop.f32.mrf.mxu0
  %8534 = vdwg.mxu0
  %v8535 = vadd.f32 %v8369, %v8532
  %s8536 = scalar_lea.vmem [#allocation5], 6
  %v8537 = vld [vmem:[%s8536] sm:$0x3]
  %s8538 = scalar_lea.vmem %s5, 384
  %v8539 = vld [vmem:[%s8538] sm:$0xf]
  %v8540 = vld [vmem:[%s8538 + $0x4] sm:$0xf]
  %v8541 = vld [vmem:[%s8538 + $0x8] sm:$0xf]
  %v8542 = vld [vmem:[%s8538 + $0xc] sm:$0xf]
  %v8543 = vld [vmem:[%s8538 + $0x10] sm:$0xf]
  %v8544 = vld [vmem:[%s8538 + $0x14] sm:$0xf]
  %v8545 = vld [vmem:[%s8538 + $0x18] sm:$0xf]
  %v8546 = vld [vmem:[%s8538 + $0x1c] sm:$0xf]
  %v8547 = vld [vmem:[%s8538 + $0x20] sm:$0xf]
  %v8548 = vld [vmem:[%s8538 + $0x24] sm:$0xf]
  %v8549 = vld [vmem:[%s8538 + $0x28] sm:$0xf]
  %v8550 = vld [vmem:[%s8538 + $0x2c] sm:$0xf]
  %v8551 = vld [vmem:[%s8538 + $0x30] sm:$0xf]
  %v8552 = vld [vmem:[%s8538 + $0x34] sm:$0xf]
  %v8553 = vld [vmem:[%s8538 + $0x38] sm:$0xf]
  %v8554 = vld [vmem:[%s8538 + $0x3c] sm:$0xf]
  %v8555 = vld [vmem:[%s8538 + $0x40] sm:$0xf]
  %v8556 = vld [vmem:[%s8538 + $0x44] sm:$0xf]
  %v8557 = vld [vmem:[%s8538 + $0x48] sm:$0xf]
  %v8558 = vld [vmem:[%s8538 + $0x4c] sm:$0xf]
  %v8559 = vld [vmem:[%s8538 + $0x50] sm:$0xf]
  %v8560 = vld [vmem:[%s8538 + $0x54] sm:$0xf]
  %v8561 = vld [vmem:[%s8538 + $0x58] sm:$0xf]
  %v8562 = vld [vmem:[%s8538 + $0x5c] sm:$0xf]
  %v8563 = vld [vmem:[%s8538 + $0x60] sm:$0xf]
  %v8564 = vld [vmem:[%s8538 + $0x64] sm:$0xf]
  %v8565 = vld [vmem:[%s8538 + $0x68] sm:$0xf]
  %v8566 = vld [vmem:[%s8538 + $0x6c] sm:$0xf]
  %v8567 = vld [vmem:[%s8538 + $0x70] sm:$0xf]
  %v8568 = vld [vmem:[%s8538 + $0x74] sm:$0xf]
  %v8569 = vld [vmem:[%s8538 + $0x78] sm:$0xf]
  %v8570 = vld [vmem:[%s8538 + $0x7c] sm:$0xf]
  %8572 = vst [vmem:[#allocation1] ss:$9 sm:$0xff] %v8537
  %v8573 = vld [vmem:[#allocation1] sm:$0xff]
  %v8574 = vld [vmem:[#allocation1 + $0x9] sm:$0xff]
  %v8609 = vunpack.c.l.b16 %v8539
  %v8610 = vunpack.c.l.b16 %v8540
  %v8611 = vunpack.c.l.b16 %v8541
  %v8612 = vunpack.c.l.b16 %v8542
  %v8613 = vunpack.c.l.b16 %v8543
  %v8614 = vunpack.c.l.b16 %v8544
  %v8615 = vunpack.c.l.b16 %v8545
  %v8616 = vunpack.c.l.b16 %v8546
  %v8617 = vunpack.c.l.b16 %v8547
  %v8618 = vunpack.c.l.b16 %v8548
  %v8619 = vunpack.c.l.b16 %v8549
  %v8620 = vunpack.c.l.b16 %v8550
  %v8621 = vunpack.c.l.b16 %v8551
  %v8622 = vunpack.c.l.b16 %v8552
  %v8623 = vunpack.c.l.b16 %v8553
  %v8624 = vunpack.c.l.b16 %v8554
  %v8625 = vunpack.c.l.b16 %v8555
  %v8626 = vunpack.c.l.b16 %v8556
  %v8627 = vunpack.c.l.b16 %v8557
  %v8628 = vunpack.c.l.b16 %v8558
  %v8629 = vunpack.c.l.b16 %v8559
  %v8630 = vunpack.c.l.b16 %v8560
  %v8631 = vunpack.c.l.b16 %v8561
  %v8632 = vunpack.c.l.b16 %v8562
  %v8633 = vunpack.c.l.b16 %v8563
  %v8634 = vunpack.c.l.b16 %v8564
  %v8635 = vunpack.c.l.b16 %v8565
  %v8636 = vunpack.c.l.b16 %v8566
  %v8637 = vunpack.c.l.b16 %v8567
  %v8638 = vunpack.c.l.b16 %v8568
  %v8639 = vunpack.c.l.b16 %v8569
  %v8640 = vunpack.c.l.b16 %v8570
  %v8641 = vpack.c.b16 %v8610, %v8609
  %v8642 = vpack.c.b16 %v8612, %v8611
  %v8643 = vpack.c.b16 %v8614, %v8613
  %v8644 = vpack.c.b16 %v8616, %v8615
  %v8645 = vpack.c.b16 %v8618, %v8617
  %v8646 = vpack.c.b16 %v8620, %v8619
  %v8647 = vpack.c.b16 %v8622, %v8621
  %v8648 = vpack.c.b16 %v8624, %v8623
  %v8649 = vpack.c.b16 %v8626, %v8625
  %v8650 = vpack.c.b16 %v8628, %v8627
  %v8651 = vpack.c.b16 %v8630, %v8629
  %v8652 = vpack.c.b16 %v8632, %v8631
  %v8653 = vpack.c.b16 %v8634, %v8633
  %v8654 = vpack.c.b16 %v8636, %v8635
  %v8655 = vpack.c.b16 %v8638, %v8637
  %v8656 = vpack.c.b16 %v8640, %v8639
  %8673 = vmatpush.bf16.msra.mxu0 %v8648
  %8674 = vmatpush.bf16.msra.mxu0 %v8647
  %8675 = vmatpush.bf16.msra.mxu0 %v8646
  %8676 = vmatpush.bf16.msra.mxu0 %v8645
  %8677 = vmatpush.bf16.msra.mxu0 %v8644
  %8678 = vmatpush.bf16.msra.mxu0 %v8643
  %8679 = vmatpush.bf16.msra.mxu0 %v8642
  %8680 = vmatpush.bf16.msra.mxu0 %v8641
  %8681 = vmatmul.bf16.gmra.mxu0 %v8573
  %v8682 = vpop.f32.mrf.mxu0
  %v8683 = vadd.f32 0.0, %v8682
  %v8684 = vpop.f32.mrf.mxu0
  %8685 = vdwg.mxu0
  %8686 = vmatpush.bf16.msra.mxu0 %v8656
  %8687 = vmatpush.bf16.msra.mxu0 %v8655
  %8688 = vmatpush.bf16.msra.mxu0 %v8654
  %8689 = vmatpush.bf16.msra.mxu0 %v8653
  %8690 = vmatpush.bf16.msra.mxu0 %v8652
  %8691 = vmatpush.bf16.msra.mxu0 %v8651
  %8692 = vmatpush.bf16.msra.mxu0 %v8650
  %8693 = vmatpush.bf16.msra.mxu0 %v8649
  %8694 = vmatmul.bf16.gmra.mxu0 %v8574
  %v8695 = vpop.f32.mrf.mxu0
  %v8696 = vadd.f32 %v8683, %v8695
  %v8697 = vpop.f32.mrf.mxu0
  %8698 = vdwg.mxu0
  %v8699 = vadd.f32 %v8535, %v8696
  %v8700 = vxor.u32 %v8699, 2147483648
  %v8701 = vmul.f32 %v8700, 1.442695
  %v8702 = vpow.pop %v8701
  %v8703 = vadd.f32 %v8702, 1.0
  %v8704 = vrcp.pop %v8703
  %v8705 = vmul.f32 %v8703, %v8704
  %v8706 = vsub.f32 1.0, %v8705
  %v8707 = vmul.f32 %v8704, %v8706
  %v8708 = vadd.f32 %v8704, %v8707
  %vm8709 = vweird.f32 %v8703
  %vm8710 = vweird.f32 %v8704
  %vm8711 = vmor %vm8709, %vm8710
  %v8712 = vsel %vm8711, %v8704, %v8708
  %v8713 = vand.u32 2147483647, %v8703
  %vm8714 = vcmp.eq.f32.partialorder %v8713, 8.507059e+37
  %v8715 = vand.u32 %v8703, 2147483648
  %v8716 = vor.u32 1.1754944e-38, %v8715
  %v8717 = vsel %vm8714, %v8716, %v8712
  %v8718 = vmul.f32 1.0, %v8717
  %vm8719 = vcmask 1024
  %8720 = vst.msk [vmem:[%s18] sm:$0x3] %vm8719, %v8718
  // Predicated region
  $region123: #{discriminator_forward.1} parent=0 // pred_check
    _
  $region124: #{discriminator_forward.1} parent=0 // pred_check_branch
    %8722 = sbr.rel (0) target = $region126
  $region125: #{discriminator_forward.1} parent=0 // pred_region
    _
  $region126: #{discriminator_forward.1} parent=0 // pred_fallthru
    _
  // Predicated region
  $region127: #{discriminator_forward.1} parent=0 // pred_check
    _
  $region128: #{discriminator_forward.1} parent=0 // pred_check_branch
    %8724 = sbr.rel (0) target = $region130
  $region129: #{discriminator_forward.1} parent=0 // pred_region
    _
  $region130: #{discriminator_forward.1} parent=0 // pred_fallthru
    _

</llo_original>
